<compile_context>
chip_gen: v7x
topology: tpu7x:2x2x1
jax: 0.10.0
libtpu: 0.0.40
codegen_flags: <defaults>
</compile_context>

<pallas_src>
import functools
import math

import jax
import jax.numpy as jnp
from jax.experimental import pallas as pl
from jax.experimental.pallas import tpu as pltpu


def _vmem_limit_bytes(default=48 * 1024 * 1024):
    """Generation-aware scoped-VMEM budget (v5e/v6e ~112 MiB, v7x ~56 MiB)."""
    try:
        cap = getattr(pltpu.get_tpu_info(), "vmem_capacity_bytes", None)
        if cap:
            return min((int(cap) * 7) // 8, 112 * 1024 * 1024)
    except Exception:
        pass
    return default


def _spec(shape, index_map, buffer_count=None):
    """BlockSpec, optionally with an explicit pipeline buffer count (guarded)."""
    if buffer_count is not None and hasattr(pl, "Buffered"):
        try:
            return pl.BlockSpec(shape, index_map, pipeline_mode=pl.Buffered(buffer_count))
        except TypeError:
            pass
    return pl.BlockSpec(shape, index_map)


def _layernorm(v, gamma, beta, eps=1e-5):
    mu = jnp.mean(v, axis=-1, keepdims=True)
    var = jnp.mean((v - mu) ** 2, axis=-1, keepdims=True)
    return (v - mu) * jax.lax.rsqrt(var + eps) * gamma + beta


# ------------------ kernel 1: LayerNorm1 + fused QKV projection ------------------
def qkv_kernel(x_ref, wqkv_ref, bqkv_ref, g1_ref, be1_ref, qkv_ref):
    x = x_ref[...].astype(jnp.float32)                          # (ts, D)
    x2 = _layernorm(x, g1_ref[...], be1_ref[...])
    qkv = jnp.dot(x2.astype(jnp.bfloat16), wqkv_ref[...],
                  preferred_element_type=jnp.float32) + bqkv_ref[...]   # (ts, 3D)
    qkv_ref[...] = qkv.astype(qkv_ref.dtype)                    # single lane-dense store


# ------------------ kernel 2: flash attention (online softmax over KV) -----------
def flash_attn_kernel(q_ref, k_ref, v_ref, o_ref, m_scr, l_scr, acc_scr,
                      *, heads_per_block, head_dim):
    ki = pl.program_id(3)

    @pl.when(ki == 0)
    def _():
        m_scr[...] = jnp.full_like(m_scr, -jnp.inf)
        l_scr[...] = jnp.zeros_like(l_scr)
        acc_scr[...] = jnp.zeros_like(acc_scr)

    q = q_ref[...]                                              # (tq, hp*hd) bf16, pre-scaled
    k = k_ref[...]                                              # (tk, hp*hd) bf16
    v = v_ref[...]                                              # (tk, hp*hd) bf16

    if heads_per_block == 1:
        # q @ k^T without materializing the transpose.
        s = jax.lax.dot_general(q, k, (((1,), (1,)), ((), ())),
                                preferred_element_type=jnp.float32)      # (tq, tk)
        m_prev = m_scr[...]
        m_new = jnp.maximum(m_prev, jnp.max(s, axis=-1, keepdims=True))
        alpha = jnp.exp(m_prev - m_new)
        p = jnp.exp(s - m_new)
        l_scr[...] = alpha * l_scr[...] + jnp.sum(p, axis=-1, keepdims=True)
        acc_scr[...] = alpha * acc_scr[...] + jax.lax.dot_general(
            p.astype(v.dtype), v, (((1,), (0,)), ((), ())),
            preferred_element_type=jnp.float32)
        m_scr[...] = m_new

        @pl.when(ki == pl.num_programs(3) - 1)
        def _():
            inv_l = pl.reciprocal(l_scr[...], approx=True)      # deferred normalization (EUP)
            o_ref[...] = (acc_scr[...] * inv_l).astype(o_ref.dtype)
    else:
        # Packed-heads path (head_dim < 128): batched matmuls over hp heads per block.
        hp, hd = heads_per_block, head_dim
        tq, tk = q.shape[0], k.shape[0]
        qh = jnp.swapaxes(q.reshape(tq, hp, hd), 0, 1)          # (hp, tq, hd)
        kh = jnp.swapaxes(k.reshape(tk, hp, hd), 0, 1)          # (hp, tk, hd)
        vh = jnp.swapaxes(v.reshape(tk, hp, hd), 0, 1)          # (hp, tk, hd)
        s = jnp.einsum("pqd,pkd->pqk", qh, kh,
                       preferred_element_type=jnp.float32)      # (hp, tq, tk)
        m_prev = m_scr[...]                                     # (hp, tq, 1)
        m_new = jnp.maximum(m_prev, jnp.max(s, axis=-1, keepdims=True))
        alpha = jnp.exp(m_prev - m_new)
        p = jnp.exp(s - m_new)
        l_scr[...] = alpha * l_scr[...] + jnp.sum(p, axis=-1, keepdims=True)
        acc_scr[...] = alpha * acc_scr[...] + jnp.einsum(
            "pqk,pkd->pqd", p.astype(vh.dtype), vh,
            preferred_element_type=jnp.float32)
        m_scr[...] = m_new

        @pl.when(ki == pl.num_programs(3) - 1)
        def _():
            inv_l = pl.reciprocal(l_scr[...], approx=True)
            out = acc_scr[...] * inv_l                          # (hp, tq, hd)
            o_ref[...] = jnp.swapaxes(out, 0, 1).reshape(tq, hp * hd).astype(o_ref.dtype)


# ------------------ kernel 3: out-proj + residual + LayerNorm2 + FFN -------------
def out_ffn_kernel(x_ref, attn_ref, wo_ref, bo_ref, g2_ref, be2_ref,
                   w1_ref, b1_ref, w2_ref, b2_ref, out_ref,
                   y_scr, y2_scr, acc_scr):
    fi = pl.program_id(1)

    @pl.when(fi == 0)
    def _():
        x = x_ref[...].astype(jnp.float32)                      # (ts, D)
        o = jnp.dot(attn_ref[...], wo_ref[...],
                    preferred_element_type=jnp.float32) + bo_ref[...]
        y = x + o                                               # residual 1
        y_scr[...] = y
        y2_scr[...] = _layernorm(y, g2_ref[...], be2_ref[...]).astype(jnp.bfloat16)
        acc_scr[...] = jnp.zeros_like(acc_scr)

    # One F-chunk of the feed-forward per grid step, accumulated in f32.
    h1 = jnp.dot(y2_scr[...], w1_ref[...],
                 preferred_element_type=jnp.float32) + b1_ref[...]
    h1 = jnp.maximum(h1, 0.0)                                   # ReLU
    acc_scr[...] += jnp.dot(h1.astype(jnp.bfloat16), w2_ref[...],
                            preferred_element_type=jnp.float32)

    @pl.when(fi == pl.num_programs(1) - 1)
    def _():
        out_ref[...] = (y_scr[...] + acc_scr[...] + b2_ref[...]).astype(out_ref.dtype)


# ------------------ wrapper ------------------
@functools.partial(
    jax.jit,
    static_argnames=("nhead", "row_tile", "q_tile", "kv_tile", "ff_tile", "use_buffered"))
def transformer_encoder_layer(src, params, *, nhead,
                              row_tile=512, q_tile=512, kv_tile=1024, ff_tile=1024,
                              use_buffered=True):
    """src: (B, S, D) float32. params: dict of f32 weights stored as (in, out)."""
    B, S, D = src.shape
    F = params["w1"].shape[1]
    assert D % nhead == 0, "d_model must be divisible by nhead"
    hd = D // nhead
    BS = B * S

    # Pack heads so one attention block is >= 128 lanes wide (full MXU / unmasked stores).
    hp = 1
    if hd < 128:
        hp = min(nhead, max(1, 128 // hd))
        while nhead % hp:
            hp -= 1
    Hb = nhead // hp            # head blocks (grid axis)
    bw = hp * hd                # lane width of one attention block

    ts = min(row_tile, BS)
    tq = min(q_tile, S)
    tk = min(kv_tile, S)
    tf = min(ff_tile, F)
    assert BS % ts == 0 and S % tq == 0 and S % tk == 0 and F % tf == 0

    f32, bf16 = jnp.float32, jnp.bfloat16
    scale = 1.0 / math.sqrt(hd)
    vmem_limit = _vmem_limit_bytes()
    buf = (lambda n: n) if use_buffered else (lambda n: None)

    # Fused QKV weight, 1/sqrt(hd) folded into Q columns; weights bf16, biases (1, N) f32.
    wqkv = jnp.concatenate(
        [params["wq"] * scale, params["wk"], params["wv"]], axis=1).astype(bf16)
    bqkv = jnp.concatenate(
        [params["bq"] * scale, params["bk"], params["bv"]]).reshape(1, 3 * D).astype(f32)
    g1 = params["g1"].reshape(1, D).astype(f32)
    be1 = params["be1"].reshape(1, D).astype(f32)
    g2 = params["g2"].reshape(1, D).astype(f32)
    be2 = params["be2"].reshape(1, D).astype(f32)
    wo = params["wo"].astype(bf16)
    bo = params["bo"].reshape(1, D).astype(f32)
    w1 = params["w1"].astype(bf16)
    b1 = params["b1"].reshape(1, F).astype(f32)
    w2 = params["w2"].astype(bf16)
    b2 = params["b2"].reshape(1, D).astype(f32)

    x2d = src.reshape(BS, D)    # free row-major reshape (no transpose)

    # ---- 1) LayerNorm1 + fused QKV projection -> one (BS, 3D) bf16 buffer ----
    # TODO(synk): chunk the 3*D output columns (extra grid axis) for very large D on v7x.
    qkv = pl.pallas_call(
        qkv_kernel,
        out_shape=jax.ShapeDtypeStruct((BS, 3 * D), bf16),
        grid=(BS // ts,),
        in_specs=[
            pl.BlockSpec((ts, D), lambda i: (i, 0)),             # src rows
            _spec((D, 3 * D), lambda i: (0, 0), buf(1)),          # wqkv (resident)
            _spec((1, 3 * D), lambda i: (0, 0), buf(1)),          # bqkv
            _spec((1, D), lambda i: (0, 0), buf(1)),               # gamma1
            _spec((1, D), lambda i: (0, 0), buf(1)),               # beta1
        ],
        out_specs=pl.BlockSpec((ts, 3 * D), lambda i: (i, 0)),
        compiler_params=pltpu.CompilerParams(
            dimension_semantics=("parallel",), vmem_limit_bytes=vmem_limit),
    )(x2d, wqkv, bqkv, g1, be1)

    # ---- 2) flash attention; heads sliced straight out of the QKV buffer ----
    n_q, n_k = S // tq, S // tk
    attn = pl.pallas_call(
        functools.partial(flash_attn_kernel, heads_per_block=hp, head_dim=hd),
        out_shape=jax.ShapeDtypeStruct((BS, D), bf16),
        grid=(B, Hb, n_q, n_k),
        in_specs=[
            pl.BlockSpec((tq, bw), lambda b, h, qi, ki: (b * n_q + qi, h)),          # Q
            pl.BlockSpec((tk, bw), lambda b, h, qi, ki: (b * n_k + ki, Hb + h)),     # K
            pl.BlockSpec((tk, bw), lambda b, h, qi, ki: (b * n_k + ki, 2 * Hb + h)), # V
        ],
        out_specs=pl.BlockSpec((tq, bw), lambda b, h, qi, ki: (b * n_q + qi, h)),
        scratch_shapes=(
            [pltpu.VMEM((tq, 1), f32), pltpu.VMEM((tq, 1), f32),
             pltpu.VMEM((tq, bw), f32)] if hp == 1 else
            [pltpu.VMEM((hp, tq, 1), f32), pltpu.VMEM((hp, tq, 1), f32),
             pltpu.VMEM((hp, tq, hd), f32)]),
        compiler_params=pltpu.CompilerParams(
            dimension_semantics=("parallel", "parallel", "parallel", "arbitrary"),
            vmem_limit_bytes=vmem_limit),
    )(qkv, qkv, qkv)

    # ---- 3) out-proj + residual + LayerNorm2 + FFN (F-chunked) ----
    out2d = pl.pallas_call(
        out_ffn_kernel,
        out_shape=jax.ShapeDtypeStruct((BS, D), src.dtype),
        grid=(BS // ts, F // tf),
        in_specs=[
            pl.BlockSpec((ts, D), lambda i, f: (i, 0)),            # src rows (residual)
            pl.BlockSpec((ts, D), lambda i, f: (i, 0)),            # attention rows
            _spec((D, D), lambda i, f: (0, 0), buf(1)),             # wo (resident)
            _spec((1, D), lambda i, f: (0, 0), buf(1)),             # bo
            _spec((1, D), lambda i, f: (0, 0), buf(1)),             # gamma2
            _spec((1, D), lambda i, f: (0, 0), buf(1)),             # beta2
            _spec((D, tf), lambda i, f: (0, f), buf(3)),             # w1 chunk (deep pipeline)
            pl.BlockSpec((1, tf), lambda i, f: (0, f)),              # b1 chunk
            _spec((tf, D), lambda i, f: (f, 0), buf(3)),             # w2 chunk (deep pipeline)
            _spec((1, D), lambda i, f: (0, 0), buf(1)),              # b2
        ],
        out_specs=pl.BlockSpec((ts, D), lambda i, f: (i, 0)),
        scratch_shapes=[
            pltpu.VMEM((ts, D), f32),     # y = x + out-proj(attn)
            pltpu.VMEM((ts, D), bf16),    # LayerNorm2(y), FFN matmul operand
            pltpu.VMEM((ts, D), f32),     # FFN accumulator
        ],
        compiler_params=pltpu.CompilerParams(
            dimension_semantics=("parallel", "arbitrary"),
            vmem_limit_bytes=vmem_limit),
    )(x2d, attn, wo, bo, g2, be2, w1, b1, w2, b2)

    return out2d.reshape(B, S, D)


def init_params(key, d_model, dim_feedforward):
    """Deterministic synthetic init. Linear weights stored as (in, out), f32."""
    keys = jax.random.split(key, 6)

    def lin(k, fan_in, fan_out):
        bound = 1.0 / math.sqrt(fan_in)
        kw, kb = jax.random.split(k)
        w = jax.random.uniform(kw, (fan_in, fan_out), jnp.float32, -bound, bound)
        b = jax.random.uniform(kb, (fan_out,), jnp.float32, -bound, bound)
        return w, b

    wq, bq = lin(keys[0], d_model, d_model)
    wk, bk = lin(keys[1], d_model, d_model)
    wv, bv = lin(keys[2], d_model, d_model)
    wo, bo = lin(keys[3], d_model, d_model)
    w1, b1 = lin(keys[4], d_model, dim_feedforward)
    w2, b2 = lin(keys[5], dim_feedforward, d_model)

    return dict(
        wq=wq, bq=bq, wk=wk, bk=bk, wv=wv, bv=bv, wo=wo, bo=bo,
        w1=w1, b1=b1, w2=w2, b2=b2,
        g1=jnp.ones((d_model,), jnp.float32), be1=jnp.zeros((d_model,), jnp.float32),
        g2=jnp.ones((d_model,), jnp.float32), be2=jnp.zeros((d_model,), jnp.float32),
    )


def reference_forward(src, p, nhead):
    """Pure-JAX f32 reference matching the PyTorch module (dropout = identity)."""
    B, S, D = src.shape
    hd = D // nhead

    def ln(v, g, b):
        mu = jnp.mean(v, -1, keepdims=True)
        var = jnp.mean((v - mu) ** 2, -1, keepdims=True)
        return (v - mu) / jnp.sqrt(var + 1e-5) * g + b

    x2 = ln(src, p["g1"], p["be1"])
    q = (x2 @ p["wq"] + p["bq"]).reshape(B, S, nhead, hd).transpose(0, 2, 1, 3)
    k = (x2 @ p["wk"] + p["bk"]).reshape(B, S, nhead, hd).transpose(0, 2, 1, 3)
    v = (x2 @ p["wv"] + p["bv"]).reshape(B, S, nhead, hd).transpose(0, 2, 1, 3)
    s = jnp.einsum("bhqd,bhkd->bhqk", q, k) / math.sqrt(hd)
    a = jax.nn.softmax(s, axis=-1)
    o = jnp.einsum("bhqk,bhkd->bhqd", a, v).transpose(0, 2, 1, 3).reshape(B, S, D)
    o = o @ p["wo"] + p["bo"]
    x = src + o
    x2 = ln(x, p["g2"], p["be2"])
    ff = jnp.maximum(x2 @ p["w1"] + p["b1"], 0.0) @ p["w2"] + p["b2"]
    return x + ff


if __name__ == "__main__":
    # Small but lane-aligned demo: head_dim = 128 so every block is (8,128)-friendly.
    B, S, D, NHEAD, FF = 2, 128, 256, 2, 512

    key = jax.random.PRNGKey(0)
    k_src, k_par = jax.random.split(key)
    src = jax.random.normal(k_src, (B, S, D), jnp.float32)
    params = init_params(k_par, D, FF)

    run = functools.partial(transformer_encoder_layer, src, params, nhead=NHEAD)
    try:
        out = jax.block_until_ready(run())
    except Exception:
        # Fallback if this jax build rejects pipeline_mode=pl.Buffered on BlockSpecs.
        out = jax.block_until_ready(run(use_buffered=False))

    ref = reference_forward(src, params, NHEAD)
    assert out.shape == (B, S, D)
    # bf16 matmul operands (f32 accumulation) -> relaxed tolerance vs the f32 reference.
    max_err = float(jnp.max(jnp.abs(out - ref)))
    assert jnp.allclose(out, ref, atol=1e-1, rtol=1e-1), f"mismatch vs reference: {max_err}"

    print("KERNEL_OK")
</pallas_src>

<mosaic_0001>
module attributes {stable_mosaic.version = 11 : i64} {
  func.func @flash_attn_kernel(%arg0: i32, %arg1: i32, %arg2: i32, %arg3: i32, %arg4: memref<128x128xbf16, #tpu.memory_space<vmem>>, %arg5: memref<128x128xbf16, #tpu.memory_space<vmem>>, %arg6: memref<128x128xbf16, #tpu.memory_space<vmem>>, %arg7: memref<128x128xbf16, #tpu.memory_space<vmem>>, %arg8: memref<128x1xf32, #tpu.memory_space<vmem>>, %arg9: memref<128x1xf32, #tpu.memory_space<vmem>>, %arg10: memref<128x128xf32, #tpu.memory_space<vmem>>) attributes {dimension_semantics = [#tpu.dimension_semantics<parallel>, #tpu.dimension_semantics<parallel>, #tpu.dimension_semantics<parallel>, #tpu.dimension_semantics<arbitrary>], iteration_bounds = array<i64: 2, 2, 1, 1>, scalar_prefetch = 0 : i64, scratch_operands = 3 : i64, tpu.core_type = #tpu.core_type<tc>, window_params = [{transform_indices = @transform_0, window_bounds = array<i64: 128, 128>}, {transform_indices = @transform_1, window_bounds = array<i64: 128, 128>}, {transform_indices = @transform_2, window_bounds = array<i64: 128, 128>}, {transform_indices = @transform_3, window_bounds = array<i64: 128, 128>}]} {
    %c0_i32 = arith.constant 0 : i32
    %0 = arith.cmpi eq, %arg3, %c0_i32 : i32
    %1 = arith.extui %0 : i1 to i32
    %c0_i32_0 = arith.constant 0 : i32
    %2 = arith.cmpi ne, %1, %c0_i32_0 : i32
    scf.if %2 {
      %cst_23 = arith.constant 0xFF800000 : f32
      %33 = vector.broadcast %cst_23 : f32 to vector<128x1xf32>
      %c0_24 = arith.constant 0 : index
      %c0_25 = arith.constant 0 : index
      %34 = vector.load %arg8[%c0_24, %c0_25] : memref<128x1xf32, #tpu.memory_space<vmem>>, vector<128x1xf32>
      tpu.vector_store %arg8[%c0_24, %c0_25], %33 {strides = array<i32>} : memref<128x1xf32, #tpu.memory_space<vmem>>, vector<128x1xf32>,
      %cst_26 = arith.constant 0.000000e+00 : f32
      %35 = vector.broadcast %cst_26 : f32 to vector<128x1xf32>
      %c0_27 = arith.constant 0 : index
      %c0_28 = arith.constant 0 : index
      %36 = vector.load %arg9[%c0_27, %c0_28] : memref<128x1xf32, #tpu.memory_space<vmem>>, vector<128x1xf32>
      tpu.vector_store %arg9[%c0_27, %c0_28], %35 {strides = array<i32>} : memref<128x1xf32, #tpu.memory_space<vmem>>, vector<128x1xf32>,
      %cst_29 = arith.constant 0.000000e+00 : f32
      %37 = vector.broadcast %cst_29 : f32 to vector<128x128xf32>
      %c0_30 = arith.constant 0 : index
      %c0_31 = arith.constant 0 : index
      %38 = vector.load %arg10[%c0_30, %c0_31] : memref<128x128xf32, #tpu.memory_space<vmem>>, vector<128x128xf32>
      tpu.vector_store %arg10[%c0_30, %c0_31], %37 {strides = array<i32>} : memref<128x128xf32, #tpu.memory_space<vmem>>, vector<128x128xf32>,
    } else {
    }
    %c0 = arith.constant 0 : index
    %c0_1 = arith.constant 0 : index
    %3 = vector.load %arg4[%c0, %c0_1] : memref<128x128xbf16, #tpu.memory_space<vmem>>, vector<128x128xbf16>
    %c0_2 = arith.constant 0 : index
    %c0_3 = arith.constant 0 : index
    %4 = vector.load %arg5[%c0_2, %c0_3] : memref<128x128xbf16, #tpu.memory_space<vmem>>, vector<128x128xbf16>
    %c0_4 = arith.constant 0 : index
    %c0_5 = arith.constant 0 : index
    %5 = vector.load %arg6[%c0_4, %c0_5] : memref<128x128xbf16, #tpu.memory_space<vmem>>, vector<128x128xbf16>
    %cst = arith.constant dense<0.000000e+00> : vector<128x128xf32>
    %6 = tpu.matmul %3, %4, %cst {dimension_numbers = #tpu.dot_dimension_numbers<[1], [1], [0], [0], [0, 0, 1, 0], [], []>} : vector<128x128xbf16>, vector<128x128xbf16>, vector<128x128xf32> -> vector<128x128xf32>
    %c0_6 = arith.constant 0 : index
    %c0_7 = arith.constant 0 : index
    %7 = vector.load %arg8[%c0_6, %c0_7] : memref<128x1xf32, #tpu.memory_space<vmem>>, vector<128x1xf32>
    %cst_8 = arith.constant dense<0xFF800000> : vector<128xf32>
    %8 = vector.multi_reduction <maximumf>, %6, %cst_8 [1] : vector<128x128xf32> to vector<128xf32>
    %9 = vector.shape_cast %8 : vector<128xf32> to vector<128x1xf32>
    %10 = arith.maximumf %7, %9 : vector<128x1xf32>
    %11 = arith.subf %7, %10 : vector<128x1xf32>
    %12 = math.exp %11 : vector<128x1xf32>
    %13 = vector.broadcast %10 : vector<128x1xf32> to vector<128x128xf32>
    %14 = arith.subf %6, %13 : vector<128x128xf32>
    %15 = math.exp %14 : vector<128x128xf32>
    %c0_9 = arith.constant 0 : index
    %c0_10 = arith.constant 0 : index
    %16 = vector.load %arg9[%c0_9, %c0_10] : memref<128x1xf32, #tpu.memory_space<vmem>>, vector<128x1xf32>
    %17 = arith.mulf %12, %16 : vector<128x1xf32>
    %cst_11 = arith.constant dense<0.000000e+00> : vector<128xf32>
    %18 = vector.multi_reduction <add>, %15, %cst_11 [1] : vector<128x128xf32> to vector<128xf32>
    %19 = vector.shape_cast %18 : vector<128xf32> to vector<128x1xf32>
    %20 = arith.addf %17, %19 : vector<128x1xf32>
    %c0_12 = arith.constant 0 : index
    %c0_13 = arith.constant 0 : index
    %21 = vector.load %arg9[%c0_12, %c0_13] : memref<128x1xf32, #tpu.memory_space<vmem>>, vector<128x1xf32>
    tpu.vector_store %arg9[%c0_12, %c0_13], %20 {strides = array<i32>} : memref<128x1xf32, #tpu.memory_space<vmem>>, vector<128x1xf32>,
    %c0_14 = arith.constant 0 : index
    %c0_15 = arith.constant 0 : index
    %22 = vector.load %arg10[%c0_14, %c0_15] : memref<128x128xf32, #tpu.memory_space<vmem>>, vector<128x128xf32>
    %23 = vector.broadcast %12 : vector<128x1xf32> to vector<128x128xf32>
    %24 = arith.mulf %23, %22 : vector<128x128xf32>
    %25 = arith.truncf %15 : vector<128x128xf32> to vector<128x128xbf16>
    %cst_16 = arith.constant dense<0.000000e+00> : vector<128x128xf32>
    %26 = tpu.matmul %25, %5, %cst_16 {dimension_numbers = #tpu.dot_dimension_numbers<[1], [0], [0], [1], [0, 0, 1, 1], [], []>} : vector<128x128xbf16>, vector<128x128xbf16>, vector<128x128xf32> -> vector<128x128xf32>
    %27 = arith.addf %24, %26 : vector<128x128xf32>
    %c0_17 = arith.constant 0 : index
    %c0_18 = arith.constant 0 : index
    %28 = vector.load %arg10[%c0_17, %c0_18] : memref<128x128xf32, #tpu.memory_space<vmem>>, vector<128x128xf32>
    tpu.vector_store %arg10[%c0_17, %c0_18], %27 {strides = array<i32>} : memref<128x128xf32, #tpu.memory_space<vmem>>, vector<128x128xf32>,
    %c0_19 = arith.constant 0 : index
    %c0_20 = arith.constant 0 : index
    %29 = vector.load %arg8[%c0_19, %c0_20] : memref<128x1xf32, #tpu.memory_space<vmem>>, vector<128x1xf32>
    tpu.vector_store %arg8[%c0_19, %c0_20], %10 {strides = array<i32>} : memref<128x1xf32, #tpu.memory_space<vmem>>, vector<128x1xf32>,
    %c0_i32_21 = arith.constant 0 : i32
    %30 = arith.cmpi eq, %arg3, %c0_i32_21 : i32
    %31 = arith.extui %30 : i1 to i32
    %c0_i32_22 = arith.constant 0 : i32
    %32 = arith.cmpi ne, %31, %c0_i32_22 : i32
    scf.if %32 {
      %c0_23 = arith.constant 0 : index
      %c0_24 = arith.constant 0 : index
      %33 = vector.load %arg9[%c0_23, %c0_24] : memref<128x1xf32, #tpu.memory_space<vmem>>, vector<128x1xf32>
      %34 = tpu.reciprocal %33 {approx = true} : vector<128x1xf32> -> vector<128x1xf32>
      %c0_25 = arith.constant 0 : index
      %c0_26 = arith.constant 0 : index
      %35 = vector.load %arg10[%c0_25, %c0_26] : memref<128x128xf32, #tpu.memory_space<vmem>>, vector<128x128xf32>
      %36 = vector.broadcast %34 : vector<128x1xf32> to vector<128x128xf32>
      %37 = arith.mulf %35, %36 : vector<128x128xf32>
      %38 = arith.truncf %37 : vector<128x128xf32> to vector<128x128xbf16>
      %c0_27 = arith.constant 0 : index
      %c0_28 = arith.constant 0 : index
      %39 = vector.load %arg7[%c0_27, %c0_28] : memref<128x128xbf16, #tpu.memory_space<vmem>>, vector<128x128xbf16>
      tpu.vector_store %arg7[%c0_27, %c0_28], %38 {strides = array<i32>} : memref<128x128xbf16, #tpu.memory_space<vmem>>, vector<128x128xbf16>,
    } else {
    }
    return
  }
  func.func @transform_0(%arg0: i32, %arg1: i32, %arg2: i32, %arg3: i32) -> (i32, i32) {
    %c1_i32 = arith.constant 1 : i32
    %0 = arith.muli %arg0, %c1_i32 : i32
    %1 = arith.addi %0, %arg2 : i32
    %c0_i32 = arith.constant 0 : i32
    return %1, %arg1 : i32, i32
  }
  func.func @transform_1(%arg0: i32, %arg1: i32, %arg2: i32, %arg3: i32) -> (i32, i32) {
    %c1_i32 = arith.constant 1 : i32
    %0 = arith.muli %arg0, %c1_i32 : i32
    %1 = arith.addi %0, %arg3 : i32
    %c2_i32 = arith.constant 2 : i32
    %2 = arith.addi %c2_i32, %arg1 : i32
    %c0_i32 = arith.constant 0 : i32
    return %1, %2 : i32, i32
  }
  func.func @transform_2(%arg0: i32, %arg1: i32, %arg2: i32, %arg3: i32) -> (i32, i32) {
    %c1_i32 = arith.constant 1 : i32
    %0 = arith.muli %arg0, %c1_i32 : i32
    %1 = arith.addi %0, %arg3 : i32
    %c4_i32 = arith.constant 4 : i32
    %2 = arith.addi %c4_i32, %arg1 : i32
    %c0_i32 = arith.constant 0 : i32
    return %1, %2 : i32, i32
  }
  func.func @transform_3(%arg0: i32, %arg1: i32, %arg2: i32, %arg3: i32) -> (i32, i32) {
    %c1_i32 = arith.constant 1 : i32
    %0 = arith.muli %arg0, %c1_i32 : i32
    %1 = arith.addi %0, %arg2 : i32
    %c0_i32 = arith.constant 0 : i32
    return %1, %arg1 : i32, i32
  }
}

module attributes {stable_mosaic.version = 11 : i64} {
  func.func @qkv_kernel(%arg0: i32, %arg1: memref<256x256xf32, #tpu.memory_space<vmem>>, %arg2: memref<256x768xbf16, #tpu.memory_space<vmem>>, %arg3: memref<1x768xf32, #tpu.memory_space<vmem>>, %arg4: memref<1x256xf32, #tpu.memory_space<vmem>>, %arg5: memref<1x256xf32, #tpu.memory_space<vmem>>, %arg6: memref<256x768xbf16, #tpu.memory_space<vmem>>) attributes {dimension_semantics = [#tpu.dimension_semantics<parallel>], iteration_bounds = array<i64: 1>, scalar_prefetch = 0 : i64, scratch_operands = 0 : i64, tpu.core_type = #tpu.core_type<tc>, window_params = [{transform_indices = @transform_0, window_bounds = array<i64: 256, 256>}, {pipeline_mode = #tpu.pipeline_mode<synchronous>, transform_indices = @transform_1, window_bounds = array<i64: 256, 768>}, {pipeline_mode = #tpu.pipeline_mode<synchronous>, transform_indices = @transform_2, window_bounds = array<i64: 1, 768>}, {pipeline_mode = #tpu.pipeline_mode<synchronous>, transform_indices = @transform_3, window_bounds = array<i64: 1, 256>}, {pipeline_mode = #tpu.pipeline_mode<synchronous>, transform_indices = @transform_4, window_bounds = array<i64: 1, 256>}, {transform_indices = @transform_5, window_bounds = array<i64: 256, 768>}]} {
    %c0 = arith.constant 0 : index
    %c0_0 = arith.constant 0 : index
    %0 = vector.load %arg1[%c0, %c0_0] : memref<256x256xf32, #tpu.memory_space<vmem>>, vector<256x256xf32>
    %c0_1 = arith.constant 0 : index
    %c0_2 = arith.constant 0 : index
    %1 = vector.load %arg4[%c0_1, %c0_2] : memref<1x256xf32, #tpu.memory_space<vmem>>, vector<1x256xf32>
    %c0_3 = arith.constant 0 : index
    %c0_4 = arith.constant 0 : index
    %2 = vector.load %arg5[%c0_3, %c0_4] : memref<1x256xf32, #tpu.memory_space<vmem>>, vector<1x256xf32>
    %cst = arith.constant dense<0.000000e+00> : vector<256xf32>
    %3 = vector.multi_reduction <add>, %0, %cst [1] : vector<256x256xf32> to vector<256xf32>
    %4 = vector.shape_cast %3 : vector<256xf32> to vector<256x1xf32>
    %cst_5 = arith.constant 2.560000e+02 : f32
    %5 = vector.broadcast %cst_5 : f32 to vector<256x1xf32>
    %6 = arith.divf %4, %5 : vector<256x1xf32>
    %7 = vector.broadcast %6 : vector<256x1xf32> to vector<256x256xf32>
    %8 = arith.subf %0, %7 : vector<256x256xf32>
    %9 = arith.mulf %8, %8 : vector<256x256xf32>
    %cst_6 = arith.constant dense<0.000000e+00> : vector<256xf32>
    %10 = vector.multi_reduction <add>, %9, %cst_6 [1] : vector<256x256xf32> to vector<256xf32>
    %11 = vector.shape_cast %10 : vector<256xf32> to vector<256x1xf32>
    %cst_7 = arith.constant 2.560000e+02 : f32
    %12 = vector.broadcast %cst_7 : f32 to vector<256x1xf32>
    %13 = arith.divf %11, %12 : vector<256x1xf32>
    %14 = vector.broadcast %6 : vector<256x1xf32> to vector<256x256xf32>
    %15 = arith.subf %0, %14 : vector<256x256xf32>
    %cst_8 = arith.constant 9.99999974E-6 : f32
    %16 = vector.broadcast %cst_8 : f32 to vector<256x1xf32>
    %17 = arith.addf %13, %16 : vector<256x1xf32>
    %18 = math.rsqrt %17 : vector<256x1xf32>
    %19 = vector.broadcast %18 : vector<256x1xf32> to vector<256x256xf32>
    %20 = arith.mulf %15, %19 : vector<256x256xf32>
    %21 = vector.broadcast %1 : vector<1x256xf32> to vector<256x256xf32>
    %22 = arith.mulf %20, %21 : vector<256x256xf32>
    %23 = vector.broadcast %2 : vector<1x256xf32> to vector<256x256xf32>
    %24 = arith.addf %22, %23 : vector<256x256xf32>
    %25 = arith.truncf %24 : vector<256x256xf32> to vector<256x256xbf16>
    %c0_9 = arith.constant 0 : index
    %c0_10 = arith.constant 0 : index
    %26 = vector.load %arg2[%c0_9, %c0_10] : memref<256x768xbf16, #tpu.memory_space<vmem>>, vector<256x768xbf16>
    %cst_11 = arith.constant dense<0.000000e+00> : vector<256x768xf32>
    %27 = tpu.matmul %25, %26, %cst_11 {dimension_numbers = #tpu.dot_dimension_numbers<[1], [0], [0], [1], [0, 0, 1, 1], [], []>} : vector<256x256xbf16>, vector<256x768xbf16>, vector<256x768xf32> -> vector<256x768xf32>
    %c0_12 = arith.constant 0 : index
    %c0_13 = arith.constant 0 : index
    %28 = vector.load %arg3[%c0_12, %c0_13] : memref<1x768xf32, #tpu.memory_space<vmem>>, vector<1x768xf32>
    %29 = vector.broadcast %28 : vector<1x768xf32> to vector<256x768xf32>
    %30 = arith.addf %27, %29 : vector<256x768xf32>
    %31 = arith.truncf %30 : vector<256x768xf32> to vector<256x768xbf16>
    %c0_14 = arith.constant 0 : index
    %c0_15 = arith.constant 0 : index
    %32 = vector.load %arg6[%c0_14, %c0_15] : memref<256x768xbf16, #tpu.memory_space<vmem>>, vector<256x768xbf16>
    tpu.vector_store %arg6[%c0_14, %c0_15], %31 {strides = array<i32>} : memref<256x768xbf16, #tpu.memory_space<vmem>>, vector<256x768xbf16>,
    return
  }
  func.func @transform_0(%arg0: i32) -> (i32, i32) {
    %c0_i32 = arith.constant 0 : i32
    %c0_i32_0 = arith.constant 0 : i32
    return %arg0, %c0_i32 : i32, i32
  }
  func.func @transform_1(%arg0: i32) -> (i32, i32) {
    %c0_i32 = arith.constant 0 : i32
    %c0_i32_0 = arith.constant 0 : i32
    %c0_i32_1 = arith.constant 0 : i32
    return %c0_i32, %c0_i32_0 : i32, i32
  }
  func.func @transform_2(%arg0: i32) -> (i32, i32) {
    %c0_i32 = arith.constant 0 : i32
    %c0_i32_0 = arith.constant 0 : i32
    %c0_i32_1 = arith.constant 0 : i32
    return %c0_i32, %c0_i32_0 : i32, i32
  }
  func.func @transform_3(%arg0: i32) -> (i32, i32) {
    %c0_i32 = arith.constant 0 : i32
    %c0_i32_0 = arith.constant 0 : i32
    %c0_i32_1 = arith.constant 0 : i32
    return %c0_i32, %c0_i32_0 : i32, i32
  }
  func.func @transform_4(%arg0: i32) -> (i32, i32) {
    %c0_i32 = arith.constant 0 : i32
    %c0_i32_0 = arith.constant 0 : i32
    %c0_i32_1 = arith.constant 0 : i32
    return %c0_i32, %c0_i32_0 : i32, i32
  }
  func.func @transform_5(%arg0: i32) -> (i32, i32) {
    %c0_i32 = arith.constant 0 : i32
    %c0_i32_0 = arith.constant 0 : i32
    return %arg0, %c0_i32 : i32, i32
  }
}

module attributes {stable_mosaic.version = 11 : i64} {
  func.func @out_ffn_kernel(%arg0: i32, %arg1: i32, %arg2: memref<256x256xf32, #tpu.memory_space<vmem>>, %arg3: memref<256x256xbf16, #tpu.memory_space<vmem>>, %arg4: memref<256x256xbf16, #tpu.memory_space<vmem>>, %arg5: memref<1x256xf32, #tpu.memory_space<vmem>>, %arg6: memref<1x256xf32, #tpu.memory_space<vmem>>, %arg7: memref<1x256xf32, #tpu.memory_space<vmem>>, %arg8: memref<256x512xbf16, #tpu.memory_space<vmem>>, %arg9: memref<1x512xf32, #tpu.memory_space<vmem>>, %arg10: memref<512x256xbf16, #tpu.memory_space<vmem>>, %arg11: memref<1x256xf32, #tpu.memory_space<vmem>>, %arg12: memref<256x256xf32, #tpu.memory_space<vmem>>, %arg13: memref<256x256xf32, #tpu.memory_space<vmem>>, %arg14: memref<256x256xbf16, #tpu.memory_space<vmem>>, %arg15: memref<256x256xf32, #tpu.memory_space<vmem>>) attributes {dimension_semantics = [#tpu.dimension_semantics<parallel>, #tpu.dimension_semantics<arbitrary>], iteration_bounds = array<i64: 1, 1>, scalar_prefetch = 0 : i64, scratch_operands = 3 : i64, tpu.core_type = #tpu.core_type<tc>, window_params = [{transform_indices = @transform_0, window_bounds = array<i64: 256, 256>}, {transform_indices = @transform_1, window_bounds = array<i64: 256, 256>}, {pipeline_mode = #tpu.pipeline_mode<synchronous>, transform_indices = @transform_2, window_bounds = array<i64: 256, 256>}, {pipeline_mode = #tpu.pipeline_mode<synchronous>, transform_indices = @transform_3, window_bounds = array<i64: 1, 256>}, {pipeline_mode = #tpu.pipeline_mode<synchronous>, transform_indices = @transform_4, window_bounds = array<i64: 1, 256>}, {pipeline_mode = #tpu.pipeline_mode<synchronous>, transform_indices = @transform_5, window_bounds = array<i64: 1, 256>}, {transform_indices = @transform_6, window_bounds = array<i64: 256, 512>}, {transform_indices = @transform_7, window_bounds = array<i64: 1, 512>}, {transform_indices = @transform_8, window_bounds = array<i64: 512, 256>}, {pipeline_mode = #tpu.pipeline_mode<synchronous>, transform_indices = @transform_9, window_bounds = array<i64: 1, 256>}, {transform_indices = @transform_10, window_bounds = array<i64: 256, 256>}]} {
    %c0_i32 = arith.constant 0 : i32
    %0 = arith.cmpi eq, %arg1, %c0_i32 : i32
    %1 = arith.extui %0 : i1 to i32
    %c0_i32_0 = arith.constant 0 : i32
    %2 = arith.cmpi ne, %1, %c0_i32_0 : i32
    scf.if %2 {
      %c0_16 = arith.constant 0 : index
      %c0_17 = arith.constant 0 : index
      %20 = vector.load %arg2[%c0_16, %c0_17] : memref<256x256xf32, #tpu.memory_space<vmem>>, vector<256x256xf32>
      %c0_18 = arith.constant 0 : index
      %c0_19 = arith.constant 0 : index
      %21 = vector.load %arg3[%c0_18, %c0_19] : memref<256x256xbf16, #tpu.memory_space<vmem>>, vector<256x256xbf16>
      %c0_20 = arith.constant 0 : index
      %c0_21 = arith.constant 0 : index
      %22 = vector.load %arg4[%c0_20, %c0_21] : memref<256x256xbf16, #tpu.memory_space<vmem>>, vector<256x256xbf16>
      %cst_22 = arith.constant dense<0.000000e+00> : vector<256x256xf32>
      %23 = tpu.matmul %21, %22, %cst_22 {dimension_numbers = #tpu.dot_dimension_numbers<[1], [0], [0], [1], [0, 0, 1, 1], [], []>} : vector<256x256xbf16>, vector<256x256xbf16>, vector<256x256xf32> -> vector<256x256xf32>
      %c0_23 = arith.constant 0 : index
      %c0_24 = arith.constant 0 : index
      %24 = vector.load %arg5[%c0_23, %c0_24] : memref<1x256xf32, #tpu.memory_space<vmem>>, vector<1x256xf32>
      %25 = vector.broadcast %24 : vector<1x256xf32> to vector<256x256xf32>
      %26 = arith.addf %23, %25 : vector<256x256xf32>
      %27 = arith.addf %20, %26 : vector<256x256xf32>
      %c0_25 = arith.constant 0 : index
      %c0_26 = arith.constant 0 : index
      %28 = vector.load %arg13[%c0_25, %c0_26] : memref<256x256xf32, #tpu.memory_space<vmem>>, vector<256x256xf32>
      tpu.vector_store %arg13[%c0_25, %c0_26], %27 {strides = array<i32>} : memref<256x256xf32, #tpu.memory_space<vmem>>, vector<256x256xf32>,
      %c0_27 = arith.constant 0 : index
      %c0_28 = arith.constant 0 : index
      %29 = vector.load %arg6[%c0_27, %c0_28] : memref<1x256xf32, #tpu.memory_space<vmem>>, vector<1x256xf32>
      %c0_29 = arith.constant 0 : index
      %c0_30 = arith.constant 0 : index
      %30 = vector.load %arg7[%c0_29, %c0_30] : memref<1x256xf32, #tpu.memory_space<vmem>>, vector<1x256xf32>
      %cst_31 = arith.constant dense<0.000000e+00> : vector<256xf32>
      %31 = vector.multi_reduction <add>, %27, %cst_31 [1] : vector<256x256xf32> to vector<256xf32>
      %32 = vector.shape_cast %31 : vector<256xf32> to vector<256x1xf32>
      %cst_32 = arith.constant 2.560000e+02 : f32
      %33 = vector.broadcast %cst_32 : f32 to vector<256x1xf32>
      %34 = arith.divf %32, %33 : vector<256x1xf32>
      %35 = vector.broadcast %34 : vector<256x1xf32> to vector<256x256xf32>
      %36 = arith.subf %27, %35 : vector<256x256xf32>
      %37 = arith.mulf %36, %36 : vector<256x256xf32>
      %cst_33 = arith.constant dense<0.000000e+00> : vector<256xf32>
      %38 = vector.multi_reduction <add>, %37, %cst_33 [1] : vector<256x256xf32> to vector<256xf32>
      %39 = vector.shape_cast %38 : vector<256xf32> to vector<256x1xf32>
      %cst_34 = arith.constant 2.560000e+02 : f32
      %40 = vector.broadcast %cst_34 : f32 to vector<256x1xf32>
      %41 = arith.divf %39, %40 : vector<256x1xf32>
      %42 = vector.broadcast %34 : vector<256x1xf32> to vector<256x256xf32>
      %43 = arith.subf %27, %42 : vector<256x256xf32>
      %cst_35 = arith.constant 9.99999974E-6 : f32
      %44 = vector.broadcast %cst_35 : f32 to vector<256x1xf32>
      %45 = arith.addf %41, %44 : vector<256x1xf32>
      %46 = math.rsqrt %45 : vector<256x1xf32>
      %47 = vector.broadcast %46 : vector<256x1xf32> to vector<256x256xf32>
      %48 = arith.mulf %43, %47 : vector<256x256xf32>
      %49 = vector.broadcast %29 : vector<1x256xf32> to vector<256x256xf32>
      %50 = arith.mulf %48, %49 : vector<256x256xf32>
      %51 = vector.broadcast %30 : vector<1x256xf32> to vector<256x256xf32>
      %52 = arith.addf %50, %51 : vector<256x256xf32>
      %53 = arith.truncf %52 : vector<256x256xf32> to vector<256x256xbf16>
      %c0_36 = arith.constant 0 : index
      %c0_37 = arith.constant 0 : index
      %54 = vector.load %arg14[%c0_36, %c0_37] : memref<256x256xbf16, #tpu.memory_space<vmem>>, vector<256x256xbf16>
      tpu.vector_store %arg14[%c0_36, %c0_37], %53 {strides = array<i32>} : memref<256x256xbf16, #tpu.memory_space<vmem>>, vector<256x256xbf16>,
      %cst_38 = arith.constant 0.000000e+00 : f32
      %55 = vector.broadcast %cst_38 : f32 to vector<256x256xf32>
      %c0_39 = arith.constant 0 : index
      %c0_40 = arith.constant 0 : index
      %56 = vector.load %arg15[%c0_39, %c0_40] : memref<256x256xf32, #tpu.memory_space<vmem>>, vector<256x256xf32>
      tpu.vector_store %arg15[%c0_39, %c0_40], %55 {strides = array<i32>} : memref<256x256xf32, #tpu.memory_space<vmem>>, vector<256x256xf32>,
    } else {
    }
    %c0 = arith.constant 0 : index
    %c0_1 = arith.constant 0 : index
    %3 = vector.load %arg14[%c0, %c0_1] : memref<256x256xbf16, #tpu.memory_space<vmem>>, vector<256x256xbf16>
    %c0_2 = arith.constant 0 : index
    %c0_3 = arith.constant 0 : index
    %4 = vector.load %arg8[%c0_2, %c0_3] : memref<256x512xbf16, #tpu.memory_space<vmem>>, vector<256x512xbf16>
    %cst = arith.constant dense<0.000000e+00> : vector<256x512xf32>
    %5 = tpu.matmul %3, %4, %cst {dimension_numbers = #tpu.dot_dimension_numbers<[1], [0], [0], [1], [0, 0, 1, 1], [], []>} : vector<256x256xbf16>, vector<256x512xbf16>, vector<256x512xf32> -> vector<256x512xf32>
    %c0_4 = arith.constant 0 : index
    %c0_5 = arith.constant 0 : index
    %6 = vector.load %arg9[%c0_4, %c0_5] : memref<1x512xf32, #tpu.memory_space<vmem>>, vector<1x512xf32>
    %7 = vector.broadcast %6 : vector<1x512xf32> to vector<256x512xf32>
    %8 = arith.addf %5, %7 : vector<256x512xf32>
    %cst_6 = arith.constant 0.000000e+00 : f32
    %9 = vector.broadcast %cst_6 : f32 to vector<256x512xf32>
    %10 = arith.maximumf %8, %9 : vector<256x512xf32>
    %c0_7 = arith.constant 0 : index
    %c0_8 = arith.constant 0 : index
    %11 = vector.load %arg15[%c0_7, %c0_8] : memref<256x256xf32, #tpu.memory_space<vmem>>, vector<256x256xf32>
    %12 = arith.truncf %10 : vector<256x512xf32> to vector<256x512xbf16>
    %c0_9 = arith.constant 0 : index
    %c0_10 = arith.constant 0 : index
    %13 = vector.load %arg10[%c0_9, %c0_10] : memref<512x256xbf16, #tpu.memory_space<vmem>>, vector<512x256xbf16>
    %cst_11 = arith.constant dense<0.000000e+00> : vector<256x256xf32>
    %14 = tpu.matmul %12, %13, %cst_11 {dimension_numbers = #tpu.dot_dimension_numbers<[1], [0], [0], [1], [0, 0, 1, 1], [], []>} : vector<256x512xbf16>, vector<512x256xbf16>, vector<256x256xf32> -> vector<256x256xf32>
    %15 = arith.addf %11, %14 : vector<256x256xf32>
    %c0_12 = arith.constant 0 : index
    %c0_13 = arith.constant 0 : index
    %16 = vector.load %arg15[%c0_12, %c0_13] : memref<256x256xf32, #tpu.memory_space<vmem>>, vector<256x256xf32>
    tpu.vector_store %arg15[%c0_12, %c0_13], %15 {strides = array<i32>} : memref<256x256xf32, #tpu.memory_space<vmem>>, vector<256x256xf32>,
    %c0_i32_14 = arith.constant 0 : i32
    %17 = arith.cmpi eq, %arg1, %c0_i32_14 : i32
    %18 = arith.extui %17 : i1 to i32
    %c0_i32_15 = arith.constant 0 : i32
    %19 = arith.cmpi ne, %18, %c0_i32_15 : i32
    scf.if %19 {
      %c0_16 = arith.constant 0 : index
      %c0_17 = arith.constant 0 : index
      %20 = vector.load %arg13[%c0_16, %c0_17] : memref<256x256xf32, #tpu.memory_space<vmem>>, vector<256x256xf32>
      %c0_18 = arith.constant 0 : index
      %c0_19 = arith.constant 0 : index
      %21 = vector.load %arg15[%c0_18, %c0_19] : memref<256x256xf32, #tpu.memory_space<vmem>>, vector<256x256xf32>
      %22 = arith.addf %20, %21 : vector<256x256xf32>
      %c0_20 = arith.constant 0 : index
      %c0_21 = arith.constant 0 : index
      %23 = vector.load %arg11[%c0_20, %c0_21] : memref<1x256xf32, #tpu.memory_space<vmem>>, vector<1x256xf32>
      %24 = vector.broadcast %23 : vector<1x256xf32> to vector<256x256xf32>
      %25 = arith.addf %22, %24 : vector<256x256xf32>
      %c0_22 = arith.constant 0 : index
      %c0_23 = arith.constant 0 : index
      %26 = vector.load %arg12[%c0_22, %c0_23] : memref<256x256xf32, #tpu.memory_space<vmem>>, vector<256x256xf32>
      tpu.vector_store %arg12[%c0_22, %c0_23], %25 {strides = array<i32>} : memref<256x256xf32, #tpu.memory_space<vmem>>, vector<256x256xf32>,
    } else {
    }
    return
  }
  func.func @transform_0(%arg0: i32, %arg1: i32) -> (i32, i32) {
    %c0_i32 = arith.constant 0 : i32
    %c0_i32_0 = arith.constant 0 : i32
    return %arg0, %c0_i32 : i32, i32
  }
  func.func @transform_1(%arg0: i32, %arg1: i32) -> (i32, i32) {
    %c0_i32 = arith.constant 0 : i32
    %c0_i32_0 = arith.constant 0 : i32
    return %arg0, %c0_i32 : i32, i32
  }
  func.func @transform_2(%arg0: i32, %arg1: i32) -> (i32, i32) {
    %c0_i32 = arith.constant 0 : i32
    %c0_i32_0 = arith.constant 0 : i32
    %c0_i32_1 = arith.constant 0 : i32
    return %c0_i32, %c0_i32_0 : i32, i32
  }
  func.func @transform_3(%arg0: i32, %arg1: i32) -> (i32, i32) {
    %c0_i32 = arith.constant 0 : i32
    %c0_i32_0 = arith.constant 0 : i32
    %c0_i32_1 = arith.constant 0 : i32
    return %c0_i32, %c0_i32_0 : i32, i32
  }
  func.func @transform_4(%arg0: i32, %arg1: i32) -> (i32, i32) {
    %c0_i32 = arith.constant 0 : i32
    %c0_i32_0 = arith.constant 0 : i32
    %c0_i32_1 = arith.constant 0 : i32
    return %c0_i32, %c0_i32_0 : i32, i32
  }
  func.func @transform_5(%arg0: i32, %arg1: i32) -> (i32, i32) {
    %c0_i32 = arith.constant 0 : i32
    %c0_i32_0 = arith.constant 0 : i32
    %c0_i32_1 = arith.constant 0 : i32
    return %c0_i32, %c0_i32_0 : i32, i32
  }
  func.func @transform_6(%arg0: i32, %arg1: i32) -> (i32, i32) {
    %c0_i32 = arith.constant 0 : i32
    %c0_i32_0 = arith.constant 0 : i32
    return %c0_i32, %arg1 : i32, i32
  }
  func.func @transform_7(%arg0: i32, %arg1: i32) -> (i32, i32) {
    %c0_i32 = arith.constant 0 : i32
    %c0_i32_0 = arith.constant 0 : i32
    return %c0_i32, %arg1 : i32, i32
  }
  func.func @transform_8(%arg0: i32, %arg1: i32) -> (i32, i32) {
    %c0_i32 = arith.constant 0 : i32
    %c0_i32_0 = arith.constant 0 : i32
    return %arg1, %c0_i32 : i32, i32
  }
  func.func @transform_9(%arg0: i32, %arg1: i32) -> (i32, i32) {
    %c0_i32 = arith.constant 0 : i32
    %c0_i32_0 = arith.constant 0 : i32
    %c0_i32_1 = arith.constant 0 : i32
    return %c0_i32, %c0_i32_0 : i32, i32
  }
  func.func @transform_10(%arg0: i32, %arg1: i32) -> (i32, i32) {
    %c0_i32 = arith.constant 0 : i32
    %c0_i32_0 = arith.constant 0 : i32
    return %arg0, %c0_i32 : i32, i32
  }
}

</mosaic_0001>

<llo_original>
// kernel: transformer_encoder_layer.4
$region0: #{transformer_encoder_layer.4}
  #allocation0 [shape = 'u32[]', space=smem, size = 0x4, offset = 0x4, fixed_abs, tag = 'smem constant byte address 0x4 - core index']
  #allocation1 [shape = 'u32[144,128]{1,0:T(1,128)}', space=vmem, size = 0x12000, scoped, tag = 'internal scratch']
  #allocation2 [shape = 'f32[128,1]{1,0:T(8,128)}', space=vmem, size = 0x10000, scoped, tag = 'scratch operand']
  #allocation3 [shape = 'f32[128,1]{1,0:T(8,128)}', space=vmem, size = 0x10000, scoped, tag = 'scratch operand']
  #allocation4 [shape = 'f32[128,128]{1,0:T(8,128)}', space=vmem, size = 0x10000, scoped, tag = 'scratch operand']
  %s0 = inlined_call_operand.vmem [shape: bf16[256,768], index: 0, kind: input, shape index: {}, may-alias: {0,1,2}]
  %s1 = inlined_call_operand.vmem [shape: bf16[256,768], index: 1, kind: input, shape index: {}, may-alias: {0,1,2}]
  %s2 = inlined_call_operand.vmem [shape: bf16[256,768], index: 2, kind: input, shape index: {}, may-alias: {0,1,2}]
  %s3 = inlined_call_operand.vmem [shape: bf16[256,256], index: 3, kind: output, shape index: {}]
  %s4 = sld [smem:[#allocation0]]
  $region213: #{transformer_encoder_layer.4} parent=0
    _
  %s6 = ssub.s32 1, %s4
  %s7 = scalar_select 0, %s6, %s4
  $region1: #{transformer_encoder_layer.4} parent=0
    #allocation5 [shape = 'u8[65536]{0}', space=vmem, size = 0x10000, scoped, tag = 'input window, operand 0']
    #allocation6 [shape = 'u8[65536]{0}', space=vmem, size = 0x10000, scoped, tag = 'input window, operand 1']
    #allocation7 [shape = 'u8[65536]{0}', space=vmem, size = 0x10000, scoped, tag = 'input window, operand 2']
    #allocation8 [shape = 'u8[65536]{0}', space=vmem, size = 0x10000, scoped, tag = 'output window, operand 0']
    loop: start=0, step=1, limit=6
    $region2: #{transformer_encoder_layer.4} parent=1 // loop_pre_header
      _
    $region3: #{transformer_encoder_layer.4} parent=1 // loop_header
      %s9 = sphi 0, %s13
      %p10 = scmp.ge.s32.totalorder %s9, 6
      %s16 = sphi 0, %s42
      %s17 = sphi 0, %s38
      %s18 = sphi 0, %s34
      %s19 = sphi 0, %s30
      %s20 = sphi 0, %s16
      %s21 = sphi 0, %s17
      %s22 = sphi 0, %s18
      %s23 = sphi 0, %s19
      %s24 = sphi 0, %s20
      %s25 = sphi 0, %s21
      %s26 = sphi 0, %s22
      %s27 = sphi 0, %s23
      %s49 = sphi 0, %s51
      %s52 = sphi 0, %s49
      %s53 = sphi 0, %s52
      %s69 = sphi 0, %s53
      %s81 = sphi 0, %s83
      %s84 = sphi 0, %s81
      %s85 = sphi 0, %s84
      %s101 = sphi 0, %s85
      %s113 = sphi 0, %s115
      %s116 = sphi 0, %s113
      %s117 = sphi 0, %s116
      %s133 = sphi 0, %s117
      %s143 = sphi 0, %s145
      %s146 = sphi 0, %s143
      %s147 = sphi 0, %s146
      %s163 = sphi 0, %s147
    $region4: #{transformer_encoder_layer.4} parent=1 // loop_header_branch
      %12 = sbr.rel (%p10) target = $region8
    $region5: #{transformer_encoder_layer.4} parent=1 // loop_body
      %s14 = ssub.s32 %s9, 1
      %s15 = ssub.s32 %s9, 2
      %s28 = sadd.s32 1, %s19
      %p29 = scmp.ge.s32.totalorder %s28, 1
      %s30 = scalar_select %p29, 0, %s28
      %s31 = sadd.s32 1, %s18
      %s32 = scalar_select %p29, %s31, %s18
      %p33 = scmp.ge.s32.totalorder %s32, 1
      %s34 = scalar_select %p33, 0, %s32
      %s35 = sadd.s32 1, %s17
      %s36 = scalar_select %p33, %s35, %s17
      %p37 = scmp.ge.s32.totalorder %s36, 2
      %s38 = scalar_select %p37, 0, %s36
      %s39 = sadd.s32 1, %s16
      %s40 = scalar_select %p37, %s39, %s16
      %p41 = scmp.ge.s32.totalorder %s40, 2
      %s42 = scalar_select %p41, 0, %s40
      %s43 = sadd.s32 %s16, %s18
      %s44 = sadd.s32 %s42, %s34
      %s45 = ssub.s32 %s43, %s44
      %s46 = ssub.s32 %s17, %s38
      %s47 = sor.u32 %s45, %s46
      %p48 = scmp.eq.s32.totalorder %s47, 0
      %s50 = sadd.s32 %s49, 1
      %s51 = scalar_select %p48, %s49, %s50
      %p54 = pneg %p48
      %p55 = scmp.eq.s32.totalorder %s9, 3
      %p56 = por %p54, %p55
      %p57 = scmp.ne.s32.totalorder %s49, %s52
      %p58 = scmp.eq.s32.totalorder %s9, 0
      %p59 = por %p57, %p58
      %p60 = scmp.ne.s32.totalorder %s49, %s52
      %p61 = scmp.eq.s32.totalorder %s14, 3
      %p62 = por %p60, %p61
      %p63 = scmp.ne.s32.totalorder %s52, %s53
      %p64 = scmp.eq.s32.totalorder %s14, 0
      %p65 = por %p63, %p64
      %p66 = scmp.ne.s32.totalorder %s52, %s53
      %p67 = scmp.eq.s32.totalorder %s15, 3
      %p68 = por %p66, %p67
      %p70 = scmp.ne.s32.totalorder %s53, %s69
      %p71 = scmp.eq.s32.totalorder %s15, 0
      %p72 = por %p70, %p71
      %s73 = sadd.s32 %s16, %s19
      %s74 = sadd.s32 %s17, 2
      %s75 = sadd.s32 %s42, %s30
      %s76 = sadd.s32 %s38, 2
      %s77 = ssub.s32 %s73, %s75
      %s78 = ssub.s32 %s74, %s76
      %s79 = sor.u32 %s77, %s78
      %p80 = scmp.eq.s32.totalorder %s79, 0
      %s82 = sadd.s32 %s81, 1
      %s83 = scalar_select %p80, %s81, %s82
      %p86 = pneg %p80
      %p87 = scmp.eq.s32.totalorder %s9, 3
      %p88 = por %p86, %p87
      %p89 = scmp.ne.s32.totalorder %s81, %s84
      %p90 = scmp.eq.s32.totalorder %s9, 0
      %p91 = por %p89, %p90
      %p92 = scmp.ne.s32.totalorder %s81, %s84
      %p93 = scmp.eq.s32.totalorder %s14, 3
      %p94 = por %p92, %p93
      %p95 = scmp.ne.s32.totalorder %s84, %s85
      %p96 = scmp.eq.s32.totalorder %s14, 0
      %p97 = por %p95, %p96
      %p98 = scmp.ne.s32.totalorder %s84, %s85
      %p99 = scmp.eq.s32.totalorder %s15, 3
      %p100 = por %p98, %p99
      %p102 = scmp.ne.s32.totalorder %s85, %s101
      %p103 = scmp.eq.s32.totalorder %s15, 0
      %p104 = por %p102, %p103
      %s105 = sadd.s32 %s16, %s19
      %s106 = sadd.s32 %s17, 4
      %s107 = sadd.s32 %s42, %s30
      %s108 = sadd.s32 %s38, 4
      %s109 = ssub.s32 %s105, %s107
      %s110 = ssub.s32 %s106, %s108
      %s111 = sor.u32 %s109, %s110
      %p112 = scmp.eq.s32.totalorder %s111, 0
      %s114 = sadd.s32 %s113, 1
      %s115 = scalar_select %p112, %s113, %s114
      %p118 = pneg %p112
      %p119 = scmp.eq.s32.totalorder %s9, 3
      %p120 = por %p118, %p119
      %p121 = scmp.ne.s32.totalorder %s113, %s116
      %p122 = scmp.eq.s32.totalorder %s9, 0
      %p123 = por %p121, %p122
      %p124 = scmp.ne.s32.totalorder %s113, %s116
      %p125 = scmp.eq.s32.totalorder %s14, 3
      %p126 = por %p124, %p125
      %p127 = scmp.ne.s32.totalorder %s116, %s117
      %p128 = scmp.eq.s32.totalorder %s14, 0
      %p129 = por %p127, %p128
      %p130 = scmp.ne.s32.totalorder %s116, %s117
      %p131 = scmp.eq.s32.totalorder %s15, 3
      %p132 = por %p130, %p131
      %p134 = scmp.ne.s32.totalorder %s117, %s133
      %p135 = scmp.eq.s32.totalorder %s15, 0
      %p136 = por %p134, %p135
      %s137 = sadd.s32 %s16, %s18
      %s138 = sadd.s32 %s42, %s34
      %s139 = ssub.s32 %s137, %s138
      %s140 = ssub.s32 %s17, %s38
      %s141 = sor.u32 %s139, %s140
      %p142 = scmp.eq.s32.totalorder %s141, 0
      %s144 = sadd.s32 %s143, 1
      %s145 = scalar_select %p142, %s143, %s144
      %p148 = pneg %p142
      %p149 = scmp.eq.s32.totalorder %s9, 3
      %p150 = por %p148, %p149
      %p151 = scmp.ne.s32.totalorder %s143, %s146
      %p152 = scmp.eq.s32.totalorder %s9, 0
      %p153 = por %p151, %p152
      %p154 = scmp.ne.s32.totalorder %s143, %s146
      %p155 = scmp.eq.s32.totalorder %s14, 3
      %p156 = por %p154, %p155
      %p157 = scmp.ne.s32.totalorder %s146, %s147
      %p158 = scmp.eq.s32.totalorder %s14, 0
      %p159 = por %p157, %p158
      %p160 = scmp.ne.s32.totalorder %s146, %s147
      %p161 = scmp.eq.s32.totalorder %s15, 3
      %p162 = por %p160, %p161
      %p164 = scmp.ne.s32.totalorder %s147, %s163
      %p165 = scmp.eq.s32.totalorder %s15, 0
      %p166 = por %p164, %p165
      %p167 = scmp.le.s32.totalorder 1, %s9
      %p168 = scmp.lt.s32.totalorder %s9, 5
      %p169 = pnand %p167, %p168
      %p170 = pneg %p169
      // Predicated region
      $region9: #{transformer_encoder_layer.4} parent=5 // pred_check
        _
      $region10: #{transformer_encoder_layer.4} parent=5 // pred_check_branch
        %172 = sbr.rel (%p169) target = $region12
      $region11: #{transformer_encoder_layer.4} parent=5 // pred_region
        %s173 = ssub.s32 %s9, 1
      $region12: #{transformer_encoder_layer.4} parent=5 // pred_fallthru
        _
      %p174 = scmp.lt.s32.totalorder %s9, 4
      // Predicated region
      $region13: #{transformer_encoder_layer.4} parent=5 // pred_check
        %p175 = pneg %p174
      $region14: #{transformer_encoder_layer.4} parent=5 // pred_check_branch
        %177 = sbr.rel (%p175) target = $region16
      $region15: #{transformer_encoder_layer.4} parent=5 // pred_region
        // Predicated region
        $region17: #{transformer_encoder_layer.4} parent=15 // pred_check
          %p178 = pneg %p59
        $region18: #{transformer_encoder_layer.4} parent=15 // pred_check_branch
          %180 = sbr.rel (%p178) target = $region20
        $region19: #{transformer_encoder_layer.4} parent=15 // pred_region
          %s181 = sand.u32 %s49, 1
          %s182 = sand.u32 %s49, 1
          %s183 = smul.addr %s182, 64
          %s184 = scalar_lea.vmem [#allocation5], %s183
          %s185 = sadd.s32 %s16, %s18
          %s186 = smul.u32 16, %s185
          %s187 = smul.addr %s186, 6
          %s188 = sadd.s32 %s17, %s187
          %s189 = smul.addr %s188, 4
          %s190 = scalar_lea.vmem %s0, %s189
          // Predicated region
          $region21: #{transformer_encoder_layer.4} parent=19 // pred_check
            _
          $region22: #{transformer_encoder_layer.4} parent=19 // pred_check_branch
            %192 = sbr.rel (0) target = $region24
          $region23: #{transformer_encoder_layer.4} parent=19 // pred_region
            // Predicated region
            $region25: #{transformer_encoder_layer.4} parent=23 // pred_check
              _
            $region26: #{transformer_encoder_layer.4} parent=23 // pred_check_branch
              %194 = sbr.rel target = $region28
            $region27: #{transformer_encoder_layer.4} parent=23 // pred_region
              // Predicated region
              $region40: #{transformer_encoder_layer.4} parent=27 // pred_check
                _
              $region41: #{transformer_encoder_layer.4} parent=27 // pred_check_branch
                %239 = sbr.rel (0) target = $region43
              $region42: #{transformer_encoder_layer.4} parent=27 // pred_region
                loop: start=0, step=1, limit=1
                $region44: #{transformer_encoder_layer.4} parent=42 // loop_pre_header
                  _
                $region45: #{transformer_encoder_layer.4} parent=42 // loop_header
                  %s241 = sphi 0, %s245
                  %p242 = scmp.ge.s32.totalorder %s241, 1
                  %s246 = sphi %s190, %s190
                  %s247 = sphi %s184, %s184
                $region46: #{transformer_encoder_layer.4} parent=42 // loop_header_branch
                  %244 = sbr.rel (%p242) target = $region50
                $region47: #{transformer_encoder_layer.4} parent=42 // loop_body
                  _
                $region48: #{transformer_encoder_layer.4} parent=42 // loop_footer
                  %s245 = sadd.s32 1, %s241
                $region49: #{transformer_encoder_layer.4} parent=42 // loop_footer_branch
                  %240 = sbr.rel target = $region45
                $region50: #{transformer_encoder_layer.4} parent=42 // loop_exit
                  _
                loop: start=0, step=1, limit=1
                $region51: #{transformer_encoder_layer.4} parent=42 // loop_pre_header
                  _
                $region52: #{transformer_encoder_layer.4} parent=42 // loop_header
                  %s250 = sphi 0, %s254
                  %p251 = scmp.ge.s32.totalorder %s250, 1
                  %s255 = sphi %s190, %s190
                  %s256 = sphi %s184, %s184
                $region53: #{transformer_encoder_layer.4} parent=42 // loop_header_branch
                  %253 = sbr.rel (%p251) target = $region57
                $region54: #{transformer_encoder_layer.4} parent=42 // loop_body
                  %v257 = vld [vmem:[%s255] sm:$0xf]
                  %258 = vst [vmem:[%s256] sm:$0xf] %v257
                  %v259 = vld [vmem:[%s255 + $0x18] sm:$0xf]
                  %260 = vst [vmem:[%s256 + $0x4] sm:$0xf] %v259
                  %v261 = vld [vmem:[%s255 + $0x30] sm:$0xf]
                  %262 = vst [vmem:[%s256 + $0x8] sm:$0xf] %v261
                  %v263 = vld [vmem:[%s255 + $0x48] sm:$0xf]
                  %264 = vst [vmem:[%s256 + $0xc] sm:$0xf] %v263
                  %v265 = vld [vmem:[%s255 + $0x60] sm:$0xf]
                  %266 = vst [vmem:[%s256 + $0x10] sm:$0xf] %v265
                  %v267 = vld [vmem:[%s255 + $0x78] sm:$0xf]
                  %268 = vst [vmem:[%s256 + $0x14] sm:$0xf] %v267
                  %v269 = vld [vmem:[%s255 + $0x90] sm:$0xf]
                  %270 = vst [vmem:[%s256 + $0x18] sm:$0xf] %v269
                  %v271 = vld [vmem:[%s255 + $0xa8] sm:$0xf]
                  %272 = vst [vmem:[%s256 + $0x1c] sm:$0xf] %v271
                  %v273 = vld [vmem:[%s255 + $0xc0] sm:$0xf]
                  %274 = vst [vmem:[%s256 + $0x20] sm:$0xf] %v273
                  %v275 = vld [vmem:[%s255 + $0xd8] sm:$0xf]
                  %276 = vst [vmem:[%s256 + $0x24] sm:$0xf] %v275
                  %v277 = vld [vmem:[%s255 + $0xf0] sm:$0xf]
                  %278 = vst [vmem:[%s256 + $0x28] sm:$0xf] %v277
                  %v279 = vld [vmem:[%s255 + $0x108] sm:$0xf]
                  %280 = vst [vmem:[%s256 + $0x2c] sm:$0xf] %v279
                  %v281 = vld [vmem:[%s255 + $0x120] sm:$0xf]
                  %282 = vst [vmem:[%s256 + $0x30] sm:$0xf] %v281
                  %v283 = vld [vmem:[%s255 + $0x138] sm:$0xf]
                  %284 = vst [vmem:[%s256 + $0x34] sm:$0xf] %v283
                  %v285 = vld [vmem:[%s255 + $0x150] sm:$0xf]
                  %286 = vst [vmem:[%s256 + $0x38] sm:$0xf] %v285
                  %v287 = vld [vmem:[%s255 + $0x168] sm:$0xf]
                  %288 = vst [vmem:[%s256 + $0x3c] sm:$0xf] %v287
                $region55: #{transformer_encoder_layer.4} parent=42 // loop_footer
                  %s254 = sadd.s32 1, %s250
                $region56: #{transformer_encoder_layer.4} parent=42 // loop_footer_branch
                  %249 = sbr.rel target = $region52
                $region57: #{transformer_encoder_layer.4} parent=42 // loop_exit
                  _
              $region43: #{transformer_encoder_layer.4} parent=27 // pred_fallthru
                _
            $region28: #{transformer_encoder_layer.4} parent=23 // pred_fallthru
              _
            // Predicated region
            $region29: #{transformer_encoder_layer.4} parent=23 // pred_check
              _
            $region30: #{transformer_encoder_layer.4} parent=23 // pred_check_branch
              %196 = sbr.rel (0) target = $region32
            $region31: #{transformer_encoder_layer.4} parent=23 // pred_region
              loop: start=0, step=1, limit=1
              $region33: #{transformer_encoder_layer.4} parent=31 // loop_pre_header
                _
              $region34: #{transformer_encoder_layer.4} parent=31 // loop_header
                %s199 = sphi 0, %s203
                %p200 = scmp.ge.s32.totalorder %s199, 1
                %s204 = sphi %s190, %s190
                %s205 = sphi %s184, %s184
              $region35: #{transformer_encoder_layer.4} parent=31 // loop_header_branch
                %202 = sbr.rel (%p200) target = $region39
              $region36: #{transformer_encoder_layer.4} parent=31 // loop_body
                %v206 = vld [vmem:[%s204] sm:$0xf]
                %207 = vst [vmem:[%s205] sm:$0xf] %v206
                %v208 = vld [vmem:[%s204 + $0x18] sm:$0xf]
                %209 = vst [vmem:[%s205 + $0x4] sm:$0xf] %v208
                %v210 = vld [vmem:[%s204 + $0x30] sm:$0xf]
                %211 = vst [vmem:[%s205 + $0x8] sm:$0xf] %v210
                %v212 = vld [vmem:[%s204 + $0x48] sm:$0xf]
                %213 = vst [vmem:[%s205 + $0xc] sm:$0xf] %v212
                %v214 = vld [vmem:[%s204 + $0x60] sm:$0xf]
                %215 = vst [vmem:[%s205 + $0x10] sm:$0xf] %v214
                %v216 = vld [vmem:[%s204 + $0x78] sm:$0xf]
                %217 = vst [vmem:[%s205 + $0x14] sm:$0xf] %v216
                %v218 = vld [vmem:[%s204 + $0x90] sm:$0xf]
                %219 = vst [vmem:[%s205 + $0x18] sm:$0xf] %v218
                %v220 = vld [vmem:[%s204 + $0xa8] sm:$0xf]
                %221 = vst [vmem:[%s205 + $0x1c] sm:$0xf] %v220
                %v222 = vld [vmem:[%s204 + $0xc0] sm:$0xf]
                %223 = vst [vmem:[%s205 + $0x20] sm:$0xf] %v222
                %v224 = vld [vmem:[%s204 + $0xd8] sm:$0xf]
                %225 = vst [vmem:[%s205 + $0x24] sm:$0xf] %v224
                %v226 = vld [vmem:[%s204 + $0xf0] sm:$0xf]
                %227 = vst [vmem:[%s205 + $0x28] sm:$0xf] %v226
                %v228 = vld [vmem:[%s204 + $0x108] sm:$0xf]
                %229 = vst [vmem:[%s205 + $0x2c] sm:$0xf] %v228
                %v230 = vld [vmem:[%s204 + $0x120] sm:$0xf]
                %231 = vst [vmem:[%s205 + $0x30] sm:$0xf] %v230
                %v232 = vld [vmem:[%s204 + $0x138] sm:$0xf]
                %233 = vst [vmem:[%s205 + $0x34] sm:$0xf] %v232
                %v234 = vld [vmem:[%s204 + $0x150] sm:$0xf]
                %235 = vst [vmem:[%s205 + $0x38] sm:$0xf] %v234
                %v236 = vld [vmem:[%s204 + $0x168] sm:$0xf]
                %237 = vst [vmem:[%s205 + $0x3c] sm:$0xf] %v236
              $region37: #{transformer_encoder_layer.4} parent=31 // loop_footer
                %s203 = sadd.s32 1, %s199
              $region38: #{transformer_encoder_layer.4} parent=31 // loop_footer_branch
                %198 = sbr.rel target = $region34
              $region39: #{transformer_encoder_layer.4} parent=31 // loop_exit
                _
            $region32: #{transformer_encoder_layer.4} parent=23 // pred_fallthru
              _
          $region24: #{transformer_encoder_layer.4} parent=19 // pred_fallthru
            _
          %289 = vnop
        $region20: #{transformer_encoder_layer.4} parent=15 // pred_fallthru
          _
        // Predicated region
        $region58: #{transformer_encoder_layer.4} parent=15 // pred_check
          %p290 = pneg %p91
        $region59: #{transformer_encoder_layer.4} parent=15 // pred_check_branch
          %292 = sbr.rel (%p290) target = $region61
        $region60: #{transformer_encoder_layer.4} parent=15 // pred_region
          %s293 = sand.u32 %s81, 1
          %s294 = sand.u32 %s81, 1
          %s295 = smul.addr %s294, 64
          %s296 = scalar_lea.vmem [#allocation6], %s295
          %s297 = sadd.s32 %s16, %s19
          %s298 = sadd.s32 %s17, 2
          %s299 = smul.u32 16, %s297
          %s300 = smul.addr %s299, 6
          %s301 = sadd.s32 %s298, %s300
          %s302 = smul.addr %s301, 4
          %s303 = scalar_lea.vmem %s1, %s302
          // Predicated region
          $region62: #{transformer_encoder_layer.4} parent=60 // pred_check
            _
          $region63: #{transformer_encoder_layer.4} parent=60 // pred_check_branch
            %305 = sbr.rel (0) target = $region65
          $region64: #{transformer_encoder_layer.4} parent=60 // pred_region
            // Predicated region
            $region66: #{transformer_encoder_layer.4} parent=64 // pred_check
              _
            $region67: #{transformer_encoder_layer.4} parent=64 // pred_check_branch
              %307 = sbr.rel target = $region69
            $region68: #{transformer_encoder_layer.4} parent=64 // pred_region
              // Predicated region
              $region81: #{transformer_encoder_layer.4} parent=68 // pred_check
                _
              $region82: #{transformer_encoder_layer.4} parent=68 // pred_check_branch
                %352 = sbr.rel (0) target = $region84
              $region83: #{transformer_encoder_layer.4} parent=68 // pred_region
                loop: start=0, step=1, limit=1
                $region85: #{transformer_encoder_layer.4} parent=83 // loop_pre_header
                  _
                $region86: #{transformer_encoder_layer.4} parent=83 // loop_header
                  %s354 = sphi 0, %s358
                  %p355 = scmp.ge.s32.totalorder %s354, 1
                  %s359 = sphi %s303, %s303
                  %s360 = sphi %s296, %s296
                $region87: #{transformer_encoder_layer.4} parent=83 // loop_header_branch
                  %357 = sbr.rel (%p355) target = $region91
                $region88: #{transformer_encoder_layer.4} parent=83 // loop_body
                  _
                $region89: #{transformer_encoder_layer.4} parent=83 // loop_footer
                  %s358 = sadd.s32 1, %s354
                $region90: #{transformer_encoder_layer.4} parent=83 // loop_footer_branch
                  %353 = sbr.rel target = $region86
                $region91: #{transformer_encoder_layer.4} parent=83 // loop_exit
                  _
                loop: start=0, step=1, limit=1
                $region92: #{transformer_encoder_layer.4} parent=83 // loop_pre_header
                  _
                $region93: #{transformer_encoder_layer.4} parent=83 // loop_header
                  %s363 = sphi 0, %s367
                  %p364 = scmp.ge.s32.totalorder %s363, 1
                  %s368 = sphi %s303, %s303
                  %s369 = sphi %s296, %s296
                $region94: #{transformer_encoder_layer.4} parent=83 // loop_header_branch
                  %366 = sbr.rel (%p364) target = $region98
                $region95: #{transformer_encoder_layer.4} parent=83 // loop_body
                  %v370 = vld [vmem:[%s368] sm:$0xf]
                  %371 = vst [vmem:[%s369] sm:$0xf] %v370
                  %v372 = vld [vmem:[%s368 + $0x18] sm:$0xf]
                  %373 = vst [vmem:[%s369 + $0x4] sm:$0xf] %v372
                  %v374 = vld [vmem:[%s368 + $0x30] sm:$0xf]
                  %375 = vst [vmem:[%s369 + $0x8] sm:$0xf] %v374
                  %v376 = vld [vmem:[%s368 + $0x48] sm:$0xf]
                  %377 = vst [vmem:[%s369 + $0xc] sm:$0xf] %v376
                  %v378 = vld [vmem:[%s368 + $0x60] sm:$0xf]
                  %379 = vst [vmem:[%s369 + $0x10] sm:$0xf] %v378
                  %v380 = vld [vmem:[%s368 + $0x78] sm:$0xf]
                  %381 = vst [vmem:[%s369 + $0x14] sm:$0xf] %v380
                  %v382 = vld [vmem:[%s368 + $0x90] sm:$0xf]
                  %383 = vst [vmem:[%s369 + $0x18] sm:$0xf] %v382
                  %v384 = vld [vmem:[%s368 + $0xa8] sm:$0xf]
                  %385 = vst [vmem:[%s369 + $0x1c] sm:$0xf] %v384
                  %v386 = vld [vmem:[%s368 + $0xc0] sm:$0xf]
                  %387 = vst [vmem:[%s369 + $0x20] sm:$0xf] %v386
                  %v388 = vld [vmem:[%s368 + $0xd8] sm:$0xf]
                  %389 = vst [vmem:[%s369 + $0x24] sm:$0xf] %v388
                  %v390 = vld [vmem:[%s368 + $0xf0] sm:$0xf]
                  %391 = vst [vmem:[%s369 + $0x28] sm:$0xf] %v390
                  %v392 = vld [vmem:[%s368 + $0x108] sm:$0xf]
                  %393 = vst [vmem:[%s369 + $0x2c] sm:$0xf] %v392
                  %v394 = vld [vmem:[%s368 + $0x120] sm:$0xf]
                  %395 = vst [vmem:[%s369 + $0x30] sm:$0xf] %v394
                  %v396 = vld [vmem:[%s368 + $0x138] sm:$0xf]
                  %397 = vst [vmem:[%s369 + $0x34] sm:$0xf] %v396
                  %v398 = vld [vmem:[%s368 + $0x150] sm:$0xf]
                  %399 = vst [vmem:[%s369 + $0x38] sm:$0xf] %v398
                  %v400 = vld [vmem:[%s368 + $0x168] sm:$0xf]
                  %401 = vst [vmem:[%s369 + $0x3c] sm:$0xf] %v400
                $region96: #{transformer_encoder_layer.4} parent=83 // loop_footer
                  %s367 = sadd.s32 1, %s363
                $region97: #{transformer_encoder_layer.4} parent=83 // loop_footer_branch
                  %362 = sbr.rel target = $region93
                $region98: #{transformer_encoder_layer.4} parent=83 // loop_exit
                  _
              $region84: #{transformer_encoder_layer.4} parent=68 // pred_fallthru
                _
            $region69: #{transformer_encoder_layer.4} parent=64 // pred_fallthru
              _
            // Predicated region
            $region70: #{transformer_encoder_layer.4} parent=64 // pred_check
              _
            $region71: #{transformer_encoder_layer.4} parent=64 // pred_check_branch
              %309 = sbr.rel (0) target = $region73
            $region72: #{transformer_encoder_layer.4} parent=64 // pred_region
              loop: start=0, step=1, limit=1
              $region74: #{transformer_encoder_layer.4} parent=72 // loop_pre_header
                _
              $region75: #{transformer_encoder_layer.4} parent=72 // loop_header
                %s312 = sphi 0, %s316
                %p313 = scmp.ge.s32.totalorder %s312, 1
                %s317 = sphi %s303, %s303
                %s318 = sphi %s296, %s296
              $region76: #{transformer_encoder_layer.4} parent=72 // loop_header_branch
                %315 = sbr.rel (%p313) target = $region80
              $region77: #{transformer_encoder_layer.4} parent=72 // loop_body
                %v319 = vld [vmem:[%s317] sm:$0xf]
                %320 = vst [vmem:[%s318] sm:$0xf] %v319
                %v321 = vld [vmem:[%s317 + $0x18] sm:$0xf]
                %322 = vst [vmem:[%s318 + $0x4] sm:$0xf] %v321
                %v323 = vld [vmem:[%s317 + $0x30] sm:$0xf]
                %324 = vst [vmem:[%s318 + $0x8] sm:$0xf] %v323
                %v325 = vld [vmem:[%s317 + $0x48] sm:$0xf]
                %326 = vst [vmem:[%s318 + $0xc] sm:$0xf] %v325
                %v327 = vld [vmem:[%s317 + $0x60] sm:$0xf]
                %328 = vst [vmem:[%s318 + $0x10] sm:$0xf] %v327
                %v329 = vld [vmem:[%s317 + $0x78] sm:$0xf]
                %330 = vst [vmem:[%s318 + $0x14] sm:$0xf] %v329
                %v331 = vld [vmem:[%s317 + $0x90] sm:$0xf]
                %332 = vst [vmem:[%s318 + $0x18] sm:$0xf] %v331
                %v333 = vld [vmem:[%s317 + $0xa8] sm:$0xf]
                %334 = vst [vmem:[%s318 + $0x1c] sm:$0xf] %v333
                %v335 = vld [vmem:[%s317 + $0xc0] sm:$0xf]
                %336 = vst [vmem:[%s318 + $0x20] sm:$0xf] %v335
                %v337 = vld [vmem:[%s317 + $0xd8] sm:$0xf]
                %338 = vst [vmem:[%s318 + $0x24] sm:$0xf] %v337
                %v339 = vld [vmem:[%s317 + $0xf0] sm:$0xf]
                %340 = vst [vmem:[%s318 + $0x28] sm:$0xf] %v339
                %v341 = vld [vmem:[%s317 + $0x108] sm:$0xf]
                %342 = vst [vmem:[%s318 + $0x2c] sm:$0xf] %v341
                %v343 = vld [vmem:[%s317 + $0x120] sm:$0xf]
                %344 = vst [vmem:[%s318 + $0x30] sm:$0xf] %v343
                %v345 = vld [vmem:[%s317 + $0x138] sm:$0xf]
                %346 = vst [vmem:[%s318 + $0x34] sm:$0xf] %v345
                %v347 = vld [vmem:[%s317 + $0x150] sm:$0xf]
                %348 = vst [vmem:[%s318 + $0x38] sm:$0xf] %v347
                %v349 = vld [vmem:[%s317 + $0x168] sm:$0xf]
                %350 = vst [vmem:[%s318 + $0x3c] sm:$0xf] %v349
              $region78: #{transformer_encoder_layer.4} parent=72 // loop_footer
                %s316 = sadd.s32 1, %s312
              $region79: #{transformer_encoder_layer.4} parent=72 // loop_footer_branch
                %311 = sbr.rel target = $region75
              $region80: #{transformer_encoder_layer.4} parent=72 // loop_exit
                _
            $region73: #{transformer_encoder_layer.4} parent=64 // pred_fallthru
              _
          $region65: #{transformer_encoder_layer.4} parent=60 // pred_fallthru
            _
          %402 = vnop
        $region61: #{transformer_encoder_layer.4} parent=15 // pred_fallthru
          _
        // Predicated region
        $region99: #{transformer_encoder_layer.4} parent=15 // pred_check
          %p403 = pneg %p123
        $region100: #{transformer_encoder_layer.4} parent=15 // pred_check_branch
          %405 = sbr.rel (%p403) target = $region102
        $region101: #{transformer_encoder_layer.4} parent=15 // pred_region
          %s406 = sand.u32 %s113, 1
          %s407 = sand.u32 %s113, 1
          %s408 = smul.addr %s407, 64
          %s409 = scalar_lea.vmem [#allocation7], %s408
          %s410 = sadd.s32 %s16, %s19
          %s411 = sadd.s32 %s17, 4
          %s412 = smul.u32 16, %s410
          %s413 = smul.addr %s412, 6
          %s414 = sadd.s32 %s411, %s413
          %s415 = smul.addr %s414, 4
          %s416 = scalar_lea.vmem %s2, %s415
          // Predicated region
          $region103: #{transformer_encoder_layer.4} parent=101 // pred_check
            _
          $region104: #{transformer_encoder_layer.4} parent=101 // pred_check_branch
            %418 = sbr.rel (0) target = $region106
          $region105: #{transformer_encoder_layer.4} parent=101 // pred_region
            // Predicated region
            $region107: #{transformer_encoder_layer.4} parent=105 // pred_check
              _
            $region108: #{transformer_encoder_layer.4} parent=105 // pred_check_branch
              %420 = sbr.rel target = $region110
            $region109: #{transformer_encoder_layer.4} parent=105 // pred_region
              // Predicated region
              $region122: #{transformer_encoder_layer.4} parent=109 // pred_check
                _
              $region123: #{transformer_encoder_layer.4} parent=109 // pred_check_branch
                %465 = sbr.rel (0) target = $region125
              $region124: #{transformer_encoder_layer.4} parent=109 // pred_region
                loop: start=0, step=1, limit=1
                $region126: #{transformer_encoder_layer.4} parent=124 // loop_pre_header
                  _
                $region127: #{transformer_encoder_layer.4} parent=124 // loop_header
                  %s467 = sphi 0, %s471
                  %p468 = scmp.ge.s32.totalorder %s467, 1
                  %s472 = sphi %s416, %s416
                  %s473 = sphi %s409, %s409
                $region128: #{transformer_encoder_layer.4} parent=124 // loop_header_branch
                  %470 = sbr.rel (%p468) target = $region132
                $region129: #{transformer_encoder_layer.4} parent=124 // loop_body
                  _
                $region130: #{transformer_encoder_layer.4} parent=124 // loop_footer
                  %s471 = sadd.s32 1, %s467
                $region131: #{transformer_encoder_layer.4} parent=124 // loop_footer_branch
                  %466 = sbr.rel target = $region127
                $region132: #{transformer_encoder_layer.4} parent=124 // loop_exit
                  _
                loop: start=0, step=1, limit=1
                $region133: #{transformer_encoder_layer.4} parent=124 // loop_pre_header
                  _
                $region134: #{transformer_encoder_layer.4} parent=124 // loop_header
                  %s476 = sphi 0, %s480
                  %p477 = scmp.ge.s32.totalorder %s476, 1
                  %s481 = sphi %s416, %s416
                  %s482 = sphi %s409, %s409
                $region135: #{transformer_encoder_layer.4} parent=124 // loop_header_branch
                  %479 = sbr.rel (%p477) target = $region139
                $region136: #{transformer_encoder_layer.4} parent=124 // loop_body
                  %v483 = vld [vmem:[%s481] sm:$0xf]
                  %484 = vst [vmem:[%s482] sm:$0xf] %v483
                  %v485 = vld [vmem:[%s481 + $0x18] sm:$0xf]
                  %486 = vst [vmem:[%s482 + $0x4] sm:$0xf] %v485
                  %v487 = vld [vmem:[%s481 + $0x30] sm:$0xf]
                  %488 = vst [vmem:[%s482 + $0x8] sm:$0xf] %v487
                  %v489 = vld [vmem:[%s481 + $0x48] sm:$0xf]
                  %490 = vst [vmem:[%s482 + $0xc] sm:$0xf] %v489
                  %v491 = vld [vmem:[%s481 + $0x60] sm:$0xf]
                  %492 = vst [vmem:[%s482 + $0x10] sm:$0xf] %v491
                  %v493 = vld [vmem:[%s481 + $0x78] sm:$0xf]
                  %494 = vst [vmem:[%s482 + $0x14] sm:$0xf] %v493
                  %v495 = vld [vmem:[%s481 + $0x90] sm:$0xf]
                  %496 = vst [vmem:[%s482 + $0x18] sm:$0xf] %v495
                  %v497 = vld [vmem:[%s481 + $0xa8] sm:$0xf]
                  %498 = vst [vmem:[%s482 + $0x1c] sm:$0xf] %v497
                  %v499 = vld [vmem:[%s481 + $0xc0] sm:$0xf]
                  %500 = vst [vmem:[%s482 + $0x20] sm:$0xf] %v499
                  %v501 = vld [vmem:[%s481 + $0xd8] sm:$0xf]
                  %502 = vst [vmem:[%s482 + $0x24] sm:$0xf] %v501
                  %v503 = vld [vmem:[%s481 + $0xf0] sm:$0xf]
                  %504 = vst [vmem:[%s482 + $0x28] sm:$0xf] %v503
                  %v505 = vld [vmem:[%s481 + $0x108] sm:$0xf]
                  %506 = vst [vmem:[%s482 + $0x2c] sm:$0xf] %v505
                  %v507 = vld [vmem:[%s481 + $0x120] sm:$0xf]
                  %508 = vst [vmem:[%s482 + $0x30] sm:$0xf] %v507
                  %v509 = vld [vmem:[%s481 + $0x138] sm:$0xf]
                  %510 = vst [vmem:[%s482 + $0x34] sm:$0xf] %v509
                  %v511 = vld [vmem:[%s481 + $0x150] sm:$0xf]
                  %512 = vst [vmem:[%s482 + $0x38] sm:$0xf] %v511
                  %v513 = vld [vmem:[%s481 + $0x168] sm:$0xf]
                  %514 = vst [vmem:[%s482 + $0x3c] sm:$0xf] %v513
                $region137: #{transformer_encoder_layer.4} parent=124 // loop_footer
                  %s480 = sadd.s32 1, %s476
                $region138: #{transformer_encoder_layer.4} parent=124 // loop_footer_branch
                  %475 = sbr.rel target = $region134
                $region139: #{transformer_encoder_layer.4} parent=124 // loop_exit
                  _
              $region125: #{transformer_encoder_layer.4} parent=109 // pred_fallthru
                _
            $region110: #{transformer_encoder_layer.4} parent=105 // pred_fallthru
              _
            // Predicated region
            $region111: #{transformer_encoder_layer.4} parent=105 // pred_check
              _
            $region112: #{transformer_encoder_layer.4} parent=105 // pred_check_branch
              %422 = sbr.rel (0) target = $region114
            $region113: #{transformer_encoder_layer.4} parent=105 // pred_region
              loop: start=0, step=1, limit=1
              $region115: #{transformer_encoder_layer.4} parent=113 // loop_pre_header
                _
              $region116: #{transformer_encoder_layer.4} parent=113 // loop_header
                %s425 = sphi 0, %s429
                %p426 = scmp.ge.s32.totalorder %s425, 1
                %s430 = sphi %s416, %s416
                %s431 = sphi %s409, %s409
              $region117: #{transformer_encoder_layer.4} parent=113 // loop_header_branch
                %428 = sbr.rel (%p426) target = $region121
              $region118: #{transformer_encoder_layer.4} parent=113 // loop_body
                %v432 = vld [vmem:[%s430] sm:$0xf]
                %433 = vst [vmem:[%s431] sm:$0xf] %v432
                %v434 = vld [vmem:[%s430 + $0x18] sm:$0xf]
                %435 = vst [vmem:[%s431 + $0x4] sm:$0xf] %v434
                %v436 = vld [vmem:[%s430 + $0x30] sm:$0xf]
                %437 = vst [vmem:[%s431 + $0x8] sm:$0xf] %v436
                %v438 = vld [vmem:[%s430 + $0x48] sm:$0xf]
                %439 = vst [vmem:[%s431 + $0xc] sm:$0xf] %v438
                %v440 = vld [vmem:[%s430 + $0x60] sm:$0xf]
                %441 = vst [vmem:[%s431 + $0x10] sm:$0xf] %v440
                %v442 = vld [vmem:[%s430 + $0x78] sm:$0xf]
                %443 = vst [vmem:[%s431 + $0x14] sm:$0xf] %v442
                %v444 = vld [vmem:[%s430 + $0x90] sm:$0xf]
                %445 = vst [vmem:[%s431 + $0x18] sm:$0xf] %v444
                %v446 = vld [vmem:[%s430 + $0xa8] sm:$0xf]
                %447 = vst [vmem:[%s431 + $0x1c] sm:$0xf] %v446
                %v448 = vld [vmem:[%s430 + $0xc0] sm:$0xf]
                %449 = vst [vmem:[%s431 + $0x20] sm:$0xf] %v448
                %v450 = vld [vmem:[%s430 + $0xd8] sm:$0xf]
                %451 = vst [vmem:[%s431 + $0x24] sm:$0xf] %v450
                %v452 = vld [vmem:[%s430 + $0xf0] sm:$0xf]
                %453 = vst [vmem:[%s431 + $0x28] sm:$0xf] %v452
                %v454 = vld [vmem:[%s430 + $0x108] sm:$0xf]
                %455 = vst [vmem:[%s431 + $0x2c] sm:$0xf] %v454
                %v456 = vld [vmem:[%s430 + $0x120] sm:$0xf]
                %457 = vst [vmem:[%s431 + $0x30] sm:$0xf] %v456
                %v458 = vld [vmem:[%s430 + $0x138] sm:$0xf]
                %459 = vst [vmem:[%s431 + $0x34] sm:$0xf] %v458
                %v460 = vld [vmem:[%s430 + $0x150] sm:$0xf]
                %461 = vst [vmem:[%s431 + $0x38] sm:$0xf] %v460
                %v462 = vld [vmem:[%s430 + $0x168] sm:$0xf]
                %463 = vst [vmem:[%s431 + $0x3c] sm:$0xf] %v462
              $region119: #{transformer_encoder_layer.4} parent=113 // loop_footer
                %s429 = sadd.s32 1, %s425
              $region120: #{transformer_encoder_layer.4} parent=113 // loop_footer_branch
                %424 = sbr.rel target = $region116
              $region121: #{transformer_encoder_layer.4} parent=113 // loop_exit
                _
            $region114: #{transformer_encoder_layer.4} parent=105 // pred_fallthru
              _
          $region106: #{transformer_encoder_layer.4} parent=101 // pred_fallthru
            _
          %515 = vnop
        $region102: #{transformer_encoder_layer.4} parent=15 // pred_fallthru
          _
      $region16: #{transformer_encoder_layer.4} parent=5 // pred_fallthru
        _
      %p516 = scmp.le.s32.totalorder 1, %s9
      %p517 = scmp.lt.s32.totalorder %s9, 5
      %p518 = pnand %p516, %p517
      %p519 = pneg %p518
      // Predicated region
      $region140: #{transformer_encoder_layer.4} parent=5 // pred_check
        _
      $region141: #{transformer_encoder_layer.4} parent=5 // pred_check_branch
        %521 = sbr.rel (%p518) target = $region143
      $region142: #{transformer_encoder_layer.4} parent=5 // pred_region
        %s522 = ssub.s32 %s9, 1
        %s523 = sand.u32 %s52, 1
        %s524 = sand.u32 %s52, 1
        %s525 = smul.addr %s524, 64
        %s526 = scalar_lea.vmem [#allocation5], %s525
        // Predicated region
        $region144: #{transformer_encoder_layer.4} parent=142 // pred_check
          %p527 = pneg %p65
        $region145: #{transformer_encoder_layer.4} parent=142 // pred_check_branch
          %529 = sbr.rel (%p527) target = $region147
        $region146: #{transformer_encoder_layer.4} parent=142 // pred_region
          _
        $region147: #{transformer_encoder_layer.4} parent=142 // pred_fallthru
          _
        %s530 = sand.u32 %s84, 1
        %s531 = sand.u32 %s84, 1
        %s532 = smul.addr %s531, 64
        %s533 = scalar_lea.vmem [#allocation6], %s532
        // Predicated region
        $region148: #{transformer_encoder_layer.4} parent=142 // pred_check
          %p534 = pneg %p97
        $region149: #{transformer_encoder_layer.4} parent=142 // pred_check_branch
          %536 = sbr.rel (%p534) target = $region151
        $region150: #{transformer_encoder_layer.4} parent=142 // pred_region
          _
        $region151: #{transformer_encoder_layer.4} parent=142 // pred_fallthru
          _
        %s537 = sand.u32 %s116, 1
        %s538 = sand.u32 %s116, 1
        %s539 = smul.addr %s538, 64
        %s540 = scalar_lea.vmem [#allocation7], %s539
        // Predicated region
        $region152: #{transformer_encoder_layer.4} parent=142 // pred_check
          %p541 = pneg %p129
        $region153: #{transformer_encoder_layer.4} parent=142 // pred_check_branch
          %543 = sbr.rel (%p541) target = $region155
        $region154: #{transformer_encoder_layer.4} parent=142 // pred_region
          _
        $region155: #{transformer_encoder_layer.4} parent=142 // pred_fallthru
          _
        %s544 = sand.u32 %s52, 1
        %s545 = sand.u32 %s52, 1
        %s546 = smul.addr %s545, 64
        %s547 = scalar_lea.vmem [#allocation5], %s546
        %p548 = pneg %p65
        %p549 = pneg %p62
        %s550 = sand.u32 %s84, 1
        %s551 = sand.u32 %s84, 1
        %s552 = smul.addr %s551, 64
        %s553 = scalar_lea.vmem [#allocation6], %s552
        %p554 = pneg %p97
        %p555 = pneg %p94
        %s556 = sand.u32 %s116, 1
        %s557 = sand.u32 %s116, 1
        %s558 = smul.addr %s557, 64
        %s559 = scalar_lea.vmem [#allocation7], %s558
        %p560 = pneg %p129
        %p561 = pneg %p126
        %p562 = pneg %p159
        %p563 = pneg %p156
        %s564 = sand.u32 %s146, 1
        %s565 = sand.u32 %s146, 1
        %s566 = smul.addr %s565, 64
        %s567 = scalar_lea.vmem [#allocation8], %s566
        %s568 = sadd.s32 %s20, %s22
        %s569 = smul.u32 16, %s568
        %s570 = sadd.s32 %s20, %s23
        %s571 = sadd.s32 %s21, 2
        %s572 = smul.u32 16, %s570
        %s573 = sadd.s32 %s20, %s23
        %s574 = sadd.s32 %s21, 4
        %s575 = smul.u32 16, %s573
        %s576 = sadd.s32 %s20, %s22
        %s577 = smul.u32 16, %s576
        %p579 = scmp.eq.s32.totalorder %s23, 0
        // Predicated region
        $region156: #{transformer_encoder_layer.4} parent=142 // pred_check
          %p580 = pneg %p579
        $region157: #{transformer_encoder_layer.4} parent=142 // pred_check_branch
          %582 = sbr.rel (%p580) target = $region159
        $region158: #{transformer_encoder_layer.4} parent=142 // pred_region
          %vm583 = vcmask 7168
          %584 = vst.msk [vmem:[#allocation2] sm:$0xff] %vm583, -inf
          %585 = vst.msk [vmem:[#allocation2 + $0x8] sm:$0xff] %vm583, -inf
          %586 = vst.msk [vmem:[#allocation2 + $0x10] sm:$0xff] %vm583, -inf
          %587 = vst.msk [vmem:[#allocation2 + $0x18] sm:$0xff] %vm583, -inf
          %588 = vst.msk [vmem:[#allocation2 + $0x20] sm:$0xff] %vm583, -inf
          %589 = vst.msk [vmem:[#allocation2 + $0x28] sm:$0xff] %vm583, -inf
          %590 = vst.msk [vmem:[#allocation2 + $0x30] sm:$0xff] %vm583, -inf
          %591 = vst.msk [vmem:[#allocation2 + $0x38] sm:$0xff] %vm583, -inf
          %592 = vst.msk [vmem:[#allocation2 + $0x40] sm:$0xff] %vm583, -inf
          %593 = vst.msk [vmem:[#allocation2 + $0x48] sm:$0xff] %vm583, -inf
          %594 = vst.msk [vmem:[#allocation2 + $0x50] sm:$0xff] %vm583, -inf
          %595 = vst.msk [vmem:[#allocation2 + $0x58] sm:$0xff] %vm583, -inf
          %596 = vst.msk [vmem:[#allocation2 + $0x60] sm:$0xff] %vm583, -inf
          %597 = vst.msk [vmem:[#allocation2 + $0x68] sm:$0xff] %vm583, -inf
          %598 = vst.msk [vmem:[#allocation2 + $0x70] sm:$0xff] %vm583, -inf
          %599 = vst.msk [vmem:[#allocation2 + $0x78] sm:$0xff] %vm583, -inf
          %600 = vst.msk [vmem:[#allocation3] sm:$0xff] %vm583, 0.0
          %601 = vst.msk [vmem:[#allocation3 + $0x8] sm:$0xff] %vm583, 0.0
          %602 = vst.msk [vmem:[#allocation3 + $0x10] sm:$0xff] %vm583, 0.0
          %603 = vst.msk [vmem:[#allocation3 + $0x18] sm:$0xff] %vm583, 0.0
          %604 = vst.msk [vmem:[#allocation3 + $0x20] sm:$0xff] %vm583, 0.0
          %605 = vst.msk [vmem:[#allocation3 + $0x28] sm:$0xff] %vm583, 0.0
          %606 = vst.msk [vmem:[#allocation3 + $0x30] sm:$0xff] %vm583, 0.0
          %607 = vst.msk [vmem:[#allocation3 + $0x38] sm:$0xff] %vm583, 0.0
          %608 = vst.msk [vmem:[#allocation3 + $0x40] sm:$0xff] %vm583, 0.0
          %609 = vst.msk [vmem:[#allocation3 + $0x48] sm:$0xff] %vm583, 0.0
          %610 = vst.msk [vmem:[#allocation3 + $0x50] sm:$0xff] %vm583, 0.0
          %611 = vst.msk [vmem:[#allocation3 + $0x58] sm:$0xff] %vm583, 0.0
          %612 = vst.msk [vmem:[#allocation3 + $0x60] sm:$0xff] %vm583, 0.0
          %613 = vst.msk [vmem:[#allocation3 + $0x68] sm:$0xff] %vm583, 0.0
          %614 = vst.msk [vmem:[#allocation3 + $0x70] sm:$0xff] %vm583, 0.0
          %615 = vst.msk [vmem:[#allocation3 + $0x78] sm:$0xff] %vm583, 0.0
          %616 = vst [vmem:[#allocation4] sm:$0xff] 0.0
          %617 = vst [vmem:[#allocation4 + $0x8] sm:$0xff] 0.0
          %618 = vst [vmem:[#allocation4 + $0x10] sm:$0xff] 0.0
          %619 = vst [vmem:[#allocation4 + $0x18] sm:$0xff] 0.0
          %620 = vst [vmem:[#allocation4 + $0x20] sm:$0xff] 0.0
          %621 = vst [vmem:[#allocation4 + $0x28] sm:$0xff] 0.0
          %622 = vst [vmem:[#allocation4 + $0x30] sm:$0xff] 0.0
          %623 = vst [vmem:[#allocation4 + $0x38] sm:$0xff] 0.0
          %624 = vst [vmem:[#allocation4 + $0x40] sm:$0xff] 0.0
          %625 = vst [vmem:[#allocation4 + $0x48] sm:$0xff] 0.0
          %626 = vst [vmem:[#allocation4 + $0x50] sm:$0xff] 0.0
          %627 = vst [vmem:[#allocation4 + $0x58] sm:$0xff] 0.0
          %628 = vst [vmem:[#allocation4 + $0x60] sm:$0xff] 0.0
          %629 = vst [vmem:[#allocation4 + $0x68] sm:$0xff] 0.0
          %630 = vst [vmem:[#allocation4 + $0x70] sm:$0xff] 0.0
          %631 = vst [vmem:[#allocation4 + $0x78] sm:$0xff] 0.0
        $region159: #{transformer_encoder_layer.4} parent=142 // pred_fallthru
          _
        %v632 = vld [vmem:[%s526] sm:$0xf]
        %v633 = vld [vmem:[%s526 + $0x4] sm:$0xf]
        %v634 = vld [vmem:[%s526 + $0x8] sm:$0xf]
        %v635 = vld [vmem:[%s526 + $0xc] sm:$0xf]
        %v636 = vld [vmem:[%s526 + $0x10] sm:$0xf]
        %v637 = vld [vmem:[%s526 + $0x14] sm:$0xf]
        %v638 = vld [vmem:[%s526 + $0x18] sm:$0xf]
        %v639 = vld [vmem:[%s526 + $0x1c] sm:$0xf]
        %v640 = vld [vmem:[%s526 + $0x20] sm:$0xf]
        %v641 = vld [vmem:[%s526 + $0x24] sm:$0xf]
        %v642 = vld [vmem:[%s526 + $0x28] sm:$0xf]
        %v643 = vld [vmem:[%s526 + $0x2c] sm:$0xf]
        %v644 = vld [vmem:[%s526 + $0x30] sm:$0xf]
        %v645 = vld [vmem:[%s526 + $0x34] sm:$0xf]
        %v646 = vld [vmem:[%s526 + $0x38] sm:$0xf]
        %v647 = vld [vmem:[%s526 + $0x3c] sm:$0xf]
        %v648 = vld [vmem:[%s533] sm:$0xf]
        %v649 = vld [vmem:[%s533 + $0x4] sm:$0xf]
        %v650 = vld [vmem:[%s533 + $0x8] sm:$0xf]
        %v651 = vld [vmem:[%s533 + $0xc] sm:$0xf]
        %v652 = vld [vmem:[%s533 + $0x10] sm:$0xf]
        %v653 = vld [vmem:[%s533 + $0x14] sm:$0xf]
        %v654 = vld [vmem:[%s533 + $0x18] sm:$0xf]
        %v655 = vld [vmem:[%s533 + $0x1c] sm:$0xf]
        %v656 = vld [vmem:[%s533 + $0x20] sm:$0xf]
        %v657 = vld [vmem:[%s533 + $0x24] sm:$0xf]
        %v658 = vld [vmem:[%s533 + $0x28] sm:$0xf]
        %v659 = vld [vmem:[%s533 + $0x2c] sm:$0xf]
        %v660 = vld [vmem:[%s533 + $0x30] sm:$0xf]
        %v661 = vld [vmem:[%s533 + $0x34] sm:$0xf]
        %v662 = vld [vmem:[%s533 + $0x38] sm:$0xf]
        %v663 = vld [vmem:[%s533 + $0x3c] sm:$0xf]
        %v664 = vld [vmem:[%s540] sm:$0xf]
        %v665 = vld [vmem:[%s540 + $0x4] sm:$0xf]
        %v666 = vld [vmem:[%s540 + $0x8] sm:$0xf]
        %v667 = vld [vmem:[%s540 + $0xc] sm:$0xf]
        %v668 = vld [vmem:[%s540 + $0x10] sm:$0xf]
        %v669 = vld [vmem:[%s540 + $0x14] sm:$0xf]
        %v670 = vld [vmem:[%s540 + $0x18] sm:$0xf]
        %v671 = vld [vmem:[%s540 + $0x1c] sm:$0xf]
        %v672 = vld [vmem:[%s540 + $0x20] sm:$0xf]
        %v673 = vld [vmem:[%s540 + $0x24] sm:$0xf]
        %v674 = vld [vmem:[%s540 + $0x28] sm:$0xf]
        %v675 = vld [vmem:[%s540 + $0x2c] sm:$0xf]
        %v676 = vld [vmem:[%s540 + $0x30] sm:$0xf]
        %v677 = vld [vmem:[%s540 + $0x34] sm:$0xf]
        %v678 = vld [vmem:[%s540 + $0x38] sm:$0xf]
        %v679 = vld [vmem:[%s540 + $0x3c] sm:$0xf]
        %v696 = vunpack.c.l.b16 %v632
        %v697 = vunpack.c.l.b16 %v633
        %v698 = vunpack.c.l.b16 %v634
        %v699 = vunpack.c.l.b16 %v635
        %v700 = vunpack.c.l.b16 %v636
        %v701 = vunpack.c.l.b16 %v637
        %v702 = vunpack.c.l.b16 %v638
        %v703 = vunpack.c.l.b16 %v639
        %v704 = vunpack.c.l.b16 %v640
        %v705 = vunpack.c.l.b16 %v641
        %v706 = vunpack.c.l.b16 %v642
        %v707 = vunpack.c.l.b16 %v643
        %v708 = vunpack.c.l.b16 %v644
        %v709 = vunpack.c.l.b16 %v645
        %v710 = vunpack.c.l.b16 %v646
        %v711 = vunpack.c.l.b16 %v647
        %v712 = vpack.c.b16 %v697, %v696
        %v713 = vpack.c.b16 %v699, %v698
        %v714 = vpack.c.b16 %v701, %v700
        %v715 = vpack.c.b16 %v703, %v702
        %v716 = vpack.c.b16 %v705, %v704
        %v717 = vpack.c.b16 %v707, %v706
        %v718 = vpack.c.b16 %v709, %v708
        %v719 = vpack.c.b16 %v711, %v710
        %v744 = vunpack.c.l.b16 %v648
        %v745 = vunpack.c.l.b16 %v649
        %v746 = vunpack.c.l.b16 %v650
        %v747 = vunpack.c.l.b16 %v651
        %v748 = vunpack.c.l.b16 %v652
        %v749 = vunpack.c.l.b16 %v653
        %v750 = vunpack.c.l.b16 %v654
        %v751 = vunpack.c.l.b16 %v655
        %v752 = vunpack.c.l.b16 %v656
        %v753 = vunpack.c.l.b16 %v657
        %v754 = vunpack.c.l.b16 %v658
        %v755 = vunpack.c.l.b16 %v659
        %v756 = vunpack.c.l.b16 %v660
        %v757 = vunpack.c.l.b16 %v661
        %v758 = vunpack.c.l.b16 %v662
        %v759 = vunpack.c.l.b16 %v663
        %v760 = vpack.c.b16 %v745, %v744
        %v761 = vpack.c.b16 %v747, %v746
        %v762 = vpack.c.b16 %v749, %v748
        %v763 = vpack.c.b16 %v751, %v750
        %v764 = vpack.c.b16 %v753, %v752
        %v765 = vpack.c.b16 %v755, %v754
        %v766 = vpack.c.b16 %v757, %v756
        %v767 = vpack.c.b16 %v759, %v758
        %776 = vmatprep.subr.bf16.mxu0 0
        %777 = vmatpush1.bf16.xpose.msra.mxu0 %v760
        %778 = vmatprep.subr.bf16.mxu0 0
        %779 = vmatpush1.bf16.xpose.msra.mxu0 %v761
        %780 = vmatprep.subr.bf16.mxu0 0
        %781 = vmatpush1.bf16.xpose.msra.mxu0 %v762
        %782 = vmatprep.subr.bf16.mxu0 0
        %783 = vmatpush1.bf16.xpose.msra.mxu0 %v763
        %784 = vmatprep.subr.bf16.mxu0 0
        %785 = vmatpush1.bf16.xpose.msra.mxu0 %v764
        %786 = vmatprep.subr.bf16.mxu0 0
        %787 = vmatpush1.bf16.xpose.msra.mxu0 %v765
        %788 = vmatprep.subr.bf16.mxu0 0
        %789 = vmatpush1.bf16.xpose.msra.mxu0 %v766
        %790 = vmatprep.subr.bf16.mxu0 0
        %791 = vmatpush1.bf16.xpose.msra.mxu0 %v767
        %792 = vmatprep.subr.bf16.mxu0 0
        %793 = vmatpush1.bf16.xpose.msra.mxu0 0
        %794 = vmatprep.subr.bf16.mxu0 0
        %795 = vmatpush1.bf16.xpose.msra.mxu0 0
        %796 = vmatprep.subr.bf16.mxu0 0
        %797 = vmatpush1.bf16.xpose.msra.mxu0 0
        %798 = vmatprep.subr.bf16.mxu0 0
        %799 = vmatpush1.bf16.xpose.msra.mxu0 0
        %800 = vmatprep.subr.bf16.mxu0 0
        %801 = vmatpush1.bf16.xpose.msra.mxu0 0
        %802 = vmatprep.subr.bf16.mxu0 0
        %803 = vmatpush1.bf16.xpose.msra.mxu0 0
        %804 = vmatprep.subr.bf16.mxu0 0
        %805 = vmatpush1.bf16.xpose.msra.mxu0 0
        %806 = vmatprep.subr.bf16.mxu0 0
        %807 = vmatpush1.bf16.xpose.msra.mxu0 0
        %808 = vmatprep.mubr.bf16.mxu0 0
        %809 = vmatmul.mubr.bf16.gmra.mrb[0].mxu0 %v712
        %v810 = vpop.f32.mrb[0].mxu0
        %v811 = vadd.f32 0.0, %v810
        %v812 = vpop.f32.mrb[0].mxu0
        %v813 = vpop.f32.mrb[0].mxu0
        %v814 = vadd.f32 0.0, %v813
        %v815 = vpop.f32.mrb[0].mxu0
        %816 = vmatprep.mubr.bf16.mxu0 0
        %817 = vmatmul.mubr.bf16.gmra.mrb[0].mxu0 %v713
        %v818 = vpop.f32.mrb[0].mxu0
        %v819 = vadd.f32 0.0, %v818
        %v820 = vpop.f32.mrb[0].mxu0
        %v821 = vpop.f32.mrb[0].mxu0
        %v822 = vadd.f32 0.0, %v821
        %v823 = vpop.f32.mrb[0].mxu0
        %824 = vmatprep.mubr.bf16.mxu0 0
        %825 = vmatmul.mubr.bf16.gmra.mrb[0].mxu0 %v714
        %v826 = vpop.f32.mrb[0].mxu0
        %v827 = vadd.f32 0.0, %v826
        %v828 = vpop.f32.mrb[0].mxu0
        %v829 = vpop.f32.mrb[0].mxu0
        %v830 = vadd.f32 0.0, %v829
        %v831 = vpop.f32.mrb[0].mxu0
        %832 = vmatprep.mubr.bf16.mxu0 0
        %833 = vmatmul.mubr.bf16.gmra.mrb[0].mxu0 %v715
        %v834 = vpop.f32.mrb[0].mxu0
        %v835 = vadd.f32 0.0, %v834
        %v836 = vpop.f32.mrb[0].mxu0
        %v837 = vpop.f32.mrb[0].mxu0
        %v838 = vadd.f32 0.0, %v837
        %v839 = vpop.f32.mrb[0].mxu0
        %840 = vmatprep.mubr.bf16.mxu0 0
        %841 = vmatmul.mubr.bf16.gmra.mrb[0].mxu0 %v716
        %v842 = vpop.f32.mrb[0].mxu0
        %v843 = vadd.f32 0.0, %v842
        %v844 = vpop.f32.mrb[0].mxu0
        %v845 = vpop.f32.mrb[0].mxu0
        %v846 = vadd.f32 0.0, %v845
        %v847 = vpop.f32.mrb[0].mxu0
        %848 = vmatprep.mubr.bf16.mxu0 0
        %849 = vmatmul.mubr.bf16.gmra.mrb[0].mxu0 %v717
        %v850 = vpop.f32.mrb[0].mxu0
        %v851 = vadd.f32 0.0, %v850
        %v852 = vpop.f32.mrb[0].mxu0
        %v853 = vpop.f32.mrb[0].mxu0
        %v854 = vadd.f32 0.0, %v853
        %v855 = vpop.f32.mrb[0].mxu0
        %856 = vmatprep.mubr.bf16.mxu0 0
        %857 = vmatmul.mubr.bf16.gmra.mrb[0].mxu0 %v718
        %v858 = vpop.f32.mrb[0].mxu0
        %v859 = vadd.f32 0.0, %v858
        %v860 = vpop.f32.mrb[0].mxu0
        %v861 = vpop.f32.mrb[0].mxu0
        %v862 = vadd.f32 0.0, %v861
        %v863 = vpop.f32.mrb[0].mxu0
        %864 = vmatprep.mubr.bf16.mxu0 0
        %865 = vmatmul.mubr.bf16.gmra.mrb[0].mxu0 %v719
        %v866 = vpop.f32.mrb[0].mxu0
        %v867 = vadd.f32 0.0, %v866
        %v868 = vpop.f32.mrb[0].mxu0
        %v869 = vpop.f32.mrb[0].mxu0
        %v870 = vadd.f32 0.0, %v869
        %v871 = vpop.f32.mrb[0].mxu0
        %872 = vdwg.mxu0
        %v873 = vld [vmem:[#allocation2] sm:$0xff]
        %v874 = vld [vmem:[#allocation2 + $0x8] sm:$0xff]
        %v875 = vld [vmem:[#allocation2 + $0x10] sm:$0xff]
        %v876 = vld [vmem:[#allocation2 + $0x18] sm:$0xff]
        %v877 = vld [vmem:[#allocation2 + $0x20] sm:$0xff]
        %v878 = vld [vmem:[#allocation2 + $0x28] sm:$0xff]
        %v879 = vld [vmem:[#allocation2 + $0x30] sm:$0xff]
        %v880 = vld [vmem:[#allocation2 + $0x38] sm:$0xff]
        %v881 = vld [vmem:[#allocation2 + $0x40] sm:$0xff]
        %v882 = vld [vmem:[#allocation2 + $0x48] sm:$0xff]
        %v883 = vld [vmem:[#allocation2 + $0x50] sm:$0xff]
        %v884 = vld [vmem:[#allocation2 + $0x58] sm:$0xff]
        %v885 = vld [vmem:[#allocation2 + $0x60] sm:$0xff]
        %v886 = vld [vmem:[#allocation2 + $0x68] sm:$0xff]
        %v887 = vld [vmem:[#allocation2 + $0x70] sm:$0xff]
        %v888 = vld [vmem:[#allocation2 + $0x78] sm:$0xff]
        %889 = vmax.xlane.f32.xlu0 %v811
        %v890 = vpop.xlane.xlu0 %889
        %891 = vmax.xlane.f32.xlu0 %v814
        %v892 = vpop.xlane.xlu0 %891
        %893 = vmax.xlane.f32.xlu0 %v819
        %v894 = vpop.xlane.xlu0 %893
        %895 = vmax.xlane.f32.xlu0 %v822
        %v896 = vpop.xlane.xlu0 %895
        %897 = vmax.xlane.f32.xlu0 %v827
        %v898 = vpop.xlane.xlu0 %897
        %899 = vmax.xlane.f32.xlu0 %v830
        %v900 = vpop.xlane.xlu0 %899
        %901 = vmax.xlane.f32.xlu0 %v835
        %v902 = vpop.xlane.xlu0 %901
        %903 = vmax.xlane.f32.xlu0 %v838
        %v904 = vpop.xlane.xlu0 %903
        %905 = vmax.xlane.f32.xlu0 %v843
        %v906 = vpop.xlane.xlu0 %905
        %907 = vmax.xlane.f32.xlu0 %v846
        %v908 = vpop.xlane.xlu0 %907
        %909 = vmax.xlane.f32.xlu0 %v851
        %v910 = vpop.xlane.xlu0 %909
        %911 = vmax.xlane.f32.xlu0 %v854
        %v912 = vpop.xlane.xlu0 %911
        %913 = vmax.xlane.f32.xlu0 %v859
        %v914 = vpop.xlane.xlu0 %913
        %915 = vmax.xlane.f32.xlu0 %v862
        %v916 = vpop.xlane.xlu0 %915
        %917 = vmax.xlane.f32.xlu0 %v867
        %v918 = vpop.xlane.xlu0 %917
        %919 = vmax.xlane.f32.xlu0 %v870
        %v920 = vpop.xlane.xlu0 %919
        %v921 = vmax.f32 %v873, %v890
        %v922 = vmax.f32 %v874, %v892
        %v923 = vmax.f32 %v875, %v894
        %v924 = vmax.f32 %v876, %v896
        %v925 = vmax.f32 %v877, %v898
        %v926 = vmax.f32 %v878, %v900
        %v927 = vmax.f32 %v879, %v902
        %v928 = vmax.f32 %v880, %v904
        %v929 = vmax.f32 %v881, %v906
        %v930 = vmax.f32 %v882, %v908
        %v931 = vmax.f32 %v883, %v910
        %v932 = vmax.f32 %v884, %v912
        %v933 = vmax.f32 %v885, %v914
        %v934 = vmax.f32 %v886, %v916
        %v935 = vmax.f32 %v887, %v918
        %v936 = vmax.f32 %v888, %v920
        %v937 = vsub.f32 %v873, %v921
        %v938 = vsub.f32 %v874, %v922
        %v939 = vsub.f32 %v875, %v923
        %v940 = vsub.f32 %v876, %v924
        %v941 = vsub.f32 %v877, %v925
        %v942 = vsub.f32 %v878, %v926
        %v943 = vsub.f32 %v879, %v927
        %v944 = vsub.f32 %v880, %v928
        %v945 = vsub.f32 %v881, %v929
        %v946 = vsub.f32 %v882, %v930
        %v947 = vsub.f32 %v883, %v931
        %v948 = vsub.f32 %v884, %v932
        %v949 = vsub.f32 %v885, %v933
        %v950 = vsub.f32 %v886, %v934
        %v951 = vsub.f32 %v887, %v935
        %v952 = vsub.f32 %v888, %v936
        %v953 = vmul.f32 %v937, 1.442695
        %v954 = vpow.pop %v953
        %v955 = vmul.f32 %v938, 1.442695
        %v956 = vpow.pop %v955
        %v957 = vmul.f32 %v939, 1.442695
        %v958 = vpow.pop %v957
        %v959 = vmul.f32 %v940, 1.442695
        %v960 = vpow.pop %v959
        %v961 = vmul.f32 %v941, 1.442695
        %v962 = vpow.pop %v961
        %v963 = vmul.f32 %v942, 1.442695
        %v964 = vpow.pop %v963
        %v965 = vmul.f32 %v943, 1.442695
        %v966 = vpow.pop %v965
        %v967 = vmul.f32 %v944, 1.442695
        %v968 = vpow.pop %v967
        %v969 = vmul.f32 %v945, 1.442695
        %v970 = vpow.pop %v969
        %v971 = vmul.f32 %v946, 1.442695
        %v972 = vpow.pop %v971
        %v973 = vmul.f32 %v947, 1.442695
        %v974 = vpow.pop %v973
        %v975 = vmul.f32 %v948, 1.442695
        %v976 = vpow.pop %v975
        %v977 = vmul.f32 %v949, 1.442695
        %v978 = vpow.pop %v977
        %v979 = vmul.f32 %v950, 1.442695
        %v980 = vpow.pop %v979
        %v981 = vmul.f32 %v951, 1.442695
        %v982 = vpow.pop %v981
        %v983 = vmul.f32 %v952, 1.442695
        %v984 = vpow.pop %v983
        %986 = vset.pattern.permute.xlu0 0
        %987 = vperm.xlu0 %986, %v921
        %v988 = vpop.permute.xlu0 %987
        %991 = vset.pattern.permute.xlu0 0
        %992 = vperm.xlu0 %991, %v922
        %v993 = vpop.permute.xlu0 %992
        %996 = vset.pattern.permute.xlu0 0
        %997 = vperm.xlu0 %996, %v923
        %v998 = vpop.permute.xlu0 %997
        %1001 = vset.pattern.permute.xlu0 0
        %1002 = vperm.xlu0 %1001, %v924
        %v1003 = vpop.permute.xlu0 %1002
        %1006 = vset.pattern.permute.xlu0 0
        %1007 = vperm.xlu0 %1006, %v925
        %v1008 = vpop.permute.xlu0 %1007
        %1011 = vset.pattern.permute.xlu0 0
        %1012 = vperm.xlu0 %1011, %v926
        %v1013 = vpop.permute.xlu0 %1012
        %1016 = vset.pattern.permute.xlu0 0
        %1017 = vperm.xlu0 %1016, %v927
        %v1018 = vpop.permute.xlu0 %1017
        %1021 = vset.pattern.permute.xlu0 0
        %1022 = vperm.xlu0 %1021, %v928
        %v1023 = vpop.permute.xlu0 %1022
        %1026 = vset.pattern.permute.xlu0 0
        %1027 = vperm.xlu0 %1026, %v929
        %v1028 = vpop.permute.xlu0 %1027
        %1031 = vset.pattern.permute.xlu0 0
        %1032 = vperm.xlu0 %1031, %v930
        %v1033 = vpop.permute.xlu0 %1032
        %1036 = vset.pattern.permute.xlu0 0
        %1037 = vperm.xlu0 %1036, %v931
        %v1038 = vpop.permute.xlu0 %1037
        %1041 = vset.pattern.permute.xlu0 0
        %1042 = vperm.xlu0 %1041, %v932
        %v1043 = vpop.permute.xlu0 %1042
        %1046 = vset.pattern.permute.xlu0 0
        %1047 = vperm.xlu0 %1046, %v933
        %v1048 = vpop.permute.xlu0 %1047
        %1051 = vset.pattern.permute.xlu0 0
        %1052 = vperm.xlu0 %1051, %v934
        %v1053 = vpop.permute.xlu0 %1052
        %1056 = vset.pattern.permute.xlu0 0
        %1057 = vperm.xlu0 %1056, %v935
        %v1058 = vpop.permute.xlu0 %1057
        %1061 = vset.pattern.permute.xlu0 0
        %1062 = vperm.xlu0 %1061, %v936
        %v1063 = vpop.permute.xlu0 %1062
        %v1065 = vsub.f32 %v811, %v988
        %v1066 = vsub.f32 %v814, %v993
        %v1067 = vsub.f32 %v819, %v998
        %v1068 = vsub.f32 %v822, %v1003
        %v1069 = vsub.f32 %v827, %v1008
        %v1070 = vsub.f32 %v830, %v1013
        %v1071 = vsub.f32 %v835, %v1018
        %v1072 = vsub.f32 %v838, %v1023
        %v1073 = vsub.f32 %v843, %v1028
        %v1074 = vsub.f32 %v846, %v1033
        %v1075 = vsub.f32 %v851, %v1038
        %v1076 = vsub.f32 %v854, %v1043
        %v1077 = vsub.f32 %v859, %v1048
        %v1078 = vsub.f32 %v862, %v1053
        %v1079 = vsub.f32 %v867, %v1058
        %v1080 = vsub.f32 %v870, %v1063
        %v1081 = vmul.f32 %v1065, 1.442695
        %v1082 = vpow.pop %v1081
        %v1083 = vmul.f32 %v1066, 1.442695
        %v1084 = vpow.pop %v1083
        %v1085 = vmul.f32 %v1067, 1.442695
        %v1086 = vpow.pop %v1085
        %v1087 = vmul.f32 %v1068, 1.442695
        %v1088 = vpow.pop %v1087
        %v1089 = vmul.f32 %v1069, 1.442695
        %v1090 = vpow.pop %v1089
        %v1091 = vmul.f32 %v1070, 1.442695
        %v1092 = vpow.pop %v1091
        %v1093 = vmul.f32 %v1071, 1.442695
        %v1094 = vpow.pop %v1093
        %v1095 = vmul.f32 %v1072, 1.442695
        %v1096 = vpow.pop %v1095
        %v1097 = vmul.f32 %v1073, 1.442695
        %v1098 = vpow.pop %v1097
        %v1099 = vmul.f32 %v1074, 1.442695
        %v1100 = vpow.pop %v1099
        %v1101 = vmul.f32 %v1075, 1.442695
        %v1102 = vpow.pop %v1101
        %v1103 = vmul.f32 %v1076, 1.442695
        %v1104 = vpow.pop %v1103
        %v1105 = vmul.f32 %v1077, 1.442695
        %v1106 = vpow.pop %v1105
        %v1107 = vmul.f32 %v1078, 1.442695
        %v1108 = vpow.pop %v1107
        %v1109 = vmul.f32 %v1079, 1.442695
        %v1110 = vpow.pop %v1109
        %v1111 = vmul.f32 %v1080, 1.442695
        %v1112 = vpow.pop %v1111
        %v1113 = vld [vmem:[#allocation3] sm:$0xff]
        %v1114 = vld [vmem:[#allocation3 + $0x8] sm:$0xff]
        %v1115 = vld [vmem:[#allocation3 + $0x10] sm:$0xff]
        %v1116 = vld [vmem:[#allocation3 + $0x18] sm:$0xff]
        %v1117 = vld [vmem:[#allocation3 + $0x20] sm:$0xff]
        %v1118 = vld [vmem:[#allocation3 + $0x28] sm:$0xff]
        %v1119 = vld [vmem:[#allocation3 + $0x30] sm:$0xff]
        %v1120 = vld [vmem:[#allocation3 + $0x38] sm:$0xff]
        %v1121 = vld [vmem:[#allocation3 + $0x40] sm:$0xff]
        %v1122 = vld [vmem:[#allocation3 + $0x48] sm:$0xff]
        %v1123 = vld [vmem:[#allocation3 + $0x50] sm:$0xff]
        %v1124 = vld [vmem:[#allocation3 + $0x58] sm:$0xff]
        %v1125 = vld [vmem:[#allocation3 + $0x60] sm:$0xff]
        %v1126 = vld [vmem:[#allocation3 + $0x68] sm:$0xff]
        %v1127 = vld [vmem:[#allocation3 + $0x70] sm:$0xff]
        %v1128 = vld [vmem:[#allocation3 + $0x78] sm:$0xff]
        %v1129 = vmul.f32 %v954, %v1113
        %v1130 = vmul.f32 %v956, %v1114
        %v1131 = vmul.f32 %v958, %v1115
        %v1132 = vmul.f32 %v960, %v1116
        %v1133 = vmul.f32 %v962, %v1117
        %v1134 = vmul.f32 %v964, %v1118
        %v1135 = vmul.f32 %v966, %v1119
        %v1136 = vmul.f32 %v968, %v1120
        %v1137 = vmul.f32 %v970, %v1121
        %v1138 = vmul.f32 %v972, %v1122
        %v1139 = vmul.f32 %v974, %v1123
        %v1140 = vmul.f32 %v976, %v1124
        %v1141 = vmul.f32 %v978, %v1125
        %v1142 = vmul.f32 %v980, %v1126
        %v1143 = vmul.f32 %v982, %v1127
        %v1144 = vmul.f32 %v984, %v1128
        %1145 = vadd.xlane.f32.xlu0 %v1082
        %v1146 = vpop.xlane.xlu0 %1145
        %1147 = vadd.xlane.f32.xlu0 %v1084
        %v1148 = vpop.xlane.xlu0 %1147
        %1149 = vadd.xlane.f32.xlu0 %v1086
        %v1150 = vpop.xlane.xlu0 %1149
        %1151 = vadd.xlane.f32.xlu0 %v1088
        %v1152 = vpop.xlane.xlu0 %1151
        %1153 = vadd.xlane.f32.xlu0 %v1090
        %v1154 = vpop.xlane.xlu0 %1153
        %1155 = vadd.xlane.f32.xlu0 %v1092
        %v1156 = vpop.xlane.xlu0 %1155
        %1157 = vadd.xlane.f32.xlu0 %v1094
        %v1158 = vpop.xlane.xlu0 %1157
        %1159 = vadd.xlane.f32.xlu0 %v1096
        %v1160 = vpop.xlane.xlu0 %1159
        %1161 = vadd.xlane.f32.xlu0 %v1098
        %v1162 = vpop.xlane.xlu0 %1161
        %1163 = vadd.xlane.f32.xlu0 %v1100
        %v1164 = vpop.xlane.xlu0 %1163
        %1165 = vadd.xlane.f32.xlu0 %v1102
        %v1166 = vpop.xlane.xlu0 %1165
        %1167 = vadd.xlane.f32.xlu0 %v1104
        %v1168 = vpop.xlane.xlu0 %1167
        %1169 = vadd.xlane.f32.xlu0 %v1106
        %v1170 = vpop.xlane.xlu0 %1169
        %1171 = vadd.xlane.f32.xlu0 %v1108
        %v1172 = vpop.xlane.xlu0 %1171
        %1173 = vadd.xlane.f32.xlu0 %v1110
        %v1174 = vpop.xlane.xlu0 %1173
        %1175 = vadd.xlane.f32.xlu0 %v1112
        %v1176 = vpop.xlane.xlu0 %1175
        %v1177 = vadd.f32 %v1129, %v1146
        %v1178 = vadd.f32 %v1130, %v1148
        %v1179 = vadd.f32 %v1131, %v1150
        %v1180 = vadd.f32 %v1132, %v1152
        %v1181 = vadd.f32 %v1133, %v1154
        %v1182 = vadd.f32 %v1134, %v1156
        %v1183 = vadd.f32 %v1135, %v1158
        %v1184 = vadd.f32 %v1136, %v1160
        %v1185 = vadd.f32 %v1137, %v1162
        %v1186 = vadd.f32 %v1138, %v1164
        %v1187 = vadd.f32 %v1139, %v1166
        %v1188 = vadd.f32 %v1140, %v1168
        %v1189 = vadd.f32 %v1141, %v1170
        %v1190 = vadd.f32 %v1142, %v1172
        %v1191 = vadd.f32 %v1143, %v1174
        %v1192 = vadd.f32 %v1144, %v1176
        %vm1193 = vcmask 7168
        %1194 = vst.msk [vmem:[#allocation3] sm:$0xff] %vm1193, %v1177
        %1195 = vst.msk [vmem:[#allocation3 + $0x8] sm:$0xff] %vm1193, %v1178
        %1196 = vst.msk [vmem:[#allocation3 + $0x10] sm:$0xff] %vm1193, %v1179
        %1197 = vst.msk [vmem:[#allocation3 + $0x18] sm:$0xff] %vm1193, %v1180
        %1198 = vst.msk [vmem:[#allocation3 + $0x20] sm:$0xff] %vm1193, %v1181
        %1199 = vst.msk [vmem:[#allocation3 + $0x28] sm:$0xff] %vm1193, %v1182
        %1200 = vst.msk [vmem:[#allocation3 + $0x30] sm:$0xff] %vm1193, %v1183
        %1201 = vst.msk [vmem:[#allocation3 + $0x38] sm:$0xff] %vm1193, %v1184
        %1202 = vst.msk [vmem:[#allocation3 + $0x40] sm:$0xff] %vm1193, %v1185
        %1203 = vst.msk [vmem:[#allocation3 + $0x48] sm:$0xff] %vm1193, %v1186
        %1204 = vst.msk [vmem:[#allocation3 + $0x50] sm:$0xff] %vm1193, %v1187
        %1205 = vst.msk [vmem:[#allocation3 + $0x58] sm:$0xff] %vm1193, %v1188
        %1206 = vst.msk [vmem:[#allocation3 + $0x60] sm:$0xff] %vm1193, %v1189
        %1207 = vst.msk [vmem:[#allocation3 + $0x68] sm:$0xff] %vm1193, %v1190
        %1208 = vst.msk [vmem:[#allocation3 + $0x70] sm:$0xff] %vm1193, %v1191
        %1209 = vst.msk [vmem:[#allocation3 + $0x78] sm:$0xff] %vm1193, %v1192
        %v1210 = vld [vmem:[#allocation4] sm:$0xff]
        %v1211 = vld [vmem:[#allocation4 + $0x8] sm:$0xff]
        %v1212 = vld [vmem:[#allocation4 + $0x10] sm:$0xff]
        %v1213 = vld [vmem:[#allocation4 + $0x18] sm:$0xff]
        %v1214 = vld [vmem:[#allocation4 + $0x20] sm:$0xff]
        %v1215 = vld [vmem:[#allocation4 + $0x28] sm:$0xff]
        %v1216 = vld [vmem:[#allocation4 + $0x30] sm:$0xff]
        %v1217 = vld [vmem:[#allocation4 + $0x38] sm:$0xff]
        %v1218 = vld [vmem:[#allocation4 + $0x40] sm:$0xff]
        %v1219 = vld [vmem:[#allocation4 + $0x48] sm:$0xff]
        %v1220 = vld [vmem:[#allocation4 + $0x50] sm:$0xff]
        %v1221 = vld [vmem:[#allocation4 + $0x58] sm:$0xff]
        %v1222 = vld [vmem:[#allocation4 + $0x60] sm:$0xff]
        %v1223 = vld [vmem:[#allocation4 + $0x68] sm:$0xff]
        %v1224 = vld [vmem:[#allocation4 + $0x70] sm:$0xff]
        %v1225 = vld [vmem:[#allocation4 + $0x78] sm:$0xff]
        %1227 = vset.pattern.permute.xlu0 0
        %1228 = vperm.xlu0 %1227, %v954
        %v1229 = vpop.permute.xlu0 %1228
        %1232 = vset.pattern.permute.xlu0 0
        %1233 = vperm.xlu0 %1232, %v956
        %v1234 = vpop.permute.xlu0 %1233
        %1237 = vset.pattern.permute.xlu0 0
        %1238 = vperm.xlu0 %1237, %v958
        %v1239 = vpop.permute.xlu0 %1238
        %1242 = vset.pattern.permute.xlu0 0
        %1243 = vperm.xlu0 %1242, %v960
        %v1244 = vpop.permute.xlu0 %1243
        %1247 = vset.pattern.permute.xlu0 0
        %1248 = vperm.xlu0 %1247, %v962
        %v1249 = vpop.permute.xlu0 %1248
        %1252 = vset.pattern.permute.xlu0 0
        %1253 = vperm.xlu0 %1252, %v964
        %v1254 = vpop.permute.xlu0 %1253
        %1257 = vset.pattern.permute.xlu0 0
        %1258 = vperm.xlu0 %1257, %v966
        %v1259 = vpop.permute.xlu0 %1258
        %1262 = vset.pattern.permute.xlu0 0
        %1263 = vperm.xlu0 %1262, %v968
        %v1264 = vpop.permute.xlu0 %1263
        %1267 = vset.pattern.permute.xlu0 0
        %1268 = vperm.xlu0 %1267, %v970
        %v1269 = vpop.permute.xlu0 %1268
        %1272 = vset.pattern.permute.xlu0 0
        %1273 = vperm.xlu0 %1272, %v972
        %v1274 = vpop.permute.xlu0 %1273
        %1277 = vset.pattern.permute.xlu0 0
        %1278 = vperm.xlu0 %1277, %v974
        %v1279 = vpop.permute.xlu0 %1278
        %1282 = vset.pattern.permute.xlu0 0
        %1283 = vperm.xlu0 %1282, %v976
        %v1284 = vpop.permute.xlu0 %1283
        %1287 = vset.pattern.permute.xlu0 0
        %1288 = vperm.xlu0 %1287, %v978
        %v1289 = vpop.permute.xlu0 %1288
        %1292 = vset.pattern.permute.xlu0 0
        %1293 = vperm.xlu0 %1292, %v980
        %v1294 = vpop.permute.xlu0 %1293
        %1297 = vset.pattern.permute.xlu0 0
        %1298 = vperm.xlu0 %1297, %v982
        %v1299 = vpop.permute.xlu0 %1298
        %1302 = vset.pattern.permute.xlu0 0
        %1303 = vperm.xlu0 %1302, %v984
        %v1304 = vpop.permute.xlu0 %1303
        %v1306 = vmul.f32 %v1229, %v1210
        %v1307 = vmul.f32 %v1234, %v1211
        %v1308 = vmul.f32 %v1239, %v1212
        %v1309 = vmul.f32 %v1244, %v1213
        %v1310 = vmul.f32 %v1249, %v1214
        %v1311 = vmul.f32 %v1254, %v1215
        %v1312 = vmul.f32 %v1259, %v1216
        %v1313 = vmul.f32 %v1264, %v1217
        %v1314 = vmul.f32 %v1269, %v1218
        %v1315 = vmul.f32 %v1274, %v1219
        %v1316 = vmul.f32 %v1279, %v1220
        %v1317 = vmul.f32 %v1284, %v1221
        %v1318 = vmul.f32 %v1289, %v1222
        %v1319 = vmul.f32 %v1294, %v1223
        %v1320 = vmul.f32 %v1299, %v1224
        %v1321 = vmul.f32 %v1304, %v1225
        %v1322 = vpack.c.bf16 %v1084, %v1082
        %v1323 = vpack.c.bf16 %v1088, %v1086
        %v1324 = vpack.c.bf16 %v1092, %v1090
        %v1325 = vpack.c.bf16 %v1096, %v1094
        %v1326 = vpack.c.bf16 %v1100, %v1098
        %v1327 = vpack.c.bf16 %v1104, %v1102
        %v1328 = vpack.c.bf16 %v1108, %v1106
        %v1329 = vpack.c.bf16 %v1112, %v1110
        %v1346 = vunpack.c.l.b16 %v664
        %v1347 = vunpack.c.l.b16 %v665
        %v1348 = vunpack.c.l.b16 %v666
        %v1349 = vunpack.c.l.b16 %v667
        %v1350 = vunpack.c.l.b16 %v668
        %v1351 = vunpack.c.l.b16 %v669
        %v1352 = vunpack.c.l.b16 %v670
        %v1353 = vunpack.c.l.b16 %v671
        %v1354 = vunpack.c.l.b16 %v672
        %v1355 = vunpack.c.l.b16 %v673
        %v1356 = vunpack.c.l.b16 %v674
        %v1357 = vunpack.c.l.b16 %v675
        %v1358 = vunpack.c.l.b16 %v676
        %v1359 = vunpack.c.l.b16 %v677
        %v1360 = vunpack.c.l.b16 %v678
        %v1361 = vunpack.c.l.b16 %v679
        %v1362 = vpack.c.b16 %v1347, %v1346
        %v1363 = vpack.c.b16 %v1349, %v1348
        %v1364 = vpack.c.b16 %v1351, %v1350
        %v1365 = vpack.c.b16 %v1353, %v1352
        %v1366 = vpack.c.b16 %v1355, %v1354
        %v1367 = vpack.c.b16 %v1357, %v1356
        %v1368 = vpack.c.b16 %v1359, %v1358
        %v1369 = vpack.c.b16 %v1361, %v1360
        %1378 = vmatprep.subr.bf16.mxu0 0
        %1379 = vmatpush1.bf16.msra.mxu0 %v1362
        %1380 = vmatprep.subr.bf16.mxu0 0
        %1381 = vmatpush1.bf16.msra.mxu0 %v1363
        %1382 = vmatprep.subr.bf16.mxu0 0
        %1383 = vmatpush1.bf16.msra.mxu0 %v1364
        %1384 = vmatprep.subr.bf16.mxu0 0
        %1385 = vmatpush1.bf16.msra.mxu0 %v1365
        %1386 = vmatprep.subr.bf16.mxu0 0
        %1387 = vmatpush1.bf16.msra.mxu0 %v1366
        %1388 = vmatprep.subr.bf16.mxu0 0
        %1389 = vmatpush1.bf16.msra.mxu0 %v1367
        %1390 = vmatprep.subr.bf16.mxu0 0
        %1391 = vmatpush1.bf16.msra.mxu0 %v1368
        %1392 = vmatprep.subr.bf16.mxu0 0
        %1393 = vmatpush1.bf16.msra.mxu0 %v1369
        %1394 = vmatprep.subr.bf16.mxu0 0
        %1395 = vmatpush1.bf16.msra.mxu0 0
        %1396 = vmatprep.subr.bf16.mxu0 0
        %1397 = vmatpush1.bf16.msra.mxu0 0
        %1398 = vmatprep.subr.bf16.mxu0 0
        %1399 = vmatpush1.bf16.msra.mxu0 0
        %1400 = vmatprep.subr.bf16.mxu0 0
        %1401 = vmatpush1.bf16.msra.mxu0 0
        %1402 = vmatprep.subr.bf16.mxu0 0
        %1403 = vmatpush1.bf16.msra.mxu0 0
        %1404 = vmatprep.subr.bf16.mxu0 0
        %1405 = vmatpush1.bf16.msra.mxu0 0
        %1406 = vmatprep.subr.bf16.mxu0 0
        %1407 = vmatpush1.bf16.msra.mxu0 0
        %1408 = vmatprep.subr.bf16.mxu0 0
        %1409 = vmatpush1.bf16.msra.mxu0 0
        %1410 = vmatprep.mubr.bf16.mxu0 0
        %1411 = vmatmul.mubr.bf16.gmra.mrb[0].mxu0 %v1322
        %v1412 = vpop.f32.mrb[0].mxu0
        %v1413 = vadd.f32 0.0, %v1412
        %v1414 = vpop.f32.mrb[0].mxu0
        %v1415 = vpop.f32.mrb[0].mxu0
        %v1416 = vadd.f32 0.0, %v1415
        %v1417 = vpop.f32.mrb[0].mxu0
        %1418 = vmatprep.mubr.bf16.mxu0 0
        %1419 = vmatmul.mubr.bf16.gmra.mrb[0].mxu0 %v1323
        %v1420 = vpop.f32.mrb[0].mxu0
        %v1421 = vadd.f32 0.0, %v1420
        %v1422 = vpop.f32.mrb[0].mxu0
        %v1423 = vpop.f32.mrb[0].mxu0
        %v1424 = vadd.f32 0.0, %v1423
        %v1425 = vpop.f32.mrb[0].mxu0
        %1426 = vmatprep.mubr.bf16.mxu0 0
        %1427 = vmatmul.mubr.bf16.gmra.mrb[0].mxu0 %v1324
        %v1428 = vpop.f32.mrb[0].mxu0
        %v1429 = vadd.f32 0.0, %v1428
        %v1430 = vpop.f32.mrb[0].mxu0
        %v1431 = vpop.f32.mrb[0].mxu0
        %v1432 = vadd.f32 0.0, %v1431
        %v1433 = vpop.f32.mrb[0].mxu0
        %1434 = vmatprep.mubr.bf16.mxu0 0
        %1435 = vmatmul.mubr.bf16.gmra.mrb[0].mxu0 %v1325
        %v1436 = vpop.f32.mrb[0].mxu0
        %v1437 = vadd.f32 0.0, %v1436
        %v1438 = vpop.f32.mrb[0].mxu0
        %v1439 = vpop.f32.mrb[0].mxu0
        %v1440 = vadd.f32 0.0, %v1439
        %v1441 = vpop.f32.mrb[0].mxu0
        %1442 = vmatprep.mubr.bf16.mxu0 0
        %1443 = vmatmul.mubr.bf16.gmra.mrb[0].mxu0 %v1326
        %v1444 = vpop.f32.mrb[0].mxu0
        %v1445 = vadd.f32 0.0, %v1444
        %v1446 = vpop.f32.mrb[0].mxu0
        %v1447 = vpop.f32.mrb[0].mxu0
        %v1448 = vadd.f32 0.0, %v1447
        %v1449 = vpop.f32.mrb[0].mxu0
        %1450 = vmatprep.mubr.bf16.mxu0 0
        %1451 = vmatmul.mubr.bf16.gmra.mrb[0].mxu0 %v1327
        %v1452 = vpop.f32.mrb[0].mxu0
        %v1453 = vadd.f32 0.0, %v1452
        %v1454 = vpop.f32.mrb[0].mxu0
        %v1455 = vpop.f32.mrb[0].mxu0
        %v1456 = vadd.f32 0.0, %v1455
        %v1457 = vpop.f32.mrb[0].mxu0
        %1458 = vmatprep.mubr.bf16.mxu0 0
        %1459 = vmatmul.mubr.bf16.gmra.mrb[0].mxu0 %v1328
        %v1460 = vpop.f32.mrb[0].mxu0
        %v1461 = vadd.f32 0.0, %v1460
        %v1462 = vpop.f32.mrb[0].mxu0
        %v1463 = vpop.f32.mrb[0].mxu0
        %v1464 = vadd.f32 0.0, %v1463
        %v1465 = vpop.f32.mrb[0].mxu0
        %1466 = vmatprep.mubr.bf16.mxu0 0
        %1467 = vmatmul.mubr.bf16.gmra.mrb[0].mxu0 %v1329
        %v1468 = vpop.f32.mrb[0].mxu0
        %v1469 = vadd.f32 0.0, %v1468
        %v1470 = vpop.f32.mrb[0].mxu0
        %v1471 = vpop.f32.mrb[0].mxu0
        %v1472 = vadd.f32 0.0, %v1471
        %v1473 = vpop.f32.mrb[0].mxu0
        %1474 = vdwg.mxu0
        %v1475 = vadd.f32 %v1306, %v1413
        %v1476 = vadd.f32 %v1307, %v1416
        %v1477 = vadd.f32 %v1308, %v1421
        %v1478 = vadd.f32 %v1309, %v1424
        %v1479 = vadd.f32 %v1310, %v1429
        %v1480 = vadd.f32 %v1311, %v1432
        %v1481 = vadd.f32 %v1312, %v1437
        %v1482 = vadd.f32 %v1313, %v1440
        %v1483 = vadd.f32 %v1314, %v1445
        %v1484 = vadd.f32 %v1315, %v1448
        %v1485 = vadd.f32 %v1316, %v1453
        %v1486 = vadd.f32 %v1317, %v1456
        %v1487 = vadd.f32 %v1318, %v1461
        %v1488 = vadd.f32 %v1319, %v1464
        %v1489 = vadd.f32 %v1320, %v1469
        %v1490 = vadd.f32 %v1321, %v1472
        %1491 = vst [vmem:[#allocation4] sm:$0xff] %v1475
        %1492 = vst [vmem:[#allocation4 + $0x8] sm:$0xff] %v1476
        %1493 = vst [vmem:[#allocation4 + $0x10] sm:$0xff] %v1477
        %1494 = vst [vmem:[#allocation4 + $0x18] sm:$0xff] %v1478
        %1495 = vst [vmem:[#allocation4 + $0x20] sm:$0xff] %v1479
        %1496 = vst [vmem:[#allocation4 + $0x28] sm:$0xff] %v1480
        %1497 = vst [vmem:[#allocation4 + $0x30] sm:$0xff] %v1481
        %1498 = vst [vmem:[#allocation4 + $0x38] sm:$0xff] %v1482
        %1499 = vst [vmem:[#allocation4 + $0x40] sm:$0xff] %v1483
        %1500 = vst [vmem:[#allocation4 + $0x48] sm:$0xff] %v1484
        %1501 = vst [vmem:[#allocation4 + $0x50] sm:$0xff] %v1485
        %1502 = vst [vmem:[#allocation4 + $0x58] sm:$0xff] %v1486
        %1503 = vst [vmem:[#allocation4 + $0x60] sm:$0xff] %v1487
        %1504 = vst [vmem:[#allocation4 + $0x68] sm:$0xff] %v1488
        %1505 = vst [vmem:[#allocation4 + $0x70] sm:$0xff] %v1489
        %1506 = vst [vmem:[#allocation4 + $0x78] sm:$0xff] %v1490
        %1507 = vst.msk [vmem:[#allocation2] sm:$0xff] %vm1193, %v921
        %1508 = vst.msk [vmem:[#allocation2 + $0x8] sm:$0xff] %vm1193, %v922
        %1509 = vst.msk [vmem:[#allocation2 + $0x10] sm:$0xff] %vm1193, %v923
        %1510 = vst.msk [vmem:[#allocation2 + $0x18] sm:$0xff] %vm1193, %v924
        %1511 = vst.msk [vmem:[#allocation2 + $0x20] sm:$0xff] %vm1193, %v925
        %1512 = vst.msk [vmem:[#allocation2 + $0x28] sm:$0xff] %vm1193, %v926
        %1513 = vst.msk [vmem:[#allocation2 + $0x30] sm:$0xff] %vm1193, %v927
        %1514 = vst.msk [vmem:[#allocation2 + $0x38] sm:$0xff] %vm1193, %v928
        %1515 = vst.msk [vmem:[#allocation2 + $0x40] sm:$0xff] %vm1193, %v929
        %1516 = vst.msk [vmem:[#allocation2 + $0x48] sm:$0xff] %vm1193, %v930
        %1517 = vst.msk [vmem:[#allocation2 + $0x50] sm:$0xff] %vm1193, %v931
        %1518 = vst.msk [vmem:[#allocation2 + $0x58] sm:$0xff] %vm1193, %v932
        %1519 = vst.msk [vmem:[#allocation2 + $0x60] sm:$0xff] %vm1193, %v933
        %1520 = vst.msk [vmem:[#allocation2 + $0x68] sm:$0xff] %vm1193, %v934
        %1521 = vst.msk [vmem:[#allocation2 + $0x70] sm:$0xff] %vm1193, %v935
        %1522 = vst.msk [vmem:[#allocation2 + $0x78] sm:$0xff] %vm1193, %v936
        // Predicated region
        $region160: #{transformer_encoder_layer.4} parent=142 // pred_check
          %p1523 = pneg %p579
        $region161: #{transformer_encoder_layer.4} parent=142 // pred_check_branch
          %1525 = sbr.rel (%p1523) target = $region163
        $region162: #{transformer_encoder_layer.4} parent=142 // pred_region
          %v1526 = vld [vmem:[#allocation3] sm:$0xff]
          %v1527 = vld [vmem:[#allocation3 + $0x8] sm:$0xff]
          %v1528 = vld [vmem:[#allocation3 + $0x10] sm:$0xff]
          %v1529 = vld [vmem:[#allocation3 + $0x18] sm:$0xff]
          %v1530 = vld [vmem:[#allocation3 + $0x20] sm:$0xff]
          %v1531 = vld [vmem:[#allocation3 + $0x28] sm:$0xff]
          %v1532 = vld [vmem:[#allocation3 + $0x30] sm:$0xff]
          %v1533 = vld [vmem:[#allocation3 + $0x38] sm:$0xff]
          %v1534 = vld [vmem:[#allocation3 + $0x40] sm:$0xff]
          %v1535 = vld [vmem:[#allocation3 + $0x48] sm:$0xff]
          %v1536 = vld [vmem:[#allocation3 + $0x50] sm:$0xff]
          %v1537 = vld [vmem:[#allocation3 + $0x58] sm:$0xff]
          %v1538 = vld [vmem:[#allocation3 + $0x60] sm:$0xff]
          %v1539 = vld [vmem:[#allocation3 + $0x68] sm:$0xff]
          %v1540 = vld [vmem:[#allocation3 + $0x70] sm:$0xff]
          %v1541 = vld [vmem:[#allocation3 + $0x78] sm:$0xff]
          %v1542 = vrcp.pop %v1526
          %v1543 = vrcp.pop %v1527
          %v1544 = vrcp.pop %v1528
          %v1545 = vrcp.pop %v1529
          %v1546 = vrcp.pop %v1530
          %v1547 = vrcp.pop %v1531
          %v1548 = vrcp.pop %v1532
          %v1549 = vrcp.pop %v1533
          %v1550 = vrcp.pop %v1534
          %v1551 = vrcp.pop %v1535
          %v1552 = vrcp.pop %v1536
          %v1553 = vrcp.pop %v1537
          %v1554 = vrcp.pop %v1538
          %v1555 = vrcp.pop %v1539
          %v1556 = vrcp.pop %v1540
          %v1557 = vrcp.pop %v1541
          %v1558 = vld [vmem:[#allocation4] sm:$0xff]
          %v1559 = vld [vmem:[#allocation4 + $0x8] sm:$0xff]
          %v1560 = vld [vmem:[#allocation4 + $0x10] sm:$0xff]
          %v1561 = vld [vmem:[#allocation4 + $0x18] sm:$0xff]
          %v1562 = vld [vmem:[#allocation4 + $0x20] sm:$0xff]
          %v1563 = vld [vmem:[#allocation4 + $0x28] sm:$0xff]
          %v1564 = vld [vmem:[#allocation4 + $0x30] sm:$0xff]
          %v1565 = vld [vmem:[#allocation4 + $0x38] sm:$0xff]
          %v1566 = vld [vmem:[#allocation4 + $0x40] sm:$0xff]
          %v1567 = vld [vmem:[#allocation4 + $0x48] sm:$0xff]
          %v1568 = vld [vmem:[#allocation4 + $0x50] sm:$0xff]
          %v1569 = vld [vmem:[#allocation4 + $0x58] sm:$0xff]
          %v1570 = vld [vmem:[#allocation4 + $0x60] sm:$0xff]
          %v1571 = vld [vmem:[#allocation4 + $0x68] sm:$0xff]
          %v1572 = vld [vmem:[#allocation4 + $0x70] sm:$0xff]
          %v1573 = vld [vmem:[#allocation4 + $0x78] sm:$0xff]
          %1575 = vset.pattern.permute.xlu0 0
          %1576 = vperm.xlu0 %1575, %v1542
          %v1577 = vpop.permute.xlu0 %1576
          %1580 = vset.pattern.permute.xlu0 0
          %1581 = vperm.xlu0 %1580, %v1543
          %v1582 = vpop.permute.xlu0 %1581
          %1585 = vset.pattern.permute.xlu0 0
          %1586 = vperm.xlu0 %1585, %v1544
          %v1587 = vpop.permute.xlu0 %1586
          %1590 = vset.pattern.permute.xlu0 0
          %1591 = vperm.xlu0 %1590, %v1545
          %v1592 = vpop.permute.xlu0 %1591
          %1595 = vset.pattern.permute.xlu0 0
          %1596 = vperm.xlu0 %1595, %v1546
          %v1597 = vpop.permute.xlu0 %1596
          %1600 = vset.pattern.permute.xlu0 0
          %1601 = vperm.xlu0 %1600, %v1547
          %v1602 = vpop.permute.xlu0 %1601
          %1605 = vset.pattern.permute.xlu0 0
          %1606 = vperm.xlu0 %1605, %v1548
          %v1607 = vpop.permute.xlu0 %1606
          %1610 = vset.pattern.permute.xlu0 0
          %1611 = vperm.xlu0 %1610, %v1549
          %v1612 = vpop.permute.xlu0 %1611
          %1615 = vset.pattern.permute.xlu0 0
          %1616 = vperm.xlu0 %1615, %v1550
          %v1617 = vpop.permute.xlu0 %1616
          %1620 = vset.pattern.permute.xlu0 0
          %1621 = vperm.xlu0 %1620, %v1551
          %v1622 = vpop.permute.xlu0 %1621
          %1625 = vset.pattern.permute.xlu0 0
          %1626 = vperm.xlu0 %1625, %v1552
          %v1627 = vpop.permute.xlu0 %1626
          %1630 = vset.pattern.permute.xlu0 0
          %1631 = vperm.xlu0 %1630, %v1553
          %v1632 = vpop.permute.xlu0 %1631
          %1635 = vset.pattern.permute.xlu0 0
          %1636 = vperm.xlu0 %1635, %v1554
          %v1637 = vpop.permute.xlu0 %1636
          %1640 = vset.pattern.permute.xlu0 0
          %1641 = vperm.xlu0 %1640, %v1555
          %v1642 = vpop.permute.xlu0 %1641
          %1645 = vset.pattern.permute.xlu0 0
          %1646 = vperm.xlu0 %1645, %v1556
          %v1647 = vpop.permute.xlu0 %1646
          %1650 = vset.pattern.permute.xlu0 0
          %1651 = vperm.xlu0 %1650, %v1557
          %v1652 = vpop.permute.xlu0 %1651
          %v1654 = vmul.f32 %v1558, %v1577
          %v1655 = vmul.f32 %v1559, %v1582
          %v1656 = vmul.f32 %v1560, %v1587
          %v1657 = vmul.f32 %v1561, %v1592
          %v1658 = vmul.f32 %v1562, %v1597
          %v1659 = vmul.f32 %v1563, %v1602
          %v1660 = vmul.f32 %v1564, %v1607
          %v1661 = vmul.f32 %v1565, %v1612
          %v1662 = vmul.f32 %v1566, %v1617
          %v1663 = vmul.f32 %v1567, %v1622
          %v1664 = vmul.f32 %v1568, %v1627
          %v1665 = vmul.f32 %v1569, %v1632
          %v1666 = vmul.f32 %v1570, %v1637
          %v1667 = vmul.f32 %v1571, %v1642
          %v1668 = vmul.f32 %v1572, %v1647
          %v1669 = vmul.f32 %v1573, %v1652
          %v1670 = vpack.c.bf16 %v1655, %v1654
          %v1671 = vpack.c.bf16 %v1657, %v1656
          %v1672 = vpack.c.bf16 %v1659, %v1658
          %v1673 = vpack.c.bf16 %v1661, %v1660
          %v1674 = vpack.c.bf16 %v1663, %v1662
          %v1675 = vpack.c.bf16 %v1665, %v1664
          %v1676 = vpack.c.bf16 %v1667, %v1666
          %v1677 = vpack.c.bf16 %v1669, %v1668
          %v1686 = vunpack.c.l.b16 %v1670
          %v1687 = vunpack.c.h.b16 %v1670
          %v1688 = vunpack.c.l.b16 %v1671
          %v1689 = vunpack.c.h.b16 %v1671
          %v1690 = vunpack.c.l.b16 %v1672
          %v1691 = vunpack.c.h.b16 %v1672
          %v1692 = vunpack.c.l.b16 %v1673
          %v1693 = vunpack.c.h.b16 %v1673
          %v1694 = vunpack.c.l.b16 %v1674
          %v1695 = vunpack.c.h.b16 %v1674
          %v1696 = vunpack.c.l.b16 %v1675
          %v1697 = vunpack.c.h.b16 %v1675
          %v1698 = vunpack.c.l.b16 %v1676
          %v1699 = vunpack.c.h.b16 %v1676
          %v1700 = vunpack.c.l.b16 %v1677
          %v1701 = vunpack.c.h.b16 %v1677
          %v1702 = vpack.c.b16 %v1686, %v1686
          %v1703 = vpack.c.b16 %v1687, %v1687
          %v1704 = vpack.c.b16 %v1688, %v1688
          %v1705 = vpack.c.b16 %v1689, %v1689
          %v1706 = vpack.c.b16 %v1690, %v1690
          %v1707 = vpack.c.b16 %v1691, %v1691
          %v1708 = vpack.c.b16 %v1692, %v1692
          %v1709 = vpack.c.b16 %v1693, %v1693
          %v1710 = vpack.c.b16 %v1694, %v1694
          %v1711 = vpack.c.b16 %v1695, %v1695
          %v1712 = vpack.c.b16 %v1696, %v1696
          %v1713 = vpack.c.b16 %v1697, %v1697
          %v1714 = vpack.c.b16 %v1698, %v1698
          %v1715 = vpack.c.b16 %v1699, %v1699
          %v1716 = vpack.c.b16 %v1700, %v1700
          %v1717 = vpack.c.b16 %v1701, %v1701
          %1734 = vst [vmem:[%s567] sm:$0xf] %v1702
          %1735 = vst [vmem:[%s567 + $0x4] sm:$0xf] %v1703
          %1736 = vst [vmem:[%s567 + $0x8] sm:$0xf] %v1704
          %1737 = vst [vmem:[%s567 + $0xc] sm:$0xf] %v1705
          %1738 = vst [vmem:[%s567 + $0x10] sm:$0xf] %v1706
          %1739 = vst [vmem:[%s567 + $0x14] sm:$0xf] %v1707
          %1740 = vst [vmem:[%s567 + $0x18] sm:$0xf] %v1708
          %1741 = vst [vmem:[%s567 + $0x1c] sm:$0xf] %v1709
          %1742 = vst [vmem:[%s567 + $0x20] sm:$0xf] %v1710
          %1743 = vst [vmem:[%s567 + $0x24] sm:$0xf] %v1711
          %1744 = vst [vmem:[%s567 + $0x28] sm:$0xf] %v1712
          %1745 = vst [vmem:[%s567 + $0x2c] sm:$0xf] %v1713
          %1746 = vst [vmem:[%s567 + $0x30] sm:$0xf] %v1714
          %1747 = vst [vmem:[%s567 + $0x34] sm:$0xf] %v1715
          %1748 = vst [vmem:[%s567 + $0x38] sm:$0xf] %v1716
          %1749 = vst [vmem:[%s567 + $0x3c] sm:$0xf] %v1717
        $region163: #{transformer_encoder_layer.4} parent=142 // pred_fallthru
          _
        %s1750 = sand.u32 %s146, 1
        %s1751 = sand.u32 %s146, 1
        %s1752 = smul.addr %s1751, 64
        %s1753 = scalar_lea.vmem [#allocation8], %s1752
        // Predicated region
        $region164: #{transformer_encoder_layer.4} parent=142 // pred_check
          %p1754 = pneg %p156
        $region165: #{transformer_encoder_layer.4} parent=142 // pred_check_branch
          %1756 = sbr.rel (%p1754) target = $region167
        $region166: #{transformer_encoder_layer.4} parent=142 // pred_region
          %s1757 = sadd.s32 %s20, %s22
          %s1758 = smul.u32 16, %s1757
          %s1759 = smul.addr %s1758, 2
          %s1760 = sadd.s32 %s21, %s1759
          %s1761 = smul.addr %s1760, 4
          %s1762 = scalar_lea.vmem %s3, %s1761
          // Predicated region
          $region168: #{transformer_encoder_layer.4} parent=166 // pred_check
            _
          $region169: #{transformer_encoder_layer.4} parent=166 // pred_check_branch
            %1764 = sbr.rel (0) target = $region171
          $region170: #{transformer_encoder_layer.4} parent=166 // pred_region
            // Predicated region
            $region172: #{transformer_encoder_layer.4} parent=170 // pred_check
              _
            $region173: #{transformer_encoder_layer.4} parent=170 // pred_check_branch
              %1766 = sbr.rel target = $region175
            $region174: #{transformer_encoder_layer.4} parent=170 // pred_region
              // Predicated region
              $region187: #{transformer_encoder_layer.4} parent=174 // pred_check
                _
              $region188: #{transformer_encoder_layer.4} parent=174 // pred_check_branch
                %1811 = sbr.rel (0) target = $region190
              $region189: #{transformer_encoder_layer.4} parent=174 // pred_region
                loop: start=0, step=1, limit=1
                $region191: #{transformer_encoder_layer.4} parent=189 // loop_pre_header
                  _
                $region192: #{transformer_encoder_layer.4} parent=189 // loop_header
                  %s1813 = sphi 0, %s1817
                  %p1814 = scmp.ge.s32.totalorder %s1813, 1
                  %s1818 = sphi %s1753, %s1753
                  %s1819 = sphi %s1762, %s1762
                $region193: #{transformer_encoder_layer.4} parent=189 // loop_header_branch
                  %1816 = sbr.rel (%p1814) target = $region197
                $region194: #{transformer_encoder_layer.4} parent=189 // loop_body
                  _
                $region195: #{transformer_encoder_layer.4} parent=189 // loop_footer
                  %s1817 = sadd.s32 1, %s1813
                $region196: #{transformer_encoder_layer.4} parent=189 // loop_footer_branch
                  %1812 = sbr.rel target = $region192
                $region197: #{transformer_encoder_layer.4} parent=189 // loop_exit
                  _
                loop: start=0, step=1, limit=1
                $region198: #{transformer_encoder_layer.4} parent=189 // loop_pre_header
                  _
                $region199: #{transformer_encoder_layer.4} parent=189 // loop_header
                  %s1822 = sphi 0, %s1826
                  %p1823 = scmp.ge.s32.totalorder %s1822, 1
                  %s1827 = sphi %s1753, %s1753
                  %s1828 = sphi %s1762, %s1762
                $region200: #{transformer_encoder_layer.4} parent=189 // loop_header_branch
                  %1825 = sbr.rel (%p1823) target = $region204
                $region201: #{transformer_encoder_layer.4} parent=189 // loop_body
                  %v1829 = vld [vmem:[%s1827] sm:$0xf]
                  %1830 = vst [vmem:[%s1828] sm:$0xf] %v1829
                  %v1831 = vld [vmem:[%s1827 + $0x4] sm:$0xf]
                  %1832 = vst [vmem:[%s1828 + $0x8] sm:$0xf] %v1831
                  %v1833 = vld [vmem:[%s1827 + $0x8] sm:$0xf]
                  %1834 = vst [vmem:[%s1828 + $0x10] sm:$0xf] %v1833
                  %v1835 = vld [vmem:[%s1827 + $0xc] sm:$0xf]
                  %1836 = vst [vmem:[%s1828 + $0x18] sm:$0xf] %v1835
                  %v1837 = vld [vmem:[%s1827 + $0x10] sm:$0xf]
                  %1838 = vst [vmem:[%s1828 + $0x20] sm:$0xf] %v1837
                  %v1839 = vld [vmem:[%s1827 + $0x14] sm:$0xf]
                  %1840 = vst [vmem:[%s1828 + $0x28] sm:$0xf] %v1839
                  %v1841 = vld [vmem:[%s1827 + $0x18] sm:$0xf]
                  %1842 = vst [vmem:[%s1828 + $0x30] sm:$0xf] %v1841
                  %v1843 = vld [vmem:[%s1827 + $0x1c] sm:$0xf]
                  %1844 = vst [vmem:[%s1828 + $0x38] sm:$0xf] %v1843
                  %v1845 = vld [vmem:[%s1827 + $0x20] sm:$0xf]
                  %1846 = vst [vmem:[%s1828 + $0x40] sm:$0xf] %v1845
                  %v1847 = vld [vmem:[%s1827 + $0x24] sm:$0xf]
                  %1848 = vst [vmem:[%s1828 + $0x48] sm:$0xf] %v1847
                  %v1849 = vld [vmem:[%s1827 + $0x28] sm:$0xf]
                  %1850 = vst [vmem:[%s1828 + $0x50] sm:$0xf] %v1849
                  %v1851 = vld [vmem:[%s1827 + $0x2c] sm:$0xf]
                  %1852 = vst [vmem:[%s1828 + $0x58] sm:$0xf] %v1851
                  %v1853 = vld [vmem:[%s1827 + $0x30] sm:$0xf]
                  %1854 = vst [vmem:[%s1828 + $0x60] sm:$0xf] %v1853
                  %v1855 = vld [vmem:[%s1827 + $0x34] sm:$0xf]
                  %1856 = vst [vmem:[%s1828 + $0x68] sm:$0xf] %v1855
                  %v1857 = vld [vmem:[%s1827 + $0x38] sm:$0xf]
                  %1858 = vst [vmem:[%s1828 + $0x70] sm:$0xf] %v1857
                  %v1859 = vld [vmem:[%s1827 + $0x3c] sm:$0xf]
                  %1860 = vst [vmem:[%s1828 + $0x78] sm:$0xf] %v1859
                $region202: #{transformer_encoder_layer.4} parent=189 // loop_footer
                  %s1826 = sadd.s32 1, %s1822
                $region203: #{transformer_encoder_layer.4} parent=189 // loop_footer_branch
                  %1821 = sbr.rel target = $region199
                $region204: #{transformer_encoder_layer.4} parent=189 // loop_exit
                  _
              $region190: #{transformer_encoder_layer.4} parent=174 // pred_fallthru
                _
            $region175: #{transformer_encoder_layer.4} parent=170 // pred_fallthru
              _
            // Predicated region
            $region176: #{transformer_encoder_layer.4} parent=170 // pred_check
              _
            $region177: #{transformer_encoder_layer.4} parent=170 // pred_check_branch
              %1768 = sbr.rel (0) target = $region179
            $region178: #{transformer_encoder_layer.4} parent=170 // pred_region
              loop: start=0, step=1, limit=1
              $region180: #{transformer_encoder_layer.4} parent=178 // loop_pre_header
                _
              $region181: #{transformer_encoder_layer.4} parent=178 // loop_header
                %s1771 = sphi 0, %s1775
                %p1772 = scmp.ge.s32.totalorder %s1771, 1
                %s1776 = sphi %s1753, %s1753
                %s1777 = sphi %s1762, %s1762
              $region182: #{transformer_encoder_layer.4} parent=178 // loop_header_branch
                %1774 = sbr.rel (%p1772) target = $region186
              $region183: #{transformer_encoder_layer.4} parent=178 // loop_body
                %v1778 = vld [vmem:[%s1776] sm:$0xf]
                %1779 = vst [vmem:[%s1777] sm:$0xf] %v1778
                %v1780 = vld [vmem:[%s1776 + $0x4] sm:$0xf]
                %1781 = vst [vmem:[%s1777 + $0x8] sm:$0xf] %v1780
                %v1782 = vld [vmem:[%s1776 + $0x8] sm:$0xf]
                %1783 = vst [vmem:[%s1777 + $0x10] sm:$0xf] %v1782
                %v1784 = vld [vmem:[%s1776 + $0xc] sm:$0xf]
                %1785 = vst [vmem:[%s1777 + $0x18] sm:$0xf] %v1784
                %v1786 = vld [vmem:[%s1776 + $0x10] sm:$0xf]
                %1787 = vst [vmem:[%s1777 + $0x20] sm:$0xf] %v1786
                %v1788 = vld [vmem:[%s1776 + $0x14] sm:$0xf]
                %1789 = vst [vmem:[%s1777 + $0x28] sm:$0xf] %v1788
                %v1790 = vld [vmem:[%s1776 + $0x18] sm:$0xf]
                %1791 = vst [vmem:[%s1777 + $0x30] sm:$0xf] %v1790
                %v1792 = vld [vmem:[%s1776 + $0x1c] sm:$0xf]
                %1793 = vst [vmem:[%s1777 + $0x38] sm:$0xf] %v1792
                %v1794 = vld [vmem:[%s1776 + $0x20] sm:$0xf]
                %1795 = vst [vmem:[%s1777 + $0x40] sm:$0xf] %v1794
                %v1796 = vld [vmem:[%s1776 + $0x24] sm:$0xf]
                %1797 = vst [vmem:[%s1777 + $0x48] sm:$0xf] %v1796
                %v1798 = vld [vmem:[%s1776 + $0x28] sm:$0xf]
                %1799 = vst [vmem:[%s1777 + $0x50] sm:$0xf] %v1798
                %v1800 = vld [vmem:[%s1776 + $0x2c] sm:$0xf]
                %1801 = vst [vmem:[%s1777 + $0x58] sm:$0xf] %v1800
                %v1802 = vld [vmem:[%s1776 + $0x30] sm:$0xf]
                %1803 = vst [vmem:[%s1777 + $0x60] sm:$0xf] %v1802
                %v1804 = vld [vmem:[%s1776 + $0x34] sm:$0xf]
                %1805 = vst [vmem:[%s1777 + $0x68] sm:$0xf] %v1804
                %v1806 = vld [vmem:[%s1776 + $0x38] sm:$0xf]
                %1807 = vst [vmem:[%s1777 + $0x70] sm:$0xf] %v1806
                %v1808 = vld [vmem:[%s1776 + $0x3c] sm:$0xf]
                %1809 = vst [vmem:[%s1777 + $0x78] sm:$0xf] %v1808
              $region184: #{transformer_encoder_layer.4} parent=178 // loop_footer
                %s1775 = sadd.s32 1, %s1771
              $region185: #{transformer_encoder_layer.4} parent=178 // loop_footer_branch
                %1770 = sbr.rel target = $region181
              $region186: #{transformer_encoder_layer.4} parent=178 // loop_exit
                _
            $region179: #{transformer_encoder_layer.4} parent=170 // pred_fallthru
              _
          $region171: #{transformer_encoder_layer.4} parent=166 // pred_fallthru
            _
          %1861 = vnop
        $region167: #{transformer_encoder_layer.4} parent=142 // pred_fallthru
          _
      $region143: #{transformer_encoder_layer.4} parent=5 // pred_fallthru
        _
      %p1862 = scmp.le.s32.totalorder 2, %s9
      // Predicated region
      $region205: #{transformer_encoder_layer.4} parent=5 // pred_check
        %p1863 = pneg %p1862
      $region206: #{transformer_encoder_layer.4} parent=5 // pred_check_branch
        %1865 = sbr.rel (%p1863) target = $region208
      $region207: #{transformer_encoder_layer.4} parent=5 // pred_region
        %s1866 = ssub.s32 %s9, 2
        // Predicated region
        $region209: #{transformer_encoder_layer.4} parent=207 // pred_check
          %p1867 = pneg %p162
        $region210: #{transformer_encoder_layer.4} parent=207 // pred_check_branch
          %1869 = sbr.rel (%p1867) target = $region212
        $region211: #{transformer_encoder_layer.4} parent=207 // pred_region
          %s1870 = sand.u32 %s147, 1
          %s1871 = sand.u32 %s147, 1
          %s1872 = smul.addr %s1871, 64
          %s1873 = scalar_lea.vmem [#allocation8], %s1872
        $region212: #{transformer_encoder_layer.4} parent=207 // pred_fallthru
          _
      $region208: #{transformer_encoder_layer.4} parent=5 // pred_fallthru
        _
    $region6: #{transformer_encoder_layer.4} parent=1 // loop_footer
      %s13 = sadd.s32 1, %s9
    $region7: #{transformer_encoder_layer.4} parent=1 // loop_footer_branch
      %8 = sbr.rel target = $region3
    $region8: #{transformer_encoder_layer.4} parent=1 // loop_exit
      _

// kernel: transformer_encoder_layer.3
$region0: #{transformer_encoder_layer.3}
  #allocation0 [shape = 'u32[]', space=smem, size = 0x4, offset = 0x4, fixed_abs, tag = 'smem constant byte address 0x4 - core index']
  #allocation1 [shape = 'u32[144,128]{1,0:T(1,128)}', space=vmem, size = 0x12000, scoped, tag = 'internal scratch']
  %s0 = inlined_call_operand.vmem [shape: f32[256,256], index: 0, kind: input, shape index: {}]
  %s1 = inlined_call_operand.vmem [shape: bf16[256,768], index: 1, kind: input, shape index: {}]
  %s2 = inlined_call_operand.vmem [shape: f32[1,768], index: 2, kind: input, shape index: {}]
  %s3 = inlined_call_operand.vmem [shape: f32[1,256], index: 3, kind: input, shape index: {}]
  %s4 = inlined_call_operand.vmem [shape: f32[1,256], index: 4, kind: input, shape index: {}]
  %s5 = inlined_call_operand.vmem [shape: bf16[256,768], index: 5, kind: output, shape index: {}]
  %s6 = sld [smem:[#allocation0]]
  $region30: #{transformer_encoder_layer.3} parent=0
    _
  %s8 = ssub.s32 1, %s6
  %s9 = scalar_select 0, %s8, %s6
  // Predicated region
  $region2: #{transformer_encoder_layer.3} parent=0 // pred_check
    _
  $region3: #{transformer_encoder_layer.3} parent=0 // pred_check_branch
    %11 = sbr.rel (0) target = $region5
  $region4: #{transformer_encoder_layer.3} parent=0 // pred_region
    _
  $region5: #{transformer_encoder_layer.3} parent=0 // pred_fallthru
    _
  // Predicated region
  $region6: #{transformer_encoder_layer.3} parent=0 // pred_check
    _
  $region7: #{transformer_encoder_layer.3} parent=0 // pred_check_branch
    %13 = sbr.rel (0) target = $region9
  $region8: #{transformer_encoder_layer.3} parent=0 // pred_region
    _
  $region9: #{transformer_encoder_layer.3} parent=0 // pred_fallthru
    _
  // Predicated region
  $region10: #{transformer_encoder_layer.3} parent=0 // pred_check
    _
  $region11: #{transformer_encoder_layer.3} parent=0 // pred_check_branch
    %15 = sbr.rel (0) target = $region13
  $region12: #{transformer_encoder_layer.3} parent=0 // pred_region
    _
  $region13: #{transformer_encoder_layer.3} parent=0 // pred_fallthru
    _
  // Predicated region
  $region14: #{transformer_encoder_layer.3} parent=0 // pred_check
    _
  $region15: #{transformer_encoder_layer.3} parent=0 // pred_check_branch
    %17 = sbr.rel (0) target = $region17
  $region16: #{transformer_encoder_layer.3} parent=0 // pred_region
    _
  $region17: #{transformer_encoder_layer.3} parent=0 // pred_fallthru
    _
  // Predicated region
  $region18: #{transformer_encoder_layer.3} parent=0 // pred_check
    _
  $region19: #{transformer_encoder_layer.3} parent=0 // pred_check_branch
    %19 = sbr.rel (0) target = $region21
  $region20: #{transformer_encoder_layer.3} parent=0 // pred_region
    _
  $region21: #{transformer_encoder_layer.3} parent=0 // pred_fallthru
    _
  %v20 = vld [vmem:[%s0] sm:$0xff]
  %v21 = vld [vmem:[%s0 + $0x8] sm:$0xff]
  %v22 = vld [vmem:[%s0 + $0x10] sm:$0xff]
  %v23 = vld [vmem:[%s0 + $0x18] sm:$0xff]
  %v24 = vld [vmem:[%s0 + $0x20] sm:$0xff]
  %v25 = vld [vmem:[%s0 + $0x28] sm:$0xff]
  %v26 = vld [vmem:[%s0 + $0x30] sm:$0xff]
  %v27 = vld [vmem:[%s0 + $0x38] sm:$0xff]
  %v28 = vld [vmem:[%s0 + $0x40] sm:$0xff]
  %v29 = vld [vmem:[%s0 + $0x48] sm:$0xff]
  %v30 = vld [vmem:[%s0 + $0x50] sm:$0xff]
  %v31 = vld [vmem:[%s0 + $0x58] sm:$0xff]
  %v32 = vld [vmem:[%s0 + $0x60] sm:$0xff]
  %v33 = vld [vmem:[%s0 + $0x68] sm:$0xff]
  %v34 = vld [vmem:[%s0 + $0x70] sm:$0xff]
  %v35 = vld [vmem:[%s0 + $0x78] sm:$0xff]
  %v36 = vld [vmem:[%s0 + $0x80] sm:$0xff]
  %v37 = vld [vmem:[%s0 + $0x88] sm:$0xff]
  %v38 = vld [vmem:[%s0 + $0x90] sm:$0xff]
  %v39 = vld [vmem:[%s0 + $0x98] sm:$0xff]
  %v40 = vld [vmem:[%s0 + $0xa0] sm:$0xff]
  %v41 = vld [vmem:[%s0 + $0xa8] sm:$0xff]
  %v42 = vld [vmem:[%s0 + $0xb0] sm:$0xff]
  %v43 = vld [vmem:[%s0 + $0xb8] sm:$0xff]
  %v44 = vld [vmem:[%s0 + $0xc0] sm:$0xff]
  %v45 = vld [vmem:[%s0 + $0xc8] sm:$0xff]
  %v46 = vld [vmem:[%s0 + $0xd0] sm:$0xff]
  %v47 = vld [vmem:[%s0 + $0xd8] sm:$0xff]
  %v48 = vld [vmem:[%s0 + $0xe0] sm:$0xff]
  %v49 = vld [vmem:[%s0 + $0xe8] sm:$0xff]
  %v50 = vld [vmem:[%s0 + $0xf0] sm:$0xff]
  %v51 = vld [vmem:[%s0 + $0xf8] sm:$0xff]
  %v52 = vld [vmem:[%s0 + $0x100] sm:$0xff]
  %v53 = vld [vmem:[%s0 + $0x108] sm:$0xff]
  %v54 = vld [vmem:[%s0 + $0x110] sm:$0xff]
  %v55 = vld [vmem:[%s0 + $0x118] sm:$0xff]
  %v56 = vld [vmem:[%s0 + $0x120] sm:$0xff]
  %v57 = vld [vmem:[%s0 + $0x128] sm:$0xff]
  %v58 = vld [vmem:[%s0 + $0x130] sm:$0xff]
  %v59 = vld [vmem:[%s0 + $0x138] sm:$0xff]
  %v60 = vld [vmem:[%s0 + $0x140] sm:$0xff]
  %v61 = vld [vmem:[%s0 + $0x148] sm:$0xff]
  %v62 = vld [vmem:[%s0 + $0x150] sm:$0xff]
  %v63 = vld [vmem:[%s0 + $0x158] sm:$0xff]
  %v64 = vld [vmem:[%s0 + $0x160] sm:$0xff]
  %v65 = vld [vmem:[%s0 + $0x168] sm:$0xff]
  %v66 = vld [vmem:[%s0 + $0x170] sm:$0xff]
  %v67 = vld [vmem:[%s0 + $0x178] sm:$0xff]
  %v68 = vld [vmem:[%s0 + $0x180] sm:$0xff]
  %v69 = vld [vmem:[%s0 + $0x188] sm:$0xff]
  %v70 = vld [vmem:[%s0 + $0x190] sm:$0xff]
  %v71 = vld [vmem:[%s0 + $0x198] sm:$0xff]
  %v72 = vld [vmem:[%s0 + $0x1a0] sm:$0xff]
  %v73 = vld [vmem:[%s0 + $0x1a8] sm:$0xff]
  %v74 = vld [vmem:[%s0 + $0x1b0] sm:$0xff]
  %v75 = vld [vmem:[%s0 + $0x1b8] sm:$0xff]
  %v76 = vld [vmem:[%s0 + $0x1c0] sm:$0xff]
  %v77 = vld [vmem:[%s0 + $0x1c8] sm:$0xff]
  %v78 = vld [vmem:[%s0 + $0x1d0] sm:$0xff]
  %v79 = vld [vmem:[%s0 + $0x1d8] sm:$0xff]
  %v80 = vld [vmem:[%s0 + $0x1e0] sm:$0xff]
  %v81 = vld [vmem:[%s0 + $0x1e8] sm:$0xff]
  %v82 = vld [vmem:[%s0 + $0x1f0] sm:$0xff]
  %v83 = vld [vmem:[%s0 + $0x1f8] sm:$0xff]
  %v84 = vld [vmem:[%s3] sm:$0x3]
  %v85 = vld [vmem:[%s4] sm:$0x3]
  %v86 = vadd.f32 %v20, %v21
  %87 = vadd.xlane.f32.xlu0 %v86
  %v88 = vpop.xlane.xlu0 %87
  %v89 = vadd.f32 %v22, %v23
  %90 = vadd.xlane.f32.xlu0 %v89
  %v91 = vpop.xlane.xlu0 %90
  %v92 = vadd.f32 %v24, %v25
  %93 = vadd.xlane.f32.xlu0 %v92
  %v94 = vpop.xlane.xlu0 %93
  %v95 = vadd.f32 %v26, %v27
  %96 = vadd.xlane.f32.xlu0 %v95
  %v97 = vpop.xlane.xlu0 %96
  %v98 = vadd.f32 %v28, %v29
  %99 = vadd.xlane.f32.xlu0 %v98
  %v100 = vpop.xlane.xlu0 %99
  %v101 = vadd.f32 %v30, %v31
  %102 = vadd.xlane.f32.xlu0 %v101
  %v103 = vpop.xlane.xlu0 %102
  %v104 = vadd.f32 %v32, %v33
  %105 = vadd.xlane.f32.xlu0 %v104
  %v106 = vpop.xlane.xlu0 %105
  %v107 = vadd.f32 %v34, %v35
  %108 = vadd.xlane.f32.xlu0 %v107
  %v109 = vpop.xlane.xlu0 %108
  %v110 = vadd.f32 %v36, %v37
  %111 = vadd.xlane.f32.xlu0 %v110
  %v112 = vpop.xlane.xlu0 %111
  %v113 = vadd.f32 %v38, %v39
  %114 = vadd.xlane.f32.xlu0 %v113
  %v115 = vpop.xlane.xlu0 %114
  %v116 = vadd.f32 %v40, %v41
  %117 = vadd.xlane.f32.xlu0 %v116
  %v118 = vpop.xlane.xlu0 %117
  %v119 = vadd.f32 %v42, %v43
  %120 = vadd.xlane.f32.xlu0 %v119
  %v121 = vpop.xlane.xlu0 %120
  %v122 = vadd.f32 %v44, %v45
  %123 = vadd.xlane.f32.xlu0 %v122
  %v124 = vpop.xlane.xlu0 %123
  %v125 = vadd.f32 %v46, %v47
  %126 = vadd.xlane.f32.xlu0 %v125
  %v127 = vpop.xlane.xlu0 %126
  %v128 = vadd.f32 %v48, %v49
  %129 = vadd.xlane.f32.xlu0 %v128
  %v130 = vpop.xlane.xlu0 %129
  %v131 = vadd.f32 %v50, %v51
  %132 = vadd.xlane.f32.xlu0 %v131
  %v133 = vpop.xlane.xlu0 %132
  %v134 = vadd.f32 %v52, %v53
  %135 = vadd.xlane.f32.xlu0 %v134
  %v136 = vpop.xlane.xlu0 %135
  %v137 = vadd.f32 %v54, %v55
  %138 = vadd.xlane.f32.xlu0 %v137
  %v139 = vpop.xlane.xlu0 %138
  %v140 = vadd.f32 %v56, %v57
  %141 = vadd.xlane.f32.xlu0 %v140
  %v142 = vpop.xlane.xlu0 %141
  %v143 = vadd.f32 %v58, %v59
  %144 = vadd.xlane.f32.xlu0 %v143
  %v145 = vpop.xlane.xlu0 %144
  %v146 = vadd.f32 %v60, %v61
  %147 = vadd.xlane.f32.xlu0 %v146
  %v148 = vpop.xlane.xlu0 %147
  %v149 = vadd.f32 %v62, %v63
  %150 = vadd.xlane.f32.xlu0 %v149
  %v151 = vpop.xlane.xlu0 %150
  %v152 = vadd.f32 %v64, %v65
  %153 = vadd.xlane.f32.xlu0 %v152
  %v154 = vpop.xlane.xlu0 %153
  %v155 = vadd.f32 %v66, %v67
  %156 = vadd.xlane.f32.xlu0 %v155
  %v157 = vpop.xlane.xlu0 %156
  %v158 = vadd.f32 %v68, %v69
  %159 = vadd.xlane.f32.xlu0 %v158
  %v160 = vpop.xlane.xlu0 %159
  %v161 = vadd.f32 %v70, %v71
  %162 = vadd.xlane.f32.xlu0 %v161
  %v163 = vpop.xlane.xlu0 %162
  %v164 = vadd.f32 %v72, %v73
  %165 = vadd.xlane.f32.xlu0 %v164
  %v166 = vpop.xlane.xlu0 %165
  %v167 = vadd.f32 %v74, %v75
  %168 = vadd.xlane.f32.xlu0 %v167
  %v169 = vpop.xlane.xlu0 %168
  %v170 = vadd.f32 %v76, %v77
  %171 = vadd.xlane.f32.xlu0 %v170
  %v172 = vpop.xlane.xlu0 %171
  %v173 = vadd.f32 %v78, %v79
  %174 = vadd.xlane.f32.xlu0 %v173
  %v175 = vpop.xlane.xlu0 %174
  %v176 = vadd.f32 %v80, %v81
  %177 = vadd.xlane.f32.xlu0 %v176
  %v178 = vpop.xlane.xlu0 %177
  %v179 = vadd.f32 %v82, %v83
  %180 = vadd.xlane.f32.xlu0 %v179
  %v181 = vpop.xlane.xlu0 %180
  %v182 = vrcp.pop 256.0
  %v183 = vmul.f32 %v88, %v182
  %v184 = vmul.f32 %v91, %v182
  %v185 = vmul.f32 %v94, %v182
  %v186 = vmul.f32 %v97, %v182
  %v187 = vmul.f32 %v100, %v182
  %v188 = vmul.f32 %v103, %v182
  %v189 = vmul.f32 %v106, %v182
  %v190 = vmul.f32 %v109, %v182
  %v191 = vmul.f32 %v112, %v182
  %v192 = vmul.f32 %v115, %v182
  %v193 = vmul.f32 %v118, %v182
  %v194 = vmul.f32 %v121, %v182
  %v195 = vmul.f32 %v124, %v182
  %v196 = vmul.f32 %v127, %v182
  %v197 = vmul.f32 %v130, %v182
  %v198 = vmul.f32 %v133, %v182
  %v199 = vmul.f32 %v136, %v182
  %v200 = vmul.f32 %v139, %v182
  %v201 = vmul.f32 %v142, %v182
  %v202 = vmul.f32 %v145, %v182
  %v203 = vmul.f32 %v148, %v182
  %v204 = vmul.f32 %v151, %v182
  %v205 = vmul.f32 %v154, %v182
  %v206 = vmul.f32 %v157, %v182
  %v207 = vmul.f32 %v160, %v182
  %v208 = vmul.f32 %v163, %v182
  %v209 = vmul.f32 %v166, %v182
  %v210 = vmul.f32 %v169, %v182
  %v211 = vmul.f32 %v172, %v182
  %v212 = vmul.f32 %v175, %v182
  %v213 = vmul.f32 %v178, %v182
  %v214 = vmul.f32 %v181, %v182
  %v215 = vsub.f32 %v20, %v183
  %v216 = vsub.f32 %v21, %v183
  %v217 = vsub.f32 %v22, %v184
  %v218 = vsub.f32 %v23, %v184
  %v219 = vsub.f32 %v24, %v185
  %v220 = vsub.f32 %v25, %v185
  %v221 = vsub.f32 %v26, %v186
  %v222 = vsub.f32 %v27, %v186
  %v223 = vsub.f32 %v28, %v187
  %v224 = vsub.f32 %v29, %v187
  %v225 = vsub.f32 %v30, %v188
  %v226 = vsub.f32 %v31, %v188
  %v227 = vsub.f32 %v32, %v189
  %v228 = vsub.f32 %v33, %v189
  %v229 = vsub.f32 %v34, %v190
  %v230 = vsub.f32 %v35, %v190
  %v231 = vsub.f32 %v36, %v191
  %v232 = vsub.f32 %v37, %v191
  %v233 = vsub.f32 %v38, %v192
  %v234 = vsub.f32 %v39, %v192
  %v235 = vsub.f32 %v40, %v193
  %v236 = vsub.f32 %v41, %v193
  %v237 = vsub.f32 %v42, %v194
  %v238 = vsub.f32 %v43, %v194
  %v239 = vsub.f32 %v44, %v195
  %v240 = vsub.f32 %v45, %v195
  %v241 = vsub.f32 %v46, %v196
  %v242 = vsub.f32 %v47, %v196
  %v243 = vsub.f32 %v48, %v197
  %v244 = vsub.f32 %v49, %v197
  %v245 = vsub.f32 %v50, %v198
  %v246 = vsub.f32 %v51, %v198
  %v247 = vsub.f32 %v52, %v199
  %v248 = vsub.f32 %v53, %v199
  %v249 = vsub.f32 %v54, %v200
  %v250 = vsub.f32 %v55, %v200
  %v251 = vsub.f32 %v56, %v201
  %v252 = vsub.f32 %v57, %v201
  %v253 = vsub.f32 %v58, %v202
  %v254 = vsub.f32 %v59, %v202
  %v255 = vsub.f32 %v60, %v203
  %v256 = vsub.f32 %v61, %v203
  %v257 = vsub.f32 %v62, %v204
  %v258 = vsub.f32 %v63, %v204
  %v259 = vsub.f32 %v64, %v205
  %v260 = vsub.f32 %v65, %v205
  %v261 = vsub.f32 %v66, %v206
  %v262 = vsub.f32 %v67, %v206
  %v263 = vsub.f32 %v68, %v207
  %v264 = vsub.f32 %v69, %v207
  %v265 = vsub.f32 %v70, %v208
  %v266 = vsub.f32 %v71, %v208
  %v267 = vsub.f32 %v72, %v209
  %v268 = vsub.f32 %v73, %v209
  %v269 = vsub.f32 %v74, %v210
  %v270 = vsub.f32 %v75, %v210
  %v271 = vsub.f32 %v76, %v211
  %v272 = vsub.f32 %v77, %v211
  %v273 = vsub.f32 %v78, %v212
  %v274 = vsub.f32 %v79, %v212
  %v275 = vsub.f32 %v80, %v213
  %v276 = vsub.f32 %v81, %v213
  %v277 = vsub.f32 %v82, %v214
  %v278 = vsub.f32 %v83, %v214
  %v279 = vmul.f32 %v215, %v215
  %v280 = vmul.f32 %v216, %v216
  %v281 = vmul.f32 %v217, %v217
  %v282 = vmul.f32 %v218, %v218
  %v283 = vmul.f32 %v219, %v219
  %v284 = vmul.f32 %v220, %v220
  %v285 = vmul.f32 %v221, %v221
  %v286 = vmul.f32 %v222, %v222
  %v287 = vmul.f32 %v223, %v223
  %v288 = vmul.f32 %v224, %v224
  %v289 = vmul.f32 %v225, %v225
  %v290 = vmul.f32 %v226, %v226
  %v291 = vmul.f32 %v227, %v227
  %v292 = vmul.f32 %v228, %v228
  %v293 = vmul.f32 %v229, %v229
  %v294 = vmul.f32 %v230, %v230
  %v295 = vmul.f32 %v231, %v231
  %v296 = vmul.f32 %v232, %v232
  %v297 = vmul.f32 %v233, %v233
  %v298 = vmul.f32 %v234, %v234
  %v299 = vmul.f32 %v235, %v235
  %v300 = vmul.f32 %v236, %v236
  %v301 = vmul.f32 %v237, %v237
  %v302 = vmul.f32 %v238, %v238
  %v303 = vmul.f32 %v239, %v239
  %v304 = vmul.f32 %v240, %v240
  %v305 = vmul.f32 %v241, %v241
  %v306 = vmul.f32 %v242, %v242
  %v307 = vmul.f32 %v243, %v243
  %v308 = vmul.f32 %v244, %v244
  %v309 = vmul.f32 %v245, %v245
  %v310 = vmul.f32 %v246, %v246
  %v311 = vmul.f32 %v247, %v247
  %v312 = vmul.f32 %v248, %v248
  %v313 = vmul.f32 %v249, %v249
  %v314 = vmul.f32 %v250, %v250
  %v315 = vmul.f32 %v251, %v251
  %v316 = vmul.f32 %v252, %v252
  %v317 = vmul.f32 %v253, %v253
  %v318 = vmul.f32 %v254, %v254
  %v319 = vmul.f32 %v255, %v255
  %v320 = vmul.f32 %v256, %v256
  %v321 = vmul.f32 %v257, %v257
  %v322 = vmul.f32 %v258, %v258
  %v323 = vmul.f32 %v259, %v259
  %v324 = vmul.f32 %v260, %v260
  %v325 = vmul.f32 %v261, %v261
  %v326 = vmul.f32 %v262, %v262
  %v327 = vmul.f32 %v263, %v263
  %v328 = vmul.f32 %v264, %v264
  %v329 = vmul.f32 %v265, %v265
  %v330 = vmul.f32 %v266, %v266
  %v331 = vmul.f32 %v267, %v267
  %v332 = vmul.f32 %v268, %v268
  %v333 = vmul.f32 %v269, %v269
  %v334 = vmul.f32 %v270, %v270
  %v335 = vmul.f32 %v271, %v271
  %v336 = vmul.f32 %v272, %v272
  %v337 = vmul.f32 %v273, %v273
  %v338 = vmul.f32 %v274, %v274
  %v339 = vmul.f32 %v275, %v275
  %v340 = vmul.f32 %v276, %v276
  %v341 = vmul.f32 %v277, %v277
  %v342 = vmul.f32 %v278, %v278
  %v343 = vadd.f32 %v279, %v280
  %344 = vadd.xlane.f32.xlu0 %v343
  %v345 = vpop.xlane.xlu0 %344
  %v346 = vadd.f32 %v281, %v282
  %347 = vadd.xlane.f32.xlu0 %v346
  %v348 = vpop.xlane.xlu0 %347
  %v349 = vadd.f32 %v283, %v284
  %350 = vadd.xlane.f32.xlu0 %v349
  %v351 = vpop.xlane.xlu0 %350
  %v352 = vadd.f32 %v285, %v286
  %353 = vadd.xlane.f32.xlu0 %v352
  %v354 = vpop.xlane.xlu0 %353
  %v355 = vadd.f32 %v287, %v288
  %356 = vadd.xlane.f32.xlu0 %v355
  %v357 = vpop.xlane.xlu0 %356
  %v358 = vadd.f32 %v289, %v290
  %359 = vadd.xlane.f32.xlu0 %v358
  %v360 = vpop.xlane.xlu0 %359
  %v361 = vadd.f32 %v291, %v292
  %362 = vadd.xlane.f32.xlu0 %v361
  %v363 = vpop.xlane.xlu0 %362
  %v364 = vadd.f32 %v293, %v294
  %365 = vadd.xlane.f32.xlu0 %v364
  %v366 = vpop.xlane.xlu0 %365
  %v367 = vadd.f32 %v295, %v296
  %368 = vadd.xlane.f32.xlu0 %v367
  %v369 = vpop.xlane.xlu0 %368
  %v370 = vadd.f32 %v297, %v298
  %371 = vadd.xlane.f32.xlu0 %v370
  %v372 = vpop.xlane.xlu0 %371
  %v373 = vadd.f32 %v299, %v300
  %374 = vadd.xlane.f32.xlu0 %v373
  %v375 = vpop.xlane.xlu0 %374
  %v376 = vadd.f32 %v301, %v302
  %377 = vadd.xlane.f32.xlu0 %v376
  %v378 = vpop.xlane.xlu0 %377
  %v379 = vadd.f32 %v303, %v304
  %380 = vadd.xlane.f32.xlu0 %v379
  %v381 = vpop.xlane.xlu0 %380
  %v382 = vadd.f32 %v305, %v306
  %383 = vadd.xlane.f32.xlu0 %v382
  %v384 = vpop.xlane.xlu0 %383
  %v385 = vadd.f32 %v307, %v308
  %386 = vadd.xlane.f32.xlu0 %v385
  %v387 = vpop.xlane.xlu0 %386
  %v388 = vadd.f32 %v309, %v310
  %389 = vadd.xlane.f32.xlu0 %v388
  %v390 = vpop.xlane.xlu0 %389
  %v391 = vadd.f32 %v311, %v312
  %392 = vadd.xlane.f32.xlu0 %v391
  %v393 = vpop.xlane.xlu0 %392
  %v394 = vadd.f32 %v313, %v314
  %395 = vadd.xlane.f32.xlu0 %v394
  %v396 = vpop.xlane.xlu0 %395
  %v397 = vadd.f32 %v315, %v316
  %398 = vadd.xlane.f32.xlu0 %v397
  %v399 = vpop.xlane.xlu0 %398
  %v400 = vadd.f32 %v317, %v318
  %401 = vadd.xlane.f32.xlu0 %v400
  %v402 = vpop.xlane.xlu0 %401
  %v403 = vadd.f32 %v319, %v320
  %404 = vadd.xlane.f32.xlu0 %v403
  %v405 = vpop.xlane.xlu0 %404
  %v406 = vadd.f32 %v321, %v322
  %407 = vadd.xlane.f32.xlu0 %v406
  %v408 = vpop.xlane.xlu0 %407
  %v409 = vadd.f32 %v323, %v324
  %410 = vadd.xlane.f32.xlu0 %v409
  %v411 = vpop.xlane.xlu0 %410
  %v412 = vadd.f32 %v325, %v326
  %413 = vadd.xlane.f32.xlu0 %v412
  %v414 = vpop.xlane.xlu0 %413
  %v415 = vadd.f32 %v327, %v328
  %416 = vadd.xlane.f32.xlu0 %v415
  %v417 = vpop.xlane.xlu0 %416
  %v418 = vadd.f32 %v329, %v330
  %419 = vadd.xlane.f32.xlu0 %v418
  %v420 = vpop.xlane.xlu0 %419
  %v421 = vadd.f32 %v331, %v332
  %422 = vadd.xlane.f32.xlu0 %v421
  %v423 = vpop.xlane.xlu0 %422
  %v424 = vadd.f32 %v333, %v334
  %425 = vadd.xlane.f32.xlu0 %v424
  %v426 = vpop.xlane.xlu0 %425
  %v427 = vadd.f32 %v335, %v336
  %428 = vadd.xlane.f32.xlu0 %v427
  %v429 = vpop.xlane.xlu0 %428
  %v430 = vadd.f32 %v337, %v338
  %431 = vadd.xlane.f32.xlu0 %v430
  %v432 = vpop.xlane.xlu0 %431
  %v433 = vadd.f32 %v339, %v340
  %434 = vadd.xlane.f32.xlu0 %v433
  %v435 = vpop.xlane.xlu0 %434
  %v436 = vadd.f32 %v341, %v342
  %437 = vadd.xlane.f32.xlu0 %v436
  %v438 = vpop.xlane.xlu0 %437
  %v439 = vmul.f32 %v345, %v182
  %v440 = vmul.f32 %v348, %v182
  %v441 = vmul.f32 %v351, %v182
  %v442 = vmul.f32 %v354, %v182
  %v443 = vmul.f32 %v357, %v182
  %v444 = vmul.f32 %v360, %v182
  %v445 = vmul.f32 %v363, %v182
  %v446 = vmul.f32 %v366, %v182
  %v447 = vmul.f32 %v369, %v182
  %v448 = vmul.f32 %v372, %v182
  %v449 = vmul.f32 %v375, %v182
  %v450 = vmul.f32 %v378, %v182
  %v451 = vmul.f32 %v381, %v182
  %v452 = vmul.f32 %v384, %v182
  %v453 = vmul.f32 %v387, %v182
  %v454 = vmul.f32 %v390, %v182
  %v455 = vmul.f32 %v393, %v182
  %v456 = vmul.f32 %v396, %v182
  %v457 = vmul.f32 %v399, %v182
  %v458 = vmul.f32 %v402, %v182
  %v459 = vmul.f32 %v405, %v182
  %v460 = vmul.f32 %v408, %v182
  %v461 = vmul.f32 %v411, %v182
  %v462 = vmul.f32 %v414, %v182
  %v463 = vmul.f32 %v417, %v182
  %v464 = vmul.f32 %v420, %v182
  %v465 = vmul.f32 %v423, %v182
  %v466 = vmul.f32 %v426, %v182
  %v467 = vmul.f32 %v429, %v182
  %v468 = vmul.f32 %v432, %v182
  %v469 = vmul.f32 %v435, %v182
  %v470 = vmul.f32 %v438, %v182
  %v471 = vadd.f32 %v439, 1e-05
  %v472 = vadd.f32 %v440, 1e-05
  %v473 = vadd.f32 %v441, 1e-05
  %v474 = vadd.f32 %v442, 1e-05
  %v475 = vadd.f32 %v443, 1e-05
  %v476 = vadd.f32 %v444, 1e-05
  %v477 = vadd.f32 %v445, 1e-05
  %v478 = vadd.f32 %v446, 1e-05
  %v479 = vadd.f32 %v447, 1e-05
  %v480 = vadd.f32 %v448, 1e-05
  %v481 = vadd.f32 %v449, 1e-05
  %v482 = vadd.f32 %v450, 1e-05
  %v483 = vadd.f32 %v451, 1e-05
  %v484 = vadd.f32 %v452, 1e-05
  %v485 = vadd.f32 %v453, 1e-05
  %v486 = vadd.f32 %v454, 1e-05
  %v487 = vadd.f32 %v455, 1e-05
  %v488 = vadd.f32 %v456, 1e-05
  %v489 = vadd.f32 %v457, 1e-05
  %v490 = vadd.f32 %v458, 1e-05
  %v491 = vadd.f32 %v459, 1e-05
  %v492 = vadd.f32 %v460, 1e-05
  %v493 = vadd.f32 %v461, 1e-05
  %v494 = vadd.f32 %v462, 1e-05
  %v495 = vadd.f32 %v463, 1e-05
  %v496 = vadd.f32 %v464, 1e-05
  %v497 = vadd.f32 %v465, 1e-05
  %v498 = vadd.f32 %v466, 1e-05
  %v499 = vadd.f32 %v467, 1e-05
  %v500 = vadd.f32 %v468, 1e-05
  %v501 = vadd.f32 %v469, 1e-05
  %v502 = vadd.f32 %v470, 1e-05
  %v503 = vrsqrt.pop %v471
  %v504 = vrsqrt.pop %v472
  %v505 = vrsqrt.pop %v473
  %v506 = vrsqrt.pop %v474
  %v507 = vrsqrt.pop %v475
  %v508 = vrsqrt.pop %v476
  %v509 = vrsqrt.pop %v477
  %v510 = vrsqrt.pop %v478
  %v511 = vrsqrt.pop %v479
  %v512 = vrsqrt.pop %v480
  %v513 = vrsqrt.pop %v481
  %v514 = vrsqrt.pop %v482
  %v515 = vrsqrt.pop %v483
  %v516 = vrsqrt.pop %v484
  %v517 = vrsqrt.pop %v485
  %v518 = vrsqrt.pop %v486
  %v519 = vrsqrt.pop %v487
  %v520 = vrsqrt.pop %v488
  %v521 = vrsqrt.pop %v489
  %v522 = vrsqrt.pop %v490
  %v523 = vrsqrt.pop %v491
  %v524 = vrsqrt.pop %v492
  %v525 = vrsqrt.pop %v493
  %v526 = vrsqrt.pop %v494
  %v527 = vrsqrt.pop %v495
  %v528 = vrsqrt.pop %v496
  %v529 = vrsqrt.pop %v497
  %v530 = vrsqrt.pop %v498
  %v531 = vrsqrt.pop %v499
  %v532 = vrsqrt.pop %v500
  %v533 = vrsqrt.pop %v501
  %v534 = vrsqrt.pop %v502
  %v535 = vmul.f32 %v215, %v503
  %v536 = vmul.f32 %v216, %v503
  %v537 = vmul.f32 %v217, %v504
  %v538 = vmul.f32 %v218, %v504
  %v539 = vmul.f32 %v219, %v505
  %v540 = vmul.f32 %v220, %v505
  %v541 = vmul.f32 %v221, %v506
  %v542 = vmul.f32 %v222, %v506
  %v543 = vmul.f32 %v223, %v507
  %v544 = vmul.f32 %v224, %v507
  %v545 = vmul.f32 %v225, %v508
  %v546 = vmul.f32 %v226, %v508
  %v547 = vmul.f32 %v227, %v509
  %v548 = vmul.f32 %v228, %v509
  %v549 = vmul.f32 %v229, %v510
  %v550 = vmul.f32 %v230, %v510
  %v551 = vmul.f32 %v231, %v511
  %v552 = vmul.f32 %v232, %v511
  %v553 = vmul.f32 %v233, %v512
  %v554 = vmul.f32 %v234, %v512
  %v555 = vmul.f32 %v235, %v513
  %v556 = vmul.f32 %v236, %v513
  %v557 = vmul.f32 %v237, %v514
  %v558 = vmul.f32 %v238, %v514
  %v559 = vmul.f32 %v239, %v515
  %v560 = vmul.f32 %v240, %v515
  %v561 = vmul.f32 %v241, %v516
  %v562 = vmul.f32 %v242, %v516
  %v563 = vmul.f32 %v243, %v517
  %v564 = vmul.f32 %v244, %v517
  %v565 = vmul.f32 %v245, %v518
  %v566 = vmul.f32 %v246, %v518
  %v567 = vmul.f32 %v247, %v519
  %v568 = vmul.f32 %v248, %v519
  %v569 = vmul.f32 %v249, %v520
  %v570 = vmul.f32 %v250, %v520
  %v571 = vmul.f32 %v251, %v521
  %v572 = vmul.f32 %v252, %v521
  %v573 = vmul.f32 %v253, %v522
  %v574 = vmul.f32 %v254, %v522
  %v575 = vmul.f32 %v255, %v523
  %v576 = vmul.f32 %v256, %v523
  %v577 = vmul.f32 %v257, %v524
  %v578 = vmul.f32 %v258, %v524
  %v579 = vmul.f32 %v259, %v525
  %v580 = vmul.f32 %v260, %v525
  %v581 = vmul.f32 %v261, %v526
  %v582 = vmul.f32 %v262, %v526
  %v583 = vmul.f32 %v263, %v527
  %v584 = vmul.f32 %v264, %v527
  %v585 = vmul.f32 %v265, %v528
  %v586 = vmul.f32 %v266, %v528
  %v587 = vmul.f32 %v267, %v529
  %v588 = vmul.f32 %v268, %v529
  %v589 = vmul.f32 %v269, %v530
  %v590 = vmul.f32 %v270, %v530
  %v591 = vmul.f32 %v271, %v531
  %v592 = vmul.f32 %v272, %v531
  %v593 = vmul.f32 %v273, %v532
  %v594 = vmul.f32 %v274, %v532
  %v595 = vmul.f32 %v275, %v533
  %v596 = vmul.f32 %v276, %v533
  %v597 = vmul.f32 %v277, %v534
  %v598 = vmul.f32 %v278, %v534
  %v600 = vlaneseq
  %v601 = vshrl.u32 %v600, 7
  %v602 = vsub.s32 0, %v601
  %v603 = vrot.slane %v84, %v602
  %v604 = vlaneseq
  %v605 = vshrl.u32 %v604, 7
  %v606 = vsub.s32 1, %v605
  %v607 = vrot.slane %v84, %v606
  %v610 = vmul.f32 %v535, %v603
  %v611 = vmul.f32 %v536, %v607
  %v612 = vmul.f32 %v537, %v603
  %v613 = vmul.f32 %v538, %v607
  %v614 = vmul.f32 %v539, %v603
  %v615 = vmul.f32 %v540, %v607
  %v616 = vmul.f32 %v541, %v603
  %v617 = vmul.f32 %v542, %v607
  %v618 = vmul.f32 %v543, %v603
  %v619 = vmul.f32 %v544, %v607
  %v620 = vmul.f32 %v545, %v603
  %v621 = vmul.f32 %v546, %v607
  %v622 = vmul.f32 %v547, %v603
  %v623 = vmul.f32 %v548, %v607
  %v624 = vmul.f32 %v549, %v603
  %v625 = vmul.f32 %v550, %v607
  %v626 = vmul.f32 %v551, %v603
  %v627 = vmul.f32 %v552, %v607
  %v628 = vmul.f32 %v553, %v603
  %v629 = vmul.f32 %v554, %v607
  %v630 = vmul.f32 %v555, %v603
  %v631 = vmul.f32 %v556, %v607
  %v632 = vmul.f32 %v557, %v603
  %v633 = vmul.f32 %v558, %v607
  %v634 = vmul.f32 %v559, %v603
  %v635 = vmul.f32 %v560, %v607
  %v636 = vmul.f32 %v561, %v603
  %v637 = vmul.f32 %v562, %v607
  %v638 = vmul.f32 %v563, %v603
  %v639 = vmul.f32 %v564, %v607
  %v640 = vmul.f32 %v565, %v603
  %v641 = vmul.f32 %v566, %v607
  %v642 = vmul.f32 %v567, %v603
  %v643 = vmul.f32 %v568, %v607
  %v644 = vmul.f32 %v569, %v603
  %v645 = vmul.f32 %v570, %v607
  %v646 = vmul.f32 %v571, %v603
  %v647 = vmul.f32 %v572, %v607
  %v648 = vmul.f32 %v573, %v603
  %v649 = vmul.f32 %v574, %v607
  %v650 = vmul.f32 %v575, %v603
  %v651 = vmul.f32 %v576, %v607
  %v652 = vmul.f32 %v577, %v603
  %v653 = vmul.f32 %v578, %v607
  %v654 = vmul.f32 %v579, %v603
  %v655 = vmul.f32 %v580, %v607
  %v656 = vmul.f32 %v581, %v603
  %v657 = vmul.f32 %v582, %v607
  %v658 = vmul.f32 %v583, %v603
  %v659 = vmul.f32 %v584, %v607
  %v660 = vmul.f32 %v585, %v603
  %v661 = vmul.f32 %v586, %v607
  %v662 = vmul.f32 %v587, %v603
  %v663 = vmul.f32 %v588, %v607
  %v664 = vmul.f32 %v589, %v603
  %v665 = vmul.f32 %v590, %v607
  %v666 = vmul.f32 %v591, %v603
  %v667 = vmul.f32 %v592, %v607
  %v668 = vmul.f32 %v593, %v603
  %v669 = vmul.f32 %v594, %v607
  %v670 = vmul.f32 %v595, %v603
  %v671 = vmul.f32 %v596, %v607
  %v672 = vmul.f32 %v597, %v603
  %v673 = vmul.f32 %v598, %v607
  %v675 = vlaneseq
  %v676 = vshrl.u32 %v675, 7
  %v677 = vsub.s32 0, %v676
  %v678 = vrot.slane %v85, %v677
  %v679 = vlaneseq
  %v680 = vshrl.u32 %v679, 7
  %v681 = vsub.s32 1, %v680
  %v682 = vrot.slane %v85, %v681
  %v685 = vadd.f32 %v610, %v678
  %v686 = vadd.f32 %v611, %v682
  %v687 = vadd.f32 %v612, %v678
  %v688 = vadd.f32 %v613, %v682
  %v689 = vadd.f32 %v614, %v678
  %v690 = vadd.f32 %v615, %v682
  %v691 = vadd.f32 %v616, %v678
  %v692 = vadd.f32 %v617, %v682
  %v693 = vadd.f32 %v618, %v678
  %v694 = vadd.f32 %v619, %v682
  %v695 = vadd.f32 %v620, %v678
  %v696 = vadd.f32 %v621, %v682
  %v697 = vadd.f32 %v622, %v678
  %v698 = vadd.f32 %v623, %v682
  %v699 = vadd.f32 %v624, %v678
  %v700 = vadd.f32 %v625, %v682
  %v701 = vadd.f32 %v626, %v678
  %v702 = vadd.f32 %v627, %v682
  %v703 = vadd.f32 %v628, %v678
  %v704 = vadd.f32 %v629, %v682
  %v705 = vadd.f32 %v630, %v678
  %v706 = vadd.f32 %v631, %v682
  %v707 = vadd.f32 %v632, %v678
  %v708 = vadd.f32 %v633, %v682
  %v709 = vadd.f32 %v634, %v678
  %v710 = vadd.f32 %v635, %v682
  %v711 = vadd.f32 %v636, %v678
  %v712 = vadd.f32 %v637, %v682
  %v713 = vadd.f32 %v638, %v678
  %v714 = vadd.f32 %v639, %v682
  %v715 = vadd.f32 %v640, %v678
  %v716 = vadd.f32 %v641, %v682
  %v717 = vadd.f32 %v642, %v678
  %v718 = vadd.f32 %v643, %v682
  %v719 = vadd.f32 %v644, %v678
  %v720 = vadd.f32 %v645, %v682
  %v721 = vadd.f32 %v646, %v678
  %v722 = vadd.f32 %v647, %v682
  %v723 = vadd.f32 %v648, %v678
  %v724 = vadd.f32 %v649, %v682
  %v725 = vadd.f32 %v650, %v678
  %v726 = vadd.f32 %v651, %v682
  %v727 = vadd.f32 %v652, %v678
  %v728 = vadd.f32 %v653, %v682
  %v729 = vadd.f32 %v654, %v678
  %v730 = vadd.f32 %v655, %v682
  %v731 = vadd.f32 %v656, %v678
  %v732 = vadd.f32 %v657, %v682
  %v733 = vadd.f32 %v658, %v678
  %v734 = vadd.f32 %v659, %v682
  %v735 = vadd.f32 %v660, %v678
  %v736 = vadd.f32 %v661, %v682
  %v737 = vadd.f32 %v662, %v678
  %v738 = vadd.f32 %v663, %v682
  %v739 = vadd.f32 %v664, %v678
  %v740 = vadd.f32 %v665, %v682
  %v741 = vadd.f32 %v666, %v678
  %v742 = vadd.f32 %v667, %v682
  %v743 = vadd.f32 %v668, %v678
  %v744 = vadd.f32 %v669, %v682
  %v745 = vadd.f32 %v670, %v678
  %v746 = vadd.f32 %v671, %v682
  %v747 = vadd.f32 %v672, %v678
  %v748 = vadd.f32 %v673, %v682
  %v749 = vpack.c.bf16 %v687, %v685
  %v750 = vpack.c.bf16 %v688, %v686
  %v751 = vpack.c.bf16 %v691, %v689
  %v752 = vpack.c.bf16 %v692, %v690
  %v753 = vpack.c.bf16 %v695, %v693
  %v754 = vpack.c.bf16 %v696, %v694
  %v755 = vpack.c.bf16 %v699, %v697
  %v756 = vpack.c.bf16 %v700, %v698
  %v757 = vpack.c.bf16 %v703, %v701
  %v758 = vpack.c.bf16 %v704, %v702
  %v759 = vpack.c.bf16 %v707, %v705
  %v760 = vpack.c.bf16 %v708, %v706
  %v761 = vpack.c.bf16 %v711, %v709
  %v762 = vpack.c.bf16 %v712, %v710
  %v763 = vpack.c.bf16 %v715, %v713
  %v764 = vpack.c.bf16 %v716, %v714
  %v765 = vpack.c.bf16 %v719, %v717
  %v766 = vpack.c.bf16 %v720, %v718
  %v767 = vpack.c.bf16 %v723, %v721
  %v768 = vpack.c.bf16 %v724, %v722
  %v769 = vpack.c.bf16 %v727, %v725
  %v770 = vpack.c.bf16 %v728, %v726
  %v771 = vpack.c.bf16 %v731, %v729
  %v772 = vpack.c.bf16 %v732, %v730
  %v773 = vpack.c.bf16 %v735, %v733
  %v774 = vpack.c.bf16 %v736, %v734
  %v775 = vpack.c.bf16 %v739, %v737
  %v776 = vpack.c.bf16 %v740, %v738
  %v777 = vpack.c.bf16 %v743, %v741
  %v778 = vpack.c.bf16 %v744, %v742
  %v779 = vpack.c.bf16 %v747, %v745
  %v780 = vpack.c.bf16 %v748, %v746
  %v781 = vld [vmem:[%s1] sm:$0xff]
  %v782 = vld [vmem:[%s1 + $0x8] sm:$0xff]
  %v783 = vld [vmem:[%s1 + $0x10] sm:$0xff]
  %v784 = vld [vmem:[%s1 + $0x18] sm:$0xff]
  %v785 = vld [vmem:[%s1 + $0x20] sm:$0xff]
  %v786 = vld [vmem:[%s1 + $0x28] sm:$0xff]
  %v787 = vld [vmem:[%s1 + $0x30] sm:$0xff]
  %v788 = vld [vmem:[%s1 + $0x38] sm:$0xff]
  %v789 = vld [vmem:[%s1 + $0x40] sm:$0xff]
  %v790 = vld [vmem:[%s1 + $0x48] sm:$0xff]
  %v791 = vld [vmem:[%s1 + $0x50] sm:$0xff]
  %v792 = vld [vmem:[%s1 + $0x58] sm:$0xff]
  %v793 = vld [vmem:[%s1 + $0x60] sm:$0xff]
  %v794 = vld [vmem:[%s1 + $0x68] sm:$0xff]
  %v795 = vld [vmem:[%s1 + $0x70] sm:$0xff]
  %v796 = vld [vmem:[%s1 + $0x78] sm:$0xff]
  %v797 = vld [vmem:[%s1 + $0x80] sm:$0xff]
  %v798 = vld [vmem:[%s1 + $0x88] sm:$0xff]
  %v799 = vld [vmem:[%s1 + $0x90] sm:$0xff]
  %v800 = vld [vmem:[%s1 + $0x98] sm:$0xff]
  %v801 = vld [vmem:[%s1 + $0xa0] sm:$0xff]
  %v802 = vld [vmem:[%s1 + $0xa8] sm:$0xff]
  %v803 = vld [vmem:[%s1 + $0xb0] sm:$0xff]
  %v804 = vld [vmem:[%s1 + $0xb8] sm:$0xff]
  %v805 = vld [vmem:[%s1 + $0xc0] sm:$0xff]
  %v806 = vld [vmem:[%s1 + $0xc8] sm:$0xff]
  %v807 = vld [vmem:[%s1 + $0xd0] sm:$0xff]
  %v808 = vld [vmem:[%s1 + $0xd8] sm:$0xff]
  %v809 = vld [vmem:[%s1 + $0xe0] sm:$0xff]
  %v810 = vld [vmem:[%s1 + $0xe8] sm:$0xff]
  %v811 = vld [vmem:[%s1 + $0xf0] sm:$0xff]
  %v812 = vld [vmem:[%s1 + $0xf8] sm:$0xff]
  %v813 = vld [vmem:[%s1 + $0x100] sm:$0xff]
  %v814 = vld [vmem:[%s1 + $0x108] sm:$0xff]
  %v815 = vld [vmem:[%s1 + $0x110] sm:$0xff]
  %v816 = vld [vmem:[%s1 + $0x118] sm:$0xff]
  %v817 = vld [vmem:[%s1 + $0x120] sm:$0xff]
  %v818 = vld [vmem:[%s1 + $0x128] sm:$0xff]
  %v819 = vld [vmem:[%s1 + $0x130] sm:$0xff]
  %v820 = vld [vmem:[%s1 + $0x138] sm:$0xff]
  %v821 = vld [vmem:[%s1 + $0x140] sm:$0xff]
  %v822 = vld [vmem:[%s1 + $0x148] sm:$0xff]
  %v823 = vld [vmem:[%s1 + $0x150] sm:$0xff]
  %v824 = vld [vmem:[%s1 + $0x158] sm:$0xff]
  %v825 = vld [vmem:[%s1 + $0x160] sm:$0xff]
  %v826 = vld [vmem:[%s1 + $0x168] sm:$0xff]
  %v827 = vld [vmem:[%s1 + $0x170] sm:$0xff]
  %v828 = vld [vmem:[%s1 + $0x178] sm:$0xff]
  %v829 = vld [vmem:[%s1 + $0x180] sm:$0xff]
  %v830 = vld [vmem:[%s1 + $0x188] sm:$0xff]
  %v831 = vld [vmem:[%s1 + $0x190] sm:$0xff]
  %v832 = vld [vmem:[%s1 + $0x198] sm:$0xff]
  %v833 = vld [vmem:[%s1 + $0x1a0] sm:$0xff]
  %v834 = vld [vmem:[%s1 + $0x1a8] sm:$0xff]
  %v835 = vld [vmem:[%s1 + $0x1b0] sm:$0xff]
  %v836 = vld [vmem:[%s1 + $0x1b8] sm:$0xff]
  %v837 = vld [vmem:[%s1 + $0x1c0] sm:$0xff]
  %v838 = vld [vmem:[%s1 + $0x1c8] sm:$0xff]
  %v839 = vld [vmem:[%s1 + $0x1d0] sm:$0xff]
  %v840 = vld [vmem:[%s1 + $0x1d8] sm:$0xff]
  %v841 = vld [vmem:[%s1 + $0x1e0] sm:$0xff]
  %v842 = vld [vmem:[%s1 + $0x1e8] sm:$0xff]
  %v843 = vld [vmem:[%s1 + $0x1f0] sm:$0xff]
  %v844 = vld [vmem:[%s1 + $0x1f8] sm:$0xff]
  %v845 = vld [vmem:[%s1 + $0x200] sm:$0xff]
  %v846 = vld [vmem:[%s1 + $0x208] sm:$0xff]
  %v847 = vld [vmem:[%s1 + $0x210] sm:$0xff]
  %v848 = vld [vmem:[%s1 + $0x218] sm:$0xff]
  %v849 = vld [vmem:[%s1 + $0x220] sm:$0xff]
  %v850 = vld [vmem:[%s1 + $0x228] sm:$0xff]
  %v851 = vld [vmem:[%s1 + $0x230] sm:$0xff]
  %v852 = vld [vmem:[%s1 + $0x238] sm:$0xff]
  %v853 = vld [vmem:[%s1 + $0x240] sm:$0xff]
  %v854 = vld [vmem:[%s1 + $0x248] sm:$0xff]
  %v855 = vld [vmem:[%s1 + $0x250] sm:$0xff]
  %v856 = vld [vmem:[%s1 + $0x258] sm:$0xff]
  %v857 = vld [vmem:[%s1 + $0x260] sm:$0xff]
  %v858 = vld [vmem:[%s1 + $0x268] sm:$0xff]
  %v859 = vld [vmem:[%s1 + $0x270] sm:$0xff]
  %v860 = vld [vmem:[%s1 + $0x278] sm:$0xff]
  %v861 = vld [vmem:[%s1 + $0x280] sm:$0xff]
  %v862 = vld [vmem:[%s1 + $0x288] sm:$0xff]
  %v863 = vld [vmem:[%s1 + $0x290] sm:$0xff]
  %v864 = vld [vmem:[%s1 + $0x298] sm:$0xff]
  %v865 = vld [vmem:[%s1 + $0x2a0] sm:$0xff]
  %v866 = vld [vmem:[%s1 + $0x2a8] sm:$0xff]
  %v867 = vld [vmem:[%s1 + $0x2b0] sm:$0xff]
  %v868 = vld [vmem:[%s1 + $0x2b8] sm:$0xff]
  %v869 = vld [vmem:[%s1 + $0x2c0] sm:$0xff]
  %v870 = vld [vmem:[%s1 + $0x2c8] sm:$0xff]
  %v871 = vld [vmem:[%s1 + $0x2d0] sm:$0xff]
  %v872 = vld [vmem:[%s1 + $0x2d8] sm:$0xff]
  %v873 = vld [vmem:[%s1 + $0x2e0] sm:$0xff]
  %v874 = vld [vmem:[%s1 + $0x2e8] sm:$0xff]
  %v875 = vld [vmem:[%s1 + $0x2f0] sm:$0xff]
  %v876 = vld [vmem:[%s1 + $0x2f8] sm:$0xff]
  %v877 = vld [vmem:[%s2] sm:$0x3f]
  %v879 = vlaneseq
  %v880 = vshrl.u32 %v879, 7
  %v881 = vsub.s32 0, %v880
  %v882 = vrot.slane %v877, %v881
  %v883 = vlaneseq
  %v884 = vshrl.u32 %v883, 7
  %v885 = vsub.s32 1, %v884
  %v886 = vrot.slane %v877, %v885
  %v887 = vlaneseq
  %v888 = vshrl.u32 %v887, 7
  %v889 = vsub.s32 2, %v888
  %v890 = vrot.slane %v877, %v889
  %v891 = vlaneseq
  %v892 = vshrl.u32 %v891, 7
  %v893 = vsub.s32 3, %v892
  %v894 = vrot.slane %v877, %v893
  %v895 = vlaneseq
  %v896 = vshrl.u32 %v895, 7
  %v897 = vsub.s32 4, %v896
  %v898 = vrot.slane %v877, %v897
  %v899 = vlaneseq
  %v900 = vshrl.u32 %v899, 7
  %v901 = vsub.s32 5, %v900
  %v902 = vrot.slane %v877, %v901
  %v1005 = vunpack.c.l.b16 %v781
  %v1006 = vunpack.c.h.b16 %v781
  %v1007 = vunpack.c.l.b16 %v782
  %v1008 = vunpack.c.h.b16 %v782
  %v1009 = vunpack.c.l.b16 %v783
  %v1010 = vunpack.c.h.b16 %v783
  %v1011 = vunpack.c.l.b16 %v784
  %v1012 = vunpack.c.h.b16 %v784
  %v1013 = vunpack.c.l.b16 %v785
  %v1014 = vunpack.c.h.b16 %v785
  %v1015 = vunpack.c.l.b16 %v786
  %v1016 = vunpack.c.h.b16 %v786
  %v1017 = vunpack.c.l.b16 %v787
  %v1018 = vunpack.c.h.b16 %v787
  %v1019 = vunpack.c.l.b16 %v788
  %v1020 = vunpack.c.h.b16 %v788
  %v1021 = vunpack.c.l.b16 %v789
  %v1022 = vunpack.c.h.b16 %v789
  %v1023 = vunpack.c.l.b16 %v790
  %v1024 = vunpack.c.h.b16 %v790
  %v1025 = vunpack.c.l.b16 %v791
  %v1026 = vunpack.c.h.b16 %v791
  %v1027 = vunpack.c.l.b16 %v792
  %v1028 = vunpack.c.h.b16 %v792
  %v1029 = vunpack.c.l.b16 %v793
  %v1030 = vunpack.c.h.b16 %v793
  %v1031 = vunpack.c.l.b16 %v794
  %v1032 = vunpack.c.h.b16 %v794
  %v1033 = vunpack.c.l.b16 %v795
  %v1034 = vunpack.c.h.b16 %v795
  %v1035 = vunpack.c.l.b16 %v796
  %v1036 = vunpack.c.h.b16 %v796
  %v1037 = vunpack.c.l.b16 %v797
  %v1038 = vunpack.c.h.b16 %v797
  %v1039 = vunpack.c.l.b16 %v798
  %v1040 = vunpack.c.h.b16 %v798
  %v1041 = vunpack.c.l.b16 %v799
  %v1042 = vunpack.c.h.b16 %v799
  %v1043 = vunpack.c.l.b16 %v800
  %v1044 = vunpack.c.h.b16 %v800
  %v1045 = vunpack.c.l.b16 %v801
  %v1046 = vunpack.c.h.b16 %v801
  %v1047 = vunpack.c.l.b16 %v802
  %v1048 = vunpack.c.h.b16 %v802
  %v1049 = vunpack.c.l.b16 %v803
  %v1050 = vunpack.c.h.b16 %v803
  %v1051 = vunpack.c.l.b16 %v804
  %v1052 = vunpack.c.h.b16 %v804
  %v1053 = vunpack.c.l.b16 %v805
  %v1054 = vunpack.c.h.b16 %v805
  %v1055 = vunpack.c.l.b16 %v806
  %v1056 = vunpack.c.h.b16 %v806
  %v1057 = vunpack.c.l.b16 %v807
  %v1058 = vunpack.c.h.b16 %v807
  %v1059 = vunpack.c.l.b16 %v808
  %v1060 = vunpack.c.h.b16 %v808
  %v1061 = vunpack.c.l.b16 %v809
  %v1062 = vunpack.c.h.b16 %v809
  %v1063 = vunpack.c.l.b16 %v810
  %v1064 = vunpack.c.h.b16 %v810
  %v1065 = vunpack.c.l.b16 %v811
  %v1066 = vunpack.c.h.b16 %v811
  %v1067 = vunpack.c.l.b16 %v812
  %v1068 = vunpack.c.h.b16 %v812
  %v1069 = vunpack.c.l.b16 %v813
  %v1070 = vunpack.c.h.b16 %v813
  %v1071 = vunpack.c.l.b16 %v814
  %v1072 = vunpack.c.h.b16 %v814
  %v1073 = vunpack.c.l.b16 %v815
  %v1074 = vunpack.c.h.b16 %v815
  %v1075 = vunpack.c.l.b16 %v816
  %v1076 = vunpack.c.h.b16 %v816
  %v1077 = vunpack.c.l.b16 %v817
  %v1078 = vunpack.c.h.b16 %v817
  %v1079 = vunpack.c.l.b16 %v818
  %v1080 = vunpack.c.h.b16 %v818
  %v1081 = vunpack.c.l.b16 %v819
  %v1082 = vunpack.c.h.b16 %v819
  %v1083 = vunpack.c.l.b16 %v820
  %v1084 = vunpack.c.h.b16 %v820
  %v1085 = vunpack.c.l.b16 %v821
  %v1086 = vunpack.c.h.b16 %v821
  %v1087 = vunpack.c.l.b16 %v822
  %v1088 = vunpack.c.h.b16 %v822
  %v1089 = vunpack.c.l.b16 %v823
  %v1090 = vunpack.c.h.b16 %v823
  %v1091 = vunpack.c.l.b16 %v824
  %v1092 = vunpack.c.h.b16 %v824
  %v1093 = vunpack.c.l.b16 %v825
  %v1094 = vunpack.c.h.b16 %v825
  %v1095 = vunpack.c.l.b16 %v826
  %v1096 = vunpack.c.h.b16 %v826
  %v1097 = vunpack.c.l.b16 %v827
  %v1098 = vunpack.c.h.b16 %v827
  %v1099 = vunpack.c.l.b16 %v828
  %v1100 = vunpack.c.h.b16 %v828
  %v1101 = vunpack.c.l.b16 %v829
  %v1102 = vunpack.c.h.b16 %v829
  %v1103 = vunpack.c.l.b16 %v830
  %v1104 = vunpack.c.h.b16 %v830
  %v1105 = vunpack.c.l.b16 %v831
  %v1106 = vunpack.c.h.b16 %v831
  %v1107 = vunpack.c.l.b16 %v832
  %v1108 = vunpack.c.h.b16 %v832
  %v1109 = vunpack.c.l.b16 %v833
  %v1110 = vunpack.c.h.b16 %v833
  %v1111 = vunpack.c.l.b16 %v834
  %v1112 = vunpack.c.h.b16 %v834
  %v1113 = vunpack.c.l.b16 %v835
  %v1114 = vunpack.c.h.b16 %v835
  %v1115 = vunpack.c.l.b16 %v836
  %v1116 = vunpack.c.h.b16 %v836
  %v1117 = vunpack.c.l.b16 %v837
  %v1118 = vunpack.c.h.b16 %v837
  %v1119 = vunpack.c.l.b16 %v838
  %v1120 = vunpack.c.h.b16 %v838
  %v1121 = vunpack.c.l.b16 %v839
  %v1122 = vunpack.c.h.b16 %v839
  %v1123 = vunpack.c.l.b16 %v840
  %v1124 = vunpack.c.h.b16 %v840
  %v1125 = vunpack.c.l.b16 %v841
  %v1126 = vunpack.c.h.b16 %v841
  %v1127 = vunpack.c.l.b16 %v842
  %v1128 = vunpack.c.h.b16 %v842
  %v1129 = vunpack.c.l.b16 %v843
  %v1130 = vunpack.c.h.b16 %v843
  %v1131 = vunpack.c.l.b16 %v844
  %v1132 = vunpack.c.h.b16 %v844
  %v1133 = vunpack.c.l.b16 %v845
  %v1134 = vunpack.c.h.b16 %v845
  %v1135 = vunpack.c.l.b16 %v846
  %v1136 = vunpack.c.h.b16 %v846
  %v1137 = vunpack.c.l.b16 %v847
  %v1138 = vunpack.c.h.b16 %v847
  %v1139 = vunpack.c.l.b16 %v848
  %v1140 = vunpack.c.h.b16 %v848
  %v1141 = vunpack.c.l.b16 %v849
  %v1142 = vunpack.c.h.b16 %v849
  %v1143 = vunpack.c.l.b16 %v850
  %v1144 = vunpack.c.h.b16 %v850
  %v1145 = vunpack.c.l.b16 %v851
  %v1146 = vunpack.c.h.b16 %v851
  %v1147 = vunpack.c.l.b16 %v852
  %v1148 = vunpack.c.h.b16 %v852
  %v1149 = vunpack.c.l.b16 %v853
  %v1150 = vunpack.c.h.b16 %v853
  %v1151 = vunpack.c.l.b16 %v854
  %v1152 = vunpack.c.h.b16 %v854
  %v1153 = vunpack.c.l.b16 %v855
  %v1154 = vunpack.c.h.b16 %v855
  %v1155 = vunpack.c.l.b16 %v856
  %v1156 = vunpack.c.h.b16 %v856
  %v1157 = vunpack.c.l.b16 %v857
  %v1158 = vunpack.c.h.b16 %v857
  %v1159 = vunpack.c.l.b16 %v858
  %v1160 = vunpack.c.h.b16 %v858
  %v1161 = vunpack.c.l.b16 %v859
  %v1162 = vunpack.c.h.b16 %v859
  %v1163 = vunpack.c.l.b16 %v860
  %v1164 = vunpack.c.h.b16 %v860
  %v1165 = vunpack.c.l.b16 %v861
  %v1166 = vunpack.c.h.b16 %v861
  %v1167 = vunpack.c.l.b16 %v862
  %v1168 = vunpack.c.h.b16 %v862
  %v1169 = vunpack.c.l.b16 %v863
  %v1170 = vunpack.c.h.b16 %v863
  %v1171 = vunpack.c.l.b16 %v864
  %v1172 = vunpack.c.h.b16 %v864
  %v1173 = vunpack.c.l.b16 %v865
  %v1174 = vunpack.c.h.b16 %v865
  %v1175 = vunpack.c.l.b16 %v866
  %v1176 = vunpack.c.h.b16 %v866
  %v1177 = vunpack.c.l.b16 %v867
  %v1178 = vunpack.c.h.b16 %v867
  %v1179 = vunpack.c.l.b16 %v868
  %v1180 = vunpack.c.h.b16 %v868
  %v1181 = vunpack.c.l.b16 %v869
  %v1182 = vunpack.c.h.b16 %v869
  %v1183 = vunpack.c.l.b16 %v870
  %v1184 = vunpack.c.h.b16 %v870
  %v1185 = vunpack.c.l.b16 %v871
  %v1186 = vunpack.c.h.b16 %v871
  %v1187 = vunpack.c.l.b16 %v872
  %v1188 = vunpack.c.h.b16 %v872
  %v1189 = vunpack.c.l.b16 %v873
  %v1190 = vunpack.c.h.b16 %v873
  %v1191 = vunpack.c.l.b16 %v874
  %v1192 = vunpack.c.h.b16 %v874
  %v1193 = vunpack.c.l.b16 %v875
  %v1194 = vunpack.c.h.b16 %v875
  %v1195 = vunpack.c.l.b16 %v876
  %v1196 = vunpack.c.h.b16 %v876
  %v1197 = vpack.c.b16 %v1011, %v1005
  %v1198 = vpack.c.b16 %v1012, %v1006
  %v1199 = vpack.c.b16 %v1013, %v1007
  %v1200 = vpack.c.b16 %v1014, %v1008
  %v1201 = vpack.c.b16 %v1015, %v1009
  %v1202 = vpack.c.b16 %v1016, %v1010
  %v1203 = vpack.c.b16 %v1023, %v1017
  %v1204 = vpack.c.b16 %v1024, %v1018
  %v1205 = vpack.c.b16 %v1025, %v1019
  %v1206 = vpack.c.b16 %v1026, %v1020
  %v1207 = vpack.c.b16 %v1027, %v1021
  %v1208 = vpack.c.b16 %v1028, %v1022
  %v1209 = vpack.c.b16 %v1035, %v1029
  %v1210 = vpack.c.b16 %v1036, %v1030
  %v1211 = vpack.c.b16 %v1037, %v1031
  %v1212 = vpack.c.b16 %v1038, %v1032
  %v1213 = vpack.c.b16 %v1039, %v1033
  %v1214 = vpack.c.b16 %v1040, %v1034
  %v1215 = vpack.c.b16 %v1047, %v1041
  %v1216 = vpack.c.b16 %v1048, %v1042
  %v1217 = vpack.c.b16 %v1049, %v1043
  %v1218 = vpack.c.b16 %v1050, %v1044
  %v1219 = vpack.c.b16 %v1051, %v1045
  %v1220 = vpack.c.b16 %v1052, %v1046
  %v1221 = vpack.c.b16 %v1059, %v1053
  %v1222 = vpack.c.b16 %v1060, %v1054
  %v1223 = vpack.c.b16 %v1061, %v1055
  %v1224 = vpack.c.b16 %v1062, %v1056
  %v1225 = vpack.c.b16 %v1063, %v1057
  %v1226 = vpack.c.b16 %v1064, %v1058
  %v1227 = vpack.c.b16 %v1071, %v1065
  %v1228 = vpack.c.b16 %v1072, %v1066
  %v1229 = vpack.c.b16 %v1073, %v1067
  %v1230 = vpack.c.b16 %v1074, %v1068
  %v1231 = vpack.c.b16 %v1075, %v1069
  %v1232 = vpack.c.b16 %v1076, %v1070
  %v1233 = vpack.c.b16 %v1083, %v1077
  %v1234 = vpack.c.b16 %v1084, %v1078
  %v1235 = vpack.c.b16 %v1085, %v1079
  %v1236 = vpack.c.b16 %v1086, %v1080
  %v1237 = vpack.c.b16 %v1087, %v1081
  %v1238 = vpack.c.b16 %v1088, %v1082
  %v1239 = vpack.c.b16 %v1095, %v1089
  %v1240 = vpack.c.b16 %v1096, %v1090
  %v1241 = vpack.c.b16 %v1097, %v1091
  %v1242 = vpack.c.b16 %v1098, %v1092
  %v1243 = vpack.c.b16 %v1099, %v1093
  %v1244 = vpack.c.b16 %v1100, %v1094
  %v1245 = vpack.c.b16 %v1107, %v1101
  %v1246 = vpack.c.b16 %v1108, %v1102
  %v1247 = vpack.c.b16 %v1109, %v1103
  %v1248 = vpack.c.b16 %v1110, %v1104
  %v1249 = vpack.c.b16 %v1111, %v1105
  %v1250 = vpack.c.b16 %v1112, %v1106
  %v1251 = vpack.c.b16 %v1119, %v1113
  %v1252 = vpack.c.b16 %v1120, %v1114
  %v1253 = vpack.c.b16 %v1121, %v1115
  %v1254 = vpack.c.b16 %v1122, %v1116
  %v1255 = vpack.c.b16 %v1123, %v1117
  %v1256 = vpack.c.b16 %v1124, %v1118
  %v1257 = vpack.c.b16 %v1131, %v1125
  %v1258 = vpack.c.b16 %v1132, %v1126
  %v1259 = vpack.c.b16 %v1133, %v1127
  %v1260 = vpack.c.b16 %v1134, %v1128
  %v1261 = vpack.c.b16 %v1135, %v1129
  %v1262 = vpack.c.b16 %v1136, %v1130
  %v1263 = vpack.c.b16 %v1143, %v1137
  %v1264 = vpack.c.b16 %v1144, %v1138
  %v1265 = vpack.c.b16 %v1145, %v1139
  %v1266 = vpack.c.b16 %v1146, %v1140
  %v1267 = vpack.c.b16 %v1147, %v1141
  %v1268 = vpack.c.b16 %v1148, %v1142
  %v1269 = vpack.c.b16 %v1155, %v1149
  %v1270 = vpack.c.b16 %v1156, %v1150
  %v1271 = vpack.c.b16 %v1157, %v1151
  %v1272 = vpack.c.b16 %v1158, %v1152
  %v1273 = vpack.c.b16 %v1159, %v1153
  %v1274 = vpack.c.b16 %v1160, %v1154
  %v1275 = vpack.c.b16 %v1167, %v1161
  %v1276 = vpack.c.b16 %v1168, %v1162
  %v1277 = vpack.c.b16 %v1169, %v1163
  %v1278 = vpack.c.b16 %v1170, %v1164
  %v1279 = vpack.c.b16 %v1171, %v1165
  %v1280 = vpack.c.b16 %v1172, %v1166
  %v1281 = vpack.c.b16 %v1179, %v1173
  %v1282 = vpack.c.b16 %v1180, %v1174
  %v1283 = vpack.c.b16 %v1181, %v1175
  %v1284 = vpack.c.b16 %v1182, %v1176
  %v1285 = vpack.c.b16 %v1183, %v1177
  %v1286 = vpack.c.b16 %v1184, %v1178
  %v1287 = vpack.c.b16 %v1191, %v1185
  %v1288 = vpack.c.b16 %v1192, %v1186
  %v1289 = vpack.c.b16 %v1193, %v1187
  %v1290 = vpack.c.b16 %v1194, %v1188
  %v1291 = vpack.c.b16 %v1195, %v1189
  %v1292 = vpack.c.b16 %v1196, %v1190
  %1389 = vmatprep.subr.bf16.mxu0 %v1198
  %1390 = vmatpush1.bf16.msra.mxu0 %v1197
  %1391 = vmatprep.subr.bf16.mxu0 %v1204
  %1392 = vmatpush1.bf16.msra.mxu0 %v1203
  %1393 = vmatprep.subr.bf16.mxu0 %v1210
  %1394 = vmatpush1.bf16.msra.mxu0 %v1209
  %1395 = vmatprep.subr.bf16.mxu0 %v1216
  %1396 = vmatpush1.bf16.msra.mxu0 %v1215
  %1397 = vmatprep.subr.bf16.mxu0 %v1222
  %1398 = vmatpush1.bf16.msra.mxu0 %v1221
  %1399 = vmatprep.subr.bf16.mxu0 %v1228
  %1400 = vmatpush1.bf16.msra.mxu0 %v1227
  %1401 = vmatprep.subr.bf16.mxu0 %v1234
  %1402 = vmatpush1.bf16.msra.mxu0 %v1233
  %1403 = vmatprep.subr.bf16.mxu0 %v1240
  %1404 = vmatpush1.bf16.msra.mxu0 %v1239
  %1405 = vmatprep.subr.bf16.mxu0 %v1246
  %1406 = vmatpush1.bf16.msra.mxu0 %v1245
  %1407 = vmatprep.subr.bf16.mxu0 %v1252
  %1408 = vmatpush1.bf16.msra.mxu0 %v1251
  %1409 = vmatprep.subr.bf16.mxu0 %v1258
  %1410 = vmatpush1.bf16.msra.mxu0 %v1257
  %1411 = vmatprep.subr.bf16.mxu0 %v1264
  %1412 = vmatpush1.bf16.msra.mxu0 %v1263
  %1413 = vmatprep.subr.bf16.mxu0 %v1270
  %1414 = vmatpush1.bf16.msra.mxu0 %v1269
  %1415 = vmatprep.subr.bf16.mxu0 %v1276
  %1416 = vmatpush1.bf16.msra.mxu0 %v1275
  %1417 = vmatprep.subr.bf16.mxu0 %v1282
  %1418 = vmatpush1.bf16.msra.mxu0 %v1281
  %1419 = vmatprep.subr.bf16.mxu0 %v1288
  %1420 = vmatpush1.bf16.msra.mxu0 %v1287
  %1421 = vmatprep.mubr.bf16.mxu0 %v750
  %1422 = vmatmul.mubr.bf16.gmra.mrb[0].mxu0 %v749
  %v1423 = vpop.f32.mrb[0].mxu0
  %v1424 = vadd.f32 %v882, %v1423
  %v1425 = vpop.f32.mrb[0].mxu0
  %v1426 = vadd.f32 %v886, %v1425
  %v1427 = vpop.f32.mrb[0].mxu0
  %v1428 = vadd.f32 %v882, %v1427
  %v1429 = vpop.f32.mrb[0].mxu0
  %v1430 = vadd.f32 %v886, %v1429
  %1431 = vmatprep.mubr.bf16.mxu0 %v752
  %1432 = vmatmul.mubr.bf16.gmra.mrb[0].mxu0 %v751
  %v1433 = vpop.f32.mrb[0].mxu0
  %v1434 = vadd.f32 %v882, %v1433
  %v1435 = vpop.f32.mrb[0].mxu0
  %v1436 = vadd.f32 %v886, %v1435
  %v1437 = vpop.f32.mrb[0].mxu0
  %v1438 = vadd.f32 %v882, %v1437
  %v1439 = vpop.f32.mrb[0].mxu0
  %v1440 = vadd.f32 %v886, %v1439
  %1441 = vmatprep.mubr.bf16.mxu0 %v754
  %1442 = vmatmul.mubr.bf16.gmra.mrb[0].mxu0 %v753
  %v1443 = vpop.f32.mrb[0].mxu0
  %v1444 = vadd.f32 %v882, %v1443
  %v1445 = vpop.f32.mrb[0].mxu0
  %v1446 = vadd.f32 %v886, %v1445
  %v1447 = vpop.f32.mrb[0].mxu0
  %v1448 = vadd.f32 %v882, %v1447
  %v1449 = vpop.f32.mrb[0].mxu0
  %v1450 = vadd.f32 %v886, %v1449
  %1451 = vmatprep.mubr.bf16.mxu0 %v756
  %1452 = vmatmul.mubr.bf16.gmra.mrb[0].mxu0 %v755
  %v1453 = vpop.f32.mrb[0].mxu0
  %v1454 = vadd.f32 %v882, %v1453
  %v1455 = vpop.f32.mrb[0].mxu0
  %v1456 = vadd.f32 %v886, %v1455
  %v1457 = vpop.f32.mrb[0].mxu0
  %v1458 = vadd.f32 %v882, %v1457
  %v1459 = vpop.f32.mrb[0].mxu0
  %v1460 = vadd.f32 %v886, %v1459
  %1461 = vmatprep.mubr.bf16.mxu0 %v758
  %1462 = vmatmul.mubr.bf16.gmra.mrb[0].mxu0 %v757
  %v1463 = vpop.f32.mrb[0].mxu0
  %v1464 = vadd.f32 %v882, %v1463
  %v1465 = vpop.f32.mrb[0].mxu0
  %v1466 = vadd.f32 %v886, %v1465
  %v1467 = vpop.f32.mrb[0].mxu0
  %v1468 = vadd.f32 %v882, %v1467
  %v1469 = vpop.f32.mrb[0].mxu0
  %v1470 = vadd.f32 %v886, %v1469
  %1471 = vmatprep.mubr.bf16.mxu0 %v760
  %1472 = vmatmul.mubr.bf16.gmra.mrb[0].mxu0 %v759
  %v1473 = vpop.f32.mrb[0].mxu0
  %v1474 = vadd.f32 %v882, %v1473
  %v1475 = vpop.f32.mrb[0].mxu0
  %v1476 = vadd.f32 %v886, %v1475
  %v1477 = vpop.f32.mrb[0].mxu0
  %v1478 = vadd.f32 %v882, %v1477
  %v1479 = vpop.f32.mrb[0].mxu0
  %v1480 = vadd.f32 %v886, %v1479
  %1481 = vmatprep.mubr.bf16.mxu0 %v762
  %1482 = vmatmul.mubr.bf16.gmra.mrb[0].mxu0 %v761
  %v1483 = vpop.f32.mrb[0].mxu0
  %v1484 = vadd.f32 %v882, %v1483
  %v1485 = vpop.f32.mrb[0].mxu0
  %v1486 = vadd.f32 %v886, %v1485
  %v1487 = vpop.f32.mrb[0].mxu0
  %v1488 = vadd.f32 %v882, %v1487
  %v1489 = vpop.f32.mrb[0].mxu0
  %v1490 = vadd.f32 %v886, %v1489
  %1491 = vmatprep.mubr.bf16.mxu0 %v764
  %1492 = vmatmul.mubr.bf16.gmra.mrb[0].mxu0 %v763
  %v1493 = vpop.f32.mrb[0].mxu0
  %v1494 = vadd.f32 %v882, %v1493
  %v1495 = vpop.f32.mrb[0].mxu0
  %v1496 = vadd.f32 %v886, %v1495
  %v1497 = vpop.f32.mrb[0].mxu0
  %v1498 = vadd.f32 %v882, %v1497
  %v1499 = vpop.f32.mrb[0].mxu0
  %v1500 = vadd.f32 %v886, %v1499
  %1501 = vmatprep.mubr.bf16.mxu0 %v766
  %1502 = vmatmul.mubr.bf16.gmra.mrb[0].mxu0 %v765
  %v1503 = vpop.f32.mrb[0].mxu0
  %v1504 = vadd.f32 %v882, %v1503
  %v1505 = vpop.f32.mrb[0].mxu0
  %v1506 = vadd.f32 %v886, %v1505
  %v1507 = vpop.f32.mrb[0].mxu0
  %v1508 = vadd.f32 %v882, %v1507
  %v1509 = vpop.f32.mrb[0].mxu0
  %v1510 = vadd.f32 %v886, %v1509
  %1511 = vmatprep.mubr.bf16.mxu0 %v768
  %1512 = vmatmul.mubr.bf16.gmra.mrb[0].mxu0 %v767
  %v1513 = vpop.f32.mrb[0].mxu0
  %v1514 = vadd.f32 %v882, %v1513
  %v1515 = vpop.f32.mrb[0].mxu0
  %v1516 = vadd.f32 %v886, %v1515
  %v1517 = vpop.f32.mrb[0].mxu0
  %v1518 = vadd.f32 %v882, %v1517
  %v1519 = vpop.f32.mrb[0].mxu0
  %v1520 = vadd.f32 %v886, %v1519
  %1521 = vmatprep.mubr.bf16.mxu0 %v770
  %1522 = vmatmul.mubr.bf16.gmra.mrb[0].mxu0 %v769
  %v1523 = vpop.f32.mrb[0].mxu0
  %v1524 = vadd.f32 %v882, %v1523
  %v1525 = vpop.f32.mrb[0].mxu0
  %v1526 = vadd.f32 %v886, %v1525
  %v1527 = vpop.f32.mrb[0].mxu0
  %v1528 = vadd.f32 %v882, %v1527
  %v1529 = vpop.f32.mrb[0].mxu0
  %v1530 = vadd.f32 %v886, %v1529
  %1531 = vmatprep.mubr.bf16.mxu0 %v772
  %1532 = vmatmul.mubr.bf16.gmra.mrb[0].mxu0 %v771
  %v1533 = vpop.f32.mrb[0].mxu0
  %v1534 = vadd.f32 %v882, %v1533
  %v1535 = vpop.f32.mrb[0].mxu0
  %v1536 = vadd.f32 %v886, %v1535
  %v1537 = vpop.f32.mrb[0].mxu0
  %v1538 = vadd.f32 %v882, %v1537
  %v1539 = vpop.f32.mrb[0].mxu0
  %v1540 = vadd.f32 %v886, %v1539
  %1541 = vmatprep.mubr.bf16.mxu0 %v774
  %1542 = vmatmul.mubr.bf16.gmra.mrb[0].mxu0 %v773
  %v1543 = vpop.f32.mrb[0].mxu0
  %v1544 = vadd.f32 %v882, %v1543
  %v1545 = vpop.f32.mrb[0].mxu0
  %v1546 = vadd.f32 %v886, %v1545
  %v1547 = vpop.f32.mrb[0].mxu0
  %v1548 = vadd.f32 %v882, %v1547
  %v1549 = vpop.f32.mrb[0].mxu0
  %v1550 = vadd.f32 %v886, %v1549
  %1551 = vmatprep.mubr.bf16.mxu0 %v776
  %1552 = vmatmul.mubr.bf16.gmra.mrb[0].mxu0 %v775
  %v1553 = vpop.f32.mrb[0].mxu0
  %v1554 = vadd.f32 %v882, %v1553
  %v1555 = vpop.f32.mrb[0].mxu0
  %v1556 = vadd.f32 %v886, %v1555
  %v1557 = vpop.f32.mrb[0].mxu0
  %v1558 = vadd.f32 %v882, %v1557
  %v1559 = vpop.f32.mrb[0].mxu0
  %v1560 = vadd.f32 %v886, %v1559
  %1561 = vmatprep.mubr.bf16.mxu0 %v778
  %1562 = vmatmul.mubr.bf16.gmra.mrb[0].mxu0 %v777
  %v1563 = vpop.f32.mrb[0].mxu0
  %v1564 = vadd.f32 %v882, %v1563
  %v1565 = vpop.f32.mrb[0].mxu0
  %v1566 = vadd.f32 %v886, %v1565
  %v1567 = vpop.f32.mrb[0].mxu0
  %v1568 = vadd.f32 %v882, %v1567
  %v1569 = vpop.f32.mrb[0].mxu0
  %v1570 = vadd.f32 %v886, %v1569
  %1571 = vmatprep.mubr.bf16.mxu0 %v780
  %1572 = vmatmul.mubr.bf16.gmra.mrb[0].mxu0 %v779
  %v1573 = vpop.f32.mrb[0].mxu0
  %v1574 = vadd.f32 %v882, %v1573
  %v1575 = vpop.f32.mrb[0].mxu0
  %v1576 = vadd.f32 %v886, %v1575
  %v1577 = vpop.f32.mrb[0].mxu0
  %v1578 = vadd.f32 %v882, %v1577
  %v1579 = vpop.f32.mrb[0].mxu0
  %v1580 = vadd.f32 %v886, %v1579
  %1581 = vdwg.mxu0
  %1582 = vmatprep.subr.bf16.mxu0 %v1200
  %1583 = vmatpush1.bf16.msra.mxu0 %v1199
  %1584 = vmatprep.subr.bf16.mxu0 %v1206
  %1585 = vmatpush1.bf16.msra.mxu0 %v1205
  %1586 = vmatprep.subr.bf16.mxu0 %v1212
  %1587 = vmatpush1.bf16.msra.mxu0 %v1211
  %1588 = vmatprep.subr.bf16.mxu0 %v1218
  %1589 = vmatpush1.bf16.msra.mxu0 %v1217
  %1590 = vmatprep.subr.bf16.mxu0 %v1224
  %1591 = vmatpush1.bf16.msra.mxu0 %v1223
  %1592 = vmatprep.subr.bf16.mxu0 %v1230
  %1593 = vmatpush1.bf16.msra.mxu0 %v1229
  %1594 = vmatprep.subr.bf16.mxu0 %v1236
  %1595 = vmatpush1.bf16.msra.mxu0 %v1235
  %1596 = vmatprep.subr.bf16.mxu0 %v1242
  %1597 = vmatpush1.bf16.msra.mxu0 %v1241
  %1598 = vmatprep.subr.bf16.mxu0 %v1248
  %1599 = vmatpush1.bf16.msra.mxu0 %v1247
  %1600 = vmatprep.subr.bf16.mxu0 %v1254
  %1601 = vmatpush1.bf16.msra.mxu0 %v1253
  %1602 = vmatprep.subr.bf16.mxu0 %v1260
  %1603 = vmatpush1.bf16.msra.mxu0 %v1259
  %1604 = vmatprep.subr.bf16.mxu0 %v1266
  %1605 = vmatpush1.bf16.msra.mxu0 %v1265
  %1606 = vmatprep.subr.bf16.mxu0 %v1272
  %1607 = vmatpush1.bf16.msra.mxu0 %v1271
  %1608 = vmatprep.subr.bf16.mxu0 %v1278
  %1609 = vmatpush1.bf16.msra.mxu0 %v1277
  %1610 = vmatprep.subr.bf16.mxu0 %v1284
  %1611 = vmatpush1.bf16.msra.mxu0 %v1283
  %1612 = vmatprep.subr.bf16.mxu0 %v1290
  %1613 = vmatpush1.bf16.msra.mxu0 %v1289
  %1614 = vmatprep.mubr.bf16.mxu0 %v750
  %1615 = vmatmul.mubr.bf16.gmra.mrb[0].mxu0 %v749
  %v1616 = vpop.f32.mrb[0].mxu0
  %v1617 = vadd.f32 %v890, %v1616
  %v1618 = vpop.f32.mrb[0].mxu0
  %v1619 = vadd.f32 %v894, %v1618
  %v1620 = vpop.f32.mrb[0].mxu0
  %v1621 = vadd.f32 %v890, %v1620
  %v1622 = vpop.f32.mrb[0].mxu0
  %v1623 = vadd.f32 %v894, %v1622
  %1624 = vmatprep.mubr.bf16.mxu0 %v752
  %1625 = vmatmul.mubr.bf16.gmra.mrb[0].mxu0 %v751
  %v1626 = vpop.f32.mrb[0].mxu0
  %v1627 = vadd.f32 %v890, %v1626
  %v1628 = vpop.f32.mrb[0].mxu0
  %v1629 = vadd.f32 %v894, %v1628
  %v1630 = vpop.f32.mrb[0].mxu0
  %v1631 = vadd.f32 %v890, %v1630
  %v1632 = vpop.f32.mrb[0].mxu0
  %v1633 = vadd.f32 %v894, %v1632
  %1634 = vmatprep.mubr.bf16.mxu0 %v754
  %1635 = vmatmul.mubr.bf16.gmra.mrb[0].mxu0 %v753
  %v1636 = vpop.f32.mrb[0].mxu0
  %v1637 = vadd.f32 %v890, %v1636
  %v1638 = vpop.f32.mrb[0].mxu0
  %v1639 = vadd.f32 %v894, %v1638
  %v1640 = vpop.f32.mrb[0].mxu0
  %v1641 = vadd.f32 %v890, %v1640
  %v1642 = vpop.f32.mrb[0].mxu0
  %v1643 = vadd.f32 %v894, %v1642
  %1644 = vmatprep.mubr.bf16.mxu0 %v756
  %1645 = vmatmul.mubr.bf16.gmra.mrb[0].mxu0 %v755
  %v1646 = vpop.f32.mrb[0].mxu0
  %v1647 = vadd.f32 %v890, %v1646
  %v1648 = vpop.f32.mrb[0].mxu0
  %v1649 = vadd.f32 %v894, %v1648
  %v1650 = vpop.f32.mrb[0].mxu0
  %v1651 = vadd.f32 %v890, %v1650
  %v1652 = vpop.f32.mrb[0].mxu0
  %v1653 = vadd.f32 %v894, %v1652
  %1654 = vmatprep.mubr.bf16.mxu0 %v758
  %1655 = vmatmul.mubr.bf16.gmra.mrb[0].mxu0 %v757
  %v1656 = vpop.f32.mrb[0].mxu0
  %v1657 = vadd.f32 %v890, %v1656
  %v1658 = vpop.f32.mrb[0].mxu0
  %v1659 = vadd.f32 %v894, %v1658
  %v1660 = vpop.f32.mrb[0].mxu0
  %v1661 = vadd.f32 %v890, %v1660
  %v1662 = vpop.f32.mrb[0].mxu0
  %v1663 = vadd.f32 %v894, %v1662
  %1664 = vmatprep.mubr.bf16.mxu0 %v760
  %1665 = vmatmul.mubr.bf16.gmra.mrb[0].mxu0 %v759
  %v1666 = vpop.f32.mrb[0].mxu0
  %v1667 = vadd.f32 %v890, %v1666
  %v1668 = vpop.f32.mrb[0].mxu0
  %v1669 = vadd.f32 %v894, %v1668
  %v1670 = vpop.f32.mrb[0].mxu0
  %v1671 = vadd.f32 %v890, %v1670
  %v1672 = vpop.f32.mrb[0].mxu0
  %v1673 = vadd.f32 %v894, %v1672
  %1674 = vmatprep.mubr.bf16.mxu0 %v762
  %1675 = vmatmul.mubr.bf16.gmra.mrb[0].mxu0 %v761
  %v1676 = vpop.f32.mrb[0].mxu0
  %v1677 = vadd.f32 %v890, %v1676
  %v1678 = vpop.f32.mrb[0].mxu0
  %v1679 = vadd.f32 %v894, %v1678
  %v1680 = vpop.f32.mrb[0].mxu0
  %v1681 = vadd.f32 %v890, %v1680
  %v1682 = vpop.f32.mrb[0].mxu0
  %v1683 = vadd.f32 %v894, %v1682
  %1684 = vmatprep.mubr.bf16.mxu0 %v764
  %1685 = vmatmul.mubr.bf16.gmra.mrb[0].mxu0 %v763
  %v1686 = vpop.f32.mrb[0].mxu0
  %v1687 = vadd.f32 %v890, %v1686
  %v1688 = vpop.f32.mrb[0].mxu0
  %v1689 = vadd.f32 %v894, %v1688
  %v1690 = vpop.f32.mrb[0].mxu0
  %v1691 = vadd.f32 %v890, %v1690
  %v1692 = vpop.f32.mrb[0].mxu0
  %v1693 = vadd.f32 %v894, %v1692
  %1694 = vmatprep.mubr.bf16.mxu0 %v766
  %1695 = vmatmul.mubr.bf16.gmra.mrb[0].mxu0 %v765
  %v1696 = vpop.f32.mrb[0].mxu0
  %v1697 = vadd.f32 %v890, %v1696
  %v1698 = vpop.f32.mrb[0].mxu0
  %v1699 = vadd.f32 %v894, %v1698
  %v1700 = vpop.f32.mrb[0].mxu0
  %v1701 = vadd.f32 %v890, %v1700
  %v1702 = vpop.f32.mrb[0].mxu0
  %v1703 = vadd.f32 %v894, %v1702
  %1704 = vmatprep.mubr.bf16.mxu0 %v768
  %1705 = vmatmul.mubr.bf16.gmra.mrb[0].mxu0 %v767
  %v1706 = vpop.f32.mrb[0].mxu0
  %v1707 = vadd.f32 %v890, %v1706
  %v1708 = vpop.f32.mrb[0].mxu0
  %v1709 = vadd.f32 %v894, %v1708
  %v1710 = vpop.f32.mrb[0].mxu0
  %v1711 = vadd.f32 %v890, %v1710
  %v1712 = vpop.f32.mrb[0].mxu0
  %v1713 = vadd.f32 %v894, %v1712
  %1714 = vmatprep.mubr.bf16.mxu0 %v770
  %1715 = vmatmul.mubr.bf16.gmra.mrb[0].mxu0 %v769
  %v1716 = vpop.f32.mrb[0].mxu0
  %v1717 = vadd.f32 %v890, %v1716
  %v1718 = vpop.f32.mrb[0].mxu0
  %v1719 = vadd.f32 %v894, %v1718
  %v1720 = vpop.f32.mrb[0].mxu0
  %v1721 = vadd.f32 %v890, %v1720
  %v1722 = vpop.f32.mrb[0].mxu0
  %v1723 = vadd.f32 %v894, %v1722
  %1724 = vmatprep.mubr.bf16.mxu0 %v772
  %1725 = vmatmul.mubr.bf16.gmra.mrb[0].mxu0 %v771
  %v1726 = vpop.f32.mrb[0].mxu0
  %v1727 = vadd.f32 %v890, %v1726
  %v1728 = vpop.f32.mrb[0].mxu0
  %v1729 = vadd.f32 %v894, %v1728
  %v1730 = vpop.f32.mrb[0].mxu0
  %v1731 = vadd.f32 %v890, %v1730
  %v1732 = vpop.f32.mrb[0].mxu0
  %v1733 = vadd.f32 %v894, %v1732
  %1734 = vmatprep.mubr.bf16.mxu0 %v774
  %1735 = vmatmul.mubr.bf16.gmra.mrb[0].mxu0 %v773
  %v1736 = vpop.f32.mrb[0].mxu0
  %v1737 = vadd.f32 %v890, %v1736
  %v1738 = vpop.f32.mrb[0].mxu0
  %v1739 = vadd.f32 %v894, %v1738
  %v1740 = vpop.f32.mrb[0].mxu0
  %v1741 = vadd.f32 %v890, %v1740
  %v1742 = vpop.f32.mrb[0].mxu0
  %v1743 = vadd.f32 %v894, %v1742
  %1744 = vmatprep.mubr.bf16.mxu0 %v776
  %1745 = vmatmul.mubr.bf16.gmra.mrb[0].mxu0 %v775
  %v1746 = vpop.f32.mrb[0].mxu0
  %v1747 = vadd.f32 %v890, %v1746
  %v1748 = vpop.f32.mrb[0].mxu0
  %v1749 = vadd.f32 %v894, %v1748
  %v1750 = vpop.f32.mrb[0].mxu0
  %v1751 = vadd.f32 %v890, %v1750
  %v1752 = vpop.f32.mrb[0].mxu0
  %v1753 = vadd.f32 %v894, %v1752
  %1754 = vmatprep.mubr.bf16.mxu0 %v778
  %1755 = vmatmul.mubr.bf16.gmra.mrb[0].mxu0 %v777
  %v1756 = vpop.f32.mrb[0].mxu0
  %v1757 = vadd.f32 %v890, %v1756
  %v1758 = vpop.f32.mrb[0].mxu0
  %v1759 = vadd.f32 %v894, %v1758
  %v1760 = vpop.f32.mrb[0].mxu0
  %v1761 = vadd.f32 %v890, %v1760
  %v1762 = vpop.f32.mrb[0].mxu0
  %v1763 = vadd.f32 %v894, %v1762
  %1764 = vmatprep.mubr.bf16.mxu0 %v780
  %1765 = vmatmul.mubr.bf16.gmra.mrb[0].mxu0 %v779
  %v1766 = vpop.f32.mrb[0].mxu0
  %v1767 = vadd.f32 %v890, %v1766
  %v1768 = vpop.f32.mrb[0].mxu0
  %v1769 = vadd.f32 %v894, %v1768
  %v1770 = vpop.f32.mrb[0].mxu0
  %v1771 = vadd.f32 %v890, %v1770
  %v1772 = vpop.f32.mrb[0].mxu0
  %v1773 = vadd.f32 %v894, %v1772
  %1774 = vdwg.mxu0
  %1775 = vmatprep.subr.bf16.mxu0 %v1202
  %1776 = vmatpush1.bf16.msra.mxu0 %v1201
  %1777 = vmatprep.subr.bf16.mxu0 %v1208
  %1778 = vmatpush1.bf16.msra.mxu0 %v1207
  %1779 = vmatprep.subr.bf16.mxu0 %v1214
  %1780 = vmatpush1.bf16.msra.mxu0 %v1213
  %1781 = vmatprep.subr.bf16.mxu0 %v1220
  %1782 = vmatpush1.bf16.msra.mxu0 %v1219
  %1783 = vmatprep.subr.bf16.mxu0 %v1226
  %1784 = vmatpush1.bf16.msra.mxu0 %v1225
  %1785 = vmatprep.subr.bf16.mxu0 %v1232
  %1786 = vmatpush1.bf16.msra.mxu0 %v1231
  %1787 = vmatprep.subr.bf16.mxu0 %v1238
  %1788 = vmatpush1.bf16.msra.mxu0 %v1237
  %1789 = vmatprep.subr.bf16.mxu0 %v1244
  %1790 = vmatpush1.bf16.msra.mxu0 %v1243
  %1791 = vmatprep.subr.bf16.mxu0 %v1250
  %1792 = vmatpush1.bf16.msra.mxu0 %v1249
  %1793 = vmatprep.subr.bf16.mxu0 %v1256
  %1794 = vmatpush1.bf16.msra.mxu0 %v1255
  %1795 = vmatprep.subr.bf16.mxu0 %v1262
  %1796 = vmatpush1.bf16.msra.mxu0 %v1261
  %1797 = vmatprep.subr.bf16.mxu0 %v1268
  %1798 = vmatpush1.bf16.msra.mxu0 %v1267
  %1799 = vmatprep.subr.bf16.mxu0 %v1274
  %1800 = vmatpush1.bf16.msra.mxu0 %v1273
  %1801 = vmatprep.subr.bf16.mxu0 %v1280
  %1802 = vmatpush1.bf16.msra.mxu0 %v1279
  %1803 = vmatprep.subr.bf16.mxu0 %v1286
  %1804 = vmatpush1.bf16.msra.mxu0 %v1285
  %1805 = vmatprep.subr.bf16.mxu0 %v1292
  %1806 = vmatpush1.bf16.msra.mxu0 %v1291
  %1807 = vmatprep.mubr.bf16.mxu0 %v750
  %1808 = vmatmul.mubr.bf16.gmra.mrb[0].mxu0 %v749
  %v1809 = vpop.f32.mrb[0].mxu0
  %v1810 = vadd.f32 %v898, %v1809
  %v1811 = vpop.f32.mrb[0].mxu0
  %v1812 = vadd.f32 %v902, %v1811
  %v1813 = vpop.f32.mrb[0].mxu0
  %v1814 = vadd.f32 %v898, %v1813
  %v1815 = vpop.f32.mrb[0].mxu0
  %v1816 = vadd.f32 %v902, %v1815
  %1817 = vmatprep.mubr.bf16.mxu0 %v752
  %1818 = vmatmul.mubr.bf16.gmra.mrb[0].mxu0 %v751
  %v1819 = vpop.f32.mrb[0].mxu0
  %v1820 = vadd.f32 %v898, %v1819
  %v1821 = vpop.f32.mrb[0].mxu0
  %v1822 = vadd.f32 %v902, %v1821
  %v1823 = vpop.f32.mrb[0].mxu0
  %v1824 = vadd.f32 %v898, %v1823
  %v1825 = vpop.f32.mrb[0].mxu0
  %v1826 = vadd.f32 %v902, %v1825
  %1827 = vmatprep.mubr.bf16.mxu0 %v754
  %1828 = vmatmul.mubr.bf16.gmra.mrb[0].mxu0 %v753
  %v1829 = vpop.f32.mrb[0].mxu0
  %v1830 = vadd.f32 %v898, %v1829
  %v1831 = vpop.f32.mrb[0].mxu0
  %v1832 = vadd.f32 %v902, %v1831
  %v1833 = vpop.f32.mrb[0].mxu0
  %v1834 = vadd.f32 %v898, %v1833
  %v1835 = vpop.f32.mrb[0].mxu0
  %v1836 = vadd.f32 %v902, %v1835
  %1837 = vmatprep.mubr.bf16.mxu0 %v756
  %1838 = vmatmul.mubr.bf16.gmra.mrb[0].mxu0 %v755
  %v1839 = vpop.f32.mrb[0].mxu0
  %v1840 = vadd.f32 %v898, %v1839
  %v1841 = vpop.f32.mrb[0].mxu0
  %v1842 = vadd.f32 %v902, %v1841
  %v1843 = vpop.f32.mrb[0].mxu0
  %v1844 = vadd.f32 %v898, %v1843
  %v1845 = vpop.f32.mrb[0].mxu0
  %v1846 = vadd.f32 %v902, %v1845
  %1847 = vmatprep.mubr.bf16.mxu0 %v758
  %1848 = vmatmul.mubr.bf16.gmra.mrb[0].mxu0 %v757
  %v1849 = vpop.f32.mrb[0].mxu0
  %v1850 = vadd.f32 %v898, %v1849
  %v1851 = vpop.f32.mrb[0].mxu0
  %v1852 = vadd.f32 %v902, %v1851
  %v1853 = vpop.f32.mrb[0].mxu0
  %v1854 = vadd.f32 %v898, %v1853
  %v1855 = vpop.f32.mrb[0].mxu0
  %v1856 = vadd.f32 %v902, %v1855
  %1857 = vmatprep.mubr.bf16.mxu0 %v760
  %1858 = vmatmul.mubr.bf16.gmra.mrb[0].mxu0 %v759
  %v1859 = vpop.f32.mrb[0].mxu0
  %v1860 = vadd.f32 %v898, %v1859
  %v1861 = vpop.f32.mrb[0].mxu0
  %v1862 = vadd.f32 %v902, %v1861
  %v1863 = vpop.f32.mrb[0].mxu0
  %v1864 = vadd.f32 %v898, %v1863
  %v1865 = vpop.f32.mrb[0].mxu0
  %v1866 = vadd.f32 %v902, %v1865
  %1867 = vmatprep.mubr.bf16.mxu0 %v762
  %1868 = vmatmul.mubr.bf16.gmra.mrb[0].mxu0 %v761
  %v1869 = vpop.f32.mrb[0].mxu0
  %v1870 = vadd.f32 %v898, %v1869
  %v1871 = vpop.f32.mrb[0].mxu0
  %v1872 = vadd.f32 %v902, %v1871
  %v1873 = vpop.f32.mrb[0].mxu0
  %v1874 = vadd.f32 %v898, %v1873
  %v1875 = vpop.f32.mrb[0].mxu0
  %v1876 = vadd.f32 %v902, %v1875
  %1877 = vmatprep.mubr.bf16.mxu0 %v764
  %1878 = vmatmul.mubr.bf16.gmra.mrb[0].mxu0 %v763
  %v1879 = vpop.f32.mrb[0].mxu0
  %v1880 = vadd.f32 %v898, %v1879
  %v1881 = vpop.f32.mrb[0].mxu0
  %v1882 = vadd.f32 %v902, %v1881
  %v1883 = vpop.f32.mrb[0].mxu0
  %v1884 = vadd.f32 %v898, %v1883
  %v1885 = vpop.f32.mrb[0].mxu0
  %v1886 = vadd.f32 %v902, %v1885
  %1887 = vmatprep.mubr.bf16.mxu0 %v766
  %1888 = vmatmul.mubr.bf16.gmra.mrb[0].mxu0 %v765
  %v1889 = vpop.f32.mrb[0].mxu0
  %v1890 = vadd.f32 %v898, %v1889
  %v1891 = vpop.f32.mrb[0].mxu0
  %v1892 = vadd.f32 %v902, %v1891
  %v1893 = vpop.f32.mrb[0].mxu0
  %v1894 = vadd.f32 %v898, %v1893
  %v1895 = vpop.f32.mrb[0].mxu0
  %v1896 = vadd.f32 %v902, %v1895
  %1897 = vmatprep.mubr.bf16.mxu0 %v768
  %1898 = vmatmul.mubr.bf16.gmra.mrb[0].mxu0 %v767
  %v1899 = vpop.f32.mrb[0].mxu0
  %v1900 = vadd.f32 %v898, %v1899
  %v1901 = vpop.f32.mrb[0].mxu0
  %v1902 = vadd.f32 %v902, %v1901
  %v1903 = vpop.f32.mrb[0].mxu0
  %v1904 = vadd.f32 %v898, %v1903
  %v1905 = vpop.f32.mrb[0].mxu0
  %v1906 = vadd.f32 %v902, %v1905
  %1907 = vmatprep.mubr.bf16.mxu0 %v770
  %1908 = vmatmul.mubr.bf16.gmra.mrb[0].mxu0 %v769
  %v1909 = vpop.f32.mrb[0].mxu0
  %v1910 = vadd.f32 %v898, %v1909
  %v1911 = vpop.f32.mrb[0].mxu0
  %v1912 = vadd.f32 %v902, %v1911
  %v1913 = vpop.f32.mrb[0].mxu0
  %v1914 = vadd.f32 %v898, %v1913
  %v1915 = vpop.f32.mrb[0].mxu0
  %v1916 = vadd.f32 %v902, %v1915
  %1917 = vmatprep.mubr.bf16.mxu0 %v772
  %1918 = vmatmul.mubr.bf16.gmra.mrb[0].mxu0 %v771
  %v1919 = vpop.f32.mrb[0].mxu0
  %v1920 = vadd.f32 %v898, %v1919
  %v1921 = vpop.f32.mrb[0].mxu0
  %v1922 = vadd.f32 %v902, %v1921
  %v1923 = vpop.f32.mrb[0].mxu0
  %v1924 = vadd.f32 %v898, %v1923
  %v1925 = vpop.f32.mrb[0].mxu0
  %v1926 = vadd.f32 %v902, %v1925
  %1927 = vmatprep.mubr.bf16.mxu0 %v774
  %1928 = vmatmul.mubr.bf16.gmra.mrb[0].mxu0 %v773
  %v1929 = vpop.f32.mrb[0].mxu0
  %v1930 = vadd.f32 %v898, %v1929
  %v1931 = vpop.f32.mrb[0].mxu0
  %v1932 = vadd.f32 %v902, %v1931
  %v1933 = vpop.f32.mrb[0].mxu0
  %v1934 = vadd.f32 %v898, %v1933
  %v1935 = vpop.f32.mrb[0].mxu0
  %v1936 = vadd.f32 %v902, %v1935
  %1937 = vmatprep.mubr.bf16.mxu0 %v776
  %1938 = vmatmul.mubr.bf16.gmra.mrb[0].mxu0 %v775
  %v1939 = vpop.f32.mrb[0].mxu0
  %v1940 = vadd.f32 %v898, %v1939
  %v1941 = vpop.f32.mrb[0].mxu0
  %v1942 = vadd.f32 %v902, %v1941
  %v1943 = vpop.f32.mrb[0].mxu0
  %v1944 = vadd.f32 %v898, %v1943
  %v1945 = vpop.f32.mrb[0].mxu0
  %v1946 = vadd.f32 %v902, %v1945
  %1947 = vmatprep.mubr.bf16.mxu0 %v778
  %1948 = vmatmul.mubr.bf16.gmra.mrb[0].mxu0 %v777
  %v1949 = vpop.f32.mrb[0].mxu0
  %v1950 = vadd.f32 %v898, %v1949
  %v1951 = vpop.f32.mrb[0].mxu0
  %v1952 = vadd.f32 %v902, %v1951
  %v1953 = vpop.f32.mrb[0].mxu0
  %v1954 = vadd.f32 %v898, %v1953
  %v1955 = vpop.f32.mrb[0].mxu0
  %v1956 = vadd.f32 %v902, %v1955
  %1957 = vmatprep.mubr.bf16.mxu0 %v780
  %1958 = vmatmul.mubr.bf16.gmra.mrb[0].mxu0 %v779
  %v1959 = vpop.f32.mrb[0].mxu0
  %v1960 = vadd.f32 %v898, %v1959
  %v1961 = vpop.f32.mrb[0].mxu0
  %v1962 = vadd.f32 %v902, %v1961
  %v1963 = vpop.f32.mrb[0].mxu0
  %v1964 = vadd.f32 %v898, %v1963
  %v1965 = vpop.f32.mrb[0].mxu0
  %v1966 = vadd.f32 %v902, %v1965
  %1967 = vdwg.mxu0
  %v1968 = vpack.c.bf16 %v1428, %v1424
  %v1969 = vpack.c.bf16 %v1430, %v1426
  %v1970 = vpack.c.bf16 %v1621, %v1617
  %v1971 = vpack.c.bf16 %v1623, %v1619
  %v1972 = vpack.c.bf16 %v1814, %v1810
  %v1973 = vpack.c.bf16 %v1816, %v1812
  %v1974 = vpack.c.bf16 %v1438, %v1434
  %v1975 = vpack.c.bf16 %v1440, %v1436
  %v1976 = vpack.c.bf16 %v1631, %v1627
  %v1977 = vpack.c.bf16 %v1633, %v1629
  %v1978 = vpack.c.bf16 %v1824, %v1820
  %v1979 = vpack.c.bf16 %v1826, %v1822
  %v1980 = vpack.c.bf16 %v1448, %v1444
  %v1981 = vpack.c.bf16 %v1450, %v1446
  %v1982 = vpack.c.bf16 %v1641, %v1637
  %v1983 = vpack.c.bf16 %v1643, %v1639
  %v1984 = vpack.c.bf16 %v1834, %v1830
  %v1985 = vpack.c.bf16 %v1836, %v1832
  %v1986 = vpack.c.bf16 %v1458, %v1454
  %v1987 = vpack.c.bf16 %v1460, %v1456
  %v1988 = vpack.c.bf16 %v1651, %v1647
  %v1989 = vpack.c.bf16 %v1653, %v1649
  %v1990 = vpack.c.bf16 %v1844, %v1840
  %v1991 = vpack.c.bf16 %v1846, %v1842
  %v1992 = vpack.c.bf16 %v1468, %v1464
  %v1993 = vpack.c.bf16 %v1470, %v1466
  %v1994 = vpack.c.bf16 %v1661, %v1657
  %v1995 = vpack.c.bf16 %v1663, %v1659
  %v1996 = vpack.c.bf16 %v1854, %v1850
  %v1997 = vpack.c.bf16 %v1856, %v1852
  %v1998 = vpack.c.bf16 %v1478, %v1474
  %v1999 = vpack.c.bf16 %v1480, %v1476
  %v2000 = vpack.c.bf16 %v1671, %v1667
  %v2001 = vpack.c.bf16 %v1673, %v1669
  %v2002 = vpack.c.bf16 %v1864, %v1860
  %v2003 = vpack.c.bf16 %v1866, %v1862
  %v2004 = vpack.c.bf16 %v1488, %v1484
  %v2005 = vpack.c.bf16 %v1490, %v1486
  %v2006 = vpack.c.bf16 %v1681, %v1677
  %v2007 = vpack.c.bf16 %v1683, %v1679
  %v2008 = vpack.c.bf16 %v1874, %v1870
  %v2009 = vpack.c.bf16 %v1876, %v1872
  %v2010 = vpack.c.bf16 %v1498, %v1494
  %v2011 = vpack.c.bf16 %v1500, %v1496
  %v2012 = vpack.c.bf16 %v1691, %v1687
  %v2013 = vpack.c.bf16 %v1693, %v1689
  %v2014 = vpack.c.bf16 %v1884, %v1880
  %v2015 = vpack.c.bf16 %v1886, %v1882
  %v2016 = vpack.c.bf16 %v1508, %v1504
  %v2017 = vpack.c.bf16 %v1510, %v1506
  %v2018 = vpack.c.bf16 %v1701, %v1697
  %v2019 = vpack.c.bf16 %v1703, %v1699
  %v2020 = vpack.c.bf16 %v1894, %v1890
  %v2021 = vpack.c.bf16 %v1896, %v1892
  %v2022 = vpack.c.bf16 %v1518, %v1514
  %v2023 = vpack.c.bf16 %v1520, %v1516
  %v2024 = vpack.c.bf16 %v1711, %v1707
  %v2025 = vpack.c.bf16 %v1713, %v1709
  %v2026 = vpack.c.bf16 %v1904, %v1900
  %v2027 = vpack.c.bf16 %v1906, %v1902
  %v2028 = vpack.c.bf16 %v1528, %v1524
  %v2029 = vpack.c.bf16 %v1530, %v1526
  %v2030 = vpack.c.bf16 %v1721, %v1717
  %v2031 = vpack.c.bf16 %v1723, %v1719
  %v2032 = vpack.c.bf16 %v1914, %v1910
  %v2033 = vpack.c.bf16 %v1916, %v1912
  %v2034 = vpack.c.bf16 %v1538, %v1534
  %v2035 = vpack.c.bf16 %v1540, %v1536
  %v2036 = vpack.c.bf16 %v1731, %v1727
  %v2037 = vpack.c.bf16 %v1733, %v1729
  %v2038 = vpack.c.bf16 %v1924, %v1920
  %v2039 = vpack.c.bf16 %v1926, %v1922
  %v2040 = vpack.c.bf16 %v1548, %v1544
  %v2041 = vpack.c.bf16 %v1550, %v1546
  %v2042 = vpack.c.bf16 %v1741, %v1737
  %v2043 = vpack.c.bf16 %v1743, %v1739
  %v2044 = vpack.c.bf16 %v1934, %v1930
  %v2045 = vpack.c.bf16 %v1936, %v1932
  %v2046 = vpack.c.bf16 %v1558, %v1554
  %v2047 = vpack.c.bf16 %v1560, %v1556
  %v2048 = vpack.c.bf16 %v1751, %v1747
  %v2049 = vpack.c.bf16 %v1753, %v1749
  %v2050 = vpack.c.bf16 %v1944, %v1940
  %v2051 = vpack.c.bf16 %v1946, %v1942
  %v2052 = vpack.c.bf16 %v1568, %v1564
  %v2053 = vpack.c.bf16 %v1570, %v1566
  %v2054 = vpack.c.bf16 %v1761, %v1757
  %v2055 = vpack.c.bf16 %v1763, %v1759
  %v2056 = vpack.c.bf16 %v1954, %v1950
  %v2057 = vpack.c.bf16 %v1956, %v1952
  %v2058 = vpack.c.bf16 %v1578, %v1574
  %v2059 = vpack.c.bf16 %v1580, %v1576
  %v2060 = vpack.c.bf16 %v1771, %v1767
  %v2061 = vpack.c.bf16 %v1773, %v1769
  %v2062 = vpack.c.bf16 %v1964, %v1960
  %v2063 = vpack.c.bf16 %v1966, %v1962
  %v2160 = vunpack.c.l.b16 %v1968
  %v2161 = vunpack.c.l.b16 %v1969
  %v2162 = vunpack.c.l.b16 %v1970
  %v2163 = vunpack.c.l.b16 %v1971
  %v2164 = vunpack.c.l.b16 %v1972
  %v2165 = vunpack.c.l.b16 %v1973
  %v2166 = vunpack.c.h.b16 %v1968
  %v2167 = vunpack.c.h.b16 %v1969
  %v2168 = vunpack.c.h.b16 %v1970
  %v2169 = vunpack.c.h.b16 %v1971
  %v2170 = vunpack.c.h.b16 %v1972
  %v2171 = vunpack.c.h.b16 %v1973
  %v2172 = vunpack.c.l.b16 %v1974
  %v2173 = vunpack.c.l.b16 %v1975
  %v2174 = vunpack.c.l.b16 %v1976
  %v2175 = vunpack.c.l.b16 %v1977
  %v2176 = vunpack.c.l.b16 %v1978
  %v2177 = vunpack.c.l.b16 %v1979
  %v2178 = vunpack.c.h.b16 %v1974
  %v2179 = vunpack.c.h.b16 %v1975
  %v2180 = vunpack.c.h.b16 %v1976
  %v2181 = vunpack.c.h.b16 %v1977
  %v2182 = vunpack.c.h.b16 %v1978
  %v2183 = vunpack.c.h.b16 %v1979
  %v2184 = vunpack.c.l.b16 %v1980
  %v2185 = vunpack.c.l.b16 %v1981
  %v2186 = vunpack.c.l.b16 %v1982
  %v2187 = vunpack.c.l.b16 %v1983
  %v2188 = vunpack.c.l.b16 %v1984
  %v2189 = vunpack.c.l.b16 %v1985
  %v2190 = vunpack.c.h.b16 %v1980
  %v2191 = vunpack.c.h.b16 %v1981
  %v2192 = vunpack.c.h.b16 %v1982
  %v2193 = vunpack.c.h.b16 %v1983
  %v2194 = vunpack.c.h.b16 %v1984
  %v2195 = vunpack.c.h.b16 %v1985
  %v2196 = vunpack.c.l.b16 %v1986
  %v2197 = vunpack.c.l.b16 %v1987
  %v2198 = vunpack.c.l.b16 %v1988
  %v2199 = vunpack.c.l.b16 %v1989
  %v2200 = vunpack.c.l.b16 %v1990
  %v2201 = vunpack.c.l.b16 %v1991
  %v2202 = vunpack.c.h.b16 %v1986
  %v2203 = vunpack.c.h.b16 %v1987
  %v2204 = vunpack.c.h.b16 %v1988
  %v2205 = vunpack.c.h.b16 %v1989
  %v2206 = vunpack.c.h.b16 %v1990
  %v2207 = vunpack.c.h.b16 %v1991
  %v2208 = vunpack.c.l.b16 %v1992
  %v2209 = vunpack.c.l.b16 %v1993
  %v2210 = vunpack.c.l.b16 %v1994
  %v2211 = vunpack.c.l.b16 %v1995
  %v2212 = vunpack.c.l.b16 %v1996
  %v2213 = vunpack.c.l.b16 %v1997
  %v2214 = vunpack.c.h.b16 %v1992
  %v2215 = vunpack.c.h.b16 %v1993
  %v2216 = vunpack.c.h.b16 %v1994
  %v2217 = vunpack.c.h.b16 %v1995
  %v2218 = vunpack.c.h.b16 %v1996
  %v2219 = vunpack.c.h.b16 %v1997
  %v2220 = vunpack.c.l.b16 %v1998
  %v2221 = vunpack.c.l.b16 %v1999
  %v2222 = vunpack.c.l.b16 %v2000
  %v2223 = vunpack.c.l.b16 %v2001
  %v2224 = vunpack.c.l.b16 %v2002
  %v2225 = vunpack.c.l.b16 %v2003
  %v2226 = vunpack.c.h.b16 %v1998
  %v2227 = vunpack.c.h.b16 %v1999
  %v2228 = vunpack.c.h.b16 %v2000
  %v2229 = vunpack.c.h.b16 %v2001
  %v2230 = vunpack.c.h.b16 %v2002
  %v2231 = vunpack.c.h.b16 %v2003
  %v2232 = vunpack.c.l.b16 %v2004
  %v2233 = vunpack.c.l.b16 %v2005
  %v2234 = vunpack.c.l.b16 %v2006
  %v2235 = vunpack.c.l.b16 %v2007
  %v2236 = vunpack.c.l.b16 %v2008
  %v2237 = vunpack.c.l.b16 %v2009
  %v2238 = vunpack.c.h.b16 %v2004
  %v2239 = vunpack.c.h.b16 %v2005
  %v2240 = vunpack.c.h.b16 %v2006
  %v2241 = vunpack.c.h.b16 %v2007
  %v2242 = vunpack.c.h.b16 %v2008
  %v2243 = vunpack.c.h.b16 %v2009
  %v2244 = vunpack.c.l.b16 %v2010
  %v2245 = vunpack.c.l.b16 %v2011
  %v2246 = vunpack.c.l.b16 %v2012
  %v2247 = vunpack.c.l.b16 %v2013
  %v2248 = vunpack.c.l.b16 %v2014
  %v2249 = vunpack.c.l.b16 %v2015
  %v2250 = vunpack.c.h.b16 %v2010
  %v2251 = vunpack.c.h.b16 %v2011
  %v2252 = vunpack.c.h.b16 %v2012
  %v2253 = vunpack.c.h.b16 %v2013
  %v2254 = vunpack.c.h.b16 %v2014
  %v2255 = vunpack.c.h.b16 %v2015
  %v2256 = vunpack.c.l.b16 %v2016
  %v2257 = vunpack.c.l.b16 %v2017
  %v2258 = vunpack.c.l.b16 %v2018
  %v2259 = vunpack.c.l.b16 %v2019
  %v2260 = vunpack.c.l.b16 %v2020
  %v2261 = vunpack.c.l.b16 %v2021
  %v2262 = vunpack.c.h.b16 %v2016
  %v2263 = vunpack.c.h.b16 %v2017
  %v2264 = vunpack.c.h.b16 %v2018
  %v2265 = vunpack.c.h.b16 %v2019
  %v2266 = vunpack.c.h.b16 %v2020
  %v2267 = vunpack.c.h.b16 %v2021
  %v2268 = vunpack.c.l.b16 %v2022
  %v2269 = vunpack.c.l.b16 %v2023
  %v2270 = vunpack.c.l.b16 %v2024
  %v2271 = vunpack.c.l.b16 %v2025
  %v2272 = vunpack.c.l.b16 %v2026
  %v2273 = vunpack.c.l.b16 %v2027
  %v2274 = vunpack.c.h.b16 %v2022
  %v2275 = vunpack.c.h.b16 %v2023
  %v2276 = vunpack.c.h.b16 %v2024
  %v2277 = vunpack.c.h.b16 %v2025
  %v2278 = vunpack.c.h.b16 %v2026
  %v2279 = vunpack.c.h.b16 %v2027
  %v2280 = vunpack.c.l.b16 %v2028
  %v2281 = vunpack.c.l.b16 %v2029
  %v2282 = vunpack.c.l.b16 %v2030
  %v2283 = vunpack.c.l.b16 %v2031
  %v2284 = vunpack.c.l.b16 %v2032
  %v2285 = vunpack.c.l.b16 %v2033
  %v2286 = vunpack.c.h.b16 %v2028
  %v2287 = vunpack.c.h.b16 %v2029
  %v2288 = vunpack.c.h.b16 %v2030
  %v2289 = vunpack.c.h.b16 %v2031
  %v2290 = vunpack.c.h.b16 %v2032
  %v2291 = vunpack.c.h.b16 %v2033
  %v2292 = vunpack.c.l.b16 %v2034
  %v2293 = vunpack.c.l.b16 %v2035
  %v2294 = vunpack.c.l.b16 %v2036
  %v2295 = vunpack.c.l.b16 %v2037
  %v2296 = vunpack.c.l.b16 %v2038
  %v2297 = vunpack.c.l.b16 %v2039
  %v2298 = vunpack.c.h.b16 %v2034
  %v2299 = vunpack.c.h.b16 %v2035
  %v2300 = vunpack.c.h.b16 %v2036
  %v2301 = vunpack.c.h.b16 %v2037
  %v2302 = vunpack.c.h.b16 %v2038
  %v2303 = vunpack.c.h.b16 %v2039
  %v2304 = vunpack.c.l.b16 %v2040
  %v2305 = vunpack.c.l.b16 %v2041
  %v2306 = vunpack.c.l.b16 %v2042
  %v2307 = vunpack.c.l.b16 %v2043
  %v2308 = vunpack.c.l.b16 %v2044
  %v2309 = vunpack.c.l.b16 %v2045
  %v2310 = vunpack.c.h.b16 %v2040
  %v2311 = vunpack.c.h.b16 %v2041
  %v2312 = vunpack.c.h.b16 %v2042
  %v2313 = vunpack.c.h.b16 %v2043
  %v2314 = vunpack.c.h.b16 %v2044
  %v2315 = vunpack.c.h.b16 %v2045
  %v2316 = vunpack.c.l.b16 %v2046
  %v2317 = vunpack.c.l.b16 %v2047
  %v2318 = vunpack.c.l.b16 %v2048
  %v2319 = vunpack.c.l.b16 %v2049
  %v2320 = vunpack.c.l.b16 %v2050
  %v2321 = vunpack.c.l.b16 %v2051
  %v2322 = vunpack.c.h.b16 %v2046
  %v2323 = vunpack.c.h.b16 %v2047
  %v2324 = vunpack.c.h.b16 %v2048
  %v2325 = vunpack.c.h.b16 %v2049
  %v2326 = vunpack.c.h.b16 %v2050
  %v2327 = vunpack.c.h.b16 %v2051
  %v2328 = vunpack.c.l.b16 %v2052
  %v2329 = vunpack.c.l.b16 %v2053
  %v2330 = vunpack.c.l.b16 %v2054
  %v2331 = vunpack.c.l.b16 %v2055
  %v2332 = vunpack.c.l.b16 %v2056
  %v2333 = vunpack.c.l.b16 %v2057
  %v2334 = vunpack.c.h.b16 %v2052
  %v2335 = vunpack.c.h.b16 %v2053
  %v2336 = vunpack.c.h.b16 %v2054
  %v2337 = vunpack.c.h.b16 %v2055
  %v2338 = vunpack.c.h.b16 %v2056
  %v2339 = vunpack.c.h.b16 %v2057
  %v2340 = vunpack.c.l.b16 %v2058
  %v2341 = vunpack.c.l.b16 %v2059
  %v2342 = vunpack.c.l.b16 %v2060
  %v2343 = vunpack.c.l.b16 %v2061
  %v2344 = vunpack.c.l.b16 %v2062
  %v2345 = vunpack.c.l.b16 %v2063
  %v2346 = vunpack.c.h.b16 %v2058
  %v2347 = vunpack.c.h.b16 %v2059
  %v2348 = vunpack.c.h.b16 %v2060
  %v2349 = vunpack.c.h.b16 %v2061
  %v2350 = vunpack.c.h.b16 %v2062
  %v2351 = vunpack.c.h.b16 %v2063
  %v2352 = vpack.c.b16 %v2161, %v2160
  %v2353 = vpack.c.b16 %v2163, %v2162
  %v2354 = vpack.c.b16 %v2165, %v2164
  %v2355 = vpack.c.b16 %v2167, %v2166
  %v2356 = vpack.c.b16 %v2169, %v2168
  %v2357 = vpack.c.b16 %v2171, %v2170
  %v2358 = vpack.c.b16 %v2173, %v2172
  %v2359 = vpack.c.b16 %v2175, %v2174
  %v2360 = vpack.c.b16 %v2177, %v2176
  %v2361 = vpack.c.b16 %v2179, %v2178
  %v2362 = vpack.c.b16 %v2181, %v2180
  %v2363 = vpack.c.b16 %v2183, %v2182
  %v2364 = vpack.c.b16 %v2185, %v2184
  %v2365 = vpack.c.b16 %v2187, %v2186
  %v2366 = vpack.c.b16 %v2189, %v2188
  %v2367 = vpack.c.b16 %v2191, %v2190
  %v2368 = vpack.c.b16 %v2193, %v2192
  %v2369 = vpack.c.b16 %v2195, %v2194
  %v2370 = vpack.c.b16 %v2197, %v2196
  %v2371 = vpack.c.b16 %v2199, %v2198
  %v2372 = vpack.c.b16 %v2201, %v2200
  %v2373 = vpack.c.b16 %v2203, %v2202
  %v2374 = vpack.c.b16 %v2205, %v2204
  %v2375 = vpack.c.b16 %v2207, %v2206
  %v2376 = vpack.c.b16 %v2209, %v2208
  %v2377 = vpack.c.b16 %v2211, %v2210
  %v2378 = vpack.c.b16 %v2213, %v2212
  %v2379 = vpack.c.b16 %v2215, %v2214
  %v2380 = vpack.c.b16 %v2217, %v2216
  %v2381 = vpack.c.b16 %v2219, %v2218
  %v2382 = vpack.c.b16 %v2221, %v2220
  %v2383 = vpack.c.b16 %v2223, %v2222
  %v2384 = vpack.c.b16 %v2225, %v2224
  %v2385 = vpack.c.b16 %v2227, %v2226
  %v2386 = vpack.c.b16 %v2229, %v2228
  %v2387 = vpack.c.b16 %v2231, %v2230
  %v2388 = vpack.c.b16 %v2233, %v2232
  %v2389 = vpack.c.b16 %v2235, %v2234
  %v2390 = vpack.c.b16 %v2237, %v2236
  %v2391 = vpack.c.b16 %v2239, %v2238
  %v2392 = vpack.c.b16 %v2241, %v2240
  %v2393 = vpack.c.b16 %v2243, %v2242
  %v2394 = vpack.c.b16 %v2245, %v2244
  %v2395 = vpack.c.b16 %v2247, %v2246
  %v2396 = vpack.c.b16 %v2249, %v2248
  %v2397 = vpack.c.b16 %v2251, %v2250
  %v2398 = vpack.c.b16 %v2253, %v2252
  %v2399 = vpack.c.b16 %v2255, %v2254
  %v2400 = vpack.c.b16 %v2257, %v2256
  %v2401 = vpack.c.b16 %v2259, %v2258
  %v2402 = vpack.c.b16 %v2261, %v2260
  %v2403 = vpack.c.b16 %v2263, %v2262
  %v2404 = vpack.c.b16 %v2265, %v2264
  %v2405 = vpack.c.b16 %v2267, %v2266
  %v2406 = vpack.c.b16 %v2269, %v2268
  %v2407 = vpack.c.b16 %v2271, %v2270
  %v2408 = vpack.c.b16 %v2273, %v2272
  %v2409 = vpack.c.b16 %v2275, %v2274
  %v2410 = vpack.c.b16 %v2277, %v2276
  %v2411 = vpack.c.b16 %v2279, %v2278
  %v2412 = vpack.c.b16 %v2281, %v2280
  %v2413 = vpack.c.b16 %v2283, %v2282
  %v2414 = vpack.c.b16 %v2285, %v2284
  %v2415 = vpack.c.b16 %v2287, %v2286
  %v2416 = vpack.c.b16 %v2289, %v2288
  %v2417 = vpack.c.b16 %v2291, %v2290
  %v2418 = vpack.c.b16 %v2293, %v2292
  %v2419 = vpack.c.b16 %v2295, %v2294
  %v2420 = vpack.c.b16 %v2297, %v2296
  %v2421 = vpack.c.b16 %v2299, %v2298
  %v2422 = vpack.c.b16 %v2301, %v2300
  %v2423 = vpack.c.b16 %v2303, %v2302
  %v2424 = vpack.c.b16 %v2305, %v2304
  %v2425 = vpack.c.b16 %v2307, %v2306
  %v2426 = vpack.c.b16 %v2309, %v2308
  %v2427 = vpack.c.b16 %v2311, %v2310
  %v2428 = vpack.c.b16 %v2313, %v2312
  %v2429 = vpack.c.b16 %v2315, %v2314
  %v2430 = vpack.c.b16 %v2317, %v2316
  %v2431 = vpack.c.b16 %v2319, %v2318
  %v2432 = vpack.c.b16 %v2321, %v2320
  %v2433 = vpack.c.b16 %v2323, %v2322
  %v2434 = vpack.c.b16 %v2325, %v2324
  %v2435 = vpack.c.b16 %v2327, %v2326
  %v2436 = vpack.c.b16 %v2329, %v2328
  %v2437 = vpack.c.b16 %v2331, %v2330
  %v2438 = vpack.c.b16 %v2333, %v2332
  %v2439 = vpack.c.b16 %v2335, %v2334
  %v2440 = vpack.c.b16 %v2337, %v2336
  %v2441 = vpack.c.b16 %v2339, %v2338
  %v2442 = vpack.c.b16 %v2341, %v2340
  %v2443 = vpack.c.b16 %v2343, %v2342
  %v2444 = vpack.c.b16 %v2345, %v2344
  %v2445 = vpack.c.b16 %v2347, %v2346
  %v2446 = vpack.c.b16 %v2349, %v2348
  %v2447 = vpack.c.b16 %v2351, %v2350
  %2544 = vst [vmem:[%s5] sm:$0xff] %v2352
  %2545 = vst [vmem:[%s5 + $0x8] sm:$0xff] %v2353
  %2546 = vst [vmem:[%s5 + $0x10] sm:$0xff] %v2354
  %2547 = vst [vmem:[%s5 + $0x18] sm:$0xff] %v2355
  %2548 = vst [vmem:[%s5 + $0x20] sm:$0xff] %v2356
  %2549 = vst [vmem:[%s5 + $0x28] sm:$0xff] %v2357
  %2550 = vst [vmem:[%s5 + $0x30] sm:$0xff] %v2358
  %2551 = vst [vmem:[%s5 + $0x38] sm:$0xff] %v2359
  %2552 = vst [vmem:[%s5 + $0x40] sm:$0xff] %v2360
  %2553 = vst [vmem:[%s5 + $0x48] sm:$0xff] %v2361
  %2554 = vst [vmem:[%s5 + $0x50] sm:$0xff] %v2362
  %2555 = vst [vmem:[%s5 + $0x58] sm:$0xff] %v2363
  %2556 = vst [vmem:[%s5 + $0x60] sm:$0xff] %v2364
  %2557 = vst [vmem:[%s5 + $0x68] sm:$0xff] %v2365
  %2558 = vst [vmem:[%s5 + $0x70] sm:$0xff] %v2366
  %2559 = vst [vmem:[%s5 + $0x78] sm:$0xff] %v2367
  %2560 = vst [vmem:[%s5 + $0x80] sm:$0xff] %v2368
  %2561 = vst [vmem:[%s5 + $0x88] sm:$0xff] %v2369
  %2562 = vst [vmem:[%s5 + $0x90] sm:$0xff] %v2370
  %2563 = vst [vmem:[%s5 + $0x98] sm:$0xff] %v2371
  %2564 = vst [vmem:[%s5 + $0xa0] sm:$0xff] %v2372
  %2565 = vst [vmem:[%s5 + $0xa8] sm:$0xff] %v2373
  %2566 = vst [vmem:[%s5 + $0xb0] sm:$0xff] %v2374
  %2567 = vst [vmem:[%s5 + $0xb8] sm:$0xff] %v2375
  %2568 = vst [vmem:[%s5 + $0xc0] sm:$0xff] %v2376
  %2569 = vst [vmem:[%s5 + $0xc8] sm:$0xff] %v2377
  %2570 = vst [vmem:[%s5 + $0xd0] sm:$0xff] %v2378
  %2571 = vst [vmem:[%s5 + $0xd8] sm:$0xff] %v2379
  %2572 = vst [vmem:[%s5 + $0xe0] sm:$0xff] %v2380
  %2573 = vst [vmem:[%s5 + $0xe8] sm:$0xff] %v2381
  %2574 = vst [vmem:[%s5 + $0xf0] sm:$0xff] %v2382
  %2575 = vst [vmem:[%s5 + $0xf8] sm:$0xff] %v2383
  %2576 = vst [vmem:[%s5 + $0x100] sm:$0xff] %v2384
  %2577 = vst [vmem:[%s5 + $0x108] sm:$0xff] %v2385
  %2578 = vst [vmem:[%s5 + $0x110] sm:$0xff] %v2386
  %2579 = vst [vmem:[%s5 + $0x118] sm:$0xff] %v2387
  %2580 = vst [vmem:[%s5 + $0x120] sm:$0xff] %v2388
  %2581 = vst [vmem:[%s5 + $0x128] sm:$0xff] %v2389
  %2582 = vst [vmem:[%s5 + $0x130] sm:$0xff] %v2390
  %2583 = vst [vmem:[%s5 + $0x138] sm:$0xff] %v2391
  %2584 = vst [vmem:[%s5 + $0x140] sm:$0xff] %v2392
  %2585 = vst [vmem:[%s5 + $0x148] sm:$0xff] %v2393
  %2586 = vst [vmem:[%s5 + $0x150] sm:$0xff] %v2394
  %2587 = vst [vmem:[%s5 + $0x158] sm:$0xff] %v2395
  %2588 = vst [vmem:[%s5 + $0x160] sm:$0xff] %v2396
  %2589 = vst [vmem:[%s5 + $0x168] sm:$0xff] %v2397
  %2590 = vst [vmem:[%s5 + $0x170] sm:$0xff] %v2398
  %2591 = vst [vmem:[%s5 + $0x178] sm:$0xff] %v2399
  %2592 = vst [vmem:[%s5 + $0x180] sm:$0xff] %v2400
  %2593 = vst [vmem:[%s5 + $0x188] sm:$0xff] %v2401
  %2594 = vst [vmem:[%s5 + $0x190] sm:$0xff] %v2402
  %2595 = vst [vmem:[%s5 + $0x198] sm:$0xff] %v2403
  %2596 = vst [vmem:[%s5 + $0x1a0] sm:$0xff] %v2404
  %2597 = vst [vmem:[%s5 + $0x1a8] sm:$0xff] %v2405
  %2598 = vst [vmem:[%s5 + $0x1b0] sm:$0xff] %v2406
  %2599 = vst [vmem:[%s5 + $0x1b8] sm:$0xff] %v2407
  %2600 = vst [vmem:[%s5 + $0x1c0] sm:$0xff] %v2408
  %2601 = vst [vmem:[%s5 + $0x1c8] sm:$0xff] %v2409
  %2602 = vst [vmem:[%s5 + $0x1d0] sm:$0xff] %v2410
  %2603 = vst [vmem:[%s5 + $0x1d8] sm:$0xff] %v2411
  %2604 = vst [vmem:[%s5 + $0x1e0] sm:$0xff] %v2412
  %2605 = vst [vmem:[%s5 + $0x1e8] sm:$0xff] %v2413
  %2606 = vst [vmem:[%s5 + $0x1f0] sm:$0xff] %v2414
  %2607 = vst [vmem:[%s5 + $0x1f8] sm:$0xff] %v2415
  %2608 = vst [vmem:[%s5 + $0x200] sm:$0xff] %v2416
  %2609 = vst [vmem:[%s5 + $0x208] sm:$0xff] %v2417
  %2610 = vst [vmem:[%s5 + $0x210] sm:$0xff] %v2418
  %2611 = vst [vmem:[%s5 + $0x218] sm:$0xff] %v2419
  %2612 = vst [vmem:[%s5 + $0x220] sm:$0xff] %v2420
  %2613 = vst [vmem:[%s5 + $0x228] sm:$0xff] %v2421
  %2614 = vst [vmem:[%s5 + $0x230] sm:$0xff] %v2422
  %2615 = vst [vmem:[%s5 + $0x238] sm:$0xff] %v2423
  %2616 = vst [vmem:[%s5 + $0x240] sm:$0xff] %v2424
  %2617 = vst [vmem:[%s5 + $0x248] sm:$0xff] %v2425
  %2618 = vst [vmem:[%s5 + $0x250] sm:$0xff] %v2426
  %2619 = vst [vmem:[%s5 + $0x258] sm:$0xff] %v2427
  %2620 = vst [vmem:[%s5 + $0x260] sm:$0xff] %v2428
  %2621 = vst [vmem:[%s5 + $0x268] sm:$0xff] %v2429
  %2622 = vst [vmem:[%s5 + $0x270] sm:$0xff] %v2430
  %2623 = vst [vmem:[%s5 + $0x278] sm:$0xff] %v2431
  %2624 = vst [vmem:[%s5 + $0x280] sm:$0xff] %v2432
  %2625 = vst [vmem:[%s5 + $0x288] sm:$0xff] %v2433
  %2626 = vst [vmem:[%s5 + $0x290] sm:$0xff] %v2434
  %2627 = vst [vmem:[%s5 + $0x298] sm:$0xff] %v2435
  %2628 = vst [vmem:[%s5 + $0x2a0] sm:$0xff] %v2436
  %2629 = vst [vmem:[%s5 + $0x2a8] sm:$0xff] %v2437
  %2630 = vst [vmem:[%s5 + $0x2b0] sm:$0xff] %v2438
  %2631 = vst [vmem:[%s5 + $0x2b8] sm:$0xff] %v2439
  %2632 = vst [vmem:[%s5 + $0x2c0] sm:$0xff] %v2440
  %2633 = vst [vmem:[%s5 + $0x2c8] sm:$0xff] %v2441
  %2634 = vst [vmem:[%s5 + $0x2d0] sm:$0xff] %v2442
  %2635 = vst [vmem:[%s5 + $0x2d8] sm:$0xff] %v2443
  %2636 = vst [vmem:[%s5 + $0x2e0] sm:$0xff] %v2444
  %2637 = vst [vmem:[%s5 + $0x2e8] sm:$0xff] %v2445
  %2638 = vst [vmem:[%s5 + $0x2f0] sm:$0xff] %v2446
  %2639 = vst [vmem:[%s5 + $0x2f8] sm:$0xff] %v2447
  // Predicated region
  $region22: #{transformer_encoder_layer.3} parent=0 // pred_check
    _
  $region23: #{transformer_encoder_layer.3} parent=0 // pred_check_branch
    %2641 = sbr.rel (0) target = $region25
  $region24: #{transformer_encoder_layer.3} parent=0 // pred_region
    _
  $region25: #{transformer_encoder_layer.3} parent=0 // pred_fallthru
    _
  // Predicated region
  $region26: #{transformer_encoder_layer.3} parent=0 // pred_check
    _
  $region27: #{transformer_encoder_layer.3} parent=0 // pred_check_branch
    %2643 = sbr.rel (0) target = $region29
  $region28: #{transformer_encoder_layer.3} parent=0 // pred_region
    _
  $region29: #{transformer_encoder_layer.3} parent=0 // pred_fallthru
    _

// kernel: transformer_encoder_layer.5
$region0: #{transformer_encoder_layer.5}
  #allocation0 [shape = 'u32[]', space=smem, size = 0x4, offset = 0x4, fixed_abs, tag = 'smem constant byte address 0x4 - core index']
  #allocation1 [shape = 'u32[144,128]{1,0:T(1,128)}', space=vmem, size = 0x12000, scoped, tag = 'internal scratch']
  #allocation2 [shape = 'f32[256,256]{1,0:T(8,128)}', space=vmem, size = 0x40000, scoped, tag = 'scratch operand']
  #allocation3 [shape = 'bf16[256,256]{1,0:T(16,128)(2,1)}', space=vmem, size = 0x20000, scoped, tag = 'scratch operand']
  #allocation4 [shape = 'f32[256,256]{1,0:T(8,128)}', space=vmem, size = 0x40000, scoped, tag = 'scratch operand']
  %s0 = inlined_call_operand.vmem [shape: f32[256,256], index: 0, kind: input, shape index: {}]
  %s1 = inlined_call_operand.vmem [shape: bf16[256,256], index: 1, kind: input, shape index: {}]
  %s2 = inlined_call_operand.vmem [shape: bf16[256,256], index: 2, kind: input, shape index: {}]
  %s3 = inlined_call_operand.vmem [shape: f32[1,256], index: 3, kind: input, shape index: {}]
  %s4 = inlined_call_operand.vmem [shape: f32[1,256], index: 4, kind: input, shape index: {}]
  %s5 = inlined_call_operand.vmem [shape: f32[1,256], index: 5, kind: input, shape index: {}]
  %s6 = inlined_call_operand.vmem [shape: bf16[256,512], index: 6, kind: input, shape index: {}]
  %s7 = inlined_call_operand.vmem [shape: f32[1,512], index: 7, kind: input, shape index: {}]
  %s8 = inlined_call_operand.vmem [shape: bf16[512,256], index: 8, kind: input, shape index: {}]
  %s9 = inlined_call_operand.vmem [shape: f32[1,256], index: 9, kind: input, shape index: {}]
  %s10 = inlined_call_operand.hbm [shape: f32[256,256], index: 10, kind: output, shape index: {}]
  %s11 = sld [smem:[#allocation0]]
  $region58: #{transformer_encoder_layer.5} parent=0
    _
  %s13 = ssub.s32 1, %s11
  %s14 = scalar_select 0, %s13, %s11
  $region1: #{transformer_encoder_layer.5} parent=0
    #allocation5 [shape = 'u8[262144]{0}', space=vmem, size = 0x40000, scoped, tag = 'output window, operand 0, single buffered']
    #allocation6 [shape = 's32[1]{0}', space=sflag, size = 0x4, scoped, tag = 'scoped memory for transformer_encoder_layer.5']
    %15 = vsyncpa [#allocation6], 0
    // Predicated region
    $region2: #{transformer_encoder_layer.5} parent=1 // pred_check
      _
    $region3: #{transformer_encoder_layer.5} parent=1 // pred_check_branch
      %17 = sbr.rel (0) target = $region5
    $region4: #{transformer_encoder_layer.5} parent=1 // pred_region
      _
    $region5: #{transformer_encoder_layer.5} parent=1 // pred_fallthru
      _
    // Predicated region
    $region6: #{transformer_encoder_layer.5} parent=1 // pred_check
      _
    $region7: #{transformer_encoder_layer.5} parent=1 // pred_check_branch
      %19 = sbr.rel (0) target = $region9
    $region8: #{transformer_encoder_layer.5} parent=1 // pred_region
      _
    $region9: #{transformer_encoder_layer.5} parent=1 // pred_fallthru
      _
    // Predicated region
    $region10: #{transformer_encoder_layer.5} parent=1 // pred_check
      _
    $region11: #{transformer_encoder_layer.5} parent=1 // pred_check_branch
      %21 = sbr.rel (0) target = $region13
    $region12: #{transformer_encoder_layer.5} parent=1 // pred_region
      _
    $region13: #{transformer_encoder_layer.5} parent=1 // pred_fallthru
      _
    // Predicated region
    $region14: #{transformer_encoder_layer.5} parent=1 // pred_check
      _
    $region15: #{transformer_encoder_layer.5} parent=1 // pred_check_branch
      %23 = sbr.rel (0) target = $region17
    $region16: #{transformer_encoder_layer.5} parent=1 // pred_region
      _
    $region17: #{transformer_encoder_layer.5} parent=1 // pred_fallthru
      _
    // Predicated region
    $region18: #{transformer_encoder_layer.5} parent=1 // pred_check
      _
    $region19: #{transformer_encoder_layer.5} parent=1 // pred_check_branch
      %25 = sbr.rel (0) target = $region21
    $region20: #{transformer_encoder_layer.5} parent=1 // pred_region
      _
    $region21: #{transformer_encoder_layer.5} parent=1 // pred_fallthru
      _
    // Predicated region
    $region22: #{transformer_encoder_layer.5} parent=1 // pred_check
      _
    $region23: #{transformer_encoder_layer.5} parent=1 // pred_check_branch
      %27 = sbr.rel (0) target = $region25
    $region24: #{transformer_encoder_layer.5} parent=1 // pred_region
      _
    $region25: #{transformer_encoder_layer.5} parent=1 // pred_fallthru
      _
    // Predicated region
    $region26: #{transformer_encoder_layer.5} parent=1 // pred_check
      _
    $region27: #{transformer_encoder_layer.5} parent=1 // pred_check_branch
      %29 = sbr.rel (0) target = $region29
    $region28: #{transformer_encoder_layer.5} parent=1 // pred_region
      _
    $region29: #{transformer_encoder_layer.5} parent=1 // pred_fallthru
      _
    // Predicated region
    $region30: #{transformer_encoder_layer.5} parent=1 // pred_check
      _
    $region31: #{transformer_encoder_layer.5} parent=1 // pred_check_branch
      %31 = sbr.rel (0) target = $region33
    $region32: #{transformer_encoder_layer.5} parent=1 // pred_region
      _
    $region33: #{transformer_encoder_layer.5} parent=1 // pred_fallthru
      _
    // Predicated region
    $region34: #{transformer_encoder_layer.5} parent=1 // pred_check
      _
    $region35: #{transformer_encoder_layer.5} parent=1 // pred_check_branch
      %33 = sbr.rel (0) target = $region37
    $region36: #{transformer_encoder_layer.5} parent=1 // pred_region
      _
    $region37: #{transformer_encoder_layer.5} parent=1 // pred_fallthru
      _
    // Predicated region
    $region38: #{transformer_encoder_layer.5} parent=1 // pred_check
      _
    $region39: #{transformer_encoder_layer.5} parent=1 // pred_check_branch
      %35 = sbr.rel (0) target = $region41
    $region40: #{transformer_encoder_layer.5} parent=1 // pred_region
      _
    $region41: #{transformer_encoder_layer.5} parent=1 // pred_fallthru
      _
    %p36 = scmp.eq.s32.totalorder 0, 0
    // Predicated region
    $region42: #{transformer_encoder_layer.5} parent=1 // pred_check
      %p37 = pneg %p36
    $region43: #{transformer_encoder_layer.5} parent=1 // pred_check_branch
      %39 = sbr.rel (%p37) target = $region45
    $region44: #{transformer_encoder_layer.5} parent=1 // pred_region
      %v40 = vld [vmem:[%s0] sm:$0xff]
      %v41 = vld [vmem:[%s0 + $0x8] sm:$0xff]
      %v42 = vld [vmem:[%s0 + $0x10] sm:$0xff]
      %v43 = vld [vmem:[%s0 + $0x18] sm:$0xff]
      %v44 = vld [vmem:[%s0 + $0x20] sm:$0xff]
      %v45 = vld [vmem:[%s0 + $0x28] sm:$0xff]
      %v46 = vld [vmem:[%s0 + $0x30] sm:$0xff]
      %v47 = vld [vmem:[%s0 + $0x38] sm:$0xff]
      %v48 = vld [vmem:[%s0 + $0x40] sm:$0xff]
      %v49 = vld [vmem:[%s0 + $0x48] sm:$0xff]
      %v50 = vld [vmem:[%s0 + $0x50] sm:$0xff]
      %v51 = vld [vmem:[%s0 + $0x58] sm:$0xff]
      %v52 = vld [vmem:[%s0 + $0x60] sm:$0xff]
      %v53 = vld [vmem:[%s0 + $0x68] sm:$0xff]
      %v54 = vld [vmem:[%s0 + $0x70] sm:$0xff]
      %v55 = vld [vmem:[%s0 + $0x78] sm:$0xff]
      %v56 = vld [vmem:[%s0 + $0x80] sm:$0xff]
      %v57 = vld [vmem:[%s0 + $0x88] sm:$0xff]
      %v58 = vld [vmem:[%s0 + $0x90] sm:$0xff]
      %v59 = vld [vmem:[%s0 + $0x98] sm:$0xff]
      %v60 = vld [vmem:[%s0 + $0xa0] sm:$0xff]
      %v61 = vld [vmem:[%s0 + $0xa8] sm:$0xff]
      %v62 = vld [vmem:[%s0 + $0xb0] sm:$0xff]
      %v63 = vld [vmem:[%s0 + $0xb8] sm:$0xff]
      %v64 = vld [vmem:[%s0 + $0xc0] sm:$0xff]
      %v65 = vld [vmem:[%s0 + $0xc8] sm:$0xff]
      %v66 = vld [vmem:[%s0 + $0xd0] sm:$0xff]
      %v67 = vld [vmem:[%s0 + $0xd8] sm:$0xff]
      %v68 = vld [vmem:[%s0 + $0xe0] sm:$0xff]
      %v69 = vld [vmem:[%s0 + $0xe8] sm:$0xff]
      %v70 = vld [vmem:[%s0 + $0xf0] sm:$0xff]
      %v71 = vld [vmem:[%s0 + $0xf8] sm:$0xff]
      %v72 = vld [vmem:[%s0 + $0x100] sm:$0xff]
      %v73 = vld [vmem:[%s0 + $0x108] sm:$0xff]
      %v74 = vld [vmem:[%s0 + $0x110] sm:$0xff]
      %v75 = vld [vmem:[%s0 + $0x118] sm:$0xff]
      %v76 = vld [vmem:[%s0 + $0x120] sm:$0xff]
      %v77 = vld [vmem:[%s0 + $0x128] sm:$0xff]
      %v78 = vld [vmem:[%s0 + $0x130] sm:$0xff]
      %v79 = vld [vmem:[%s0 + $0x138] sm:$0xff]
      %v80 = vld [vmem:[%s0 + $0x140] sm:$0xff]
      %v81 = vld [vmem:[%s0 + $0x148] sm:$0xff]
      %v82 = vld [vmem:[%s0 + $0x150] sm:$0xff]
      %v83 = vld [vmem:[%s0 + $0x158] sm:$0xff]
      %v84 = vld [vmem:[%s0 + $0x160] sm:$0xff]
      %v85 = vld [vmem:[%s0 + $0x168] sm:$0xff]
      %v86 = vld [vmem:[%s0 + $0x170] sm:$0xff]
      %v87 = vld [vmem:[%s0 + $0x178] sm:$0xff]
      %v88 = vld [vmem:[%s0 + $0x180] sm:$0xff]
      %v89 = vld [vmem:[%s0 + $0x188] sm:$0xff]
      %v90 = vld [vmem:[%s0 + $0x190] sm:$0xff]
      %v91 = vld [vmem:[%s0 + $0x198] sm:$0xff]
      %v92 = vld [vmem:[%s0 + $0x1a0] sm:$0xff]
      %v93 = vld [vmem:[%s0 + $0x1a8] sm:$0xff]
      %v94 = vld [vmem:[%s0 + $0x1b0] sm:$0xff]
      %v95 = vld [vmem:[%s0 + $0x1b8] sm:$0xff]
      %v96 = vld [vmem:[%s0 + $0x1c0] sm:$0xff]
      %v97 = vld [vmem:[%s0 + $0x1c8] sm:$0xff]
      %v98 = vld [vmem:[%s0 + $0x1d0] sm:$0xff]
      %v99 = vld [vmem:[%s0 + $0x1d8] sm:$0xff]
      %v100 = vld [vmem:[%s0 + $0x1e0] sm:$0xff]
      %v101 = vld [vmem:[%s0 + $0x1e8] sm:$0xff]
      %v102 = vld [vmem:[%s0 + $0x1f0] sm:$0xff]
      %v103 = vld [vmem:[%s0 + $0x1f8] sm:$0xff]
      %v104 = vld [vmem:[%s1] sm:$0xff]
      %v105 = vld [vmem:[%s1 + $0x8] sm:$0xff]
      %v106 = vld [vmem:[%s1 + $0x10] sm:$0xff]
      %v107 = vld [vmem:[%s1 + $0x18] sm:$0xff]
      %v108 = vld [vmem:[%s1 + $0x20] sm:$0xff]
      %v109 = vld [vmem:[%s1 + $0x28] sm:$0xff]
      %v110 = vld [vmem:[%s1 + $0x30] sm:$0xff]
      %v111 = vld [vmem:[%s1 + $0x38] sm:$0xff]
      %v112 = vld [vmem:[%s1 + $0x40] sm:$0xff]
      %v113 = vld [vmem:[%s1 + $0x48] sm:$0xff]
      %v114 = vld [vmem:[%s1 + $0x50] sm:$0xff]
      %v115 = vld [vmem:[%s1 + $0x58] sm:$0xff]
      %v116 = vld [vmem:[%s1 + $0x60] sm:$0xff]
      %v117 = vld [vmem:[%s1 + $0x68] sm:$0xff]
      %v118 = vld [vmem:[%s1 + $0x70] sm:$0xff]
      %v119 = vld [vmem:[%s1 + $0x78] sm:$0xff]
      %v120 = vld [vmem:[%s1 + $0x80] sm:$0xff]
      %v121 = vld [vmem:[%s1 + $0x88] sm:$0xff]
      %v122 = vld [vmem:[%s1 + $0x90] sm:$0xff]
      %v123 = vld [vmem:[%s1 + $0x98] sm:$0xff]
      %v124 = vld [vmem:[%s1 + $0xa0] sm:$0xff]
      %v125 = vld [vmem:[%s1 + $0xa8] sm:$0xff]
      %v126 = vld [vmem:[%s1 + $0xb0] sm:$0xff]
      %v127 = vld [vmem:[%s1 + $0xb8] sm:$0xff]
      %v128 = vld [vmem:[%s1 + $0xc0] sm:$0xff]
      %v129 = vld [vmem:[%s1 + $0xc8] sm:$0xff]
      %v130 = vld [vmem:[%s1 + $0xd0] sm:$0xff]
      %v131 = vld [vmem:[%s1 + $0xd8] sm:$0xff]
      %v132 = vld [vmem:[%s1 + $0xe0] sm:$0xff]
      %v133 = vld [vmem:[%s1 + $0xe8] sm:$0xff]
      %v134 = vld [vmem:[%s1 + $0xf0] sm:$0xff]
      %v135 = vld [vmem:[%s1 + $0xf8] sm:$0xff]
      %v136 = vld [vmem:[%s2] sm:$0xff]
      %v137 = vld [vmem:[%s2 + $0x8] sm:$0xff]
      %v138 = vld [vmem:[%s2 + $0x10] sm:$0xff]
      %v139 = vld [vmem:[%s2 + $0x18] sm:$0xff]
      %v140 = vld [vmem:[%s2 + $0x20] sm:$0xff]
      %v141 = vld [vmem:[%s2 + $0x28] sm:$0xff]
      %v142 = vld [vmem:[%s2 + $0x30] sm:$0xff]
      %v143 = vld [vmem:[%s2 + $0x38] sm:$0xff]
      %v144 = vld [vmem:[%s2 + $0x40] sm:$0xff]
      %v145 = vld [vmem:[%s2 + $0x48] sm:$0xff]
      %v146 = vld [vmem:[%s2 + $0x50] sm:$0xff]
      %v147 = vld [vmem:[%s2 + $0x58] sm:$0xff]
      %v148 = vld [vmem:[%s2 + $0x60] sm:$0xff]
      %v149 = vld [vmem:[%s2 + $0x68] sm:$0xff]
      %v150 = vld [vmem:[%s2 + $0x70] sm:$0xff]
      %v151 = vld [vmem:[%s2 + $0x78] sm:$0xff]
      %v152 = vld [vmem:[%s2 + $0x80] sm:$0xff]
      %v153 = vld [vmem:[%s2 + $0x88] sm:$0xff]
      %v154 = vld [vmem:[%s2 + $0x90] sm:$0xff]
      %v155 = vld [vmem:[%s2 + $0x98] sm:$0xff]
      %v156 = vld [vmem:[%s2 + $0xa0] sm:$0xff]
      %v157 = vld [vmem:[%s2 + $0xa8] sm:$0xff]
      %v158 = vld [vmem:[%s2 + $0xb0] sm:$0xff]
      %v159 = vld [vmem:[%s2 + $0xb8] sm:$0xff]
      %v160 = vld [vmem:[%s2 + $0xc0] sm:$0xff]
      %v161 = vld [vmem:[%s2 + $0xc8] sm:$0xff]
      %v162 = vld [vmem:[%s2 + $0xd0] sm:$0xff]
      %v163 = vld [vmem:[%s2 + $0xd8] sm:$0xff]
      %v164 = vld [vmem:[%s2 + $0xe0] sm:$0xff]
      %v165 = vld [vmem:[%s2 + $0xe8] sm:$0xff]
      %v166 = vld [vmem:[%s2 + $0xf0] sm:$0xff]
      %v167 = vld [vmem:[%s2 + $0xf8] sm:$0xff]
      %v168 = vld [vmem:[%s3] sm:$0x3]
      %v170 = vlaneseq
      %v171 = vshrl.u32 %v170, 7
      %v172 = vsub.s32 0, %v171
      %v173 = vrot.slane %v168, %v172
      %v174 = vlaneseq
      %v175 = vshrl.u32 %v174, 7
      %v176 = vsub.s32 1, %v175
      %v177 = vrot.slane %v168, %v176
      %v212 = vunpack.c.l.b16 %v104
      %v213 = vunpack.c.h.b16 %v104
      %v214 = vunpack.c.l.b16 %v105
      %v215 = vunpack.c.h.b16 %v105
      %v216 = vunpack.c.l.b16 %v106
      %v217 = vunpack.c.h.b16 %v106
      %v218 = vunpack.c.l.b16 %v107
      %v219 = vunpack.c.h.b16 %v107
      %v220 = vunpack.c.l.b16 %v108
      %v221 = vunpack.c.h.b16 %v108
      %v222 = vunpack.c.l.b16 %v109
      %v223 = vunpack.c.h.b16 %v109
      %v224 = vunpack.c.l.b16 %v110
      %v225 = vunpack.c.h.b16 %v110
      %v226 = vunpack.c.l.b16 %v111
      %v227 = vunpack.c.h.b16 %v111
      %v228 = vunpack.c.l.b16 %v112
      %v229 = vunpack.c.h.b16 %v112
      %v230 = vunpack.c.l.b16 %v113
      %v231 = vunpack.c.h.b16 %v113
      %v232 = vunpack.c.l.b16 %v114
      %v233 = vunpack.c.h.b16 %v114
      %v234 = vunpack.c.l.b16 %v115
      %v235 = vunpack.c.h.b16 %v115
      %v236 = vunpack.c.l.b16 %v116
      %v237 = vunpack.c.h.b16 %v116
      %v238 = vunpack.c.l.b16 %v117
      %v239 = vunpack.c.h.b16 %v117
      %v240 = vunpack.c.l.b16 %v118
      %v241 = vunpack.c.h.b16 %v118
      %v242 = vunpack.c.l.b16 %v119
      %v243 = vunpack.c.h.b16 %v119
      %v244 = vunpack.c.l.b16 %v120
      %v245 = vunpack.c.h.b16 %v120
      %v246 = vunpack.c.l.b16 %v121
      %v247 = vunpack.c.h.b16 %v121
      %v248 = vunpack.c.l.b16 %v122
      %v249 = vunpack.c.h.b16 %v122
      %v250 = vunpack.c.l.b16 %v123
      %v251 = vunpack.c.h.b16 %v123
      %v252 = vunpack.c.l.b16 %v124
      %v253 = vunpack.c.h.b16 %v124
      %v254 = vunpack.c.l.b16 %v125
      %v255 = vunpack.c.h.b16 %v125
      %v256 = vunpack.c.l.b16 %v126
      %v257 = vunpack.c.h.b16 %v126
      %v258 = vunpack.c.l.b16 %v127
      %v259 = vunpack.c.h.b16 %v127
      %v260 = vunpack.c.l.b16 %v128
      %v261 = vunpack.c.h.b16 %v128
      %v262 = vunpack.c.l.b16 %v129
      %v263 = vunpack.c.h.b16 %v129
      %v264 = vunpack.c.l.b16 %v130
      %v265 = vunpack.c.h.b16 %v130
      %v266 = vunpack.c.l.b16 %v131
      %v267 = vunpack.c.h.b16 %v131
      %v268 = vunpack.c.l.b16 %v132
      %v269 = vunpack.c.h.b16 %v132
      %v270 = vunpack.c.l.b16 %v133
      %v271 = vunpack.c.h.b16 %v133
      %v272 = vunpack.c.l.b16 %v134
      %v273 = vunpack.c.h.b16 %v134
      %v274 = vunpack.c.l.b16 %v135
      %v275 = vunpack.c.h.b16 %v135
      %v276 = vpack.c.b16 %v214, %v212
      %v277 = vpack.c.b16 %v215, %v213
      %v278 = vpack.c.b16 %v218, %v216
      %v279 = vpack.c.b16 %v219, %v217
      %v280 = vpack.c.b16 %v222, %v220
      %v281 = vpack.c.b16 %v223, %v221
      %v282 = vpack.c.b16 %v226, %v224
      %v283 = vpack.c.b16 %v227, %v225
      %v284 = vpack.c.b16 %v230, %v228
      %v285 = vpack.c.b16 %v231, %v229
      %v286 = vpack.c.b16 %v234, %v232
      %v287 = vpack.c.b16 %v235, %v233
      %v288 = vpack.c.b16 %v238, %v236
      %v289 = vpack.c.b16 %v239, %v237
      %v290 = vpack.c.b16 %v242, %v240
      %v291 = vpack.c.b16 %v243, %v241
      %v292 = vpack.c.b16 %v246, %v244
      %v293 = vpack.c.b16 %v247, %v245
      %v294 = vpack.c.b16 %v250, %v248
      %v295 = vpack.c.b16 %v251, %v249
      %v296 = vpack.c.b16 %v254, %v252
      %v297 = vpack.c.b16 %v255, %v253
      %v298 = vpack.c.b16 %v258, %v256
      %v299 = vpack.c.b16 %v259, %v257
      %v300 = vpack.c.b16 %v262, %v260
      %v301 = vpack.c.b16 %v263, %v261
      %v302 = vpack.c.b16 %v266, %v264
      %v303 = vpack.c.b16 %v267, %v265
      %v304 = vpack.c.b16 %v270, %v268
      %v305 = vpack.c.b16 %v271, %v269
      %v306 = vpack.c.b16 %v274, %v272
      %v307 = vpack.c.b16 %v275, %v273
      %v372 = vunpack.c.l.b16 %v136
      %v373 = vunpack.c.h.b16 %v136
      %v374 = vunpack.c.l.b16 %v137
      %v375 = vunpack.c.h.b16 %v137
      %v376 = vunpack.c.l.b16 %v138
      %v377 = vunpack.c.h.b16 %v138
      %v378 = vunpack.c.l.b16 %v139
      %v379 = vunpack.c.h.b16 %v139
      %v380 = vunpack.c.l.b16 %v140
      %v381 = vunpack.c.h.b16 %v140
      %v382 = vunpack.c.l.b16 %v141
      %v383 = vunpack.c.h.b16 %v141
      %v384 = vunpack.c.l.b16 %v142
      %v385 = vunpack.c.h.b16 %v142
      %v386 = vunpack.c.l.b16 %v143
      %v387 = vunpack.c.h.b16 %v143
      %v388 = vunpack.c.l.b16 %v144
      %v389 = vunpack.c.h.b16 %v144
      %v390 = vunpack.c.l.b16 %v145
      %v391 = vunpack.c.h.b16 %v145
      %v392 = vunpack.c.l.b16 %v146
      %v393 = vunpack.c.h.b16 %v146
      %v394 = vunpack.c.l.b16 %v147
      %v395 = vunpack.c.h.b16 %v147
      %v396 = vunpack.c.l.b16 %v148
      %v397 = vunpack.c.h.b16 %v148
      %v398 = vunpack.c.l.b16 %v149
      %v399 = vunpack.c.h.b16 %v149
      %v400 = vunpack.c.l.b16 %v150
      %v401 = vunpack.c.h.b16 %v150
      %v402 = vunpack.c.l.b16 %v151
      %v403 = vunpack.c.h.b16 %v151
      %v404 = vunpack.c.l.b16 %v152
      %v405 = vunpack.c.h.b16 %v152
      %v406 = vunpack.c.l.b16 %v153
      %v407 = vunpack.c.h.b16 %v153
      %v408 = vunpack.c.l.b16 %v154
      %v409 = vunpack.c.h.b16 %v154
      %v410 = vunpack.c.l.b16 %v155
      %v411 = vunpack.c.h.b16 %v155
      %v412 = vunpack.c.l.b16 %v156
      %v413 = vunpack.c.h.b16 %v156
      %v414 = vunpack.c.l.b16 %v157
      %v415 = vunpack.c.h.b16 %v157
      %v416 = vunpack.c.l.b16 %v158
      %v417 = vunpack.c.h.b16 %v158
      %v418 = vunpack.c.l.b16 %v159
      %v419 = vunpack.c.h.b16 %v159
      %v420 = vunpack.c.l.b16 %v160
      %v421 = vunpack.c.h.b16 %v160
      %v422 = vunpack.c.l.b16 %v161
      %v423 = vunpack.c.h.b16 %v161
      %v424 = vunpack.c.l.b16 %v162
      %v425 = vunpack.c.h.b16 %v162
      %v426 = vunpack.c.l.b16 %v163
      %v427 = vunpack.c.h.b16 %v163
      %v428 = vunpack.c.l.b16 %v164
      %v429 = vunpack.c.h.b16 %v164
      %v430 = vunpack.c.l.b16 %v165
      %v431 = vunpack.c.h.b16 %v165
      %v432 = vunpack.c.l.b16 %v166
      %v433 = vunpack.c.h.b16 %v166
      %v434 = vunpack.c.l.b16 %v167
      %v435 = vunpack.c.h.b16 %v167
      %v436 = vpack.c.b16 %v374, %v372
      %v437 = vpack.c.b16 %v375, %v373
      %v438 = vpack.c.b16 %v378, %v376
      %v439 = vpack.c.b16 %v379, %v377
      %v440 = vpack.c.b16 %v382, %v380
      %v441 = vpack.c.b16 %v383, %v381
      %v442 = vpack.c.b16 %v386, %v384
      %v443 = vpack.c.b16 %v387, %v385
      %v444 = vpack.c.b16 %v390, %v388
      %v445 = vpack.c.b16 %v391, %v389
      %v446 = vpack.c.b16 %v394, %v392
      %v447 = vpack.c.b16 %v395, %v393
      %v448 = vpack.c.b16 %v398, %v396
      %v449 = vpack.c.b16 %v399, %v397
      %v450 = vpack.c.b16 %v402, %v400
      %v451 = vpack.c.b16 %v403, %v401
      %v452 = vpack.c.b16 %v406, %v404
      %v453 = vpack.c.b16 %v407, %v405
      %v454 = vpack.c.b16 %v410, %v408
      %v455 = vpack.c.b16 %v411, %v409
      %v456 = vpack.c.b16 %v414, %v412
      %v457 = vpack.c.b16 %v415, %v413
      %v458 = vpack.c.b16 %v418, %v416
      %v459 = vpack.c.b16 %v419, %v417
      %v460 = vpack.c.b16 %v422, %v420
      %v461 = vpack.c.b16 %v423, %v421
      %v462 = vpack.c.b16 %v426, %v424
      %v463 = vpack.c.b16 %v427, %v425
      %v464 = vpack.c.b16 %v430, %v428
      %v465 = vpack.c.b16 %v431, %v429
      %v466 = vpack.c.b16 %v434, %v432
      %v467 = vpack.c.b16 %v435, %v433
      %500 = vmatprep.subr.bf16.mxu0 %v437
      %501 = vmatpush1.bf16.msra.mxu0 %v436
      %502 = vmatprep.subr.bf16.mxu0 %v439
      %503 = vmatpush1.bf16.msra.mxu0 %v438
      %504 = vmatprep.subr.bf16.mxu0 %v441
      %505 = vmatpush1.bf16.msra.mxu0 %v440
      %506 = vmatprep.subr.bf16.mxu0 %v443
      %507 = vmatpush1.bf16.msra.mxu0 %v442
      %508 = vmatprep.subr.bf16.mxu0 %v445
      %509 = vmatpush1.bf16.msra.mxu0 %v444
      %510 = vmatprep.subr.bf16.mxu0 %v447
      %511 = vmatpush1.bf16.msra.mxu0 %v446
      %512 = vmatprep.subr.bf16.mxu0 %v449
      %513 = vmatpush1.bf16.msra.mxu0 %v448
      %514 = vmatprep.subr.bf16.mxu0 %v451
      %515 = vmatpush1.bf16.msra.mxu0 %v450
      %516 = vmatprep.subr.bf16.mxu0 %v453
      %517 = vmatpush1.bf16.msra.mxu0 %v452
      %518 = vmatprep.subr.bf16.mxu0 %v455
      %519 = vmatpush1.bf16.msra.mxu0 %v454
      %520 = vmatprep.subr.bf16.mxu0 %v457
      %521 = vmatpush1.bf16.msra.mxu0 %v456
      %522 = vmatprep.subr.bf16.mxu0 %v459
      %523 = vmatpush1.bf16.msra.mxu0 %v458
      %524 = vmatprep.subr.bf16.mxu0 %v461
      %525 = vmatpush1.bf16.msra.mxu0 %v460
      %526 = vmatprep.subr.bf16.mxu0 %v463
      %527 = vmatpush1.bf16.msra.mxu0 %v462
      %528 = vmatprep.subr.bf16.mxu0 %v465
      %529 = vmatpush1.bf16.msra.mxu0 %v464
      %530 = vmatprep.subr.bf16.mxu0 %v467
      %531 = vmatpush1.bf16.msra.mxu0 %v466
      %532 = vmatprep.mubr.bf16.mxu0 %v277
      %533 = vmatmul.mubr.bf16.gmra.mrb[0].mxu0 %v276
      %v534 = vpop.f32.mrb[0].mxu0
      %v535 = vadd.f32 %v173, %v534
      %v536 = vpop.f32.mrb[0].mxu0
      %v537 = vadd.f32 %v177, %v536
      %v538 = vpop.f32.mrb[0].mxu0
      %v539 = vadd.f32 %v173, %v538
      %v540 = vpop.f32.mrb[0].mxu0
      %v541 = vadd.f32 %v177, %v540
      %542 = vmatprep.mubr.bf16.mxu0 %v279
      %543 = vmatmul.mubr.bf16.gmra.mrb[0].mxu0 %v278
      %v544 = vpop.f32.mrb[0].mxu0
      %v545 = vadd.f32 %v173, %v544
      %v546 = vpop.f32.mrb[0].mxu0
      %v547 = vadd.f32 %v177, %v546
      %v548 = vpop.f32.mrb[0].mxu0
      %v549 = vadd.f32 %v173, %v548
      %v550 = vpop.f32.mrb[0].mxu0
      %v551 = vadd.f32 %v177, %v550
      %552 = vmatprep.mubr.bf16.mxu0 %v281
      %553 = vmatmul.mubr.bf16.gmra.mrb[0].mxu0 %v280
      %v554 = vpop.f32.mrb[0].mxu0
      %v555 = vadd.f32 %v173, %v554
      %v556 = vpop.f32.mrb[0].mxu0
      %v557 = vadd.f32 %v177, %v556
      %v558 = vpop.f32.mrb[0].mxu0
      %v559 = vadd.f32 %v173, %v558
      %v560 = vpop.f32.mrb[0].mxu0
      %v561 = vadd.f32 %v177, %v560
      %562 = vmatprep.mubr.bf16.mxu0 %v283
      %563 = vmatmul.mubr.bf16.gmra.mrb[0].mxu0 %v282
      %v564 = vpop.f32.mrb[0].mxu0
      %v565 = vadd.f32 %v173, %v564
      %v566 = vpop.f32.mrb[0].mxu0
      %v567 = vadd.f32 %v177, %v566
      %v568 = vpop.f32.mrb[0].mxu0
      %v569 = vadd.f32 %v173, %v568
      %v570 = vpop.f32.mrb[0].mxu0
      %v571 = vadd.f32 %v177, %v570
      %572 = vmatprep.mubr.bf16.mxu0 %v285
      %573 = vmatmul.mubr.bf16.gmra.mrb[0].mxu0 %v284
      %v574 = vpop.f32.mrb[0].mxu0
      %v575 = vadd.f32 %v173, %v574
      %v576 = vpop.f32.mrb[0].mxu0
      %v577 = vadd.f32 %v177, %v576
      %v578 = vpop.f32.mrb[0].mxu0
      %v579 = vadd.f32 %v173, %v578
      %v580 = vpop.f32.mrb[0].mxu0
      %v581 = vadd.f32 %v177, %v580
      %582 = vmatprep.mubr.bf16.mxu0 %v287
      %583 = vmatmul.mubr.bf16.gmra.mrb[0].mxu0 %v286
      %v584 = vpop.f32.mrb[0].mxu0
      %v585 = vadd.f32 %v173, %v584
      %v586 = vpop.f32.mrb[0].mxu0
      %v587 = vadd.f32 %v177, %v586
      %v588 = vpop.f32.mrb[0].mxu0
      %v589 = vadd.f32 %v173, %v588
      %v590 = vpop.f32.mrb[0].mxu0
      %v591 = vadd.f32 %v177, %v590
      %592 = vmatprep.mubr.bf16.mxu0 %v289
      %593 = vmatmul.mubr.bf16.gmra.mrb[0].mxu0 %v288
      %v594 = vpop.f32.mrb[0].mxu0
      %v595 = vadd.f32 %v173, %v594
      %v596 = vpop.f32.mrb[0].mxu0
      %v597 = vadd.f32 %v177, %v596
      %v598 = vpop.f32.mrb[0].mxu0
      %v599 = vadd.f32 %v173, %v598
      %v600 = vpop.f32.mrb[0].mxu0
      %v601 = vadd.f32 %v177, %v600
      %602 = vmatprep.mubr.bf16.mxu0 %v291
      %603 = vmatmul.mubr.bf16.gmra.mrb[0].mxu0 %v290
      %v604 = vpop.f32.mrb[0].mxu0
      %v605 = vadd.f32 %v173, %v604
      %v606 = vpop.f32.mrb[0].mxu0
      %v607 = vadd.f32 %v177, %v606
      %v608 = vpop.f32.mrb[0].mxu0
      %v609 = vadd.f32 %v173, %v608
      %v610 = vpop.f32.mrb[0].mxu0
      %v611 = vadd.f32 %v177, %v610
      %612 = vmatprep.mubr.bf16.mxu0 %v293
      %613 = vmatmul.mubr.bf16.gmra.mrb[0].mxu0 %v292
      %v614 = vpop.f32.mrb[0].mxu0
      %v615 = vadd.f32 %v173, %v614
      %v616 = vpop.f32.mrb[0].mxu0
      %v617 = vadd.f32 %v177, %v616
      %v618 = vpop.f32.mrb[0].mxu0
      %v619 = vadd.f32 %v173, %v618
      %v620 = vpop.f32.mrb[0].mxu0
      %v621 = vadd.f32 %v177, %v620
      %622 = vmatprep.mubr.bf16.mxu0 %v295
      %623 = vmatmul.mubr.bf16.gmra.mrb[0].mxu0 %v294
      %v624 = vpop.f32.mrb[0].mxu0
      %v625 = vadd.f32 %v173, %v624
      %v626 = vpop.f32.mrb[0].mxu0
      %v627 = vadd.f32 %v177, %v626
      %v628 = vpop.f32.mrb[0].mxu0
      %v629 = vadd.f32 %v173, %v628
      %v630 = vpop.f32.mrb[0].mxu0
      %v631 = vadd.f32 %v177, %v630
      %632 = vmatprep.mubr.bf16.mxu0 %v297
      %633 = vmatmul.mubr.bf16.gmra.mrb[0].mxu0 %v296
      %v634 = vpop.f32.mrb[0].mxu0
      %v635 = vadd.f32 %v173, %v634
      %v636 = vpop.f32.mrb[0].mxu0
      %v637 = vadd.f32 %v177, %v636
      %v638 = vpop.f32.mrb[0].mxu0
      %v639 = vadd.f32 %v173, %v638
      %v640 = vpop.f32.mrb[0].mxu0
      %v641 = vadd.f32 %v177, %v640
      %642 = vmatprep.mubr.bf16.mxu0 %v299
      %643 = vmatmul.mubr.bf16.gmra.mrb[0].mxu0 %v298
      %v644 = vpop.f32.mrb[0].mxu0
      %v645 = vadd.f32 %v173, %v644
      %v646 = vpop.f32.mrb[0].mxu0
      %v647 = vadd.f32 %v177, %v646
      %v648 = vpop.f32.mrb[0].mxu0
      %v649 = vadd.f32 %v173, %v648
      %v650 = vpop.f32.mrb[0].mxu0
      %v651 = vadd.f32 %v177, %v650
      %652 = vmatprep.mubr.bf16.mxu0 %v301
      %653 = vmatmul.mubr.bf16.gmra.mrb[0].mxu0 %v300
      %v654 = vpop.f32.mrb[0].mxu0
      %v655 = vadd.f32 %v173, %v654
      %v656 = vpop.f32.mrb[0].mxu0
      %v657 = vadd.f32 %v177, %v656
      %v658 = vpop.f32.mrb[0].mxu0
      %v659 = vadd.f32 %v173, %v658
      %v660 = vpop.f32.mrb[0].mxu0
      %v661 = vadd.f32 %v177, %v660
      %662 = vmatprep.mubr.bf16.mxu0 %v303
      %663 = vmatmul.mubr.bf16.gmra.mrb[0].mxu0 %v302
      %v664 = vpop.f32.mrb[0].mxu0
      %v665 = vadd.f32 %v173, %v664
      %v666 = vpop.f32.mrb[0].mxu0
      %v667 = vadd.f32 %v177, %v666
      %v668 = vpop.f32.mrb[0].mxu0
      %v669 = vadd.f32 %v173, %v668
      %v670 = vpop.f32.mrb[0].mxu0
      %v671 = vadd.f32 %v177, %v670
      %672 = vmatprep.mubr.bf16.mxu0 %v305
      %673 = vmatmul.mubr.bf16.gmra.mrb[0].mxu0 %v304
      %v674 = vpop.f32.mrb[0].mxu0
      %v675 = vadd.f32 %v173, %v674
      %v676 = vpop.f32.mrb[0].mxu0
      %v677 = vadd.f32 %v177, %v676
      %v678 = vpop.f32.mrb[0].mxu0
      %v679 = vadd.f32 %v173, %v678
      %v680 = vpop.f32.mrb[0].mxu0
      %v681 = vadd.f32 %v177, %v680
      %682 = vmatprep.mubr.bf16.mxu0 %v307
      %683 = vmatmul.mubr.bf16.gmra.mrb[0].mxu0 %v306
      %v684 = vpop.f32.mrb[0].mxu0
      %v685 = vadd.f32 %v173, %v684
      %v686 = vpop.f32.mrb[0].mxu0
      %v687 = vadd.f32 %v177, %v686
      %v688 = vpop.f32.mrb[0].mxu0
      %v689 = vadd.f32 %v173, %v688
      %v690 = vpop.f32.mrb[0].mxu0
      %v691 = vadd.f32 %v177, %v690
      %692 = vdwg.mxu0
      %v693 = vadd.f32 %v40, %v535
      %v694 = vadd.f32 %v41, %v537
      %v695 = vadd.f32 %v42, %v539
      %v696 = vadd.f32 %v43, %v541
      %v697 = vadd.f32 %v44, %v545
      %v698 = vadd.f32 %v45, %v547
      %v699 = vadd.f32 %v46, %v549
      %v700 = vadd.f32 %v47, %v551
      %v701 = vadd.f32 %v48, %v555
      %v702 = vadd.f32 %v49, %v557
      %v703 = vadd.f32 %v50, %v559
      %v704 = vadd.f32 %v51, %v561
      %v705 = vadd.f32 %v52, %v565
      %v706 = vadd.f32 %v53, %v567
      %v707 = vadd.f32 %v54, %v569
      %v708 = vadd.f32 %v55, %v571
      %v709 = vadd.f32 %v56, %v575
      %v710 = vadd.f32 %v57, %v577
      %v711 = vadd.f32 %v58, %v579
      %v712 = vadd.f32 %v59, %v581
      %v713 = vadd.f32 %v60, %v585
      %v714 = vadd.f32 %v61, %v587
      %v715 = vadd.f32 %v62, %v589
      %v716 = vadd.f32 %v63, %v591
      %v717 = vadd.f32 %v64, %v595
      %v718 = vadd.f32 %v65, %v597
      %v719 = vadd.f32 %v66, %v599
      %v720 = vadd.f32 %v67, %v601
      %v721 = vadd.f32 %v68, %v605
      %v722 = vadd.f32 %v69, %v607
      %v723 = vadd.f32 %v70, %v609
      %v724 = vadd.f32 %v71, %v611
      %v725 = vadd.f32 %v72, %v615
      %v726 = vadd.f32 %v73, %v617
      %v727 = vadd.f32 %v74, %v619
      %v728 = vadd.f32 %v75, %v621
      %v729 = vadd.f32 %v76, %v625
      %v730 = vadd.f32 %v77, %v627
      %v731 = vadd.f32 %v78, %v629
      %v732 = vadd.f32 %v79, %v631
      %v733 = vadd.f32 %v80, %v635
      %v734 = vadd.f32 %v81, %v637
      %v735 = vadd.f32 %v82, %v639
      %v736 = vadd.f32 %v83, %v641
      %v737 = vadd.f32 %v84, %v645
      %v738 = vadd.f32 %v85, %v647
      %v739 = vadd.f32 %v86, %v649
      %v740 = vadd.f32 %v87, %v651
      %v741 = vadd.f32 %v88, %v655
      %v742 = vadd.f32 %v89, %v657
      %v743 = vadd.f32 %v90, %v659
      %v744 = vadd.f32 %v91, %v661
      %v745 = vadd.f32 %v92, %v665
      %v746 = vadd.f32 %v93, %v667
      %v747 = vadd.f32 %v94, %v669
      %v748 = vadd.f32 %v95, %v671
      %v749 = vadd.f32 %v96, %v675
      %v750 = vadd.f32 %v97, %v677
      %v751 = vadd.f32 %v98, %v679
      %v752 = vadd.f32 %v99, %v681
      %v753 = vadd.f32 %v100, %v685
      %v754 = vadd.f32 %v101, %v687
      %v755 = vadd.f32 %v102, %v689
      %v756 = vadd.f32 %v103, %v691
      %757 = vst [vmem:[#allocation2] sm:$0xff] %v693
      %758 = vst [vmem:[#allocation2 + $0x8] sm:$0xff] %v694
      %759 = vst [vmem:[#allocation2 + $0x10] sm:$0xff] %v695
      %760 = vst [vmem:[#allocation2 + $0x18] sm:$0xff] %v696
      %761 = vst [vmem:[#allocation2 + $0x20] sm:$0xff] %v697
      %762 = vst [vmem:[#allocation2 + $0x28] sm:$0xff] %v698
      %763 = vst [vmem:[#allocation2 + $0x30] sm:$0xff] %v699
      %764 = vst [vmem:[#allocation2 + $0x38] sm:$0xff] %v700
      %765 = vst [vmem:[#allocation2 + $0x40] sm:$0xff] %v701
      %766 = vst [vmem:[#allocation2 + $0x48] sm:$0xff] %v702
      %767 = vst [vmem:[#allocation2 + $0x50] sm:$0xff] %v703
      %768 = vst [vmem:[#allocation2 + $0x58] sm:$0xff] %v704
      %769 = vst [vmem:[#allocation2 + $0x60] sm:$0xff] %v705
      %770 = vst [vmem:[#allocation2 + $0x68] sm:$0xff] %v706
      %771 = vst [vmem:[#allocation2 + $0x70] sm:$0xff] %v707
      %772 = vst [vmem:[#allocation2 + $0x78] sm:$0xff] %v708
      %773 = vst [vmem:[#allocation2 + $0x80] sm:$0xff] %v709
      %774 = vst [vmem:[#allocation2 + $0x88] sm:$0xff] %v710
      %775 = vst [vmem:[#allocation2 + $0x90] sm:$0xff] %v711
      %776 = vst [vmem:[#allocation2 + $0x98] sm:$0xff] %v712
      %777 = vst [vmem:[#allocation2 + $0xa0] sm:$0xff] %v713
      %778 = vst [vmem:[#allocation2 + $0xa8] sm:$0xff] %v714
      %779 = vst [vmem:[#allocation2 + $0xb0] sm:$0xff] %v715
      %780 = vst [vmem:[#allocation2 + $0xb8] sm:$0xff] %v716
      %781 = vst [vmem:[#allocation2 + $0xc0] sm:$0xff] %v717
      %782 = vst [vmem:[#allocation2 + $0xc8] sm:$0xff] %v718
      %783 = vst [vmem:[#allocation2 + $0xd0] sm:$0xff] %v719
      %784 = vst [vmem:[#allocation2 + $0xd8] sm:$0xff] %v720
      %785 = vst [vmem:[#allocation2 + $0xe0] sm:$0xff] %v721
      %786 = vst [vmem:[#allocation2 + $0xe8] sm:$0xff] %v722
      %787 = vst [vmem:[#allocation2 + $0xf0] sm:$0xff] %v723
      %788 = vst [vmem:[#allocation2 + $0xf8] sm:$0xff] %v724
      %789 = vst [vmem:[#allocation2 + $0x100] sm:$0xff] %v725
      %790 = vst [vmem:[#allocation2 + $0x108] sm:$0xff] %v726
      %791 = vst [vmem:[#allocation2 + $0x110] sm:$0xff] %v727
      %792 = vst [vmem:[#allocation2 + $0x118] sm:$0xff] %v728
      %793 = vst [vmem:[#allocation2 + $0x120] sm:$0xff] %v729
      %794 = vst [vmem:[#allocation2 + $0x128] sm:$0xff] %v730
      %795 = vst [vmem:[#allocation2 + $0x130] sm:$0xff] %v731
      %796 = vst [vmem:[#allocation2 + $0x138] sm:$0xff] %v732
      %797 = vst [vmem:[#allocation2 + $0x140] sm:$0xff] %v733
      %798 = vst [vmem:[#allocation2 + $0x148] sm:$0xff] %v734
      %799 = vst [vmem:[#allocation2 + $0x150] sm:$0xff] %v735
      %800 = vst [vmem:[#allocation2 + $0x158] sm:$0xff] %v736
      %801 = vst [vmem:[#allocation2 + $0x160] sm:$0xff] %v737
      %802 = vst [vmem:[#allocation2 + $0x168] sm:$0xff] %v738
      %803 = vst [vmem:[#allocation2 + $0x170] sm:$0xff] %v739
      %804 = vst [vmem:[#allocation2 + $0x178] sm:$0xff] %v740
      %805 = vst [vmem:[#allocation2 + $0x180] sm:$0xff] %v741
      %806 = vst [vmem:[#allocation2 + $0x188] sm:$0xff] %v742
      %807 = vst [vmem:[#allocation2 + $0x190] sm:$0xff] %v743
      %808 = vst [vmem:[#allocation2 + $0x198] sm:$0xff] %v744
      %809 = vst [vmem:[#allocation2 + $0x1a0] sm:$0xff] %v745
      %810 = vst [vmem:[#allocation2 + $0x1a8] sm:$0xff] %v746
      %811 = vst [vmem:[#allocation2 + $0x1b0] sm:$0xff] %v747
      %812 = vst [vmem:[#allocation2 + $0x1b8] sm:$0xff] %v748
      %813 = vst [vmem:[#allocation2 + $0x1c0] sm:$0xff] %v749
      %814 = vst [vmem:[#allocation2 + $0x1c8] sm:$0xff] %v750
      %815 = vst [vmem:[#allocation2 + $0x1d0] sm:$0xff] %v751
      %816 = vst [vmem:[#allocation2 + $0x1d8] sm:$0xff] %v752
      %817 = vst [vmem:[#allocation2 + $0x1e0] sm:$0xff] %v753
      %818 = vst [vmem:[#allocation2 + $0x1e8] sm:$0xff] %v754
      %819 = vst [vmem:[#allocation2 + $0x1f0] sm:$0xff] %v755
      %820 = vst [vmem:[#allocation2 + $0x1f8] sm:$0xff] %v756
      %v821 = vld [vmem:[%s4] sm:$0x3]
      %v822 = vld [vmem:[%s5] sm:$0x3]
      %v823 = vadd.f32 %v693, %v694
      %824 = vadd.xlane.f32.xlu0 %v823
      %v825 = vpop.xlane.xlu0 %824
      %v826 = vadd.f32 %v695, %v696
      %827 = vadd.xlane.f32.xlu0 %v826
      %v828 = vpop.xlane.xlu0 %827
      %v829 = vadd.f32 %v697, %v698
      %830 = vadd.xlane.f32.xlu0 %v829
      %v831 = vpop.xlane.xlu0 %830
      %v832 = vadd.f32 %v699, %v700
      %833 = vadd.xlane.f32.xlu0 %v832
      %v834 = vpop.xlane.xlu0 %833
      %v835 = vadd.f32 %v701, %v702
      %836 = vadd.xlane.f32.xlu0 %v835
      %v837 = vpop.xlane.xlu0 %836
      %v838 = vadd.f32 %v703, %v704
      %839 = vadd.xlane.f32.xlu0 %v838
      %v840 = vpop.xlane.xlu0 %839
      %v841 = vadd.f32 %v705, %v706
      %842 = vadd.xlane.f32.xlu0 %v841
      %v843 = vpop.xlane.xlu0 %842
      %v844 = vadd.f32 %v707, %v708
      %845 = vadd.xlane.f32.xlu0 %v844
      %v846 = vpop.xlane.xlu0 %845
      %v847 = vadd.f32 %v709, %v710
      %848 = vadd.xlane.f32.xlu0 %v847
      %v849 = vpop.xlane.xlu0 %848
      %v850 = vadd.f32 %v711, %v712
      %851 = vadd.xlane.f32.xlu0 %v850
      %v852 = vpop.xlane.xlu0 %851
      %v853 = vadd.f32 %v713, %v714
      %854 = vadd.xlane.f32.xlu0 %v853
      %v855 = vpop.xlane.xlu0 %854
      %v856 = vadd.f32 %v715, %v716
      %857 = vadd.xlane.f32.xlu0 %v856
      %v858 = vpop.xlane.xlu0 %857
      %v859 = vadd.f32 %v717, %v718
      %860 = vadd.xlane.f32.xlu0 %v859
      %v861 = vpop.xlane.xlu0 %860
      %v862 = vadd.f32 %v719, %v720
      %863 = vadd.xlane.f32.xlu0 %v862
      %v864 = vpop.xlane.xlu0 %863
      %v865 = vadd.f32 %v721, %v722
      %866 = vadd.xlane.f32.xlu0 %v865
      %v867 = vpop.xlane.xlu0 %866
      %v868 = vadd.f32 %v723, %v724
      %869 = vadd.xlane.f32.xlu0 %v868
      %v870 = vpop.xlane.xlu0 %869
      %v871 = vadd.f32 %v725, %v726
      %872 = vadd.xlane.f32.xlu0 %v871
      %v873 = vpop.xlane.xlu0 %872
      %v874 = vadd.f32 %v727, %v728
      %875 = vadd.xlane.f32.xlu0 %v874
      %v876 = vpop.xlane.xlu0 %875
      %v877 = vadd.f32 %v729, %v730
      %878 = vadd.xlane.f32.xlu0 %v877
      %v879 = vpop.xlane.xlu0 %878
      %v880 = vadd.f32 %v731, %v732
      %881 = vadd.xlane.f32.xlu0 %v880
      %v882 = vpop.xlane.xlu0 %881
      %v883 = vadd.f32 %v733, %v734
      %884 = vadd.xlane.f32.xlu0 %v883
      %v885 = vpop.xlane.xlu0 %884
      %v886 = vadd.f32 %v735, %v736
      %887 = vadd.xlane.f32.xlu0 %v886
      %v888 = vpop.xlane.xlu0 %887
      %v889 = vadd.f32 %v737, %v738
      %890 = vadd.xlane.f32.xlu0 %v889
      %v891 = vpop.xlane.xlu0 %890
      %v892 = vadd.f32 %v739, %v740
      %893 = vadd.xlane.f32.xlu0 %v892
      %v894 = vpop.xlane.xlu0 %893
      %v895 = vadd.f32 %v741, %v742
      %896 = vadd.xlane.f32.xlu0 %v895
      %v897 = vpop.xlane.xlu0 %896
      %v898 = vadd.f32 %v743, %v744
      %899 = vadd.xlane.f32.xlu0 %v898
      %v900 = vpop.xlane.xlu0 %899
      %v901 = vadd.f32 %v745, %v746
      %902 = vadd.xlane.f32.xlu0 %v901
      %v903 = vpop.xlane.xlu0 %902
      %v904 = vadd.f32 %v747, %v748
      %905 = vadd.xlane.f32.xlu0 %v904
      %v906 = vpop.xlane.xlu0 %905
      %v907 = vadd.f32 %v749, %v750
      %908 = vadd.xlane.f32.xlu0 %v907
      %v909 = vpop.xlane.xlu0 %908
      %v910 = vadd.f32 %v751, %v752
      %911 = vadd.xlane.f32.xlu0 %v910
      %v912 = vpop.xlane.xlu0 %911
      %v913 = vadd.f32 %v753, %v754
      %914 = vadd.xlane.f32.xlu0 %v913
      %v915 = vpop.xlane.xlu0 %914
      %v916 = vadd.f32 %v755, %v756
      %917 = vadd.xlane.f32.xlu0 %v916
      %v918 = vpop.xlane.xlu0 %917
      %v919 = vrcp.pop 256.0
      %v920 = vmul.f32 %v825, %v919
      %v921 = vmul.f32 %v828, %v919
      %v922 = vmul.f32 %v831, %v919
      %v923 = vmul.f32 %v834, %v919
      %v924 = vmul.f32 %v837, %v919
      %v925 = vmul.f32 %v840, %v919
      %v926 = vmul.f32 %v843, %v919
      %v927 = vmul.f32 %v846, %v919
      %v928 = vmul.f32 %v849, %v919
      %v929 = vmul.f32 %v852, %v919
      %v930 = vmul.f32 %v855, %v919
      %v931 = vmul.f32 %v858, %v919
      %v932 = vmul.f32 %v861, %v919
      %v933 = vmul.f32 %v864, %v919
      %v934 = vmul.f32 %v867, %v919
      %v935 = vmul.f32 %v870, %v919
      %v936 = vmul.f32 %v873, %v919
      %v937 = vmul.f32 %v876, %v919
      %v938 = vmul.f32 %v879, %v919
      %v939 = vmul.f32 %v882, %v919
      %v940 = vmul.f32 %v885, %v919
      %v941 = vmul.f32 %v888, %v919
      %v942 = vmul.f32 %v891, %v919
      %v943 = vmul.f32 %v894, %v919
      %v944 = vmul.f32 %v897, %v919
      %v945 = vmul.f32 %v900, %v919
      %v946 = vmul.f32 %v903, %v919
      %v947 = vmul.f32 %v906, %v919
      %v948 = vmul.f32 %v909, %v919
      %v949 = vmul.f32 %v912, %v919
      %v950 = vmul.f32 %v915, %v919
      %v951 = vmul.f32 %v918, %v919
      %v952 = vsub.f32 %v693, %v920
      %v953 = vsub.f32 %v694, %v920
      %v954 = vsub.f32 %v695, %v921
      %v955 = vsub.f32 %v696, %v921
      %v956 = vsub.f32 %v697, %v922
      %v957 = vsub.f32 %v698, %v922
      %v958 = vsub.f32 %v699, %v923
      %v959 = vsub.f32 %v700, %v923
      %v960 = vsub.f32 %v701, %v924
      %v961 = vsub.f32 %v702, %v924
      %v962 = vsub.f32 %v703, %v925
      %v963 = vsub.f32 %v704, %v925
      %v964 = vsub.f32 %v705, %v926
      %v965 = vsub.f32 %v706, %v926
      %v966 = vsub.f32 %v707, %v927
      %v967 = vsub.f32 %v708, %v927
      %v968 = vsub.f32 %v709, %v928
      %v969 = vsub.f32 %v710, %v928
      %v970 = vsub.f32 %v711, %v929
      %v971 = vsub.f32 %v712, %v929
      %v972 = vsub.f32 %v713, %v930
      %v973 = vsub.f32 %v714, %v930
      %v974 = vsub.f32 %v715, %v931
      %v975 = vsub.f32 %v716, %v931
      %v976 = vsub.f32 %v717, %v932
      %v977 = vsub.f32 %v718, %v932
      %v978 = vsub.f32 %v719, %v933
      %v979 = vsub.f32 %v720, %v933
      %v980 = vsub.f32 %v721, %v934
      %v981 = vsub.f32 %v722, %v934
      %v982 = vsub.f32 %v723, %v935
      %v983 = vsub.f32 %v724, %v935
      %v984 = vsub.f32 %v725, %v936
      %v985 = vsub.f32 %v726, %v936
      %v986 = vsub.f32 %v727, %v937
      %v987 = vsub.f32 %v728, %v937
      %v988 = vsub.f32 %v729, %v938
      %v989 = vsub.f32 %v730, %v938
      %v990 = vsub.f32 %v731, %v939
      %v991 = vsub.f32 %v732, %v939
      %v992 = vsub.f32 %v733, %v940
      %v993 = vsub.f32 %v734, %v940
      %v994 = vsub.f32 %v735, %v941
      %v995 = vsub.f32 %v736, %v941
      %v996 = vsub.f32 %v737, %v942
      %v997 = vsub.f32 %v738, %v942
      %v998 = vsub.f32 %v739, %v943
      %v999 = vsub.f32 %v740, %v943
      %v1000 = vsub.f32 %v741, %v944
      %v1001 = vsub.f32 %v742, %v944
      %v1002 = vsub.f32 %v743, %v945
      %v1003 = vsub.f32 %v744, %v945
      %v1004 = vsub.f32 %v745, %v946
      %v1005 = vsub.f32 %v746, %v946
      %v1006 = vsub.f32 %v747, %v947
      %v1007 = vsub.f32 %v748, %v947
      %v1008 = vsub.f32 %v749, %v948
      %v1009 = vsub.f32 %v750, %v948
      %v1010 = vsub.f32 %v751, %v949
      %v1011 = vsub.f32 %v752, %v949
      %v1012 = vsub.f32 %v753, %v950
      %v1013 = vsub.f32 %v754, %v950
      %v1014 = vsub.f32 %v755, %v951
      %v1015 = vsub.f32 %v756, %v951
      %v1016 = vmul.f32 %v952, %v952
      %v1017 = vmul.f32 %v953, %v953
      %v1018 = vmul.f32 %v954, %v954
      %v1019 = vmul.f32 %v955, %v955
      %v1020 = vmul.f32 %v956, %v956
      %v1021 = vmul.f32 %v957, %v957
      %v1022 = vmul.f32 %v958, %v958
      %v1023 = vmul.f32 %v959, %v959
      %v1024 = vmul.f32 %v960, %v960
      %v1025 = vmul.f32 %v961, %v961
      %v1026 = vmul.f32 %v962, %v962
      %v1027 = vmul.f32 %v963, %v963
      %v1028 = vmul.f32 %v964, %v964
      %v1029 = vmul.f32 %v965, %v965
      %v1030 = vmul.f32 %v966, %v966
      %v1031 = vmul.f32 %v967, %v967
      %v1032 = vmul.f32 %v968, %v968
      %v1033 = vmul.f32 %v969, %v969
      %v1034 = vmul.f32 %v970, %v970
      %v1035 = vmul.f32 %v971, %v971
      %v1036 = vmul.f32 %v972, %v972
      %v1037 = vmul.f32 %v973, %v973
      %v1038 = vmul.f32 %v974, %v974
      %v1039 = vmul.f32 %v975, %v975
      %v1040 = vmul.f32 %v976, %v976
      %v1041 = vmul.f32 %v977, %v977
      %v1042 = vmul.f32 %v978, %v978
      %v1043 = vmul.f32 %v979, %v979
      %v1044 = vmul.f32 %v980, %v980
      %v1045 = vmul.f32 %v981, %v981
      %v1046 = vmul.f32 %v982, %v982
      %v1047 = vmul.f32 %v983, %v983
      %v1048 = vmul.f32 %v984, %v984
      %v1049 = vmul.f32 %v985, %v985
      %v1050 = vmul.f32 %v986, %v986
      %v1051 = vmul.f32 %v987, %v987
      %v1052 = vmul.f32 %v988, %v988
      %v1053 = vmul.f32 %v989, %v989
      %v1054 = vmul.f32 %v990, %v990
      %v1055 = vmul.f32 %v991, %v991
      %v1056 = vmul.f32 %v992, %v992
      %v1057 = vmul.f32 %v993, %v993
      %v1058 = vmul.f32 %v994, %v994
      %v1059 = vmul.f32 %v995, %v995
      %v1060 = vmul.f32 %v996, %v996
      %v1061 = vmul.f32 %v997, %v997
      %v1062 = vmul.f32 %v998, %v998
      %v1063 = vmul.f32 %v999, %v999
      %v1064 = vmul.f32 %v1000, %v1000
      %v1065 = vmul.f32 %v1001, %v1001
      %v1066 = vmul.f32 %v1002, %v1002
      %v1067 = vmul.f32 %v1003, %v1003
      %v1068 = vmul.f32 %v1004, %v1004
      %v1069 = vmul.f32 %v1005, %v1005
      %v1070 = vmul.f32 %v1006, %v1006
      %v1071 = vmul.f32 %v1007, %v1007
      %v1072 = vmul.f32 %v1008, %v1008
      %v1073 = vmul.f32 %v1009, %v1009
      %v1074 = vmul.f32 %v1010, %v1010
      %v1075 = vmul.f32 %v1011, %v1011
      %v1076 = vmul.f32 %v1012, %v1012
      %v1077 = vmul.f32 %v1013, %v1013
      %v1078 = vmul.f32 %v1014, %v1014
      %v1079 = vmul.f32 %v1015, %v1015
      %v1080 = vadd.f32 %v1016, %v1017
      %1081 = vadd.xlane.f32.xlu0 %v1080
      %v1082 = vpop.xlane.xlu0 %1081
      %v1083 = vadd.f32 %v1018, %v1019
      %1084 = vadd.xlane.f32.xlu0 %v1083
      %v1085 = vpop.xlane.xlu0 %1084
      %v1086 = vadd.f32 %v1020, %v1021
      %1087 = vadd.xlane.f32.xlu0 %v1086
      %v1088 = vpop.xlane.xlu0 %1087
      %v1089 = vadd.f32 %v1022, %v1023
      %1090 = vadd.xlane.f32.xlu0 %v1089
      %v1091 = vpop.xlane.xlu0 %1090
      %v1092 = vadd.f32 %v1024, %v1025
      %1093 = vadd.xlane.f32.xlu0 %v1092
      %v1094 = vpop.xlane.xlu0 %1093
      %v1095 = vadd.f32 %v1026, %v1027
      %1096 = vadd.xlane.f32.xlu0 %v1095
      %v1097 = vpop.xlane.xlu0 %1096
      %v1098 = vadd.f32 %v1028, %v1029
      %1099 = vadd.xlane.f32.xlu0 %v1098
      %v1100 = vpop.xlane.xlu0 %1099
      %v1101 = vadd.f32 %v1030, %v1031
      %1102 = vadd.xlane.f32.xlu0 %v1101
      %v1103 = vpop.xlane.xlu0 %1102
      %v1104 = vadd.f32 %v1032, %v1033
      %1105 = vadd.xlane.f32.xlu0 %v1104
      %v1106 = vpop.xlane.xlu0 %1105
      %v1107 = vadd.f32 %v1034, %v1035
      %1108 = vadd.xlane.f32.xlu0 %v1107
      %v1109 = vpop.xlane.xlu0 %1108
      %v1110 = vadd.f32 %v1036, %v1037
      %1111 = vadd.xlane.f32.xlu0 %v1110
      %v1112 = vpop.xlane.xlu0 %1111
      %v1113 = vadd.f32 %v1038, %v1039
      %1114 = vadd.xlane.f32.xlu0 %v1113
      %v1115 = vpop.xlane.xlu0 %1114
      %v1116 = vadd.f32 %v1040, %v1041
      %1117 = vadd.xlane.f32.xlu0 %v1116
      %v1118 = vpop.xlane.xlu0 %1117
      %v1119 = vadd.f32 %v1042, %v1043
      %1120 = vadd.xlane.f32.xlu0 %v1119
      %v1121 = vpop.xlane.xlu0 %1120
      %v1122 = vadd.f32 %v1044, %v1045
      %1123 = vadd.xlane.f32.xlu0 %v1122
      %v1124 = vpop.xlane.xlu0 %1123
      %v1125 = vadd.f32 %v1046, %v1047
      %1126 = vadd.xlane.f32.xlu0 %v1125
      %v1127 = vpop.xlane.xlu0 %1126
      %v1128 = vadd.f32 %v1048, %v1049
      %1129 = vadd.xlane.f32.xlu0 %v1128
      %v1130 = vpop.xlane.xlu0 %1129
      %v1131 = vadd.f32 %v1050, %v1051
      %1132 = vadd.xlane.f32.xlu0 %v1131
      %v1133 = vpop.xlane.xlu0 %1132
      %v1134 = vadd.f32 %v1052, %v1053
      %1135 = vadd.xlane.f32.xlu0 %v1134
      %v1136 = vpop.xlane.xlu0 %1135
      %v1137 = vadd.f32 %v1054, %v1055
      %1138 = vadd.xlane.f32.xlu0 %v1137
      %v1139 = vpop.xlane.xlu0 %1138
      %v1140 = vadd.f32 %v1056, %v1057
      %1141 = vadd.xlane.f32.xlu0 %v1140
      %v1142 = vpop.xlane.xlu0 %1141
      %v1143 = vadd.f32 %v1058, %v1059
      %1144 = vadd.xlane.f32.xlu0 %v1143
      %v1145 = vpop.xlane.xlu0 %1144
      %v1146 = vadd.f32 %v1060, %v1061
      %1147 = vadd.xlane.f32.xlu0 %v1146
      %v1148 = vpop.xlane.xlu0 %1147
      %v1149 = vadd.f32 %v1062, %v1063
      %1150 = vadd.xlane.f32.xlu0 %v1149
      %v1151 = vpop.xlane.xlu0 %1150
      %v1152 = vadd.f32 %v1064, %v1065
      %1153 = vadd.xlane.f32.xlu0 %v1152
      %v1154 = vpop.xlane.xlu0 %1153
      %v1155 = vadd.f32 %v1066, %v1067
      %1156 = vadd.xlane.f32.xlu0 %v1155
      %v1157 = vpop.xlane.xlu0 %1156
      %v1158 = vadd.f32 %v1068, %v1069
      %1159 = vadd.xlane.f32.xlu0 %v1158
      %v1160 = vpop.xlane.xlu0 %1159
      %v1161 = vadd.f32 %v1070, %v1071
      %1162 = vadd.xlane.f32.xlu0 %v1161
      %v1163 = vpop.xlane.xlu0 %1162
      %v1164 = vadd.f32 %v1072, %v1073
      %1165 = vadd.xlane.f32.xlu0 %v1164
      %v1166 = vpop.xlane.xlu0 %1165
      %v1167 = vadd.f32 %v1074, %v1075
      %1168 = vadd.xlane.f32.xlu0 %v1167
      %v1169 = vpop.xlane.xlu0 %1168
      %v1170 = vadd.f32 %v1076, %v1077
      %1171 = vadd.xlane.f32.xlu0 %v1170
      %v1172 = vpop.xlane.xlu0 %1171
      %v1173 = vadd.f32 %v1078, %v1079
      %1174 = vadd.xlane.f32.xlu0 %v1173
      %v1175 = vpop.xlane.xlu0 %1174
      %v1176 = vmul.f32 %v1082, %v919
      %v1177 = vmul.f32 %v1085, %v919
      %v1178 = vmul.f32 %v1088, %v919
      %v1179 = vmul.f32 %v1091, %v919
      %v1180 = vmul.f32 %v1094, %v919
      %v1181 = vmul.f32 %v1097, %v919
      %v1182 = vmul.f32 %v1100, %v919
      %v1183 = vmul.f32 %v1103, %v919
      %v1184 = vmul.f32 %v1106, %v919
      %v1185 = vmul.f32 %v1109, %v919
      %v1186 = vmul.f32 %v1112, %v919
      %v1187 = vmul.f32 %v1115, %v919
      %v1188 = vmul.f32 %v1118, %v919
      %v1189 = vmul.f32 %v1121, %v919
      %v1190 = vmul.f32 %v1124, %v919
      %v1191 = vmul.f32 %v1127, %v919
      %v1192 = vmul.f32 %v1130, %v919
      %v1193 = vmul.f32 %v1133, %v919
      %v1194 = vmul.f32 %v1136, %v919
      %v1195 = vmul.f32 %v1139, %v919
      %v1196 = vmul.f32 %v1142, %v919
      %v1197 = vmul.f32 %v1145, %v919
      %v1198 = vmul.f32 %v1148, %v919
      %v1199 = vmul.f32 %v1151, %v919
      %v1200 = vmul.f32 %v1154, %v919
      %v1201 = vmul.f32 %v1157, %v919
      %v1202 = vmul.f32 %v1160, %v919
      %v1203 = vmul.f32 %v1163, %v919
      %v1204 = vmul.f32 %v1166, %v919
      %v1205 = vmul.f32 %v1169, %v919
      %v1206 = vmul.f32 %v1172, %v919
      %v1207 = vmul.f32 %v1175, %v919
      %v1208 = vadd.f32 %v1176, 1e-05
      %v1209 = vadd.f32 %v1177, 1e-05
      %v1210 = vadd.f32 %v1178, 1e-05
      %v1211 = vadd.f32 %v1179, 1e-05
      %v1212 = vadd.f32 %v1180, 1e-05
      %v1213 = vadd.f32 %v1181, 1e-05
      %v1214 = vadd.f32 %v1182, 1e-05
      %v1215 = vadd.f32 %v1183, 1e-05
      %v1216 = vadd.f32 %v1184, 1e-05
      %v1217 = vadd.f32 %v1185, 1e-05
      %v1218 = vadd.f32 %v1186, 1e-05
      %v1219 = vadd.f32 %v1187, 1e-05
      %v1220 = vadd.f32 %v1188, 1e-05
      %v1221 = vadd.f32 %v1189, 1e-05
      %v1222 = vadd.f32 %v1190, 1e-05
      %v1223 = vadd.f32 %v1191, 1e-05
      %v1224 = vadd.f32 %v1192, 1e-05
      %v1225 = vadd.f32 %v1193, 1e-05
      %v1226 = vadd.f32 %v1194, 1e-05
      %v1227 = vadd.f32 %v1195, 1e-05
      %v1228 = vadd.f32 %v1196, 1e-05
      %v1229 = vadd.f32 %v1197, 1e-05
      %v1230 = vadd.f32 %v1198, 1e-05
      %v1231 = vadd.f32 %v1199, 1e-05
      %v1232 = vadd.f32 %v1200, 1e-05
      %v1233 = vadd.f32 %v1201, 1e-05
      %v1234 = vadd.f32 %v1202, 1e-05
      %v1235 = vadd.f32 %v1203, 1e-05
      %v1236 = vadd.f32 %v1204, 1e-05
      %v1237 = vadd.f32 %v1205, 1e-05
      %v1238 = vadd.f32 %v1206, 1e-05
      %v1239 = vadd.f32 %v1207, 1e-05
      %v1240 = vrsqrt.pop %v1208
      %v1241 = vrsqrt.pop %v1209
      %v1242 = vrsqrt.pop %v1210
      %v1243 = vrsqrt.pop %v1211
      %v1244 = vrsqrt.pop %v1212
      %v1245 = vrsqrt.pop %v1213
      %v1246 = vrsqrt.pop %v1214
      %v1247 = vrsqrt.pop %v1215
      %v1248 = vrsqrt.pop %v1216
      %v1249 = vrsqrt.pop %v1217
      %v1250 = vrsqrt.pop %v1218
      %v1251 = vrsqrt.pop %v1219
      %v1252 = vrsqrt.pop %v1220
      %v1253 = vrsqrt.pop %v1221
      %v1254 = vrsqrt.pop %v1222
      %v1255 = vrsqrt.pop %v1223
      %v1256 = vrsqrt.pop %v1224
      %v1257 = vrsqrt.pop %v1225
      %v1258 = vrsqrt.pop %v1226
      %v1259 = vrsqrt.pop %v1227
      %v1260 = vrsqrt.pop %v1228
      %v1261 = vrsqrt.pop %v1229
      %v1262 = vrsqrt.pop %v1230
      %v1263 = vrsqrt.pop %v1231
      %v1264 = vrsqrt.pop %v1232
      %v1265 = vrsqrt.pop %v1233
      %v1266 = vrsqrt.pop %v1234
      %v1267 = vrsqrt.pop %v1235
      %v1268 = vrsqrt.pop %v1236
      %v1269 = vrsqrt.pop %v1237
      %v1270 = vrsqrt.pop %v1238
      %v1271 = vrsqrt.pop %v1239
      %v1272 = vmul.f32 %v952, %v1240
      %v1273 = vmul.f32 %v953, %v1240
      %v1274 = vmul.f32 %v954, %v1241
      %v1275 = vmul.f32 %v955, %v1241
      %v1276 = vmul.f32 %v956, %v1242
      %v1277 = vmul.f32 %v957, %v1242
      %v1278 = vmul.f32 %v958, %v1243
      %v1279 = vmul.f32 %v959, %v1243
      %v1280 = vmul.f32 %v960, %v1244
      %v1281 = vmul.f32 %v961, %v1244
      %v1282 = vmul.f32 %v962, %v1245
      %v1283 = vmul.f32 %v963, %v1245
      %v1284 = vmul.f32 %v964, %v1246
      %v1285 = vmul.f32 %v965, %v1246
      %v1286 = vmul.f32 %v966, %v1247
      %v1287 = vmul.f32 %v967, %v1247
      %v1288 = vmul.f32 %v968, %v1248
      %v1289 = vmul.f32 %v969, %v1248
      %v1290 = vmul.f32 %v970, %v1249
      %v1291 = vmul.f32 %v971, %v1249
      %v1292 = vmul.f32 %v972, %v1250
      %v1293 = vmul.f32 %v973, %v1250
      %v1294 = vmul.f32 %v974, %v1251
      %v1295 = vmul.f32 %v975, %v1251
      %v1296 = vmul.f32 %v976, %v1252
      %v1297 = vmul.f32 %v977, %v1252
      %v1298 = vmul.f32 %v978, %v1253
      %v1299 = vmul.f32 %v979, %v1253
      %v1300 = vmul.f32 %v980, %v1254
      %v1301 = vmul.f32 %v981, %v1254
      %v1302 = vmul.f32 %v982, %v1255
      %v1303 = vmul.f32 %v983, %v1255
      %v1304 = vmul.f32 %v984, %v1256
      %v1305 = vmul.f32 %v985, %v1256
      %v1306 = vmul.f32 %v986, %v1257
      %v1307 = vmul.f32 %v987, %v1257
      %v1308 = vmul.f32 %v988, %v1258
      %v1309 = vmul.f32 %v989, %v1258
      %v1310 = vmul.f32 %v990, %v1259
      %v1311 = vmul.f32 %v991, %v1259
      %v1312 = vmul.f32 %v992, %v1260
      %v1313 = vmul.f32 %v993, %v1260
      %v1314 = vmul.f32 %v994, %v1261
      %v1315 = vmul.f32 %v995, %v1261
      %v1316 = vmul.f32 %v996, %v1262
      %v1317 = vmul.f32 %v997, %v1262
      %v1318 = vmul.f32 %v998, %v1263
      %v1319 = vmul.f32 %v999, %v1263
      %v1320 = vmul.f32 %v1000, %v1264
      %v1321 = vmul.f32 %v1001, %v1264
      %v1322 = vmul.f32 %v1002, %v1265
      %v1323 = vmul.f32 %v1003, %v1265
      %v1324 = vmul.f32 %v1004, %v1266
      %v1325 = vmul.f32 %v1005, %v1266
      %v1326 = vmul.f32 %v1006, %v1267
      %v1327 = vmul.f32 %v1007, %v1267
      %v1328 = vmul.f32 %v1008, %v1268
      %v1329 = vmul.f32 %v1009, %v1268
      %v1330 = vmul.f32 %v1010, %v1269
      %v1331 = vmul.f32 %v1011, %v1269
      %v1332 = vmul.f32 %v1012, %v1270
      %v1333 = vmul.f32 %v1013, %v1270
      %v1334 = vmul.f32 %v1014, %v1271
      %v1335 = vmul.f32 %v1015, %v1271
      %v1337 = vlaneseq
      %v1338 = vshrl.u32 %v1337, 7
      %v1339 = vsub.s32 0, %v1338
      %v1340 = vrot.slane %v821, %v1339
      %v1341 = vlaneseq
      %v1342 = vshrl.u32 %v1341, 7
      %v1343 = vsub.s32 1, %v1342
      %v1344 = vrot.slane %v821, %v1343
      %v1347 = vmul.f32 %v1272, %v1340
      %v1348 = vmul.f32 %v1273, %v1344
      %v1349 = vmul.f32 %v1274, %v1340
      %v1350 = vmul.f32 %v1275, %v1344
      %v1351 = vmul.f32 %v1276, %v1340
      %v1352 = vmul.f32 %v1277, %v1344
      %v1353 = vmul.f32 %v1278, %v1340
      %v1354 = vmul.f32 %v1279, %v1344
      %v1355 = vmul.f32 %v1280, %v1340
      %v1356 = vmul.f32 %v1281, %v1344
      %v1357 = vmul.f32 %v1282, %v1340
      %v1358 = vmul.f32 %v1283, %v1344
      %v1359 = vmul.f32 %v1284, %v1340
      %v1360 = vmul.f32 %v1285, %v1344
      %v1361 = vmul.f32 %v1286, %v1340
      %v1362 = vmul.f32 %v1287, %v1344
      %v1363 = vmul.f32 %v1288, %v1340
      %v1364 = vmul.f32 %v1289, %v1344
      %v1365 = vmul.f32 %v1290, %v1340
      %v1366 = vmul.f32 %v1291, %v1344
      %v1367 = vmul.f32 %v1292, %v1340
      %v1368 = vmul.f32 %v1293, %v1344
      %v1369 = vmul.f32 %v1294, %v1340
      %v1370 = vmul.f32 %v1295, %v1344
      %v1371 = vmul.f32 %v1296, %v1340
      %v1372 = vmul.f32 %v1297, %v1344
      %v1373 = vmul.f32 %v1298, %v1340
      %v1374 = vmul.f32 %v1299, %v1344
      %v1375 = vmul.f32 %v1300, %v1340
      %v1376 = vmul.f32 %v1301, %v1344
      %v1377 = vmul.f32 %v1302, %v1340
      %v1378 = vmul.f32 %v1303, %v1344
      %v1379 = vmul.f32 %v1304, %v1340
      %v1380 = vmul.f32 %v1305, %v1344
      %v1381 = vmul.f32 %v1306, %v1340
      %v1382 = vmul.f32 %v1307, %v1344
      %v1383 = vmul.f32 %v1308, %v1340
      %v1384 = vmul.f32 %v1309, %v1344
      %v1385 = vmul.f32 %v1310, %v1340
      %v1386 = vmul.f32 %v1311, %v1344
      %v1387 = vmul.f32 %v1312, %v1340
      %v1388 = vmul.f32 %v1313, %v1344
      %v1389 = vmul.f32 %v1314, %v1340
      %v1390 = vmul.f32 %v1315, %v1344
      %v1391 = vmul.f32 %v1316, %v1340
      %v1392 = vmul.f32 %v1317, %v1344
      %v1393 = vmul.f32 %v1318, %v1340
      %v1394 = vmul.f32 %v1319, %v1344
      %v1395 = vmul.f32 %v1320, %v1340
      %v1396 = vmul.f32 %v1321, %v1344
      %v1397 = vmul.f32 %v1322, %v1340
      %v1398 = vmul.f32 %v1323, %v1344
      %v1399 = vmul.f32 %v1324, %v1340
      %v1400 = vmul.f32 %v1325, %v1344
      %v1401 = vmul.f32 %v1326, %v1340
      %v1402 = vmul.f32 %v1327, %v1344
      %v1403 = vmul.f32 %v1328, %v1340
      %v1404 = vmul.f32 %v1329, %v1344
      %v1405 = vmul.f32 %v1330, %v1340
      %v1406 = vmul.f32 %v1331, %v1344
      %v1407 = vmul.f32 %v1332, %v1340
      %v1408 = vmul.f32 %v1333, %v1344
      %v1409 = vmul.f32 %v1334, %v1340
      %v1410 = vmul.f32 %v1335, %v1344
      %v1412 = vlaneseq
      %v1413 = vshrl.u32 %v1412, 7
      %v1414 = vsub.s32 0, %v1413
      %v1415 = vrot.slane %v822, %v1414
      %v1416 = vlaneseq
      %v1417 = vshrl.u32 %v1416, 7
      %v1418 = vsub.s32 1, %v1417
      %v1419 = vrot.slane %v822, %v1418
      %v1422 = vadd.f32 %v1347, %v1415
      %v1423 = vadd.f32 %v1348, %v1419
      %v1424 = vadd.f32 %v1349, %v1415
      %v1425 = vadd.f32 %v1350, %v1419
      %v1426 = vadd.f32 %v1351, %v1415
      %v1427 = vadd.f32 %v1352, %v1419
      %v1428 = vadd.f32 %v1353, %v1415
      %v1429 = vadd.f32 %v1354, %v1419
      %v1430 = vadd.f32 %v1355, %v1415
      %v1431 = vadd.f32 %v1356, %v1419
      %v1432 = vadd.f32 %v1357, %v1415
      %v1433 = vadd.f32 %v1358, %v1419
      %v1434 = vadd.f32 %v1359, %v1415
      %v1435 = vadd.f32 %v1360, %v1419
      %v1436 = vadd.f32 %v1361, %v1415
      %v1437 = vadd.f32 %v1362, %v1419
      %v1438 = vadd.f32 %v1363, %v1415
      %v1439 = vadd.f32 %v1364, %v1419
      %v1440 = vadd.f32 %v1365, %v1415
      %v1441 = vadd.f32 %v1366, %v1419
      %v1442 = vadd.f32 %v1367, %v1415
      %v1443 = vadd.f32 %v1368, %v1419
      %v1444 = vadd.f32 %v1369, %v1415
      %v1445 = vadd.f32 %v1370, %v1419
      %v1446 = vadd.f32 %v1371, %v1415
      %v1447 = vadd.f32 %v1372, %v1419
      %v1448 = vadd.f32 %v1373, %v1415
      %v1449 = vadd.f32 %v1374, %v1419
      %v1450 = vadd.f32 %v1375, %v1415
      %v1451 = vadd.f32 %v1376, %v1419
      %v1452 = vadd.f32 %v1377, %v1415
      %v1453 = vadd.f32 %v1378, %v1419
      %v1454 = vadd.f32 %v1379, %v1415
      %v1455 = vadd.f32 %v1380, %v1419
      %v1456 = vadd.f32 %v1381, %v1415
      %v1457 = vadd.f32 %v1382, %v1419
      %v1458 = vadd.f32 %v1383, %v1415
      %v1459 = vadd.f32 %v1384, %v1419
      %v1460 = vadd.f32 %v1385, %v1415
      %v1461 = vadd.f32 %v1386, %v1419
      %v1462 = vadd.f32 %v1387, %v1415
      %v1463 = vadd.f32 %v1388, %v1419
      %v1464 = vadd.f32 %v1389, %v1415
      %v1465 = vadd.f32 %v1390, %v1419
      %v1466 = vadd.f32 %v1391, %v1415
      %v1467 = vadd.f32 %v1392, %v1419
      %v1468 = vadd.f32 %v1393, %v1415
      %v1469 = vadd.f32 %v1394, %v1419
      %v1470 = vadd.f32 %v1395, %v1415
      %v1471 = vadd.f32 %v1396, %v1419
      %v1472 = vadd.f32 %v1397, %v1415
      %v1473 = vadd.f32 %v1398, %v1419
      %v1474 = vadd.f32 %v1399, %v1415
      %v1475 = vadd.f32 %v1400, %v1419
      %v1476 = vadd.f32 %v1401, %v1415
      %v1477 = vadd.f32 %v1402, %v1419
      %v1478 = vadd.f32 %v1403, %v1415
      %v1479 = vadd.f32 %v1404, %v1419
      %v1480 = vadd.f32 %v1405, %v1415
      %v1481 = vadd.f32 %v1406, %v1419
      %v1482 = vadd.f32 %v1407, %v1415
      %v1483 = vadd.f32 %v1408, %v1419
      %v1484 = vadd.f32 %v1409, %v1415
      %v1485 = vadd.f32 %v1410, %v1419
      %v1486 = vpack.c.bf16 %v1424, %v1422
      %v1487 = vpack.c.bf16 %v1425, %v1423
      %v1488 = vpack.c.bf16 %v1428, %v1426
      %v1489 = vpack.c.bf16 %v1429, %v1427
      %v1490 = vpack.c.bf16 %v1432, %v1430
      %v1491 = vpack.c.bf16 %v1433, %v1431
      %v1492 = vpack.c.bf16 %v1436, %v1434
      %v1493 = vpack.c.bf16 %v1437, %v1435
      %v1494 = vpack.c.bf16 %v1440, %v1438
      %v1495 = vpack.c.bf16 %v1441, %v1439
      %v1496 = vpack.c.bf16 %v1444, %v1442
      %v1497 = vpack.c.bf16 %v1445, %v1443
      %v1498 = vpack.c.bf16 %v1448, %v1446
      %v1499 = vpack.c.bf16 %v1449, %v1447
      %v1500 = vpack.c.bf16 %v1452, %v1450
      %v1501 = vpack.c.bf16 %v1453, %v1451
      %v1502 = vpack.c.bf16 %v1456, %v1454
      %v1503 = vpack.c.bf16 %v1457, %v1455
      %v1504 = vpack.c.bf16 %v1460, %v1458
      %v1505 = vpack.c.bf16 %v1461, %v1459
      %v1506 = vpack.c.bf16 %v1464, %v1462
      %v1507 = vpack.c.bf16 %v1465, %v1463
      %v1508 = vpack.c.bf16 %v1468, %v1466
      %v1509 = vpack.c.bf16 %v1469, %v1467
      %v1510 = vpack.c.bf16 %v1472, %v1470
      %v1511 = vpack.c.bf16 %v1473, %v1471
      %v1512 = vpack.c.bf16 %v1476, %v1474
      %v1513 = vpack.c.bf16 %v1477, %v1475
      %v1514 = vpack.c.bf16 %v1480, %v1478
      %v1515 = vpack.c.bf16 %v1481, %v1479
      %v1516 = vpack.c.bf16 %v1484, %v1482
      %v1517 = vpack.c.bf16 %v1485, %v1483
      %1518 = vst [vmem:[#allocation3] sm:$0xff] %v1486
      %1519 = vst [vmem:[#allocation3 + $0x8] sm:$0xff] %v1487
      %1520 = vst [vmem:[#allocation3 + $0x10] sm:$0xff] %v1488
      %1521 = vst [vmem:[#allocation3 + $0x18] sm:$0xff] %v1489
      %1522 = vst [vmem:[#allocation3 + $0x20] sm:$0xff] %v1490
      %1523 = vst [vmem:[#allocation3 + $0x28] sm:$0xff] %v1491
      %1524 = vst [vmem:[#allocation3 + $0x30] sm:$0xff] %v1492
      %1525 = vst [vmem:[#allocation3 + $0x38] sm:$0xff] %v1493
      %1526 = vst [vmem:[#allocation3 + $0x40] sm:$0xff] %v1494
      %1527 = vst [vmem:[#allocation3 + $0x48] sm:$0xff] %v1495
      %1528 = vst [vmem:[#allocation3 + $0x50] sm:$0xff] %v1496
      %1529 = vst [vmem:[#allocation3 + $0x58] sm:$0xff] %v1497
      %1530 = vst [vmem:[#allocation3 + $0x60] sm:$0xff] %v1498
      %1531 = vst [vmem:[#allocation3 + $0x68] sm:$0xff] %v1499
      %1532 = vst [vmem:[#allocation3 + $0x70] sm:$0xff] %v1500
      %1533 = vst [vmem:[#allocation3 + $0x78] sm:$0xff] %v1501
      %1534 = vst [vmem:[#allocation3 + $0x80] sm:$0xff] %v1502
      %1535 = vst [vmem:[#allocation3 + $0x88] sm:$0xff] %v1503
      %1536 = vst [vmem:[#allocation3 + $0x90] sm:$0xff] %v1504
      %1537 = vst [vmem:[#allocation3 + $0x98] sm:$0xff] %v1505
      %1538 = vst [vmem:[#allocation3 + $0xa0] sm:$0xff] %v1506
      %1539 = vst [vmem:[#allocation3 + $0xa8] sm:$0xff] %v1507
      %1540 = vst [vmem:[#allocation3 + $0xb0] sm:$0xff] %v1508
      %1541 = vst [vmem:[#allocation3 + $0xb8] sm:$0xff] %v1509
      %1542 = vst [vmem:[#allocation3 + $0xc0] sm:$0xff] %v1510
      %1543 = vst [vmem:[#allocation3 + $0xc8] sm:$0xff] %v1511
      %1544 = vst [vmem:[#allocation3 + $0xd0] sm:$0xff] %v1512
      %1545 = vst [vmem:[#allocation3 + $0xd8] sm:$0xff] %v1513
      %1546 = vst [vmem:[#allocation3 + $0xe0] sm:$0xff] %v1514
      %1547 = vst [vmem:[#allocation3 + $0xe8] sm:$0xff] %v1515
      %1548 = vst [vmem:[#allocation3 + $0xf0] sm:$0xff] %v1516
      %1549 = vst [vmem:[#allocation3 + $0xf8] sm:$0xff] %v1517
      %1550 = vst [vmem:[#allocation4] sm:$0xff] 0.0
      %1551 = vst [vmem:[#allocation4 + $0x8] sm:$0xff] 0.0
      %1552 = vst [vmem:[#allocation4 + $0x10] sm:$0xff] 0.0
      %1553 = vst [vmem:[#allocation4 + $0x18] sm:$0xff] 0.0
      %1554 = vst [vmem:[#allocation4 + $0x20] sm:$0xff] 0.0
      %1555 = vst [vmem:[#allocation4 + $0x28] sm:$0xff] 0.0
      %1556 = vst [vmem:[#allocation4 + $0x30] sm:$0xff] 0.0
      %1557 = vst [vmem:[#allocation4 + $0x38] sm:$0xff] 0.0
      %1558 = vst [vmem:[#allocation4 + $0x40] sm:$0xff] 0.0
      %1559 = vst [vmem:[#allocation4 + $0x48] sm:$0xff] 0.0
      %1560 = vst [vmem:[#allocation4 + $0x50] sm:$0xff] 0.0
      %1561 = vst [vmem:[#allocation4 + $0x58] sm:$0xff] 0.0
      %1562 = vst [vmem:[#allocation4 + $0x60] sm:$0xff] 0.0
      %1563 = vst [vmem:[#allocation4 + $0x68] sm:$0xff] 0.0
      %1564 = vst [vmem:[#allocation4 + $0x70] sm:$0xff] 0.0
      %1565 = vst [vmem:[#allocation4 + $0x78] sm:$0xff] 0.0
      %1566 = vst [vmem:[#allocation4 + $0x80] sm:$0xff] 0.0
      %1567 = vst [vmem:[#allocation4 + $0x88] sm:$0xff] 0.0
      %1568 = vst [vmem:[#allocation4 + $0x90] sm:$0xff] 0.0
      %1569 = vst [vmem:[#allocation4 + $0x98] sm:$0xff] 0.0
      %1570 = vst [vmem:[#allocation4 + $0xa0] sm:$0xff] 0.0
      %1571 = vst [vmem:[#allocation4 + $0xa8] sm:$0xff] 0.0
      %1572 = vst [vmem:[#allocation4 + $0xb0] sm:$0xff] 0.0
      %1573 = vst [vmem:[#allocation4 + $0xb8] sm:$0xff] 0.0
      %1574 = vst [vmem:[#allocation4 + $0xc0] sm:$0xff] 0.0
      %1575 = vst [vmem:[#allocation4 + $0xc8] sm:$0xff] 0.0
      %1576 = vst [vmem:[#allocation4 + $0xd0] sm:$0xff] 0.0
      %1577 = vst [vmem:[#allocation4 + $0xd8] sm:$0xff] 0.0
      %1578 = vst [vmem:[#allocation4 + $0xe0] sm:$0xff] 0.0
      %1579 = vst [vmem:[#allocation4 + $0xe8] sm:$0xff] 0.0
      %1580 = vst [vmem:[#allocation4 + $0xf0] sm:$0xff] 0.0
      %1581 = vst [vmem:[#allocation4 + $0xf8] sm:$0xff] 0.0
      %1582 = vst [vmem:[#allocation4 + $0x100] sm:$0xff] 0.0
      %1583 = vst [vmem:[#allocation4 + $0x108] sm:$0xff] 0.0
      %1584 = vst [vmem:[#allocation4 + $0x110] sm:$0xff] 0.0
      %1585 = vst [vmem:[#allocation4 + $0x118] sm:$0xff] 0.0
      %1586 = vst [vmem:[#allocation4 + $0x120] sm:$0xff] 0.0
      %1587 = vst [vmem:[#allocation4 + $0x128] sm:$0xff] 0.0
      %1588 = vst [vmem:[#allocation4 + $0x130] sm:$0xff] 0.0
      %1589 = vst [vmem:[#allocation4 + $0x138] sm:$0xff] 0.0
      %1590 = vst [vmem:[#allocation4 + $0x140] sm:$0xff] 0.0
      %1591 = vst [vmem:[#allocation4 + $0x148] sm:$0xff] 0.0
      %1592 = vst [vmem:[#allocation4 + $0x150] sm:$0xff] 0.0
      %1593 = vst [vmem:[#allocation4 + $0x158] sm:$0xff] 0.0
      %1594 = vst [vmem:[#allocation4 + $0x160] sm:$0xff] 0.0
      %1595 = vst [vmem:[#allocation4 + $0x168] sm:$0xff] 0.0
      %1596 = vst [vmem:[#allocation4 + $0x170] sm:$0xff] 0.0
      %1597 = vst [vmem:[#allocation4 + $0x178] sm:$0xff] 0.0
      %1598 = vst [vmem:[#allocation4 + $0x180] sm:$0xff] 0.0
      %1599 = vst [vmem:[#allocation4 + $0x188] sm:$0xff] 0.0
      %1600 = vst [vmem:[#allocation4 + $0x190] sm:$0xff] 0.0
      %1601 = vst [vmem:[#allocation4 + $0x198] sm:$0xff] 0.0
      %1602 = vst [vmem:[#allocation4 + $0x1a0] sm:$0xff] 0.0
      %1603 = vst [vmem:[#allocation4 + $0x1a8] sm:$0xff] 0.0
      %1604 = vst [vmem:[#allocation4 + $0x1b0] sm:$0xff] 0.0
      %1605 = vst [vmem:[#allocation4 + $0x1b8] sm:$0xff] 0.0
      %1606 = vst [vmem:[#allocation4 + $0x1c0] sm:$0xff] 0.0
      %1607 = vst [vmem:[#allocation4 + $0x1c8] sm:$0xff] 0.0
      %1608 = vst [vmem:[#allocation4 + $0x1d0] sm:$0xff] 0.0
      %1609 = vst [vmem:[#allocation4 + $0x1d8] sm:$0xff] 0.0
      %1610 = vst [vmem:[#allocation4 + $0x1e0] sm:$0xff] 0.0
      %1611 = vst [vmem:[#allocation4 + $0x1e8] sm:$0xff] 0.0
      %1612 = vst [vmem:[#allocation4 + $0x1f0] sm:$0xff] 0.0
      %1613 = vst [vmem:[#allocation4 + $0x1f8] sm:$0xff] 0.0
    $region45: #{transformer_encoder_layer.5} parent=1 // pred_fallthru
      _
    %v1614 = vld [vmem:[#allocation3] sm:$0xff]
    %v1615 = vld [vmem:[#allocation3 + $0x8] sm:$0xff]
    %v1616 = vld [vmem:[#allocation3 + $0x10] sm:$0xff]
    %v1617 = vld [vmem:[#allocation3 + $0x18] sm:$0xff]
    %v1618 = vld [vmem:[#allocation3 + $0x20] sm:$0xff]
    %v1619 = vld [vmem:[#allocation3 + $0x28] sm:$0xff]
    %v1620 = vld [vmem:[#allocation3 + $0x30] sm:$0xff]
    %v1621 = vld [vmem:[#allocation3 + $0x38] sm:$0xff]
    %v1622 = vld [vmem:[#allocation3 + $0x40] sm:$0xff]
    %v1623 = vld [vmem:[#allocation3 + $0x48] sm:$0xff]
    %v1624 = vld [vmem:[#allocation3 + $0x50] sm:$0xff]
    %v1625 = vld [vmem:[#allocation3 + $0x58] sm:$0xff]
    %v1626 = vld [vmem:[#allocation3 + $0x60] sm:$0xff]
    %v1627 = vld [vmem:[#allocation3 + $0x68] sm:$0xff]
    %v1628 = vld [vmem:[#allocation3 + $0x70] sm:$0xff]
    %v1629 = vld [vmem:[#allocation3 + $0x78] sm:$0xff]
    %v1630 = vld [vmem:[#allocation3 + $0x80] sm:$0xff]
    %v1631 = vld [vmem:[#allocation3 + $0x88] sm:$0xff]
    %v1632 = vld [vmem:[#allocation3 + $0x90] sm:$0xff]
    %v1633 = vld [vmem:[#allocation3 + $0x98] sm:$0xff]
    %v1634 = vld [vmem:[#allocation3 + $0xa0] sm:$0xff]
    %v1635 = vld [vmem:[#allocation3 + $0xa8] sm:$0xff]
    %v1636 = vld [vmem:[#allocation3 + $0xb0] sm:$0xff]
    %v1637 = vld [vmem:[#allocation3 + $0xb8] sm:$0xff]
    %v1638 = vld [vmem:[#allocation3 + $0xc0] sm:$0xff]
    %v1639 = vld [vmem:[#allocation3 + $0xc8] sm:$0xff]
    %v1640 = vld [vmem:[#allocation3 + $0xd0] sm:$0xff]
    %v1641 = vld [vmem:[#allocation3 + $0xd8] sm:$0xff]
    %v1642 = vld [vmem:[#allocation3 + $0xe0] sm:$0xff]
    %v1643 = vld [vmem:[#allocation3 + $0xe8] sm:$0xff]
    %v1644 = vld [vmem:[#allocation3 + $0xf0] sm:$0xff]
    %v1645 = vld [vmem:[#allocation3 + $0xf8] sm:$0xff]
    %v1646 = vld [vmem:[%s6] sm:$0xff]
    %v1647 = vld [vmem:[%s6 + $0x8] sm:$0xff]
    %v1648 = vld [vmem:[%s6 + $0x10] sm:$0xff]
    %v1649 = vld [vmem:[%s6 + $0x18] sm:$0xff]
    %v1650 = vld [vmem:[%s6 + $0x20] sm:$0xff]
    %v1651 = vld [vmem:[%s6 + $0x28] sm:$0xff]
    %v1652 = vld [vmem:[%s6 + $0x30] sm:$0xff]
    %v1653 = vld [vmem:[%s6 + $0x38] sm:$0xff]
    %v1654 = vld [vmem:[%s6 + $0x40] sm:$0xff]
    %v1655 = vld [vmem:[%s6 + $0x48] sm:$0xff]
    %v1656 = vld [vmem:[%s6 + $0x50] sm:$0xff]
    %v1657 = vld [vmem:[%s6 + $0x58] sm:$0xff]
    %v1658 = vld [vmem:[%s6 + $0x60] sm:$0xff]
    %v1659 = vld [vmem:[%s6 + $0x68] sm:$0xff]
    %v1660 = vld [vmem:[%s6 + $0x70] sm:$0xff]
    %v1661 = vld [vmem:[%s6 + $0x78] sm:$0xff]
    %v1662 = vld [vmem:[%s6 + $0x80] sm:$0xff]
    %v1663 = vld [vmem:[%s6 + $0x88] sm:$0xff]
    %v1664 = vld [vmem:[%s6 + $0x90] sm:$0xff]
    %v1665 = vld [vmem:[%s6 + $0x98] sm:$0xff]
    %v1666 = vld [vmem:[%s6 + $0xa0] sm:$0xff]
    %v1667 = vld [vmem:[%s6 + $0xa8] sm:$0xff]
    %v1668 = vld [vmem:[%s6 + $0xb0] sm:$0xff]
    %v1669 = vld [vmem:[%s6 + $0xb8] sm:$0xff]
    %v1670 = vld [vmem:[%s6 + $0xc0] sm:$0xff]
    %v1671 = vld [vmem:[%s6 + $0xc8] sm:$0xff]
    %v1672 = vld [vmem:[%s6 + $0xd0] sm:$0xff]
    %v1673 = vld [vmem:[%s6 + $0xd8] sm:$0xff]
    %v1674 = vld [vmem:[%s6 + $0xe0] sm:$0xff]
    %v1675 = vld [vmem:[%s6 + $0xe8] sm:$0xff]
    %v1676 = vld [vmem:[%s6 + $0xf0] sm:$0xff]
    %v1677 = vld [vmem:[%s6 + $0xf8] sm:$0xff]
    %v1678 = vld [vmem:[%s6 + $0x100] sm:$0xff]
    %v1679 = vld [vmem:[%s6 + $0x108] sm:$0xff]
    %v1680 = vld [vmem:[%s6 + $0x110] sm:$0xff]
    %v1681 = vld [vmem:[%s6 + $0x118] sm:$0xff]
    %v1682 = vld [vmem:[%s6 + $0x120] sm:$0xff]
    %v1683 = vld [vmem:[%s6 + $0x128] sm:$0xff]
    %v1684 = vld [vmem:[%s6 + $0x130] sm:$0xff]
    %v1685 = vld [vmem:[%s6 + $0x138] sm:$0xff]
    %v1686 = vld [vmem:[%s6 + $0x140] sm:$0xff]
    %v1687 = vld [vmem:[%s6 + $0x148] sm:$0xff]
    %v1688 = vld [vmem:[%s6 + $0x150] sm:$0xff]
    %v1689 = vld [vmem:[%s6 + $0x158] sm:$0xff]
    %v1690 = vld [vmem:[%s6 + $0x160] sm:$0xff]
    %v1691 = vld [vmem:[%s6 + $0x168] sm:$0xff]
    %v1692 = vld [vmem:[%s6 + $0x170] sm:$0xff]
    %v1693 = vld [vmem:[%s6 + $0x178] sm:$0xff]
    %v1694 = vld [vmem:[%s6 + $0x180] sm:$0xff]
    %v1695 = vld [vmem:[%s6 + $0x188] sm:$0xff]
    %v1696 = vld [vmem:[%s6 + $0x190] sm:$0xff]
    %v1697 = vld [vmem:[%s6 + $0x198] sm:$0xff]
    %v1698 = vld [vmem:[%s6 + $0x1a0] sm:$0xff]
    %v1699 = vld [vmem:[%s6 + $0x1a8] sm:$0xff]
    %v1700 = vld [vmem:[%s6 + $0x1b0] sm:$0xff]
    %v1701 = vld [vmem:[%s6 + $0x1b8] sm:$0xff]
    %v1702 = vld [vmem:[%s6 + $0x1c0] sm:$0xff]
    %v1703 = vld [vmem:[%s6 + $0x1c8] sm:$0xff]
    %v1704 = vld [vmem:[%s6 + $0x1d0] sm:$0xff]
    %v1705 = vld [vmem:[%s6 + $0x1d8] sm:$0xff]
    %v1706 = vld [vmem:[%s6 + $0x1e0] sm:$0xff]
    %v1707 = vld [vmem:[%s6 + $0x1e8] sm:$0xff]
    %v1708 = vld [vmem:[%s6 + $0x1f0] sm:$0xff]
    %v1709 = vld [vmem:[%s6 + $0x1f8] sm:$0xff]
    %v1710 = vld [vmem:[%s7] sm:$0xf]
    %v1712 = vlaneseq
    %v1713 = vshrl.u32 %v1712, 7
    %v1714 = vsub.s32 0, %v1713
    %v1715 = vrot.slane %v1710, %v1714
    %v1716 = vlaneseq
    %v1717 = vshrl.u32 %v1716, 7
    %v1718 = vsub.s32 1, %v1717
    %v1719 = vrot.slane %v1710, %v1718
    %v1720 = vlaneseq
    %v1721 = vshrl.u32 %v1720, 7
    %v1722 = vsub.s32 2, %v1721
    %v1723 = vrot.slane %v1710, %v1722
    %v1724 = vlaneseq
    %v1725 = vshrl.u32 %v1724, 7
    %v1726 = vsub.s32 3, %v1725
    %v1727 = vrot.slane %v1710, %v1726
    %v1796 = vunpack.c.l.b16 %v1646
    %v1797 = vunpack.c.h.b16 %v1646
    %v1798 = vunpack.c.l.b16 %v1647
    %v1799 = vunpack.c.h.b16 %v1647
    %v1800 = vunpack.c.l.b16 %v1648
    %v1801 = vunpack.c.h.b16 %v1648
    %v1802 = vunpack.c.l.b16 %v1649
    %v1803 = vunpack.c.h.b16 %v1649
    %v1804 = vunpack.c.l.b16 %v1650
    %v1805 = vunpack.c.h.b16 %v1650
    %v1806 = vunpack.c.l.b16 %v1651
    %v1807 = vunpack.c.h.b16 %v1651
    %v1808 = vunpack.c.l.b16 %v1652
    %v1809 = vunpack.c.h.b16 %v1652
    %v1810 = vunpack.c.l.b16 %v1653
    %v1811 = vunpack.c.h.b16 %v1653
    %v1812 = vunpack.c.l.b16 %v1654
    %v1813 = vunpack.c.h.b16 %v1654
    %v1814 = vunpack.c.l.b16 %v1655
    %v1815 = vunpack.c.h.b16 %v1655
    %v1816 = vunpack.c.l.b16 %v1656
    %v1817 = vunpack.c.h.b16 %v1656
    %v1818 = vunpack.c.l.b16 %v1657
    %v1819 = vunpack.c.h.b16 %v1657
    %v1820 = vunpack.c.l.b16 %v1658
    %v1821 = vunpack.c.h.b16 %v1658
    %v1822 = vunpack.c.l.b16 %v1659
    %v1823 = vunpack.c.h.b16 %v1659
    %v1824 = vunpack.c.l.b16 %v1660
    %v1825 = vunpack.c.h.b16 %v1660
    %v1826 = vunpack.c.l.b16 %v1661
    %v1827 = vunpack.c.h.b16 %v1661
    %v1828 = vunpack.c.l.b16 %v1662
    %v1829 = vunpack.c.h.b16 %v1662
    %v1830 = vunpack.c.l.b16 %v1663
    %v1831 = vunpack.c.h.b16 %v1663
    %v1832 = vunpack.c.l.b16 %v1664
    %v1833 = vunpack.c.h.b16 %v1664
    %v1834 = vunpack.c.l.b16 %v1665
    %v1835 = vunpack.c.h.b16 %v1665
    %v1836 = vunpack.c.l.b16 %v1666
    %v1837 = vunpack.c.h.b16 %v1666
    %v1838 = vunpack.c.l.b16 %v1667
    %v1839 = vunpack.c.h.b16 %v1667
    %v1840 = vunpack.c.l.b16 %v1668
    %v1841 = vunpack.c.h.b16 %v1668
    %v1842 = vunpack.c.l.b16 %v1669
    %v1843 = vunpack.c.h.b16 %v1669
    %v1844 = vunpack.c.l.b16 %v1670
    %v1845 = vunpack.c.h.b16 %v1670
    %v1846 = vunpack.c.l.b16 %v1671
    %v1847 = vunpack.c.h.b16 %v1671
    %v1848 = vunpack.c.l.b16 %v1672
    %v1849 = vunpack.c.h.b16 %v1672
    %v1850 = vunpack.c.l.b16 %v1673
    %v1851 = vunpack.c.h.b16 %v1673
    %v1852 = vunpack.c.l.b16 %v1674
    %v1853 = vunpack.c.h.b16 %v1674
    %v1854 = vunpack.c.l.b16 %v1675
    %v1855 = vunpack.c.h.b16 %v1675
    %v1856 = vunpack.c.l.b16 %v1676
    %v1857 = vunpack.c.h.b16 %v1676
    %v1858 = vunpack.c.l.b16 %v1677
    %v1859 = vunpack.c.h.b16 %v1677
    %v1860 = vunpack.c.l.b16 %v1678
    %v1861 = vunpack.c.h.b16 %v1678
    %v1862 = vunpack.c.l.b16 %v1679
    %v1863 = vunpack.c.h.b16 %v1679
    %v1864 = vunpack.c.l.b16 %v1680
    %v1865 = vunpack.c.h.b16 %v1680
    %v1866 = vunpack.c.l.b16 %v1681
    %v1867 = vunpack.c.h.b16 %v1681
    %v1868 = vunpack.c.l.b16 %v1682
    %v1869 = vunpack.c.h.b16 %v1682
    %v1870 = vunpack.c.l.b16 %v1683
    %v1871 = vunpack.c.h.b16 %v1683
    %v1872 = vunpack.c.l.b16 %v1684
    %v1873 = vunpack.c.h.b16 %v1684
    %v1874 = vunpack.c.l.b16 %v1685
    %v1875 = vunpack.c.h.b16 %v1685
    %v1876 = vunpack.c.l.b16 %v1686
    %v1877 = vunpack.c.h.b16 %v1686
    %v1878 = vunpack.c.l.b16 %v1687
    %v1879 = vunpack.c.h.b16 %v1687
    %v1880 = vunpack.c.l.b16 %v1688
    %v1881 = vunpack.c.h.b16 %v1688
    %v1882 = vunpack.c.l.b16 %v1689
    %v1883 = vunpack.c.h.b16 %v1689
    %v1884 = vunpack.c.l.b16 %v1690
    %v1885 = vunpack.c.h.b16 %v1690
    %v1886 = vunpack.c.l.b16 %v1691
    %v1887 = vunpack.c.h.b16 %v1691
    %v1888 = vunpack.c.l.b16 %v1692
    %v1889 = vunpack.c.h.b16 %v1692
    %v1890 = vunpack.c.l.b16 %v1693
    %v1891 = vunpack.c.h.b16 %v1693
    %v1892 = vunpack.c.l.b16 %v1694
    %v1893 = vunpack.c.h.b16 %v1694
    %v1894 = vunpack.c.l.b16 %v1695
    %v1895 = vunpack.c.h.b16 %v1695
    %v1896 = vunpack.c.l.b16 %v1696
    %v1897 = vunpack.c.h.b16 %v1696
    %v1898 = vunpack.c.l.b16 %v1697
    %v1899 = vunpack.c.h.b16 %v1697
    %v1900 = vunpack.c.l.b16 %v1698
    %v1901 = vunpack.c.h.b16 %v1698
    %v1902 = vunpack.c.l.b16 %v1699
    %v1903 = vunpack.c.h.b16 %v1699
    %v1904 = vunpack.c.l.b16 %v1700
    %v1905 = vunpack.c.h.b16 %v1700
    %v1906 = vunpack.c.l.b16 %v1701
    %v1907 = vunpack.c.h.b16 %v1701
    %v1908 = vunpack.c.l.b16 %v1702
    %v1909 = vunpack.c.h.b16 %v1702
    %v1910 = vunpack.c.l.b16 %v1703
    %v1911 = vunpack.c.h.b16 %v1703
    %v1912 = vunpack.c.l.b16 %v1704
    %v1913 = vunpack.c.h.b16 %v1704
    %v1914 = vunpack.c.l.b16 %v1705
    %v1915 = vunpack.c.h.b16 %v1705
    %v1916 = vunpack.c.l.b16 %v1706
    %v1917 = vunpack.c.h.b16 %v1706
    %v1918 = vunpack.c.l.b16 %v1707
    %v1919 = vunpack.c.h.b16 %v1707
    %v1920 = vunpack.c.l.b16 %v1708
    %v1921 = vunpack.c.h.b16 %v1708
    %v1922 = vunpack.c.l.b16 %v1709
    %v1923 = vunpack.c.h.b16 %v1709
    %v1924 = vpack.c.b16 %v1800, %v1796
    %v1925 = vpack.c.b16 %v1801, %v1797
    %v1926 = vpack.c.b16 %v1802, %v1798
    %v1927 = vpack.c.b16 %v1803, %v1799
    %v1928 = vpack.c.b16 %v1808, %v1804
    %v1929 = vpack.c.b16 %v1809, %v1805
    %v1930 = vpack.c.b16 %v1810, %v1806
    %v1931 = vpack.c.b16 %v1811, %v1807
    %v1932 = vpack.c.b16 %v1816, %v1812
    %v1933 = vpack.c.b16 %v1817, %v1813
    %v1934 = vpack.c.b16 %v1818, %v1814
    %v1935 = vpack.c.b16 %v1819, %v1815
    %v1936 = vpack.c.b16 %v1824, %v1820
    %v1937 = vpack.c.b16 %v1825, %v1821
    %v1938 = vpack.c.b16 %v1826, %v1822
    %v1939 = vpack.c.b16 %v1827, %v1823
    %v1940 = vpack.c.b16 %v1832, %v1828
    %v1941 = vpack.c.b16 %v1833, %v1829
    %v1942 = vpack.c.b16 %v1834, %v1830
    %v1943 = vpack.c.b16 %v1835, %v1831
    %v1944 = vpack.c.b16 %v1840, %v1836
    %v1945 = vpack.c.b16 %v1841, %v1837
    %v1946 = vpack.c.b16 %v1842, %v1838
    %v1947 = vpack.c.b16 %v1843, %v1839
    %v1948 = vpack.c.b16 %v1848, %v1844
    %v1949 = vpack.c.b16 %v1849, %v1845
    %v1950 = vpack.c.b16 %v1850, %v1846
    %v1951 = vpack.c.b16 %v1851, %v1847
    %v1952 = vpack.c.b16 %v1856, %v1852
    %v1953 = vpack.c.b16 %v1857, %v1853
    %v1954 = vpack.c.b16 %v1858, %v1854
    %v1955 = vpack.c.b16 %v1859, %v1855
    %v1956 = vpack.c.b16 %v1864, %v1860
    %v1957 = vpack.c.b16 %v1865, %v1861
    %v1958 = vpack.c.b16 %v1866, %v1862
    %v1959 = vpack.c.b16 %v1867, %v1863
    %v1960 = vpack.c.b16 %v1872, %v1868
    %v1961 = vpack.c.b16 %v1873, %v1869
    %v1962 = vpack.c.b16 %v1874, %v1870
    %v1963 = vpack.c.b16 %v1875, %v1871
    %v1964 = vpack.c.b16 %v1880, %v1876
    %v1965 = vpack.c.b16 %v1881, %v1877
    %v1966 = vpack.c.b16 %v1882, %v1878
    %v1967 = vpack.c.b16 %v1883, %v1879
    %v1968 = vpack.c.b16 %v1888, %v1884
    %v1969 = vpack.c.b16 %v1889, %v1885
    %v1970 = vpack.c.b16 %v1890, %v1886
    %v1971 = vpack.c.b16 %v1891, %v1887
    %v1972 = vpack.c.b16 %v1896, %v1892
    %v1973 = vpack.c.b16 %v1897, %v1893
    %v1974 = vpack.c.b16 %v1898, %v1894
    %v1975 = vpack.c.b16 %v1899, %v1895
    %v1976 = vpack.c.b16 %v1904, %v1900
    %v1977 = vpack.c.b16 %v1905, %v1901
    %v1978 = vpack.c.b16 %v1906, %v1902
    %v1979 = vpack.c.b16 %v1907, %v1903
    %v1980 = vpack.c.b16 %v1912, %v1908
    %v1981 = vpack.c.b16 %v1913, %v1909
    %v1982 = vpack.c.b16 %v1914, %v1910
    %v1983 = vpack.c.b16 %v1915, %v1911
    %v1984 = vpack.c.b16 %v1920, %v1916
    %v1985 = vpack.c.b16 %v1921, %v1917
    %v1986 = vpack.c.b16 %v1922, %v1918
    %v1987 = vpack.c.b16 %v1923, %v1919
    %2052 = vmatprep.subr.bf16.mxu0 %v1925
    %2053 = vmatpush1.bf16.msra.mxu0 %v1924
    %2054 = vmatprep.subr.bf16.mxu0 %v1929
    %2055 = vmatpush1.bf16.msra.mxu0 %v1928
    %2056 = vmatprep.subr.bf16.mxu0 %v1933
    %2057 = vmatpush1.bf16.msra.mxu0 %v1932
    %2058 = vmatprep.subr.bf16.mxu0 %v1937
    %2059 = vmatpush1.bf16.msra.mxu0 %v1936
    %2060 = vmatprep.subr.bf16.mxu0 %v1941
    %2061 = vmatpush1.bf16.msra.mxu0 %v1940
    %2062 = vmatprep.subr.bf16.mxu0 %v1945
    %2063 = vmatpush1.bf16.msra.mxu0 %v1944
    %2064 = vmatprep.subr.bf16.mxu0 %v1949
    %2065 = vmatpush1.bf16.msra.mxu0 %v1948
    %2066 = vmatprep.subr.bf16.mxu0 %v1953
    %2067 = vmatpush1.bf16.msra.mxu0 %v1952
    %2068 = vmatprep.subr.bf16.mxu0 %v1957
    %2069 = vmatpush1.bf16.msra.mxu0 %v1956
    %2070 = vmatprep.subr.bf16.mxu0 %v1961
    %2071 = vmatpush1.bf16.msra.mxu0 %v1960
    %2072 = vmatprep.subr.bf16.mxu0 %v1965
    %2073 = vmatpush1.bf16.msra.mxu0 %v1964
    %2074 = vmatprep.subr.bf16.mxu0 %v1969
    %2075 = vmatpush1.bf16.msra.mxu0 %v1968
    %2076 = vmatprep.subr.bf16.mxu0 %v1973
    %2077 = vmatpush1.bf16.msra.mxu0 %v1972
    %2078 = vmatprep.subr.bf16.mxu0 %v1977
    %2079 = vmatpush1.bf16.msra.mxu0 %v1976
    %2080 = vmatprep.subr.bf16.mxu0 %v1981
    %2081 = vmatpush1.bf16.msra.mxu0 %v1980
    %2082 = vmatprep.subr.bf16.mxu0 %v1985
    %2083 = vmatpush1.bf16.msra.mxu0 %v1984
    %2084 = vmatprep.mubr.bf16.mxu0 %v1615
    %2085 = vmatmul.mubr.bf16.gmra.mrb[0].mxu0 %v1614
    %v2086 = vpop.f32.mrb[0].mxu0
    %v2087 = vadd.f32 %v1715, %v2086
    %v2088 = vpop.f32.mrb[0].mxu0
    %v2089 = vadd.f32 %v1719, %v2088
    %v2090 = vpop.f32.mrb[0].mxu0
    %v2091 = vadd.f32 %v1715, %v2090
    %v2092 = vpop.f32.mrb[0].mxu0
    %v2093 = vadd.f32 %v1719, %v2092
    %2094 = vmatprep.mubr.bf16.mxu0 %v1617
    %2095 = vmatmul.mubr.bf16.gmra.mrb[0].mxu0 %v1616
    %v2096 = vpop.f32.mrb[0].mxu0
    %v2097 = vadd.f32 %v1715, %v2096
    %v2098 = vpop.f32.mrb[0].mxu0
    %v2099 = vadd.f32 %v1719, %v2098
    %v2100 = vpop.f32.mrb[0].mxu0
    %v2101 = vadd.f32 %v1715, %v2100
    %v2102 = vpop.f32.mrb[0].mxu0
    %v2103 = vadd.f32 %v1719, %v2102
    %2104 = vmatprep.mubr.bf16.mxu0 %v1619
    %2105 = vmatmul.mubr.bf16.gmra.mrb[0].mxu0 %v1618
    %v2106 = vpop.f32.mrb[0].mxu0
    %v2107 = vadd.f32 %v1715, %v2106
    %v2108 = vpop.f32.mrb[0].mxu0
    %v2109 = vadd.f32 %v1719, %v2108
    %v2110 = vpop.f32.mrb[0].mxu0
    %v2111 = vadd.f32 %v1715, %v2110
    %v2112 = vpop.f32.mrb[0].mxu0
    %v2113 = vadd.f32 %v1719, %v2112
    %2114 = vmatprep.mubr.bf16.mxu0 %v1621
    %2115 = vmatmul.mubr.bf16.gmra.mrb[0].mxu0 %v1620
    %v2116 = vpop.f32.mrb[0].mxu0
    %v2117 = vadd.f32 %v1715, %v2116
    %v2118 = vpop.f32.mrb[0].mxu0
    %v2119 = vadd.f32 %v1719, %v2118
    %v2120 = vpop.f32.mrb[0].mxu0
    %v2121 = vadd.f32 %v1715, %v2120
    %v2122 = vpop.f32.mrb[0].mxu0
    %v2123 = vadd.f32 %v1719, %v2122
    %2124 = vmatprep.mubr.bf16.mxu0 %v1623
    %2125 = vmatmul.mubr.bf16.gmra.mrb[0].mxu0 %v1622
    %v2126 = vpop.f32.mrb[0].mxu0
    %v2127 = vadd.f32 %v1715, %v2126
    %v2128 = vpop.f32.mrb[0].mxu0
    %v2129 = vadd.f32 %v1719, %v2128
    %v2130 = vpop.f32.mrb[0].mxu0
    %v2131 = vadd.f32 %v1715, %v2130
    %v2132 = vpop.f32.mrb[0].mxu0
    %v2133 = vadd.f32 %v1719, %v2132
    %2134 = vmatprep.mubr.bf16.mxu0 %v1625
    %2135 = vmatmul.mubr.bf16.gmra.mrb[0].mxu0 %v1624
    %v2136 = vpop.f32.mrb[0].mxu0
    %v2137 = vadd.f32 %v1715, %v2136
    %v2138 = vpop.f32.mrb[0].mxu0
    %v2139 = vadd.f32 %v1719, %v2138
    %v2140 = vpop.f32.mrb[0].mxu0
    %v2141 = vadd.f32 %v1715, %v2140
    %v2142 = vpop.f32.mrb[0].mxu0
    %v2143 = vadd.f32 %v1719, %v2142
    %2144 = vmatprep.mubr.bf16.mxu0 %v1627
    %2145 = vmatmul.mubr.bf16.gmra.mrb[0].mxu0 %v1626
    %v2146 = vpop.f32.mrb[0].mxu0
    %v2147 = vadd.f32 %v1715, %v2146
    %v2148 = vpop.f32.mrb[0].mxu0
    %v2149 = vadd.f32 %v1719, %v2148
    %v2150 = vpop.f32.mrb[0].mxu0
    %v2151 = vadd.f32 %v1715, %v2150
    %v2152 = vpop.f32.mrb[0].mxu0
    %v2153 = vadd.f32 %v1719, %v2152
    %2154 = vmatprep.mubr.bf16.mxu0 %v1629
    %2155 = vmatmul.mubr.bf16.gmra.mrb[0].mxu0 %v1628
    %v2156 = vpop.f32.mrb[0].mxu0
    %v2157 = vadd.f32 %v1715, %v2156
    %v2158 = vpop.f32.mrb[0].mxu0
    %v2159 = vadd.f32 %v1719, %v2158
    %v2160 = vpop.f32.mrb[0].mxu0
    %v2161 = vadd.f32 %v1715, %v2160
    %v2162 = vpop.f32.mrb[0].mxu0
    %v2163 = vadd.f32 %v1719, %v2162
    %2164 = vmatprep.mubr.bf16.mxu0 %v1631
    %2165 = vmatmul.mubr.bf16.gmra.mrb[0].mxu0 %v1630
    %v2166 = vpop.f32.mrb[0].mxu0
    %v2167 = vadd.f32 %v1715, %v2166
    %v2168 = vpop.f32.mrb[0].mxu0
    %v2169 = vadd.f32 %v1719, %v2168
    %v2170 = vpop.f32.mrb[0].mxu0
    %v2171 = vadd.f32 %v1715, %v2170
    %v2172 = vpop.f32.mrb[0].mxu0
    %v2173 = vadd.f32 %v1719, %v2172
    %2174 = vmatprep.mubr.bf16.mxu0 %v1633
    %2175 = vmatmul.mubr.bf16.gmra.mrb[0].mxu0 %v1632
    %v2176 = vpop.f32.mrb[0].mxu0
    %v2177 = vadd.f32 %v1715, %v2176
    %v2178 = vpop.f32.mrb[0].mxu0
    %v2179 = vadd.f32 %v1719, %v2178
    %v2180 = vpop.f32.mrb[0].mxu0
    %v2181 = vadd.f32 %v1715, %v2180
    %v2182 = vpop.f32.mrb[0].mxu0
    %v2183 = vadd.f32 %v1719, %v2182
    %2184 = vmatprep.mubr.bf16.mxu0 %v1635
    %2185 = vmatmul.mubr.bf16.gmra.mrb[0].mxu0 %v1634
    %v2186 = vpop.f32.mrb[0].mxu0
    %v2187 = vadd.f32 %v1715, %v2186
    %v2188 = vpop.f32.mrb[0].mxu0
    %v2189 = vadd.f32 %v1719, %v2188
    %v2190 = vpop.f32.mrb[0].mxu0
    %v2191 = vadd.f32 %v1715, %v2190
    %v2192 = vpop.f32.mrb[0].mxu0
    %v2193 = vadd.f32 %v1719, %v2192
    %2194 = vmatprep.mubr.bf16.mxu0 %v1637
    %2195 = vmatmul.mubr.bf16.gmra.mrb[0].mxu0 %v1636
    %v2196 = vpop.f32.mrb[0].mxu0
    %v2197 = vadd.f32 %v1715, %v2196
    %v2198 = vpop.f32.mrb[0].mxu0
    %v2199 = vadd.f32 %v1719, %v2198
    %v2200 = vpop.f32.mrb[0].mxu0
    %v2201 = vadd.f32 %v1715, %v2200
    %v2202 = vpop.f32.mrb[0].mxu0
    %v2203 = vadd.f32 %v1719, %v2202
    %2204 = vmatprep.mubr.bf16.mxu0 %v1639
    %2205 = vmatmul.mubr.bf16.gmra.mrb[0].mxu0 %v1638
    %v2206 = vpop.f32.mrb[0].mxu0
    %v2207 = vadd.f32 %v1715, %v2206
    %v2208 = vpop.f32.mrb[0].mxu0
    %v2209 = vadd.f32 %v1719, %v2208
    %v2210 = vpop.f32.mrb[0].mxu0
    %v2211 = vadd.f32 %v1715, %v2210
    %v2212 = vpop.f32.mrb[0].mxu0
    %v2213 = vadd.f32 %v1719, %v2212
    %2214 = vmatprep.mubr.bf16.mxu0 %v1641
    %2215 = vmatmul.mubr.bf16.gmra.mrb[0].mxu0 %v1640
    %v2216 = vpop.f32.mrb[0].mxu0
    %v2217 = vadd.f32 %v1715, %v2216
    %v2218 = vpop.f32.mrb[0].mxu0
    %v2219 = vadd.f32 %v1719, %v2218
    %v2220 = vpop.f32.mrb[0].mxu0
    %v2221 = vadd.f32 %v1715, %v2220
    %v2222 = vpop.f32.mrb[0].mxu0
    %v2223 = vadd.f32 %v1719, %v2222
    %2224 = vmatprep.mubr.bf16.mxu0 %v1643
    %2225 = vmatmul.mubr.bf16.gmra.mrb[0].mxu0 %v1642
    %v2226 = vpop.f32.mrb[0].mxu0
    %v2227 = vadd.f32 %v1715, %v2226
    %v2228 = vpop.f32.mrb[0].mxu0
    %v2229 = vadd.f32 %v1719, %v2228
    %v2230 = vpop.f32.mrb[0].mxu0
    %v2231 = vadd.f32 %v1715, %v2230
    %v2232 = vpop.f32.mrb[0].mxu0
    %v2233 = vadd.f32 %v1719, %v2232
    %2234 = vmatprep.mubr.bf16.mxu0 %v1645
    %2235 = vmatmul.mubr.bf16.gmra.mrb[0].mxu0 %v1644
    %v2236 = vpop.f32.mrb[0].mxu0
    %v2237 = vadd.f32 %v1715, %v2236
    %v2238 = vpop.f32.mrb[0].mxu0
    %v2239 = vadd.f32 %v1719, %v2238
    %v2240 = vpop.f32.mrb[0].mxu0
    %v2241 = vadd.f32 %v1715, %v2240
    %v2242 = vpop.f32.mrb[0].mxu0
    %v2243 = vadd.f32 %v1719, %v2242
    %2244 = vdwg.mxu0
    %2245 = vmatprep.subr.bf16.mxu0 %v1927
    %2246 = vmatpush1.bf16.msra.mxu0 %v1926
    %2247 = vmatprep.subr.bf16.mxu0 %v1931
    %2248 = vmatpush1.bf16.msra.mxu0 %v1930
    %2249 = vmatprep.subr.bf16.mxu0 %v1935
    %2250 = vmatpush1.bf16.msra.mxu0 %v1934
    %2251 = vmatprep.subr.bf16.mxu0 %v1939
    %2252 = vmatpush1.bf16.msra.mxu0 %v1938
    %2253 = vmatprep.subr.bf16.mxu0 %v1943
    %2254 = vmatpush1.bf16.msra.mxu0 %v1942
    %2255 = vmatprep.subr.bf16.mxu0 %v1947
    %2256 = vmatpush1.bf16.msra.mxu0 %v1946
    %2257 = vmatprep.subr.bf16.mxu0 %v1951
    %2258 = vmatpush1.bf16.msra.mxu0 %v1950
    %2259 = vmatprep.subr.bf16.mxu0 %v1955
    %2260 = vmatpush1.bf16.msra.mxu0 %v1954
    %2261 = vmatprep.subr.bf16.mxu0 %v1959
    %2262 = vmatpush1.bf16.msra.mxu0 %v1958
    %2263 = vmatprep.subr.bf16.mxu0 %v1963
    %2264 = vmatpush1.bf16.msra.mxu0 %v1962
    %2265 = vmatprep.subr.bf16.mxu0 %v1967
    %2266 = vmatpush1.bf16.msra.mxu0 %v1966
    %2267 = vmatprep.subr.bf16.mxu0 %v1971
    %2268 = vmatpush1.bf16.msra.mxu0 %v1970
    %2269 = vmatprep.subr.bf16.mxu0 %v1975
    %2270 = vmatpush1.bf16.msra.mxu0 %v1974
    %2271 = vmatprep.subr.bf16.mxu0 %v1979
    %2272 = vmatpush1.bf16.msra.mxu0 %v1978
    %2273 = vmatprep.subr.bf16.mxu0 %v1983
    %2274 = vmatpush1.bf16.msra.mxu0 %v1982
    %2275 = vmatprep.subr.bf16.mxu0 %v1987
    %2276 = vmatpush1.bf16.msra.mxu0 %v1986
    %2277 = vmatprep.mubr.bf16.mxu0 %v1615
    %2278 = vmatmul.mubr.bf16.gmra.mrb[0].mxu0 %v1614
    %v2279 = vpop.f32.mrb[0].mxu0
    %v2280 = vadd.f32 %v1723, %v2279
    %v2281 = vpop.f32.mrb[0].mxu0
    %v2282 = vadd.f32 %v1727, %v2281
    %v2283 = vpop.f32.mrb[0].mxu0
    %v2284 = vadd.f32 %v1723, %v2283
    %v2285 = vpop.f32.mrb[0].mxu0
    %v2286 = vadd.f32 %v1727, %v2285
    %2287 = vmatprep.mubr.bf16.mxu0 %v1617
    %2288 = vmatmul.mubr.bf16.gmra.mrb[0].mxu0 %v1616
    %v2289 = vpop.f32.mrb[0].mxu0
    %v2290 = vadd.f32 %v1723, %v2289
    %v2291 = vpop.f32.mrb[0].mxu0
    %v2292 = vadd.f32 %v1727, %v2291
    %v2293 = vpop.f32.mrb[0].mxu0
    %v2294 = vadd.f32 %v1723, %v2293
    %v2295 = vpop.f32.mrb[0].mxu0
    %v2296 = vadd.f32 %v1727, %v2295
    %2297 = vmatprep.mubr.bf16.mxu0 %v1619
    %2298 = vmatmul.mubr.bf16.gmra.mrb[0].mxu0 %v1618
    %v2299 = vpop.f32.mrb[0].mxu0
    %v2300 = vadd.f32 %v1723, %v2299
    %v2301 = vpop.f32.mrb[0].mxu0
    %v2302 = vadd.f32 %v1727, %v2301
    %v2303 = vpop.f32.mrb[0].mxu0
    %v2304 = vadd.f32 %v1723, %v2303
    %v2305 = vpop.f32.mrb[0].mxu0
    %v2306 = vadd.f32 %v1727, %v2305
    %2307 = vmatprep.mubr.bf16.mxu0 %v1621
    %2308 = vmatmul.mubr.bf16.gmra.mrb[0].mxu0 %v1620
    %v2309 = vpop.f32.mrb[0].mxu0
    %v2310 = vadd.f32 %v1723, %v2309
    %v2311 = vpop.f32.mrb[0].mxu0
    %v2312 = vadd.f32 %v1727, %v2311
    %v2313 = vpop.f32.mrb[0].mxu0
    %v2314 = vadd.f32 %v1723, %v2313
    %v2315 = vpop.f32.mrb[0].mxu0
    %v2316 = vadd.f32 %v1727, %v2315
    %2317 = vmatprep.mubr.bf16.mxu0 %v1623
    %2318 = vmatmul.mubr.bf16.gmra.mrb[0].mxu0 %v1622
    %v2319 = vpop.f32.mrb[0].mxu0
    %v2320 = vadd.f32 %v1723, %v2319
    %v2321 = vpop.f32.mrb[0].mxu0
    %v2322 = vadd.f32 %v1727, %v2321
    %v2323 = vpop.f32.mrb[0].mxu0
    %v2324 = vadd.f32 %v1723, %v2323
    %v2325 = vpop.f32.mrb[0].mxu0
    %v2326 = vadd.f32 %v1727, %v2325
    %2327 = vmatprep.mubr.bf16.mxu0 %v1625
    %2328 = vmatmul.mubr.bf16.gmra.mrb[0].mxu0 %v1624
    %v2329 = vpop.f32.mrb[0].mxu0
    %v2330 = vadd.f32 %v1723, %v2329
    %v2331 = vpop.f32.mrb[0].mxu0
    %v2332 = vadd.f32 %v1727, %v2331
    %v2333 = vpop.f32.mrb[0].mxu0
    %v2334 = vadd.f32 %v1723, %v2333
    %v2335 = vpop.f32.mrb[0].mxu0
    %v2336 = vadd.f32 %v1727, %v2335
    %2337 = vmatprep.mubr.bf16.mxu0 %v1627
    %2338 = vmatmul.mubr.bf16.gmra.mrb[0].mxu0 %v1626
    %v2339 = vpop.f32.mrb[0].mxu0
    %v2340 = vadd.f32 %v1723, %v2339
    %v2341 = vpop.f32.mrb[0].mxu0
    %v2342 = vadd.f32 %v1727, %v2341
    %v2343 = vpop.f32.mrb[0].mxu0
    %v2344 = vadd.f32 %v1723, %v2343
    %v2345 = vpop.f32.mrb[0].mxu0
    %v2346 = vadd.f32 %v1727, %v2345
    %2347 = vmatprep.mubr.bf16.mxu0 %v1629
    %2348 = vmatmul.mubr.bf16.gmra.mrb[0].mxu0 %v1628
    %v2349 = vpop.f32.mrb[0].mxu0
    %v2350 = vadd.f32 %v1723, %v2349
    %v2351 = vpop.f32.mrb[0].mxu0
    %v2352 = vadd.f32 %v1727, %v2351
    %v2353 = vpop.f32.mrb[0].mxu0
    %v2354 = vadd.f32 %v1723, %v2353
    %v2355 = vpop.f32.mrb[0].mxu0
    %v2356 = vadd.f32 %v1727, %v2355
    %2357 = vmatprep.mubr.bf16.mxu0 %v1631
    %2358 = vmatmul.mubr.bf16.gmra.mrb[0].mxu0 %v1630
    %v2359 = vpop.f32.mrb[0].mxu0
    %v2360 = vadd.f32 %v1723, %v2359
    %v2361 = vpop.f32.mrb[0].mxu0
    %v2362 = vadd.f32 %v1727, %v2361
    %v2363 = vpop.f32.mrb[0].mxu0
    %v2364 = vadd.f32 %v1723, %v2363
    %v2365 = vpop.f32.mrb[0].mxu0
    %v2366 = vadd.f32 %v1727, %v2365
    %2367 = vmatprep.mubr.bf16.mxu0 %v1633
    %2368 = vmatmul.mubr.bf16.gmra.mrb[0].mxu0 %v1632
    %v2369 = vpop.f32.mrb[0].mxu0
    %v2370 = vadd.f32 %v1723, %v2369
    %v2371 = vpop.f32.mrb[0].mxu0
    %v2372 = vadd.f32 %v1727, %v2371
    %v2373 = vpop.f32.mrb[0].mxu0
    %v2374 = vadd.f32 %v1723, %v2373
    %v2375 = vpop.f32.mrb[0].mxu0
    %v2376 = vadd.f32 %v1727, %v2375
    %2377 = vmatprep.mubr.bf16.mxu0 %v1635
    %2378 = vmatmul.mubr.bf16.gmra.mrb[0].mxu0 %v1634
    %v2379 = vpop.f32.mrb[0].mxu0
    %v2380 = vadd.f32 %v1723, %v2379
    %v2381 = vpop.f32.mrb[0].mxu0
    %v2382 = vadd.f32 %v1727, %v2381
    %v2383 = vpop.f32.mrb[0].mxu0
    %v2384 = vadd.f32 %v1723, %v2383
    %v2385 = vpop.f32.mrb[0].mxu0
    %v2386 = vadd.f32 %v1727, %v2385
    %2387 = vmatprep.mubr.bf16.mxu0 %v1637
    %2388 = vmatmul.mubr.bf16.gmra.mrb[0].mxu0 %v1636
    %v2389 = vpop.f32.mrb[0].mxu0
    %v2390 = vadd.f32 %v1723, %v2389
    %v2391 = vpop.f32.mrb[0].mxu0
    %v2392 = vadd.f32 %v1727, %v2391
    %v2393 = vpop.f32.mrb[0].mxu0
    %v2394 = vadd.f32 %v1723, %v2393
    %v2395 = vpop.f32.mrb[0].mxu0
    %v2396 = vadd.f32 %v1727, %v2395
    %2397 = vmatprep.mubr.bf16.mxu0 %v1639
    %2398 = vmatmul.mubr.bf16.gmra.mrb[0].mxu0 %v1638
    %v2399 = vpop.f32.mrb[0].mxu0
    %v2400 = vadd.f32 %v1723, %v2399
    %v2401 = vpop.f32.mrb[0].mxu0
    %v2402 = vadd.f32 %v1727, %v2401
    %v2403 = vpop.f32.mrb[0].mxu0
    %v2404 = vadd.f32 %v1723, %v2403
    %v2405 = vpop.f32.mrb[0].mxu0
    %v2406 = vadd.f32 %v1727, %v2405
    %2407 = vmatprep.mubr.bf16.mxu0 %v1641
    %2408 = vmatmul.mubr.bf16.gmra.mrb[0].mxu0 %v1640
    %v2409 = vpop.f32.mrb[0].mxu0
    %v2410 = vadd.f32 %v1723, %v2409
    %v2411 = vpop.f32.mrb[0].mxu0
    %v2412 = vadd.f32 %v1727, %v2411
    %v2413 = vpop.f32.mrb[0].mxu0
    %v2414 = vadd.f32 %v1723, %v2413
    %v2415 = vpop.f32.mrb[0].mxu0
    %v2416 = vadd.f32 %v1727, %v2415
    %2417 = vmatprep.mubr.bf16.mxu0 %v1643
    %2418 = vmatmul.mubr.bf16.gmra.mrb[0].mxu0 %v1642
    %v2419 = vpop.f32.mrb[0].mxu0
    %v2420 = vadd.f32 %v1723, %v2419
    %v2421 = vpop.f32.mrb[0].mxu0
    %v2422 = vadd.f32 %v1727, %v2421
    %v2423 = vpop.f32.mrb[0].mxu0
    %v2424 = vadd.f32 %v1723, %v2423
    %v2425 = vpop.f32.mrb[0].mxu0
    %v2426 = vadd.f32 %v1727, %v2425
    %2427 = vmatprep.mubr.bf16.mxu0 %v1645
    %2428 = vmatmul.mubr.bf16.gmra.mrb[0].mxu0 %v1644
    %v2429 = vpop.f32.mrb[0].mxu0
    %v2430 = vadd.f32 %v1723, %v2429
    %v2431 = vpop.f32.mrb[0].mxu0
    %v2432 = vadd.f32 %v1727, %v2431
    %v2433 = vpop.f32.mrb[0].mxu0
    %v2434 = vadd.f32 %v1723, %v2433
    %v2435 = vpop.f32.mrb[0].mxu0
    %v2436 = vadd.f32 %v1727, %v2435
    %2437 = vdwg.mxu0
    %v2438 = vmax.f32 %v2087, 0.0
    %v2439 = vmax.f32 %v2089, 0.0
    %v2440 = vmax.f32 %v2280, 0.0
    %v2441 = vmax.f32 %v2282, 0.0
    %v2442 = vmax.f32 %v2091, 0.0
    %v2443 = vmax.f32 %v2093, 0.0
    %v2444 = vmax.f32 %v2284, 0.0
    %v2445 = vmax.f32 %v2286, 0.0
    %v2446 = vmax.f32 %v2097, 0.0
    %v2447 = vmax.f32 %v2099, 0.0
    %v2448 = vmax.f32 %v2290, 0.0
    %v2449 = vmax.f32 %v2292, 0.0
    %v2450 = vmax.f32 %v2101, 0.0
    %v2451 = vmax.f32 %v2103, 0.0
    %v2452 = vmax.f32 %v2294, 0.0
    %v2453 = vmax.f32 %v2296, 0.0
    %v2454 = vmax.f32 %v2107, 0.0
    %v2455 = vmax.f32 %v2109, 0.0
    %v2456 = vmax.f32 %v2300, 0.0
    %v2457 = vmax.f32 %v2302, 0.0
    %v2458 = vmax.f32 %v2111, 0.0
    %v2459 = vmax.f32 %v2113, 0.0
    %v2460 = vmax.f32 %v2304, 0.0
    %v2461 = vmax.f32 %v2306, 0.0
    %v2462 = vmax.f32 %v2117, 0.0
    %v2463 = vmax.f32 %v2119, 0.0
    %v2464 = vmax.f32 %v2310, 0.0
    %v2465 = vmax.f32 %v2312, 0.0
    %v2466 = vmax.f32 %v2121, 0.0
    %v2467 = vmax.f32 %v2123, 0.0
    %v2468 = vmax.f32 %v2314, 0.0
    %v2469 = vmax.f32 %v2316, 0.0
    %v2470 = vmax.f32 %v2127, 0.0
    %v2471 = vmax.f32 %v2129, 0.0
    %v2472 = vmax.f32 %v2320, 0.0
    %v2473 = vmax.f32 %v2322, 0.0
    %v2474 = vmax.f32 %v2131, 0.0
    %v2475 = vmax.f32 %v2133, 0.0
    %v2476 = vmax.f32 %v2324, 0.0
    %v2477 = vmax.f32 %v2326, 0.0
    %v2478 = vmax.f32 %v2137, 0.0
    %v2479 = vmax.f32 %v2139, 0.0
    %v2480 = vmax.f32 %v2330, 0.0
    %v2481 = vmax.f32 %v2332, 0.0
    %v2482 = vmax.f32 %v2141, 0.0
    %v2483 = vmax.f32 %v2143, 0.0
    %v2484 = vmax.f32 %v2334, 0.0
    %v2485 = vmax.f32 %v2336, 0.0
    %v2486 = vmax.f32 %v2147, 0.0
    %v2487 = vmax.f32 %v2149, 0.0
    %v2488 = vmax.f32 %v2340, 0.0
    %v2489 = vmax.f32 %v2342, 0.0
    %v2490 = vmax.f32 %v2151, 0.0
    %v2491 = vmax.f32 %v2153, 0.0
    %v2492 = vmax.f32 %v2344, 0.0
    %v2493 = vmax.f32 %v2346, 0.0
    %v2494 = vmax.f32 %v2157, 0.0
    %v2495 = vmax.f32 %v2159, 0.0
    %v2496 = vmax.f32 %v2350, 0.0
    %v2497 = vmax.f32 %v2352, 0.0
    %v2498 = vmax.f32 %v2161, 0.0
    %v2499 = vmax.f32 %v2163, 0.0
    %v2500 = vmax.f32 %v2354, 0.0
    %v2501 = vmax.f32 %v2356, 0.0
    %v2502 = vmax.f32 %v2167, 0.0
    %v2503 = vmax.f32 %v2169, 0.0
    %v2504 = vmax.f32 %v2360, 0.0
    %v2505 = vmax.f32 %v2362, 0.0
    %v2506 = vmax.f32 %v2171, 0.0
    %v2507 = vmax.f32 %v2173, 0.0
    %v2508 = vmax.f32 %v2364, 0.0
    %v2509 = vmax.f32 %v2366, 0.0
    %v2510 = vmax.f32 %v2177, 0.0
    %v2511 = vmax.f32 %v2179, 0.0
    %v2512 = vmax.f32 %v2370, 0.0
    %v2513 = vmax.f32 %v2372, 0.0
    %v2514 = vmax.f32 %v2181, 0.0
    %v2515 = vmax.f32 %v2183, 0.0
    %v2516 = vmax.f32 %v2374, 0.0
    %v2517 = vmax.f32 %v2376, 0.0
    %v2518 = vmax.f32 %v2187, 0.0
    %v2519 = vmax.f32 %v2189, 0.0
    %v2520 = vmax.f32 %v2380, 0.0
    %v2521 = vmax.f32 %v2382, 0.0
    %v2522 = vmax.f32 %v2191, 0.0
    %v2523 = vmax.f32 %v2193, 0.0
    %v2524 = vmax.f32 %v2384, 0.0
    %v2525 = vmax.f32 %v2386, 0.0
    %v2526 = vmax.f32 %v2197, 0.0
    %v2527 = vmax.f32 %v2199, 0.0
    %v2528 = vmax.f32 %v2390, 0.0
    %v2529 = vmax.f32 %v2392, 0.0
    %v2530 = vmax.f32 %v2201, 0.0
    %v2531 = vmax.f32 %v2203, 0.0
    %v2532 = vmax.f32 %v2394, 0.0
    %v2533 = vmax.f32 %v2396, 0.0
    %v2534 = vmax.f32 %v2207, 0.0
    %v2535 = vmax.f32 %v2209, 0.0
    %v2536 = vmax.f32 %v2400, 0.0
    %v2537 = vmax.f32 %v2402, 0.0
    %v2538 = vmax.f32 %v2211, 0.0
    %v2539 = vmax.f32 %v2213, 0.0
    %v2540 = vmax.f32 %v2404, 0.0
    %v2541 = vmax.f32 %v2406, 0.0
    %v2542 = vmax.f32 %v2217, 0.0
    %v2543 = vmax.f32 %v2219, 0.0
    %v2544 = vmax.f32 %v2410, 0.0
    %v2545 = vmax.f32 %v2412, 0.0
    %v2546 = vmax.f32 %v2221, 0.0
    %v2547 = vmax.f32 %v2223, 0.0
    %v2548 = vmax.f32 %v2414, 0.0
    %v2549 = vmax.f32 %v2416, 0.0
    %v2550 = vmax.f32 %v2227, 0.0
    %v2551 = vmax.f32 %v2229, 0.0
    %v2552 = vmax.f32 %v2420, 0.0
    %v2553 = vmax.f32 %v2422, 0.0
    %v2554 = vmax.f32 %v2231, 0.0
    %v2555 = vmax.f32 %v2233, 0.0
    %v2556 = vmax.f32 %v2424, 0.0
    %v2557 = vmax.f32 %v2426, 0.0
    %v2558 = vmax.f32 %v2237, 0.0
    %v2559 = vmax.f32 %v2239, 0.0
    %v2560 = vmax.f32 %v2430, 0.0
    %v2561 = vmax.f32 %v2432, 0.0
    %v2562 = vmax.f32 %v2241, 0.0
    %v2563 = vmax.f32 %v2243, 0.0
    %v2564 = vmax.f32 %v2434, 0.0
    %v2565 = vmax.f32 %v2436, 0.0
    %v2566 = vld [vmem:[#allocation4] sm:$0xff]
    %v2567 = vld [vmem:[#allocation4 + $0x8] sm:$0xff]
    %v2568 = vld [vmem:[#allocation4 + $0x10] sm:$0xff]
    %v2569 = vld [vmem:[#allocation4 + $0x18] sm:$0xff]
    %v2570 = vld [vmem:[#allocation4 + $0x20] sm:$0xff]
    %v2571 = vld [vmem:[#allocation4 + $0x28] sm:$0xff]
    %v2572 = vld [vmem:[#allocation4 + $0x30] sm:$0xff]
    %v2573 = vld [vmem:[#allocation4 + $0x38] sm:$0xff]
    %v2574 = vld [vmem:[#allocation4 + $0x40] sm:$0xff]
    %v2575 = vld [vmem:[#allocation4 + $0x48] sm:$0xff]
    %v2576 = vld [vmem:[#allocation4 + $0x50] sm:$0xff]
    %v2577 = vld [vmem:[#allocation4 + $0x58] sm:$0xff]
    %v2578 = vld [vmem:[#allocation4 + $0x60] sm:$0xff]
    %v2579 = vld [vmem:[#allocation4 + $0x68] sm:$0xff]
    %v2580 = vld [vmem:[#allocation4 + $0x70] sm:$0xff]
    %v2581 = vld [vmem:[#allocation4 + $0x78] sm:$0xff]
    %v2582 = vld [vmem:[#allocation4 + $0x80] sm:$0xff]
    %v2583 = vld [vmem:[#allocation4 + $0x88] sm:$0xff]
    %v2584 = vld [vmem:[#allocation4 + $0x90] sm:$0xff]
    %v2585 = vld [vmem:[#allocation4 + $0x98] sm:$0xff]
    %v2586 = vld [vmem:[#allocation4 + $0xa0] sm:$0xff]
    %v2587 = vld [vmem:[#allocation4 + $0xa8] sm:$0xff]
    %v2588 = vld [vmem:[#allocation4 + $0xb0] sm:$0xff]
    %v2589 = vld [vmem:[#allocation4 + $0xb8] sm:$0xff]
    %v2590 = vld [vmem:[#allocation4 + $0xc0] sm:$0xff]
    %v2591 = vld [vmem:[#allocation4 + $0xc8] sm:$0xff]
    %v2592 = vld [vmem:[#allocation4 + $0xd0] sm:$0xff]
    %v2593 = vld [vmem:[#allocation4 + $0xd8] sm:$0xff]
    %v2594 = vld [vmem:[#allocation4 + $0xe0] sm:$0xff]
    %v2595 = vld [vmem:[#allocation4 + $0xe8] sm:$0xff]
    %v2596 = vld [vmem:[#allocation4 + $0xf0] sm:$0xff]
    %v2597 = vld [vmem:[#allocation4 + $0xf8] sm:$0xff]
    %v2598 = vld [vmem:[#allocation4 + $0x100] sm:$0xff]
    %v2599 = vld [vmem:[#allocation4 + $0x108] sm:$0xff]
    %v2600 = vld [vmem:[#allocation4 + $0x110] sm:$0xff]
    %v2601 = vld [vmem:[#allocation4 + $0x118] sm:$0xff]
    %v2602 = vld [vmem:[#allocation4 + $0x120] sm:$0xff]
    %v2603 = vld [vmem:[#allocation4 + $0x128] sm:$0xff]
    %v2604 = vld [vmem:[#allocation4 + $0x130] sm:$0xff]
    %v2605 = vld [vmem:[#allocation4 + $0x138] sm:$0xff]
    %v2606 = vld [vmem:[#allocation4 + $0x140] sm:$0xff]
    %v2607 = vld [vmem:[#allocation4 + $0x148] sm:$0xff]
    %v2608 = vld [vmem:[#allocation4 + $0x150] sm:$0xff]
    %v2609 = vld [vmem:[#allocation4 + $0x158] sm:$0xff]
    %v2610 = vld [vmem:[#allocation4 + $0x160] sm:$0xff]
    %v2611 = vld [vmem:[#allocation4 + $0x168] sm:$0xff]
    %v2612 = vld [vmem:[#allocation4 + $0x170] sm:$0xff]
    %v2613 = vld [vmem:[#allocation4 + $0x178] sm:$0xff]
    %v2614 = vld [vmem:[#allocation4 + $0x180] sm:$0xff]
    %v2615 = vld [vmem:[#allocation4 + $0x188] sm:$0xff]
    %v2616 = vld [vmem:[#allocation4 + $0x190] sm:$0xff]
    %v2617 = vld [vmem:[#allocation4 + $0x198] sm:$0xff]
    %v2618 = vld [vmem:[#allocation4 + $0x1a0] sm:$0xff]
    %v2619 = vld [vmem:[#allocation4 + $0x1a8] sm:$0xff]
    %v2620 = vld [vmem:[#allocation4 + $0x1b0] sm:$0xff]
    %v2621 = vld [vmem:[#allocation4 + $0x1b8] sm:$0xff]
    %v2622 = vld [vmem:[#allocation4 + $0x1c0] sm:$0xff]
    %v2623 = vld [vmem:[#allocation4 + $0x1c8] sm:$0xff]
    %v2624 = vld [vmem:[#allocation4 + $0x1d0] sm:$0xff]
    %v2625 = vld [vmem:[#allocation4 + $0x1d8] sm:$0xff]
    %v2626 = vld [vmem:[#allocation4 + $0x1e0] sm:$0xff]
    %v2627 = vld [vmem:[#allocation4 + $0x1e8] sm:$0xff]
    %v2628 = vld [vmem:[#allocation4 + $0x1f0] sm:$0xff]
    %v2629 = vld [vmem:[#allocation4 + $0x1f8] sm:$0xff]
    %v2630 = vpack.c.bf16 %v2442, %v2438
    %v2631 = vpack.c.bf16 %v2443, %v2439
    %v2632 = vpack.c.bf16 %v2444, %v2440
    %v2633 = vpack.c.bf16 %v2445, %v2441
    %v2634 = vpack.c.bf16 %v2450, %v2446
    %v2635 = vpack.c.bf16 %v2451, %v2447
    %v2636 = vpack.c.bf16 %v2452, %v2448
    %v2637 = vpack.c.bf16 %v2453, %v2449
    %v2638 = vpack.c.bf16 %v2458, %v2454
    %v2639 = vpack.c.bf16 %v2459, %v2455
    %v2640 = vpack.c.bf16 %v2460, %v2456
    %v2641 = vpack.c.bf16 %v2461, %v2457
    %v2642 = vpack.c.bf16 %v2466, %v2462
    %v2643 = vpack.c.bf16 %v2467, %v2463
    %v2644 = vpack.c.bf16 %v2468, %v2464
    %v2645 = vpack.c.bf16 %v2469, %v2465
    %v2646 = vpack.c.bf16 %v2474, %v2470
    %v2647 = vpack.c.bf16 %v2475, %v2471
    %v2648 = vpack.c.bf16 %v2476, %v2472
    %v2649 = vpack.c.bf16 %v2477, %v2473
    %v2650 = vpack.c.bf16 %v2482, %v2478
    %v2651 = vpack.c.bf16 %v2483, %v2479
    %v2652 = vpack.c.bf16 %v2484, %v2480
    %v2653 = vpack.c.bf16 %v2485, %v2481
    %v2654 = vpack.c.bf16 %v2490, %v2486
    %v2655 = vpack.c.bf16 %v2491, %v2487
    %v2656 = vpack.c.bf16 %v2492, %v2488
    %v2657 = vpack.c.bf16 %v2493, %v2489
    %v2658 = vpack.c.bf16 %v2498, %v2494
    %v2659 = vpack.c.bf16 %v2499, %v2495
    %v2660 = vpack.c.bf16 %v2500, %v2496
    %v2661 = vpack.c.bf16 %v2501, %v2497
    %v2662 = vpack.c.bf16 %v2506, %v2502
    %v2663 = vpack.c.bf16 %v2507, %v2503
    %v2664 = vpack.c.bf16 %v2508, %v2504
    %v2665 = vpack.c.bf16 %v2509, %v2505
    %v2666 = vpack.c.bf16 %v2514, %v2510
    %v2667 = vpack.c.bf16 %v2515, %v2511
    %v2668 = vpack.c.bf16 %v2516, %v2512
    %v2669 = vpack.c.bf16 %v2517, %v2513
    %v2670 = vpack.c.bf16 %v2522, %v2518
    %v2671 = vpack.c.bf16 %v2523, %v2519
    %v2672 = vpack.c.bf16 %v2524, %v2520
    %v2673 = vpack.c.bf16 %v2525, %v2521
    %v2674 = vpack.c.bf16 %v2530, %v2526
    %v2675 = vpack.c.bf16 %v2531, %v2527
    %v2676 = vpack.c.bf16 %v2532, %v2528
    %v2677 = vpack.c.bf16 %v2533, %v2529
    %v2678 = vpack.c.bf16 %v2538, %v2534
    %v2679 = vpack.c.bf16 %v2539, %v2535
    %v2680 = vpack.c.bf16 %v2540, %v2536
    %v2681 = vpack.c.bf16 %v2541, %v2537
    %v2682 = vpack.c.bf16 %v2546, %v2542
    %v2683 = vpack.c.bf16 %v2547, %v2543
    %v2684 = vpack.c.bf16 %v2548, %v2544
    %v2685 = vpack.c.bf16 %v2549, %v2545
    %v2686 = vpack.c.bf16 %v2554, %v2550
    %v2687 = vpack.c.bf16 %v2555, %v2551
    %v2688 = vpack.c.bf16 %v2556, %v2552
    %v2689 = vpack.c.bf16 %v2557, %v2553
    %v2690 = vpack.c.bf16 %v2562, %v2558
    %v2691 = vpack.c.bf16 %v2563, %v2559
    %v2692 = vpack.c.bf16 %v2564, %v2560
    %v2693 = vpack.c.bf16 %v2565, %v2561
    %v2694 = vld [vmem:[%s8] sm:$0xff]
    %v2695 = vld [vmem:[%s8 + $0x8] sm:$0xff]
    %v2696 = vld [vmem:[%s8 + $0x10] sm:$0xff]
    %v2697 = vld [vmem:[%s8 + $0x18] sm:$0xff]
    %v2698 = vld [vmem:[%s8 + $0x20] sm:$0xff]
    %v2699 = vld [vmem:[%s8 + $0x28] sm:$0xff]
    %v2700 = vld [vmem:[%s8 + $0x30] sm:$0xff]
    %v2701 = vld [vmem:[%s8 + $0x38] sm:$0xff]
    %v2702 = vld [vmem:[%s8 + $0x40] sm:$0xff]
    %v2703 = vld [vmem:[%s8 + $0x48] sm:$0xff]
    %v2704 = vld [vmem:[%s8 + $0x50] sm:$0xff]
    %v2705 = vld [vmem:[%s8 + $0x58] sm:$0xff]
    %v2706 = vld [vmem:[%s8 + $0x60] sm:$0xff]
    %v2707 = vld [vmem:[%s8 + $0x68] sm:$0xff]
    %v2708 = vld [vmem:[%s8 + $0x70] sm:$0xff]
    %v2709 = vld [vmem:[%s8 + $0x78] sm:$0xff]
    %v2710 = vld [vmem:[%s8 + $0x80] sm:$0xff]
    %v2711 = vld [vmem:[%s8 + $0x88] sm:$0xff]
    %v2712 = vld [vmem:[%s8 + $0x90] sm:$0xff]
    %v2713 = vld [vmem:[%s8 + $0x98] sm:$0xff]
    %v2714 = vld [vmem:[%s8 + $0xa0] sm:$0xff]
    %v2715 = vld [vmem:[%s8 + $0xa8] sm:$0xff]
    %v2716 = vld [vmem:[%s8 + $0xb0] sm:$0xff]
    %v2717 = vld [vmem:[%s8 + $0xb8] sm:$0xff]
    %v2718 = vld [vmem:[%s8 + $0xc0] sm:$0xff]
    %v2719 = vld [vmem:[%s8 + $0xc8] sm:$0xff]
    %v2720 = vld [vmem:[%s8 + $0xd0] sm:$0xff]
    %v2721 = vld [vmem:[%s8 + $0xd8] sm:$0xff]
    %v2722 = vld [vmem:[%s8 + $0xe0] sm:$0xff]
    %v2723 = vld [vmem:[%s8 + $0xe8] sm:$0xff]
    %v2724 = vld [vmem:[%s8 + $0xf0] sm:$0xff]
    %v2725 = vld [vmem:[%s8 + $0xf8] sm:$0xff]
    %v2726 = vld [vmem:[%s8 + $0x100] sm:$0xff]
    %v2727 = vld [vmem:[%s8 + $0x108] sm:$0xff]
    %v2728 = vld [vmem:[%s8 + $0x110] sm:$0xff]
    %v2729 = vld [vmem:[%s8 + $0x118] sm:$0xff]
    %v2730 = vld [vmem:[%s8 + $0x120] sm:$0xff]
    %v2731 = vld [vmem:[%s8 + $0x128] sm:$0xff]
    %v2732 = vld [vmem:[%s8 + $0x130] sm:$0xff]
    %v2733 = vld [vmem:[%s8 + $0x138] sm:$0xff]
    %v2734 = vld [vmem:[%s8 + $0x140] sm:$0xff]
    %v2735 = vld [vmem:[%s8 + $0x148] sm:$0xff]
    %v2736 = vld [vmem:[%s8 + $0x150] sm:$0xff]
    %v2737 = vld [vmem:[%s8 + $0x158] sm:$0xff]
    %v2738 = vld [vmem:[%s8 + $0x160] sm:$0xff]
    %v2739 = vld [vmem:[%s8 + $0x168] sm:$0xff]
    %v2740 = vld [vmem:[%s8 + $0x170] sm:$0xff]
    %v2741 = vld [vmem:[%s8 + $0x178] sm:$0xff]
    %v2742 = vld [vmem:[%s8 + $0x180] sm:$0xff]
    %v2743 = vld [vmem:[%s8 + $0x188] sm:$0xff]
    %v2744 = vld [vmem:[%s8 + $0x190] sm:$0xff]
    %v2745 = vld [vmem:[%s8 + $0x198] sm:$0xff]
    %v2746 = vld [vmem:[%s8 + $0x1a0] sm:$0xff]
    %v2747 = vld [vmem:[%s8 + $0x1a8] sm:$0xff]
    %v2748 = vld [vmem:[%s8 + $0x1b0] sm:$0xff]
    %v2749 = vld [vmem:[%s8 + $0x1b8] sm:$0xff]
    %v2750 = vld [vmem:[%s8 + $0x1c0] sm:$0xff]
    %v2751 = vld [vmem:[%s8 + $0x1c8] sm:$0xff]
    %v2752 = vld [vmem:[%s8 + $0x1d0] sm:$0xff]
    %v2753 = vld [vmem:[%s8 + $0x1d8] sm:$0xff]
    %v2754 = vld [vmem:[%s8 + $0x1e0] sm:$0xff]
    %v2755 = vld [vmem:[%s8 + $0x1e8] sm:$0xff]
    %v2756 = vld [vmem:[%s8 + $0x1f0] sm:$0xff]
    %v2757 = vld [vmem:[%s8 + $0x1f8] sm:$0xff]
    %v2822 = vunpack.c.l.b16 %v2694
    %v2823 = vunpack.c.h.b16 %v2694
    %v2824 = vunpack.c.l.b16 %v2695
    %v2825 = vunpack.c.h.b16 %v2695
    %v2826 = vunpack.c.l.b16 %v2696
    %v2827 = vunpack.c.h.b16 %v2696
    %v2828 = vunpack.c.l.b16 %v2697
    %v2829 = vunpack.c.h.b16 %v2697
    %v2830 = vunpack.c.l.b16 %v2698
    %v2831 = vunpack.c.h.b16 %v2698
    %v2832 = vunpack.c.l.b16 %v2699
    %v2833 = vunpack.c.h.b16 %v2699
    %v2834 = vunpack.c.l.b16 %v2700
    %v2835 = vunpack.c.h.b16 %v2700
    %v2836 = vunpack.c.l.b16 %v2701
    %v2837 = vunpack.c.h.b16 %v2701
    %v2838 = vunpack.c.l.b16 %v2702
    %v2839 = vunpack.c.h.b16 %v2702
    %v2840 = vunpack.c.l.b16 %v2703
    %v2841 = vunpack.c.h.b16 %v2703
    %v2842 = vunpack.c.l.b16 %v2704
    %v2843 = vunpack.c.h.b16 %v2704
    %v2844 = vunpack.c.l.b16 %v2705
    %v2845 = vunpack.c.h.b16 %v2705
    %v2846 = vunpack.c.l.b16 %v2706
    %v2847 = vunpack.c.h.b16 %v2706
    %v2848 = vunpack.c.l.b16 %v2707
    %v2849 = vunpack.c.h.b16 %v2707
    %v2850 = vunpack.c.l.b16 %v2708
    %v2851 = vunpack.c.h.b16 %v2708
    %v2852 = vunpack.c.l.b16 %v2709
    %v2853 = vunpack.c.h.b16 %v2709
    %v2854 = vunpack.c.l.b16 %v2710
    %v2855 = vunpack.c.h.b16 %v2710
    %v2856 = vunpack.c.l.b16 %v2711
    %v2857 = vunpack.c.h.b16 %v2711
    %v2858 = vunpack.c.l.b16 %v2712
    %v2859 = vunpack.c.h.b16 %v2712
    %v2860 = vunpack.c.l.b16 %v2713
    %v2861 = vunpack.c.h.b16 %v2713
    %v2862 = vunpack.c.l.b16 %v2714
    %v2863 = vunpack.c.h.b16 %v2714
    %v2864 = vunpack.c.l.b16 %v2715
    %v2865 = vunpack.c.h.b16 %v2715
    %v2866 = vunpack.c.l.b16 %v2716
    %v2867 = vunpack.c.h.b16 %v2716
    %v2868 = vunpack.c.l.b16 %v2717
    %v2869 = vunpack.c.h.b16 %v2717
    %v2870 = vunpack.c.l.b16 %v2718
    %v2871 = vunpack.c.h.b16 %v2718
    %v2872 = vunpack.c.l.b16 %v2719
    %v2873 = vunpack.c.h.b16 %v2719
    %v2874 = vunpack.c.l.b16 %v2720
    %v2875 = vunpack.c.h.b16 %v2720
    %v2876 = vunpack.c.l.b16 %v2721
    %v2877 = vunpack.c.h.b16 %v2721
    %v2878 = vunpack.c.l.b16 %v2722
    %v2879 = vunpack.c.h.b16 %v2722
    %v2880 = vunpack.c.l.b16 %v2723
    %v2881 = vunpack.c.h.b16 %v2723
    %v2882 = vunpack.c.l.b16 %v2724
    %v2883 = vunpack.c.h.b16 %v2724
    %v2884 = vunpack.c.l.b16 %v2725
    %v2885 = vunpack.c.h.b16 %v2725
    %v2886 = vunpack.c.l.b16 %v2726
    %v2887 = vunpack.c.h.b16 %v2726
    %v2888 = vunpack.c.l.b16 %v2727
    %v2889 = vunpack.c.h.b16 %v2727
    %v2890 = vunpack.c.l.b16 %v2728
    %v2891 = vunpack.c.h.b16 %v2728
    %v2892 = vunpack.c.l.b16 %v2729
    %v2893 = vunpack.c.h.b16 %v2729
    %v2894 = vunpack.c.l.b16 %v2730
    %v2895 = vunpack.c.h.b16 %v2730
    %v2896 = vunpack.c.l.b16 %v2731
    %v2897 = vunpack.c.h.b16 %v2731
    %v2898 = vunpack.c.l.b16 %v2732
    %v2899 = vunpack.c.h.b16 %v2732
    %v2900 = vunpack.c.l.b16 %v2733
    %v2901 = vunpack.c.h.b16 %v2733
    %v2902 = vunpack.c.l.b16 %v2734
    %v2903 = vunpack.c.h.b16 %v2734
    %v2904 = vunpack.c.l.b16 %v2735
    %v2905 = vunpack.c.h.b16 %v2735
    %v2906 = vunpack.c.l.b16 %v2736
    %v2907 = vunpack.c.h.b16 %v2736
    %v2908 = vunpack.c.l.b16 %v2737
    %v2909 = vunpack.c.h.b16 %v2737
    %v2910 = vunpack.c.l.b16 %v2738
    %v2911 = vunpack.c.h.b16 %v2738
    %v2912 = vunpack.c.l.b16 %v2739
    %v2913 = vunpack.c.h.b16 %v2739
    %v2914 = vunpack.c.l.b16 %v2740
    %v2915 = vunpack.c.h.b16 %v2740
    %v2916 = vunpack.c.l.b16 %v2741
    %v2917 = vunpack.c.h.b16 %v2741
    %v2918 = vunpack.c.l.b16 %v2742
    %v2919 = vunpack.c.h.b16 %v2742
    %v2920 = vunpack.c.l.b16 %v2743
    %v2921 = vunpack.c.h.b16 %v2743
    %v2922 = vunpack.c.l.b16 %v2744
    %v2923 = vunpack.c.h.b16 %v2744
    %v2924 = vunpack.c.l.b16 %v2745
    %v2925 = vunpack.c.h.b16 %v2745
    %v2926 = vunpack.c.l.b16 %v2746
    %v2927 = vunpack.c.h.b16 %v2746
    %v2928 = vunpack.c.l.b16 %v2747
    %v2929 = vunpack.c.h.b16 %v2747
    %v2930 = vunpack.c.l.b16 %v2748
    %v2931 = vunpack.c.h.b16 %v2748
    %v2932 = vunpack.c.l.b16 %v2749
    %v2933 = vunpack.c.h.b16 %v2749
    %v2934 = vunpack.c.l.b16 %v2750
    %v2935 = vunpack.c.h.b16 %v2750
    %v2936 = vunpack.c.l.b16 %v2751
    %v2937 = vunpack.c.h.b16 %v2751
    %v2938 = vunpack.c.l.b16 %v2752
    %v2939 = vunpack.c.h.b16 %v2752
    %v2940 = vunpack.c.l.b16 %v2753
    %v2941 = vunpack.c.h.b16 %v2753
    %v2942 = vunpack.c.l.b16 %v2754
    %v2943 = vunpack.c.h.b16 %v2754
    %v2944 = vunpack.c.l.b16 %v2755
    %v2945 = vunpack.c.h.b16 %v2755
    %v2946 = vunpack.c.l.b16 %v2756
    %v2947 = vunpack.c.h.b16 %v2756
    %v2948 = vunpack.c.l.b16 %v2757
    %v2949 = vunpack.c.h.b16 %v2757
    %v2950 = vpack.c.b16 %v2824, %v2822
    %v2951 = vpack.c.b16 %v2825, %v2823
    %v2952 = vpack.c.b16 %v2828, %v2826
    %v2953 = vpack.c.b16 %v2829, %v2827
    %v2954 = vpack.c.b16 %v2832, %v2830
    %v2955 = vpack.c.b16 %v2833, %v2831
    %v2956 = vpack.c.b16 %v2836, %v2834
    %v2957 = vpack.c.b16 %v2837, %v2835
    %v2958 = vpack.c.b16 %v2840, %v2838
    %v2959 = vpack.c.b16 %v2841, %v2839
    %v2960 = vpack.c.b16 %v2844, %v2842
    %v2961 = vpack.c.b16 %v2845, %v2843
    %v2962 = vpack.c.b16 %v2848, %v2846
    %v2963 = vpack.c.b16 %v2849, %v2847
    %v2964 = vpack.c.b16 %v2852, %v2850
    %v2965 = vpack.c.b16 %v2853, %v2851
    %v2966 = vpack.c.b16 %v2856, %v2854
    %v2967 = vpack.c.b16 %v2857, %v2855
    %v2968 = vpack.c.b16 %v2860, %v2858
    %v2969 = vpack.c.b16 %v2861, %v2859
    %v2970 = vpack.c.b16 %v2864, %v2862
    %v2971 = vpack.c.b16 %v2865, %v2863
    %v2972 = vpack.c.b16 %v2868, %v2866
    %v2973 = vpack.c.b16 %v2869, %v2867
    %v2974 = vpack.c.b16 %v2872, %v2870
    %v2975 = vpack.c.b16 %v2873, %v2871
    %v2976 = vpack.c.b16 %v2876, %v2874
    %v2977 = vpack.c.b16 %v2877, %v2875
    %v2978 = vpack.c.b16 %v2880, %v2878
    %v2979 = vpack.c.b16 %v2881, %v2879
    %v2980 = vpack.c.b16 %v2884, %v2882
    %v2981 = vpack.c.b16 %v2885, %v2883
    %v2982 = vpack.c.b16 %v2888, %v2886
    %v2983 = vpack.c.b16 %v2889, %v2887
    %v2984 = vpack.c.b16 %v2892, %v2890
    %v2985 = vpack.c.b16 %v2893, %v2891
    %v2986 = vpack.c.b16 %v2896, %v2894
    %v2987 = vpack.c.b16 %v2897, %v2895
    %v2988 = vpack.c.b16 %v2900, %v2898
    %v2989 = vpack.c.b16 %v2901, %v2899
    %v2990 = vpack.c.b16 %v2904, %v2902
    %v2991 = vpack.c.b16 %v2905, %v2903
    %v2992 = vpack.c.b16 %v2908, %v2906
    %v2993 = vpack.c.b16 %v2909, %v2907
    %v2994 = vpack.c.b16 %v2912, %v2910
    %v2995 = vpack.c.b16 %v2913, %v2911
    %v2996 = vpack.c.b16 %v2916, %v2914
    %v2997 = vpack.c.b16 %v2917, %v2915
    %v2998 = vpack.c.b16 %v2920, %v2918
    %v2999 = vpack.c.b16 %v2921, %v2919
    %v3000 = vpack.c.b16 %v2924, %v2922
    %v3001 = vpack.c.b16 %v2925, %v2923
    %v3002 = vpack.c.b16 %v2928, %v2926
    %v3003 = vpack.c.b16 %v2929, %v2927
    %v3004 = vpack.c.b16 %v2932, %v2930
    %v3005 = vpack.c.b16 %v2933, %v2931
    %v3006 = vpack.c.b16 %v2936, %v2934
    %v3007 = vpack.c.b16 %v2937, %v2935
    %v3008 = vpack.c.b16 %v2940, %v2938
    %v3009 = vpack.c.b16 %v2941, %v2939
    %v3010 = vpack.c.b16 %v2944, %v2942
    %v3011 = vpack.c.b16 %v2945, %v2943
    %v3012 = vpack.c.b16 %v2948, %v2946
    %v3013 = vpack.c.b16 %v2949, %v2947
    %3078 = vmatprep.subr.bf16.mxu0 %v2951
    %3079 = vmatpush1.bf16.msra.mxu0 %v2950
    %3080 = vmatprep.subr.bf16.mxu0 %v2953
    %3081 = vmatpush1.bf16.msra.mxu0 %v2952
    %3082 = vmatprep.subr.bf16.mxu0 %v2955
    %3083 = vmatpush1.bf16.msra.mxu0 %v2954
    %3084 = vmatprep.subr.bf16.mxu0 %v2957
    %3085 = vmatpush1.bf16.msra.mxu0 %v2956
    %3086 = vmatprep.subr.bf16.mxu0 %v2959
    %3087 = vmatpush1.bf16.msra.mxu0 %v2958
    %3088 = vmatprep.subr.bf16.mxu0 %v2961
    %3089 = vmatpush1.bf16.msra.mxu0 %v2960
    %3090 = vmatprep.subr.bf16.mxu0 %v2963
    %3091 = vmatpush1.bf16.msra.mxu0 %v2962
    %3092 = vmatprep.subr.bf16.mxu0 %v2965
    %3093 = vmatpush1.bf16.msra.mxu0 %v2964
    %3094 = vmatprep.subr.bf16.mxu0 %v2967
    %3095 = vmatpush1.bf16.msra.mxu0 %v2966
    %3096 = vmatprep.subr.bf16.mxu0 %v2969
    %3097 = vmatpush1.bf16.msra.mxu0 %v2968
    %3098 = vmatprep.subr.bf16.mxu0 %v2971
    %3099 = vmatpush1.bf16.msra.mxu0 %v2970
    %3100 = vmatprep.subr.bf16.mxu0 %v2973
    %3101 = vmatpush1.bf16.msra.mxu0 %v2972
    %3102 = vmatprep.subr.bf16.mxu0 %v2975
    %3103 = vmatpush1.bf16.msra.mxu0 %v2974
    %3104 = vmatprep.subr.bf16.mxu0 %v2977
    %3105 = vmatpush1.bf16.msra.mxu0 %v2976
    %3106 = vmatprep.subr.bf16.mxu0 %v2979
    %3107 = vmatpush1.bf16.msra.mxu0 %v2978
    %3108 = vmatprep.subr.bf16.mxu0 %v2981
    %3109 = vmatpush1.bf16.msra.mxu0 %v2980
    %3110 = vmatprep.mubr.bf16.mxu0 %v2631
    %3111 = vmatmul.mubr.bf16.gmra.mrb[0].mxu0 %v2630
    %v3112 = vpop.f32.mrb[0].mxu0
    %v3113 = vadd.f32 0.0, %v3112
    %v3114 = vpop.f32.mrb[0].mxu0
    %v3115 = vadd.f32 0.0, %v3114
    %v3116 = vpop.f32.mrb[0].mxu0
    %v3117 = vadd.f32 0.0, %v3116
    %v3118 = vpop.f32.mrb[0].mxu0
    %v3119 = vadd.f32 0.0, %v3118
    %3120 = vmatprep.mubr.bf16.mxu0 %v2635
    %3121 = vmatmul.mubr.bf16.gmra.mrb[0].mxu0 %v2634
    %v3122 = vpop.f32.mrb[0].mxu0
    %v3123 = vadd.f32 0.0, %v3122
    %v3124 = vpop.f32.mrb[0].mxu0
    %v3125 = vadd.f32 0.0, %v3124
    %v3126 = vpop.f32.mrb[0].mxu0
    %v3127 = vadd.f32 0.0, %v3126
    %v3128 = vpop.f32.mrb[0].mxu0
    %v3129 = vadd.f32 0.0, %v3128
    %3130 = vmatprep.mubr.bf16.mxu0 %v2639
    %3131 = vmatmul.mubr.bf16.gmra.mrb[0].mxu0 %v2638
    %v3132 = vpop.f32.mrb[0].mxu0
    %v3133 = vadd.f32 0.0, %v3132
    %v3134 = vpop.f32.mrb[0].mxu0
    %v3135 = vadd.f32 0.0, %v3134
    %v3136 = vpop.f32.mrb[0].mxu0
    %v3137 = vadd.f32 0.0, %v3136
    %v3138 = vpop.f32.mrb[0].mxu0
    %v3139 = vadd.f32 0.0, %v3138
    %3140 = vmatprep.mubr.bf16.mxu0 %v2643
    %3141 = vmatmul.mubr.bf16.gmra.mrb[0].mxu0 %v2642
    %v3142 = vpop.f32.mrb[0].mxu0
    %v3143 = vadd.f32 0.0, %v3142
    %v3144 = vpop.f32.mrb[0].mxu0
    %v3145 = vadd.f32 0.0, %v3144
    %v3146 = vpop.f32.mrb[0].mxu0
    %v3147 = vadd.f32 0.0, %v3146
    %v3148 = vpop.f32.mrb[0].mxu0
    %v3149 = vadd.f32 0.0, %v3148
    %3150 = vmatprep.mubr.bf16.mxu0 %v2647
    %3151 = vmatmul.mubr.bf16.gmra.mrb[0].mxu0 %v2646
    %v3152 = vpop.f32.mrb[0].mxu0
    %v3153 = vadd.f32 0.0, %v3152
    %v3154 = vpop.f32.mrb[0].mxu0
    %v3155 = vadd.f32 0.0, %v3154
    %v3156 = vpop.f32.mrb[0].mxu0
    %v3157 = vadd.f32 0.0, %v3156
    %v3158 = vpop.f32.mrb[0].mxu0
    %v3159 = vadd.f32 0.0, %v3158
    %3160 = vmatprep.mubr.bf16.mxu0 %v2651
    %3161 = vmatmul.mubr.bf16.gmra.mrb[0].mxu0 %v2650
    %v3162 = vpop.f32.mrb[0].mxu0
    %v3163 = vadd.f32 0.0, %v3162
    %v3164 = vpop.f32.mrb[0].mxu0
    %v3165 = vadd.f32 0.0, %v3164
    %v3166 = vpop.f32.mrb[0].mxu0
    %v3167 = vadd.f32 0.0, %v3166
    %v3168 = vpop.f32.mrb[0].mxu0
    %v3169 = vadd.f32 0.0, %v3168
    %3170 = vmatprep.mubr.bf16.mxu0 %v2655
    %3171 = vmatmul.mubr.bf16.gmra.mrb[0].mxu0 %v2654
    %v3172 = vpop.f32.mrb[0].mxu0
    %v3173 = vadd.f32 0.0, %v3172
    %v3174 = vpop.f32.mrb[0].mxu0
    %v3175 = vadd.f32 0.0, %v3174
    %v3176 = vpop.f32.mrb[0].mxu0
    %v3177 = vadd.f32 0.0, %v3176
    %v3178 = vpop.f32.mrb[0].mxu0
    %v3179 = vadd.f32 0.0, %v3178
    %3180 = vmatprep.mubr.bf16.mxu0 %v2659
    %3181 = vmatmul.mubr.bf16.gmra.mrb[0].mxu0 %v2658
    %v3182 = vpop.f32.mrb[0].mxu0
    %v3183 = vadd.f32 0.0, %v3182
    %v3184 = vpop.f32.mrb[0].mxu0
    %v3185 = vadd.f32 0.0, %v3184
    %v3186 = vpop.f32.mrb[0].mxu0
    %v3187 = vadd.f32 0.0, %v3186
    %v3188 = vpop.f32.mrb[0].mxu0
    %v3189 = vadd.f32 0.0, %v3188
    %3190 = vmatprep.mubr.bf16.mxu0 %v2663
    %3191 = vmatmul.mubr.bf16.gmra.mrb[0].mxu0 %v2662
    %v3192 = vpop.f32.mrb[0].mxu0
    %v3193 = vadd.f32 0.0, %v3192
    %v3194 = vpop.f32.mrb[0].mxu0
    %v3195 = vadd.f32 0.0, %v3194
    %v3196 = vpop.f32.mrb[0].mxu0
    %v3197 = vadd.f32 0.0, %v3196
    %v3198 = vpop.f32.mrb[0].mxu0
    %v3199 = vadd.f32 0.0, %v3198
    %3200 = vmatprep.mubr.bf16.mxu0 %v2667
    %3201 = vmatmul.mubr.bf16.gmra.mrb[0].mxu0 %v2666
    %v3202 = vpop.f32.mrb[0].mxu0
    %v3203 = vadd.f32 0.0, %v3202
    %v3204 = vpop.f32.mrb[0].mxu0
    %v3205 = vadd.f32 0.0, %v3204
    %v3206 = vpop.f32.mrb[0].mxu0
    %v3207 = vadd.f32 0.0, %v3206
    %v3208 = vpop.f32.mrb[0].mxu0
    %v3209 = vadd.f32 0.0, %v3208
    %3210 = vmatprep.mubr.bf16.mxu0 %v2671
    %3211 = vmatmul.mubr.bf16.gmra.mrb[0].mxu0 %v2670
    %v3212 = vpop.f32.mrb[0].mxu0
    %v3213 = vadd.f32 0.0, %v3212
    %v3214 = vpop.f32.mrb[0].mxu0
    %v3215 = vadd.f32 0.0, %v3214
    %v3216 = vpop.f32.mrb[0].mxu0
    %v3217 = vadd.f32 0.0, %v3216
    %v3218 = vpop.f32.mrb[0].mxu0
    %v3219 = vadd.f32 0.0, %v3218
    %3220 = vmatprep.mubr.bf16.mxu0 %v2675
    %3221 = vmatmul.mubr.bf16.gmra.mrb[0].mxu0 %v2674
    %v3222 = vpop.f32.mrb[0].mxu0
    %v3223 = vadd.f32 0.0, %v3222
    %v3224 = vpop.f32.mrb[0].mxu0
    %v3225 = vadd.f32 0.0, %v3224
    %v3226 = vpop.f32.mrb[0].mxu0
    %v3227 = vadd.f32 0.0, %v3226
    %v3228 = vpop.f32.mrb[0].mxu0
    %v3229 = vadd.f32 0.0, %v3228
    %3230 = vmatprep.mubr.bf16.mxu0 %v2679
    %3231 = vmatmul.mubr.bf16.gmra.mrb[0].mxu0 %v2678
    %v3232 = vpop.f32.mrb[0].mxu0
    %v3233 = vadd.f32 0.0, %v3232
    %v3234 = vpop.f32.mrb[0].mxu0
    %v3235 = vadd.f32 0.0, %v3234
    %v3236 = vpop.f32.mrb[0].mxu0
    %v3237 = vadd.f32 0.0, %v3236
    %v3238 = vpop.f32.mrb[0].mxu0
    %v3239 = vadd.f32 0.0, %v3238
    %3240 = vmatprep.mubr.bf16.mxu0 %v2683
    %3241 = vmatmul.mubr.bf16.gmra.mrb[0].mxu0 %v2682
    %v3242 = vpop.f32.mrb[0].mxu0
    %v3243 = vadd.f32 0.0, %v3242
    %v3244 = vpop.f32.mrb[0].mxu0
    %v3245 = vadd.f32 0.0, %v3244
    %v3246 = vpop.f32.mrb[0].mxu0
    %v3247 = vadd.f32 0.0, %v3246
    %v3248 = vpop.f32.mrb[0].mxu0
    %v3249 = vadd.f32 0.0, %v3248
    %3250 = vmatprep.mubr.bf16.mxu0 %v2687
    %3251 = vmatmul.mubr.bf16.gmra.mrb[0].mxu0 %v2686
    %v3252 = vpop.f32.mrb[0].mxu0
    %v3253 = vadd.f32 0.0, %v3252
    %v3254 = vpop.f32.mrb[0].mxu0
    %v3255 = vadd.f32 0.0, %v3254
    %v3256 = vpop.f32.mrb[0].mxu0
    %v3257 = vadd.f32 0.0, %v3256
    %v3258 = vpop.f32.mrb[0].mxu0
    %v3259 = vadd.f32 0.0, %v3258
    %3260 = vmatprep.mubr.bf16.mxu0 %v2691
    %3261 = vmatmul.mubr.bf16.gmra.mrb[0].mxu0 %v2690
    %v3262 = vpop.f32.mrb[0].mxu0
    %v3263 = vadd.f32 0.0, %v3262
    %v3264 = vpop.f32.mrb[0].mxu0
    %v3265 = vadd.f32 0.0, %v3264
    %v3266 = vpop.f32.mrb[0].mxu0
    %v3267 = vadd.f32 0.0, %v3266
    %v3268 = vpop.f32.mrb[0].mxu0
    %v3269 = vadd.f32 0.0, %v3268
    %3270 = vdwg.mxu0
    %3271 = vmatprep.subr.bf16.mxu0 %v2983
    %3272 = vmatpush1.bf16.msra.mxu0 %v2982
    %3273 = vmatprep.subr.bf16.mxu0 %v2985
    %3274 = vmatpush1.bf16.msra.mxu0 %v2984
    %3275 = vmatprep.subr.bf16.mxu0 %v2987
    %3276 = vmatpush1.bf16.msra.mxu0 %v2986
    %3277 = vmatprep.subr.bf16.mxu0 %v2989
    %3278 = vmatpush1.bf16.msra.mxu0 %v2988
    %3279 = vmatprep.subr.bf16.mxu0 %v2991
    %3280 = vmatpush1.bf16.msra.mxu0 %v2990
    %3281 = vmatprep.subr.bf16.mxu0 %v2993
    %3282 = vmatpush1.bf16.msra.mxu0 %v2992
    %3283 = vmatprep.subr.bf16.mxu0 %v2995
    %3284 = vmatpush1.bf16.msra.mxu0 %v2994
    %3285 = vmatprep.subr.bf16.mxu0 %v2997
    %3286 = vmatpush1.bf16.msra.mxu0 %v2996
    %3287 = vmatprep.subr.bf16.mxu0 %v2999
    %3288 = vmatpush1.bf16.msra.mxu0 %v2998
    %3289 = vmatprep.subr.bf16.mxu0 %v3001
    %3290 = vmatpush1.bf16.msra.mxu0 %v3000
    %3291 = vmatprep.subr.bf16.mxu0 %v3003
    %3292 = vmatpush1.bf16.msra.mxu0 %v3002
    %3293 = vmatprep.subr.bf16.mxu0 %v3005
    %3294 = vmatpush1.bf16.msra.mxu0 %v3004
    %3295 = vmatprep.subr.bf16.mxu0 %v3007
    %3296 = vmatpush1.bf16.msra.mxu0 %v3006
    %3297 = vmatprep.subr.bf16.mxu0 %v3009
    %3298 = vmatpush1.bf16.msra.mxu0 %v3008
    %3299 = vmatprep.subr.bf16.mxu0 %v3011
    %3300 = vmatpush1.bf16.msra.mxu0 %v3010
    %3301 = vmatprep.subr.bf16.mxu0 %v3013
    %3302 = vmatpush1.bf16.msra.mxu0 %v3012
    %3303 = vmatprep.mubr.bf16.mxu0 %v2633
    %3304 = vmatmul.mubr.bf16.gmra.mrb[0].mxu0 %v2632
    %v3305 = vpop.f32.mrb[0].mxu0
    %v3306 = vadd.f32 %v3113, %v3305
    %v3307 = vpop.f32.mrb[0].mxu0
    %v3308 = vadd.f32 %v3115, %v3307
    %v3309 = vpop.f32.mrb[0].mxu0
    %v3310 = vadd.f32 %v3117, %v3309
    %v3311 = vpop.f32.mrb[0].mxu0
    %v3312 = vadd.f32 %v3119, %v3311
    %3313 = vmatprep.mubr.bf16.mxu0 %v2637
    %3314 = vmatmul.mubr.bf16.gmra.mrb[0].mxu0 %v2636
    %v3315 = vpop.f32.mrb[0].mxu0
    %v3316 = vadd.f32 %v3123, %v3315
    %v3317 = vpop.f32.mrb[0].mxu0
    %v3318 = vadd.f32 %v3125, %v3317
    %v3319 = vpop.f32.mrb[0].mxu0
    %v3320 = vadd.f32 %v3127, %v3319
    %v3321 = vpop.f32.mrb[0].mxu0
    %v3322 = vadd.f32 %v3129, %v3321
    %3323 = vmatprep.mubr.bf16.mxu0 %v2641
    %3324 = vmatmul.mubr.bf16.gmra.mrb[0].mxu0 %v2640
    %v3325 = vpop.f32.mrb[0].mxu0
    %v3326 = vadd.f32 %v3133, %v3325
    %v3327 = vpop.f32.mrb[0].mxu0
    %v3328 = vadd.f32 %v3135, %v3327
    %v3329 = vpop.f32.mrb[0].mxu0
    %v3330 = vadd.f32 %v3137, %v3329
    %v3331 = vpop.f32.mrb[0].mxu0
    %v3332 = vadd.f32 %v3139, %v3331
    %3333 = vmatprep.mubr.bf16.mxu0 %v2645
    %3334 = vmatmul.mubr.bf16.gmra.mrb[0].mxu0 %v2644
    %v3335 = vpop.f32.mrb[0].mxu0
    %v3336 = vadd.f32 %v3143, %v3335
    %v3337 = vpop.f32.mrb[0].mxu0
    %v3338 = vadd.f32 %v3145, %v3337
    %v3339 = vpop.f32.mrb[0].mxu0
    %v3340 = vadd.f32 %v3147, %v3339
    %v3341 = vpop.f32.mrb[0].mxu0
    %v3342 = vadd.f32 %v3149, %v3341
    %3343 = vmatprep.mubr.bf16.mxu0 %v2649
    %3344 = vmatmul.mubr.bf16.gmra.mrb[0].mxu0 %v2648
    %v3345 = vpop.f32.mrb[0].mxu0
    %v3346 = vadd.f32 %v3153, %v3345
    %v3347 = vpop.f32.mrb[0].mxu0
    %v3348 = vadd.f32 %v3155, %v3347
    %v3349 = vpop.f32.mrb[0].mxu0
    %v3350 = vadd.f32 %v3157, %v3349
    %v3351 = vpop.f32.mrb[0].mxu0
    %v3352 = vadd.f32 %v3159, %v3351
    %3353 = vmatprep.mubr.bf16.mxu0 %v2653
    %3354 = vmatmul.mubr.bf16.gmra.mrb[0].mxu0 %v2652
    %v3355 = vpop.f32.mrb[0].mxu0
    %v3356 = vadd.f32 %v3163, %v3355
    %v3357 = vpop.f32.mrb[0].mxu0
    %v3358 = vadd.f32 %v3165, %v3357
    %v3359 = vpop.f32.mrb[0].mxu0
    %v3360 = vadd.f32 %v3167, %v3359
    %v3361 = vpop.f32.mrb[0].mxu0
    %v3362 = vadd.f32 %v3169, %v3361
    %3363 = vmatprep.mubr.bf16.mxu0 %v2657
    %3364 = vmatmul.mubr.bf16.gmra.mrb[0].mxu0 %v2656
    %v3365 = vpop.f32.mrb[0].mxu0
    %v3366 = vadd.f32 %v3173, %v3365
    %v3367 = vpop.f32.mrb[0].mxu0
    %v3368 = vadd.f32 %v3175, %v3367
    %v3369 = vpop.f32.mrb[0].mxu0
    %v3370 = vadd.f32 %v3177, %v3369
    %v3371 = vpop.f32.mrb[0].mxu0
    %v3372 = vadd.f32 %v3179, %v3371
    %3373 = vmatprep.mubr.bf16.mxu0 %v2661
    %3374 = vmatmul.mubr.bf16.gmra.mrb[0].mxu0 %v2660
    %v3375 = vpop.f32.mrb[0].mxu0
    %v3376 = vadd.f32 %v3183, %v3375
    %v3377 = vpop.f32.mrb[0].mxu0
    %v3378 = vadd.f32 %v3185, %v3377
    %v3379 = vpop.f32.mrb[0].mxu0
    %v3380 = vadd.f32 %v3187, %v3379
    %v3381 = vpop.f32.mrb[0].mxu0
    %v3382 = vadd.f32 %v3189, %v3381
    %3383 = vmatprep.mubr.bf16.mxu0 %v2665
    %3384 = vmatmul.mubr.bf16.gmra.mrb[0].mxu0 %v2664
    %v3385 = vpop.f32.mrb[0].mxu0
    %v3386 = vadd.f32 %v3193, %v3385
    %v3387 = vpop.f32.mrb[0].mxu0
    %v3388 = vadd.f32 %v3195, %v3387
    %v3389 = vpop.f32.mrb[0].mxu0
    %v3390 = vadd.f32 %v3197, %v3389
    %v3391 = vpop.f32.mrb[0].mxu0
    %v3392 = vadd.f32 %v3199, %v3391
    %3393 = vmatprep.mubr.bf16.mxu0 %v2669
    %3394 = vmatmul.mubr.bf16.gmra.mrb[0].mxu0 %v2668
    %v3395 = vpop.f32.mrb[0].mxu0
    %v3396 = vadd.f32 %v3203, %v3395
    %v3397 = vpop.f32.mrb[0].mxu0
    %v3398 = vadd.f32 %v3205, %v3397
    %v3399 = vpop.f32.mrb[0].mxu0
    %v3400 = vadd.f32 %v3207, %v3399
    %v3401 = vpop.f32.mrb[0].mxu0
    %v3402 = vadd.f32 %v3209, %v3401
    %3403 = vmatprep.mubr.bf16.mxu0 %v2673
    %3404 = vmatmul.mubr.bf16.gmra.mrb[0].mxu0 %v2672
    %v3405 = vpop.f32.mrb[0].mxu0
    %v3406 = vadd.f32 %v3213, %v3405
    %v3407 = vpop.f32.mrb[0].mxu0
    %v3408 = vadd.f32 %v3215, %v3407
    %v3409 = vpop.f32.mrb[0].mxu0
    %v3410 = vadd.f32 %v3217, %v3409
    %v3411 = vpop.f32.mrb[0].mxu0
    %v3412 = vadd.f32 %v3219, %v3411
    %3413 = vmatprep.mubr.bf16.mxu0 %v2677
    %3414 = vmatmul.mubr.bf16.gmra.mrb[0].mxu0 %v2676
    %v3415 = vpop.f32.mrb[0].mxu0
    %v3416 = vadd.f32 %v3223, %v3415
    %v3417 = vpop.f32.mrb[0].mxu0
    %v3418 = vadd.f32 %v3225, %v3417
    %v3419 = vpop.f32.mrb[0].mxu0
    %v3420 = vadd.f32 %v3227, %v3419
    %v3421 = vpop.f32.mrb[0].mxu0
    %v3422 = vadd.f32 %v3229, %v3421
    %3423 = vmatprep.mubr.bf16.mxu0 %v2681
    %3424 = vmatmul.mubr.bf16.gmra.mrb[0].mxu0 %v2680
    %v3425 = vpop.f32.mrb[0].mxu0
    %v3426 = vadd.f32 %v3233, %v3425
    %v3427 = vpop.f32.mrb[0].mxu0
    %v3428 = vadd.f32 %v3235, %v3427
    %v3429 = vpop.f32.mrb[0].mxu0
    %v3430 = vadd.f32 %v3237, %v3429
    %v3431 = vpop.f32.mrb[0].mxu0
    %v3432 = vadd.f32 %v3239, %v3431
    %3433 = vmatprep.mubr.bf16.mxu0 %v2685
    %3434 = vmatmul.mubr.bf16.gmra.mrb[0].mxu0 %v2684
    %v3435 = vpop.f32.mrb[0].mxu0
    %v3436 = vadd.f32 %v3243, %v3435
    %v3437 = vpop.f32.mrb[0].mxu0
    %v3438 = vadd.f32 %v3245, %v3437
    %v3439 = vpop.f32.mrb[0].mxu0
    %v3440 = vadd.f32 %v3247, %v3439
    %v3441 = vpop.f32.mrb[0].mxu0
    %v3442 = vadd.f32 %v3249, %v3441
    %3443 = vmatprep.mubr.bf16.mxu0 %v2689
    %3444 = vmatmul.mubr.bf16.gmra.mrb[0].mxu0 %v2688
    %v3445 = vpop.f32.mrb[0].mxu0
    %v3446 = vadd.f32 %v3253, %v3445
    %v3447 = vpop.f32.mrb[0].mxu0
    %v3448 = vadd.f32 %v3255, %v3447
    %v3449 = vpop.f32.mrb[0].mxu0
    %v3450 = vadd.f32 %v3257, %v3449
    %v3451 = vpop.f32.mrb[0].mxu0
    %v3452 = vadd.f32 %v3259, %v3451
    %3453 = vmatprep.mubr.bf16.mxu0 %v2693
    %3454 = vmatmul.mubr.bf16.gmra.mrb[0].mxu0 %v2692
    %v3455 = vpop.f32.mrb[0].mxu0
    %v3456 = vadd.f32 %v3263, %v3455
    %v3457 = vpop.f32.mrb[0].mxu0
    %v3458 = vadd.f32 %v3265, %v3457
    %v3459 = vpop.f32.mrb[0].mxu0
    %v3460 = vadd.f32 %v3267, %v3459
    %v3461 = vpop.f32.mrb[0].mxu0
    %v3462 = vadd.f32 %v3269, %v3461
    %3463 = vdwg.mxu0
    %v3464 = vadd.f32 %v2566, %v3306
    %v3465 = vadd.f32 %v2567, %v3308
    %v3466 = vadd.f32 %v2568, %v3310
    %v3467 = vadd.f32 %v2569, %v3312
    %v3468 = vadd.f32 %v2570, %v3316
    %v3469 = vadd.f32 %v2571, %v3318
    %v3470 = vadd.f32 %v2572, %v3320
    %v3471 = vadd.f32 %v2573, %v3322
    %v3472 = vadd.f32 %v2574, %v3326
    %v3473 = vadd.f32 %v2575, %v3328
    %v3474 = vadd.f32 %v2576, %v3330
    %v3475 = vadd.f32 %v2577, %v3332
    %v3476 = vadd.f32 %v2578, %v3336
    %v3477 = vadd.f32 %v2579, %v3338
    %v3478 = vadd.f32 %v2580, %v3340
    %v3479 = vadd.f32 %v2581, %v3342
    %v3480 = vadd.f32 %v2582, %v3346
    %v3481 = vadd.f32 %v2583, %v3348
    %v3482 = vadd.f32 %v2584, %v3350
    %v3483 = vadd.f32 %v2585, %v3352
    %v3484 = vadd.f32 %v2586, %v3356
    %v3485 = vadd.f32 %v2587, %v3358
    %v3486 = vadd.f32 %v2588, %v3360
    %v3487 = vadd.f32 %v2589, %v3362
    %v3488 = vadd.f32 %v2590, %v3366
    %v3489 = vadd.f32 %v2591, %v3368
    %v3490 = vadd.f32 %v2592, %v3370
    %v3491 = vadd.f32 %v2593, %v3372
    %v3492 = vadd.f32 %v2594, %v3376
    %v3493 = vadd.f32 %v2595, %v3378
    %v3494 = vadd.f32 %v2596, %v3380
    %v3495 = vadd.f32 %v2597, %v3382
    %v3496 = vadd.f32 %v2598, %v3386
    %v3497 = vadd.f32 %v2599, %v3388
    %v3498 = vadd.f32 %v2600, %v3390
    %v3499 = vadd.f32 %v2601, %v3392
    %v3500 = vadd.f32 %v2602, %v3396
    %v3501 = vadd.f32 %v2603, %v3398
    %v3502 = vadd.f32 %v2604, %v3400
    %v3503 = vadd.f32 %v2605, %v3402
    %v3504 = vadd.f32 %v2606, %v3406
    %v3505 = vadd.f32 %v2607, %v3408
    %v3506 = vadd.f32 %v2608, %v3410
    %v3507 = vadd.f32 %v2609, %v3412
    %v3508 = vadd.f32 %v2610, %v3416
    %v3509 = vadd.f32 %v2611, %v3418
    %v3510 = vadd.f32 %v2612, %v3420
    %v3511 = vadd.f32 %v2613, %v3422
    %v3512 = vadd.f32 %v2614, %v3426
    %v3513 = vadd.f32 %v2615, %v3428
    %v3514 = vadd.f32 %v2616, %v3430
    %v3515 = vadd.f32 %v2617, %v3432
    %v3516 = vadd.f32 %v2618, %v3436
    %v3517 = vadd.f32 %v2619, %v3438
    %v3518 = vadd.f32 %v2620, %v3440
    %v3519 = vadd.f32 %v2621, %v3442
    %v3520 = vadd.f32 %v2622, %v3446
    %v3521 = vadd.f32 %v2623, %v3448
    %v3522 = vadd.f32 %v2624, %v3450
    %v3523 = vadd.f32 %v2625, %v3452
    %v3524 = vadd.f32 %v2626, %v3456
    %v3525 = vadd.f32 %v2627, %v3458
    %v3526 = vadd.f32 %v2628, %v3460
    %v3527 = vadd.f32 %v2629, %v3462
    %3528 = vst [vmem:[#allocation4] sm:$0xff] %v3464
    %3529 = vst [vmem:[#allocation4 + $0x8] sm:$0xff] %v3465
    %3530 = vst [vmem:[#allocation4 + $0x10] sm:$0xff] %v3466
    %3531 = vst [vmem:[#allocation4 + $0x18] sm:$0xff] %v3467
    %3532 = vst [vmem:[#allocation4 + $0x20] sm:$0xff] %v3468
    %3533 = vst [vmem:[#allocation4 + $0x28] sm:$0xff] %v3469
    %3534 = vst [vmem:[#allocation4 + $0x30] sm:$0xff] %v3470
    %3535 = vst [vmem:[#allocation4 + $0x38] sm:$0xff] %v3471
    %3536 = vst [vmem:[#allocation4 + $0x40] sm:$0xff] %v3472
    %3537 = vst [vmem:[#allocation4 + $0x48] sm:$0xff] %v3473
    %3538 = vst [vmem:[#allocation4 + $0x50] sm:$0xff] %v3474
    %3539 = vst [vmem:[#allocation4 + $0x58] sm:$0xff] %v3475
    %3540 = vst [vmem:[#allocation4 + $0x60] sm:$0xff] %v3476
    %3541 = vst [vmem:[#allocation4 + $0x68] sm:$0xff] %v3477
    %3542 = vst [vmem:[#allocation4 + $0x70] sm:$0xff] %v3478
    %3543 = vst [vmem:[#allocation4 + $0x78] sm:$0xff] %v3479
    %3544 = vst [vmem:[#allocation4 + $0x80] sm:$0xff] %v3480
    %3545 = vst [vmem:[#allocation4 + $0x88] sm:$0xff] %v3481
    %3546 = vst [vmem:[#allocation4 + $0x90] sm:$0xff] %v3482
    %3547 = vst [vmem:[#allocation4 + $0x98] sm:$0xff] %v3483
    %3548 = vst [vmem:[#allocation4 + $0xa0] sm:$0xff] %v3484
    %3549 = vst [vmem:[#allocation4 + $0xa8] sm:$0xff] %v3485
    %3550 = vst [vmem:[#allocation4 + $0xb0] sm:$0xff] %v3486
    %3551 = vst [vmem:[#allocation4 + $0xb8] sm:$0xff] %v3487
    %3552 = vst [vmem:[#allocation4 + $0xc0] sm:$0xff] %v3488
    %3553 = vst [vmem:[#allocation4 + $0xc8] sm:$0xff] %v3489
    %3554 = vst [vmem:[#allocation4 + $0xd0] sm:$0xff] %v3490
    %3555 = vst [vmem:[#allocation4 + $0xd8] sm:$0xff] %v3491
    %3556 = vst [vmem:[#allocation4 + $0xe0] sm:$0xff] %v3492
    %3557 = vst [vmem:[#allocation4 + $0xe8] sm:$0xff] %v3493
    %3558 = vst [vmem:[#allocation4 + $0xf0] sm:$0xff] %v3494
    %3559 = vst [vmem:[#allocation4 + $0xf8] sm:$0xff] %v3495
    %3560 = vst [vmem:[#allocation4 + $0x100] sm:$0xff] %v3496
    %3561 = vst [vmem:[#allocation4 + $0x108] sm:$0xff] %v3497
    %3562 = vst [vmem:[#allocation4 + $0x110] sm:$0xff] %v3498
    %3563 = vst [vmem:[#allocation4 + $0x118] sm:$0xff] %v3499
    %3564 = vst [vmem:[#allocation4 + $0x120] sm:$0xff] %v3500
    %3565 = vst [vmem:[#allocation4 + $0x128] sm:$0xff] %v3501
    %3566 = vst [vmem:[#allocation4 + $0x130] sm:$0xff] %v3502
    %3567 = vst [vmem:[#allocation4 + $0x138] sm:$0xff] %v3503
    %3568 = vst [vmem:[#allocation4 + $0x140] sm:$0xff] %v3504
    %3569 = vst [vmem:[#allocation4 + $0x148] sm:$0xff] %v3505
    %3570 = vst [vmem:[#allocation4 + $0x150] sm:$0xff] %v3506
    %3571 = vst [vmem:[#allocation4 + $0x158] sm:$0xff] %v3507
    %3572 = vst [vmem:[#allocation4 + $0x160] sm:$0xff] %v3508
    %3573 = vst [vmem:[#allocation4 + $0x168] sm:$0xff] %v3509
    %3574 = vst [vmem:[#allocation4 + $0x170] sm:$0xff] %v3510
    %3575 = vst [vmem:[#allocation4 + $0x178] sm:$0xff] %v3511
    %3576 = vst [vmem:[#allocation4 + $0x180] sm:$0xff] %v3512
    %3577 = vst [vmem:[#allocation4 + $0x188] sm:$0xff] %v3513
    %3578 = vst [vmem:[#allocation4 + $0x190] sm:$0xff] %v3514
    %3579 = vst [vmem:[#allocation4 + $0x198] sm:$0xff] %v3515
    %3580 = vst [vmem:[#allocation4 + $0x1a0] sm:$0xff] %v3516
    %3581 = vst [vmem:[#allocation4 + $0x1a8] sm:$0xff] %v3517
    %3582 = vst [vmem:[#allocation4 + $0x1b0] sm:$0xff] %v3518
    %3583 = vst [vmem:[#allocation4 + $0x1b8] sm:$0xff] %v3519
    %3584 = vst [vmem:[#allocation4 + $0x1c0] sm:$0xff] %v3520
    %3585 = vst [vmem:[#allocation4 + $0x1c8] sm:$0xff] %v3521
    %3586 = vst [vmem:[#allocation4 + $0x1d0] sm:$0xff] %v3522
    %3587 = vst [vmem:[#allocation4 + $0x1d8] sm:$0xff] %v3523
    %3588 = vst [vmem:[#allocation4 + $0x1e0] sm:$0xff] %v3524
    %3589 = vst [vmem:[#allocation4 + $0x1e8] sm:$0xff] %v3525
    %3590 = vst [vmem:[#allocation4 + $0x1f0] sm:$0xff] %v3526
    %3591 = vst [vmem:[#allocation4 + $0x1f8] sm:$0xff] %v3527
    // Predicated region
    $region46: #{transformer_encoder_layer.5} parent=1 // pred_check
      %p3592 = pneg %p36
    $region47: #{transformer_encoder_layer.5} parent=1 // pred_check_branch
      %3594 = sbr.rel (%p3592) target = $region49
    $region48: #{transformer_encoder_layer.5} parent=1 // pred_region
      %v3595 = vld [vmem:[#allocation2] sm:$0xff]
      %v3596 = vld [vmem:[#allocation2 + $0x8] sm:$0xff]
      %v3597 = vld [vmem:[#allocation2 + $0x10] sm:$0xff]
      %v3598 = vld [vmem:[#allocation2 + $0x18] sm:$0xff]
      %v3599 = vld [vmem:[#allocation2 + $0x20] sm:$0xff]
      %v3600 = vld [vmem:[#allocation2 + $0x28] sm:$0xff]
      %v3601 = vld [vmem:[#allocation2 + $0x30] sm:$0xff]
      %v3602 = vld [vmem:[#allocation2 + $0x38] sm:$0xff]
      %v3603 = vld [vmem:[#allocation2 + $0x40] sm:$0xff]
      %v3604 = vld [vmem:[#allocation2 + $0x48] sm:$0xff]
      %v3605 = vld [vmem:[#allocation2 + $0x50] sm:$0xff]
      %v3606 = vld [vmem:[#allocation2 + $0x58] sm:$0xff]
      %v3607 = vld [vmem:[#allocation2 + $0x60] sm:$0xff]
      %v3608 = vld [vmem:[#allocation2 + $0x68] sm:$0xff]
      %v3609 = vld [vmem:[#allocation2 + $0x70] sm:$0xff]
      %v3610 = vld [vmem:[#allocation2 + $0x78] sm:$0xff]
      %v3611 = vld [vmem:[#allocation2 + $0x80] sm:$0xff]
      %v3612 = vld [vmem:[#allocation2 + $0x88] sm:$0xff]
      %v3613 = vld [vmem:[#allocation2 + $0x90] sm:$0xff]
      %v3614 = vld [vmem:[#allocation2 + $0x98] sm:$0xff]
      %v3615 = vld [vmem:[#allocation2 + $0xa0] sm:$0xff]
      %v3616 = vld [vmem:[#allocation2 + $0xa8] sm:$0xff]
      %v3617 = vld [vmem:[#allocation2 + $0xb0] sm:$0xff]
      %v3618 = vld [vmem:[#allocation2 + $0xb8] sm:$0xff]
      %v3619 = vld [vmem:[#allocation2 + $0xc0] sm:$0xff]
      %v3620 = vld [vmem:[#allocation2 + $0xc8] sm:$0xff]
      %v3621 = vld [vmem:[#allocation2 + $0xd0] sm:$0xff]
      %v3622 = vld [vmem:[#allocation2 + $0xd8] sm:$0xff]
      %v3623 = vld [vmem:[#allocation2 + $0xe0] sm:$0xff]
      %v3624 = vld [vmem:[#allocation2 + $0xe8] sm:$0xff]
      %v3625 = vld [vmem:[#allocation2 + $0xf0] sm:$0xff]
      %v3626 = vld [vmem:[#allocation2 + $0xf8] sm:$0xff]
      %v3627 = vld [vmem:[#allocation2 + $0x100] sm:$0xff]
      %v3628 = vld [vmem:[#allocation2 + $0x108] sm:$0xff]
      %v3629 = vld [vmem:[#allocation2 + $0x110] sm:$0xff]
      %v3630 = vld [vmem:[#allocation2 + $0x118] sm:$0xff]
      %v3631 = vld [vmem:[#allocation2 + $0x120] sm:$0xff]
      %v3632 = vld [vmem:[#allocation2 + $0x128] sm:$0xff]
      %v3633 = vld [vmem:[#allocation2 + $0x130] sm:$0xff]
      %v3634 = vld [vmem:[#allocation2 + $0x138] sm:$0xff]
      %v3635 = vld [vmem:[#allocation2 + $0x140] sm:$0xff]
      %v3636 = vld [vmem:[#allocation2 + $0x148] sm:$0xff]
      %v3637 = vld [vmem:[#allocation2 + $0x150] sm:$0xff]
      %v3638 = vld [vmem:[#allocation2 + $0x158] sm:$0xff]
      %v3639 = vld [vmem:[#allocation2 + $0x160] sm:$0xff]
      %v3640 = vld [vmem:[#allocation2 + $0x168] sm:$0xff]
      %v3641 = vld [vmem:[#allocation2 + $0x170] sm:$0xff]
      %v3642 = vld [vmem:[#allocation2 + $0x178] sm:$0xff]
      %v3643 = vld [vmem:[#allocation2 + $0x180] sm:$0xff]
      %v3644 = vld [vmem:[#allocation2 + $0x188] sm:$0xff]
      %v3645 = vld [vmem:[#allocation2 + $0x190] sm:$0xff]
      %v3646 = vld [vmem:[#allocation2 + $0x198] sm:$0xff]
      %v3647 = vld [vmem:[#allocation2 + $0x1a0] sm:$0xff]
      %v3648 = vld [vmem:[#allocation2 + $0x1a8] sm:$0xff]
      %v3649 = vld [vmem:[#allocation2 + $0x1b0] sm:$0xff]
      %v3650 = vld [vmem:[#allocation2 + $0x1b8] sm:$0xff]
      %v3651 = vld [vmem:[#allocation2 + $0x1c0] sm:$0xff]
      %v3652 = vld [vmem:[#allocation2 + $0x1c8] sm:$0xff]
      %v3653 = vld [vmem:[#allocation2 + $0x1d0] sm:$0xff]
      %v3654 = vld [vmem:[#allocation2 + $0x1d8] sm:$0xff]
      %v3655 = vld [vmem:[#allocation2 + $0x1e0] sm:$0xff]
      %v3656 = vld [vmem:[#allocation2 + $0x1e8] sm:$0xff]
      %v3657 = vld [vmem:[#allocation2 + $0x1f0] sm:$0xff]
      %v3658 = vld [vmem:[#allocation2 + $0x1f8] sm:$0xff]
      %v3659 = vld [vmem:[#allocation4] sm:$0xff]
      %v3660 = vld [vmem:[#allocation4 + $0x8] sm:$0xff]
      %v3661 = vld [vmem:[#allocation4 + $0x10] sm:$0xff]
      %v3662 = vld [vmem:[#allocation4 + $0x18] sm:$0xff]
      %v3663 = vld [vmem:[#allocation4 + $0x20] sm:$0xff]
      %v3664 = vld [vmem:[#allocation4 + $0x28] sm:$0xff]
      %v3665 = vld [vmem:[#allocation4 + $0x30] sm:$0xff]
      %v3666 = vld [vmem:[#allocation4 + $0x38] sm:$0xff]
      %v3667 = vld [vmem:[#allocation4 + $0x40] sm:$0xff]
      %v3668 = vld [vmem:[#allocation4 + $0x48] sm:$0xff]
      %v3669 = vld [vmem:[#allocation4 + $0x50] sm:$0xff]
      %v3670 = vld [vmem:[#allocation4 + $0x58] sm:$0xff]
      %v3671 = vld [vmem:[#allocation4 + $0x60] sm:$0xff]
      %v3672 = vld [vmem:[#allocation4 + $0x68] sm:$0xff]
      %v3673 = vld [vmem:[#allocation4 + $0x70] sm:$0xff]
      %v3674 = vld [vmem:[#allocation4 + $0x78] sm:$0xff]
      %v3675 = vld [vmem:[#allocation4 + $0x80] sm:$0xff]
      %v3676 = vld [vmem:[#allocation4 + $0x88] sm:$0xff]
      %v3677 = vld [vmem:[#allocation4 + $0x90] sm:$0xff]
      %v3678 = vld [vmem:[#allocation4 + $0x98] sm:$0xff]
      %v3679 = vld [vmem:[#allocation4 + $0xa0] sm:$0xff]
      %v3680 = vld [vmem:[#allocation4 + $0xa8] sm:$0xff]
      %v3681 = vld [vmem:[#allocation4 + $0xb0] sm:$0xff]
      %v3682 = vld [vmem:[#allocation4 + $0xb8] sm:$0xff]
      %v3683 = vld [vmem:[#allocation4 + $0xc0] sm:$0xff]
      %v3684 = vld [vmem:[#allocation4 + $0xc8] sm:$0xff]
      %v3685 = vld [vmem:[#allocation4 + $0xd0] sm:$0xff]
      %v3686 = vld [vmem:[#allocation4 + $0xd8] sm:$0xff]
      %v3687 = vld [vmem:[#allocation4 + $0xe0] sm:$0xff]
      %v3688 = vld [vmem:[#allocation4 + $0xe8] sm:$0xff]
      %v3689 = vld [vmem:[#allocation4 + $0xf0] sm:$0xff]
      %v3690 = vld [vmem:[#allocation4 + $0xf8] sm:$0xff]
      %v3691 = vld [vmem:[#allocation4 + $0x100] sm:$0xff]
      %v3692 = vld [vmem:[#allocation4 + $0x108] sm:$0xff]
      %v3693 = vld [vmem:[#allocation4 + $0x110] sm:$0xff]
      %v3694 = vld [vmem:[#allocation4 + $0x118] sm:$0xff]
      %v3695 = vld [vmem:[#allocation4 + $0x120] sm:$0xff]
      %v3696 = vld [vmem:[#allocation4 + $0x128] sm:$0xff]
      %v3697 = vld [vmem:[#allocation4 + $0x130] sm:$0xff]
      %v3698 = vld [vmem:[#allocation4 + $0x138] sm:$0xff]
      %v3699 = vld [vmem:[#allocation4 + $0x140] sm:$0xff]
      %v3700 = vld [vmem:[#allocation4 + $0x148] sm:$0xff]
      %v3701 = vld [vmem:[#allocation4 + $0x150] sm:$0xff]
      %v3702 = vld [vmem:[#allocation4 + $0x158] sm:$0xff]
      %v3703 = vld [vmem:[#allocation4 + $0x160] sm:$0xff]
      %v3704 = vld [vmem:[#allocation4 + $0x168] sm:$0xff]
      %v3705 = vld [vmem:[#allocation4 + $0x170] sm:$0xff]
      %v3706 = vld [vmem:[#allocation4 + $0x178] sm:$0xff]
      %v3707 = vld [vmem:[#allocation4 + $0x180] sm:$0xff]
      %v3708 = vld [vmem:[#allocation4 + $0x188] sm:$0xff]
      %v3709 = vld [vmem:[#allocation4 + $0x190] sm:$0xff]
      %v3710 = vld [vmem:[#allocation4 + $0x198] sm:$0xff]
      %v3711 = vld [vmem:[#allocation4 + $0x1a0] sm:$0xff]
      %v3712 = vld [vmem:[#allocation4 + $0x1a8] sm:$0xff]
      %v3713 = vld [vmem:[#allocation4 + $0x1b0] sm:$0xff]
      %v3714 = vld [vmem:[#allocation4 + $0x1b8] sm:$0xff]
      %v3715 = vld [vmem:[#allocation4 + $0x1c0] sm:$0xff]
      %v3716 = vld [vmem:[#allocation4 + $0x1c8] sm:$0xff]
      %v3717 = vld [vmem:[#allocation4 + $0x1d0] sm:$0xff]
      %v3718 = vld [vmem:[#allocation4 + $0x1d8] sm:$0xff]
      %v3719 = vld [vmem:[#allocation4 + $0x1e0] sm:$0xff]
      %v3720 = vld [vmem:[#allocation4 + $0x1e8] sm:$0xff]
      %v3721 = vld [vmem:[#allocation4 + $0x1f0] sm:$0xff]
      %v3722 = vld [vmem:[#allocation4 + $0x1f8] sm:$0xff]
      %v3723 = vadd.f32 %v3595, %v3659
      %v3724 = vadd.f32 %v3596, %v3660
      %v3725 = vadd.f32 %v3597, %v3661
      %v3726 = vadd.f32 %v3598, %v3662
      %v3727 = vadd.f32 %v3599, %v3663
      %v3728 = vadd.f32 %v3600, %v3664
      %v3729 = vadd.f32 %v3601, %v3665
      %v3730 = vadd.f32 %v3602, %v3666
      %v3731 = vadd.f32 %v3603, %v3667
      %v3732 = vadd.f32 %v3604, %v3668
      %v3733 = vadd.f32 %v3605, %v3669
      %v3734 = vadd.f32 %v3606, %v3670
      %v3735 = vadd.f32 %v3607, %v3671
      %v3736 = vadd.f32 %v3608, %v3672
      %v3737 = vadd.f32 %v3609, %v3673
      %v3738 = vadd.f32 %v3610, %v3674
      %v3739 = vadd.f32 %v3611, %v3675
      %v3740 = vadd.f32 %v3612, %v3676
      %v3741 = vadd.f32 %v3613, %v3677
      %v3742 = vadd.f32 %v3614, %v3678
      %v3743 = vadd.f32 %v3615, %v3679
      %v3744 = vadd.f32 %v3616, %v3680
      %v3745 = vadd.f32 %v3617, %v3681
      %v3746 = vadd.f32 %v3618, %v3682
      %v3747 = vadd.f32 %v3619, %v3683
      %v3748 = vadd.f32 %v3620, %v3684
      %v3749 = vadd.f32 %v3621, %v3685
      %v3750 = vadd.f32 %v3622, %v3686
      %v3751 = vadd.f32 %v3623, %v3687
      %v3752 = vadd.f32 %v3624, %v3688
      %v3753 = vadd.f32 %v3625, %v3689
      %v3754 = vadd.f32 %v3626, %v3690
      %v3755 = vadd.f32 %v3627, %v3691
      %v3756 = vadd.f32 %v3628, %v3692
      %v3757 = vadd.f32 %v3629, %v3693
      %v3758 = vadd.f32 %v3630, %v3694
      %v3759 = vadd.f32 %v3631, %v3695
      %v3760 = vadd.f32 %v3632, %v3696
      %v3761 = vadd.f32 %v3633, %v3697
      %v3762 = vadd.f32 %v3634, %v3698
      %v3763 = vadd.f32 %v3635, %v3699
      %v3764 = vadd.f32 %v3636, %v3700
      %v3765 = vadd.f32 %v3637, %v3701
      %v3766 = vadd.f32 %v3638, %v3702
      %v3767 = vadd.f32 %v3639, %v3703
      %v3768 = vadd.f32 %v3640, %v3704
      %v3769 = vadd.f32 %v3641, %v3705
      %v3770 = vadd.f32 %v3642, %v3706
      %v3771 = vadd.f32 %v3643, %v3707
      %v3772 = vadd.f32 %v3644, %v3708
      %v3773 = vadd.f32 %v3645, %v3709
      %v3774 = vadd.f32 %v3646, %v3710
      %v3775 = vadd.f32 %v3647, %v3711
      %v3776 = vadd.f32 %v3648, %v3712
      %v3777 = vadd.f32 %v3649, %v3713
      %v3778 = vadd.f32 %v3650, %v3714
      %v3779 = vadd.f32 %v3651, %v3715
      %v3780 = vadd.f32 %v3652, %v3716
      %v3781 = vadd.f32 %v3653, %v3717
      %v3782 = vadd.f32 %v3654, %v3718
      %v3783 = vadd.f32 %v3655, %v3719
      %v3784 = vadd.f32 %v3656, %v3720
      %v3785 = vadd.f32 %v3657, %v3721
      %v3786 = vadd.f32 %v3658, %v3722
      %v3787 = vld [vmem:[%s9] sm:$0x3]
      %v3789 = vlaneseq
      %v3790 = vshrl.u32 %v3789, 7
      %v3791 = vsub.s32 0, %v3790
      %v3792 = vrot.slane %v3787, %v3791
      %v3793 = vlaneseq
      %v3794 = vshrl.u32 %v3793, 7
      %v3795 = vsub.s32 1, %v3794
      %v3796 = vrot.slane %v3787, %v3795
      %v3799 = vadd.f32 %v3723, %v3792
      %v3800 = vadd.f32 %v3724, %v3796
      %v3801 = vadd.f32 %v3725, %v3792
      %v3802 = vadd.f32 %v3726, %v3796
      %v3803 = vadd.f32 %v3727, %v3792
      %v3804 = vadd.f32 %v3728, %v3796
      %v3805 = vadd.f32 %v3729, %v3792
      %v3806 = vadd.f32 %v3730, %v3796
      %v3807 = vadd.f32 %v3731, %v3792
      %v3808 = vadd.f32 %v3732, %v3796
      %v3809 = vadd.f32 %v3733, %v3792
      %v3810 = vadd.f32 %v3734, %v3796
      %v3811 = vadd.f32 %v3735, %v3792
      %v3812 = vadd.f32 %v3736, %v3796
      %v3813 = vadd.f32 %v3737, %v3792
      %v3814 = vadd.f32 %v3738, %v3796
      %v3815 = vadd.f32 %v3739, %v3792
      %v3816 = vadd.f32 %v3740, %v3796
      %v3817 = vadd.f32 %v3741, %v3792
      %v3818 = vadd.f32 %v3742, %v3796
      %v3819 = vadd.f32 %v3743, %v3792
      %v3820 = vadd.f32 %v3744, %v3796
      %v3821 = vadd.f32 %v3745, %v3792
      %v3822 = vadd.f32 %v3746, %v3796
      %v3823 = vadd.f32 %v3747, %v3792
      %v3824 = vadd.f32 %v3748, %v3796
      %v3825 = vadd.f32 %v3749, %v3792
      %v3826 = vadd.f32 %v3750, %v3796
      %v3827 = vadd.f32 %v3751, %v3792
      %v3828 = vadd.f32 %v3752, %v3796
      %v3829 = vadd.f32 %v3753, %v3792
      %v3830 = vadd.f32 %v3754, %v3796
      %v3831 = vadd.f32 %v3755, %v3792
      %v3832 = vadd.f32 %v3756, %v3796
      %v3833 = vadd.f32 %v3757, %v3792
      %v3834 = vadd.f32 %v3758, %v3796
      %v3835 = vadd.f32 %v3759, %v3792
      %v3836 = vadd.f32 %v3760, %v3796
      %v3837 = vadd.f32 %v3761, %v3792
      %v3838 = vadd.f32 %v3762, %v3796
      %v3839 = vadd.f32 %v3763, %v3792
      %v3840 = vadd.f32 %v3764, %v3796
      %v3841 = vadd.f32 %v3765, %v3792
      %v3842 = vadd.f32 %v3766, %v3796
      %v3843 = vadd.f32 %v3767, %v3792
      %v3844 = vadd.f32 %v3768, %v3796
      %v3845 = vadd.f32 %v3769, %v3792
      %v3846 = vadd.f32 %v3770, %v3796
      %v3847 = vadd.f32 %v3771, %v3792
      %v3848 = vadd.f32 %v3772, %v3796
      %v3849 = vadd.f32 %v3773, %v3792
      %v3850 = vadd.f32 %v3774, %v3796
      %v3851 = vadd.f32 %v3775, %v3792
      %v3852 = vadd.f32 %v3776, %v3796
      %v3853 = vadd.f32 %v3777, %v3792
      %v3854 = vadd.f32 %v3778, %v3796
      %v3855 = vadd.f32 %v3779, %v3792
      %v3856 = vadd.f32 %v3780, %v3796
      %v3857 = vadd.f32 %v3781, %v3792
      %v3858 = vadd.f32 %v3782, %v3796
      %v3859 = vadd.f32 %v3783, %v3792
      %v3860 = vadd.f32 %v3784, %v3796
      %v3861 = vadd.f32 %v3785, %v3792
      %v3862 = vadd.f32 %v3786, %v3796
      %3863 = vst [vmem:[#allocation5] sm:$0xff] %v3799
      %3864 = vst [vmem:[#allocation5 + $0x8] sm:$0xff] %v3800
      %3865 = vst [vmem:[#allocation5 + $0x10] sm:$0xff] %v3801
      %3866 = vst [vmem:[#allocation5 + $0x18] sm:$0xff] %v3802
      %3867 = vst [vmem:[#allocation5 + $0x20] sm:$0xff] %v3803
      %3868 = vst [vmem:[#allocation5 + $0x28] sm:$0xff] %v3804
      %3869 = vst [vmem:[#allocation5 + $0x30] sm:$0xff] %v3805
      %3870 = vst [vmem:[#allocation5 + $0x38] sm:$0xff] %v3806
      %3871 = vst [vmem:[#allocation5 + $0x40] sm:$0xff] %v3807
      %3872 = vst [vmem:[#allocation5 + $0x48] sm:$0xff] %v3808
      %3873 = vst [vmem:[#allocation5 + $0x50] sm:$0xff] %v3809
      %3874 = vst [vmem:[#allocation5 + $0x58] sm:$0xff] %v3810
      %3875 = vst [vmem:[#allocation5 + $0x60] sm:$0xff] %v3811
      %3876 = vst [vmem:[#allocation5 + $0x68] sm:$0xff] %v3812
      %3877 = vst [vmem:[#allocation5 + $0x70] sm:$0xff] %v3813
      %3878 = vst [vmem:[#allocation5 + $0x78] sm:$0xff] %v3814
      %3879 = vst [vmem:[#allocation5 + $0x80] sm:$0xff] %v3815
      %3880 = vst [vmem:[#allocation5 + $0x88] sm:$0xff] %v3816
      %3881 = vst [vmem:[#allocation5 + $0x90] sm:$0xff] %v3817
      %3882 = vst [vmem:[#allocation5 + $0x98] sm:$0xff] %v3818
      %3883 = vst [vmem:[#allocation5 + $0xa0] sm:$0xff] %v3819
      %3884 = vst [vmem:[#allocation5 + $0xa8] sm:$0xff] %v3820
      %3885 = vst [vmem:[#allocation5 + $0xb0] sm:$0xff] %v3821
      %3886 = vst [vmem:[#allocation5 + $0xb8] sm:$0xff] %v3822
      %3887 = vst [vmem:[#allocation5 + $0xc0] sm:$0xff] %v3823
      %3888 = vst [vmem:[#allocation5 + $0xc8] sm:$0xff] %v3824
      %3889 = vst [vmem:[#allocation5 + $0xd0] sm:$0xff] %v3825
      %3890 = vst [vmem:[#allocation5 + $0xd8] sm:$0xff] %v3826
      %3891 = vst [vmem:[#allocation5 + $0xe0] sm:$0xff] %v3827
      %3892 = vst [vmem:[#allocation5 + $0xe8] sm:$0xff] %v3828
      %3893 = vst [vmem:[#allocation5 + $0xf0] sm:$0xff] %v3829
      %3894 = vst [vmem:[#allocation5 + $0xf8] sm:$0xff] %v3830
      %3895 = vst [vmem:[#allocation5 + $0x100] sm:$0xff] %v3831
      %3896 = vst [vmem:[#allocation5 + $0x108] sm:$0xff] %v3832
      %3897 = vst [vmem:[#allocation5 + $0x110] sm:$0xff] %v3833
      %3898 = vst [vmem:[#allocation5 + $0x118] sm:$0xff] %v3834
      %3899 = vst [vmem:[#allocation5 + $0x120] sm:$0xff] %v3835
      %3900 = vst [vmem:[#allocation5 + $0x128] sm:$0xff] %v3836
      %3901 = vst [vmem:[#allocation5 + $0x130] sm:$0xff] %v3837
      %3902 = vst [vmem:[#allocation5 + $0x138] sm:$0xff] %v3838
      %3903 = vst [vmem:[#allocation5 + $0x140] sm:$0xff] %v3839
      %3904 = vst [vmem:[#allocation5 + $0x148] sm:$0xff] %v3840
      %3905 = vst [vmem:[#allocation5 + $0x150] sm:$0xff] %v3841
      %3906 = vst [vmem:[#allocation5 + $0x158] sm:$0xff] %v3842
      %3907 = vst [vmem:[#allocation5 + $0x160] sm:$0xff] %v3843
      %3908 = vst [vmem:[#allocation5 + $0x168] sm:$0xff] %v3844
      %3909 = vst [vmem:[#allocation5 + $0x170] sm:$0xff] %v3845
      %3910 = vst [vmem:[#allocation5 + $0x178] sm:$0xff] %v3846
      %3911 = vst [vmem:[#allocation5 + $0x180] sm:$0xff] %v3847
      %3912 = vst [vmem:[#allocation5 + $0x188] sm:$0xff] %v3848
      %3913 = vst [vmem:[#allocation5 + $0x190] sm:$0xff] %v3849
      %3914 = vst [vmem:[#allocation5 + $0x198] sm:$0xff] %v3850
      %3915 = vst [vmem:[#allocation5 + $0x1a0] sm:$0xff] %v3851
      %3916 = vst [vmem:[#allocation5 + $0x1a8] sm:$0xff] %v3852
      %3917 = vst [vmem:[#allocation5 + $0x1b0] sm:$0xff] %v3853
      %3918 = vst [vmem:[#allocation5 + $0x1b8] sm:$0xff] %v3854
      %3919 = vst [vmem:[#allocation5 + $0x1c0] sm:$0xff] %v3855
      %3920 = vst [vmem:[#allocation5 + $0x1c8] sm:$0xff] %v3856
      %3921 = vst [vmem:[#allocation5 + $0x1d0] sm:$0xff] %v3857
      %3922 = vst [vmem:[#allocation5 + $0x1d8] sm:$0xff] %v3858
      %3923 = vst [vmem:[#allocation5 + $0x1e0] sm:$0xff] %v3859
      %3924 = vst [vmem:[#allocation5 + $0x1e8] sm:$0xff] %v3860
      %3925 = vst [vmem:[#allocation5 + $0x1f0] sm:$0xff] %v3861
      %3926 = vst [vmem:[#allocation5 + $0x1f8] sm:$0xff] %v3862
    $region49: #{transformer_encoder_layer.5} parent=1 // pred_fallthru
      _
    // Predicated region
    $region50: #{transformer_encoder_layer.5} parent=1 // pred_check
      _
    $region51: #{transformer_encoder_layer.5} parent=1 // pred_check_branch
      %3928 = sbr.rel (0) target = $region53
    $region52: #{transformer_encoder_layer.5} parent=1 // pred_region
      %s3930 = ssub.s32 8192, 8192
      %3931 = vsyncadd [#allocation6], %s3930
      %s3932 = sshll.u32 [#allocation5], 4
      %s3933 = int_to_ptr.vmem [resolvable:$true] %s3932
      %3938 = dma.vmem_to_hbm [thread:$0]  %s3933, 8192, %s10, [#allocation6], 256, 256, 16
    $region53: #{transformer_encoder_layer.5} parent=1 // pred_fallthru
      _
    // Predicated region
    $region54: #{transformer_encoder_layer.5} parent=1 // pred_check
      _
    $region55: #{transformer_encoder_layer.5} parent=1 // pred_check_branch
      %3940 = sbr.rel (0) target = $region57
    $region56: #{transformer_encoder_layer.5} parent=1 // pred_region
      %3941 = dma.done [#allocation6], 8192
    $region57: #{transformer_encoder_layer.5} parent=1 // pred_fallthru
      _
    %3942 = vsyncpa [#allocation6], 1

</llo_original>
